<compile_context>
chip_gen: v7x
topology: tpu7x:2x2x1
jax: 0.10.0
libtpu: 0.0.40
codegen_flags: <defaults>
</compile_context>

<pallas_src>
import jax
import jax.numpy as jnp
from jax.experimental import pallas as pl
from jax.experimental.pallas import tpu as pltpu


# ----------------------------------------------------------------------------
# Matmul + bias kernel — used for the conv-as-im2col matmuls.
# ----------------------------------------------------------------------------
def _linear_kernel(x_ref, w_ref, b_ref, o_ref):
    y = jnp.dot(x_ref[...], w_ref[...], preferred_element_type=jnp.float32)
    o_ref[...] = (y + b_ref[...]).astype(o_ref.dtype)


def linear(x, w, b):
    """y = x @ w + b.   x:(M,K)  w:(K,N)  b:(N,).  N is kept lane-dense (128k)."""
    M, K = x.shape
    N = w.shape[1]
    tm = M
    for t in (512, 256, 128, 64, 32, 16, 8):
        if M % t == 0:
            tm = t
            break
    # TODO(synk): pad/mask a ragged M (never hit for the shapes used here).
    return pl.pallas_call(
        _linear_kernel,
        out_shape=jax.ShapeDtypeStruct((M, N), jnp.float32),
        grid=(M // tm,),
        in_specs=[
            pl.BlockSpec((tm, K), lambda i: (i, 0)),
            pl.BlockSpec((K, N), lambda i: (0, 0)),
            pl.BlockSpec((1, N), lambda i: (0, 0)),
        ],
        out_specs=pl.BlockSpec((tm, N), lambda i: (i, 0)),
        compiler_params=pltpu.CompilerParams(dimension_semantics=("parallel",)),
    )(x, w, b.reshape(1, N))


# ----------------------------------------------------------------------------
# Conv3d(kernel=3, padding=1) as im2col (JAX glue) + Pallas matmul (the FLOPs).
# Channel dims are pre-padded to 128 so the matmul output is lane-dense.
# ----------------------------------------------------------------------------
def conv3d_3x3x3_same(x, wmat, b, *, k_pad=None):
    """x:(B,D,H,W,Cin)  wmat:(27*Cin[+pad], Cout) flattened (kd,kh,kw,cin)."""
    B, D, H, W, Cin = x.shape
    Cout = wmat.shape[1]
    xp = jnp.pad(x, ((0, 0), (1, 1), (1, 1), (1, 1), (0, 0)))  # zero pad
    taps = []
    for kd in range(3):
        for kh in range(3):
            for kw in range(3):
                taps.append(xp[:, kd:kd + D, kh:kh + H, kw:kw + W, :])
    # TODO(synk): for large volumes, accumulate the 27 taps inside the matmul
    # kernel (K grid axis) instead of materializing the im2col tensor in HBM.
    cols = jnp.stack(taps, axis=4).reshape(B * D * H * W, 27 * Cin)
    if k_pad is not None and k_pad > 27 * Cin:
        cols = jnp.pad(cols, ((0, 0), (0, k_pad - 27 * Cin)))
    y = linear(cols, wmat, b)                       # Pallas matmul hot path
    return y.reshape(B, D, H, W, Cout)


# ----------------------------------------------------------------------------
# MaxPool3d(kernel=3, stride=2, padding=1) + fused ReLU.
# Separable 3-tap sliding max (6 maxes instead of 26); stride-2 subsample of
# the dense pooled volume is done outside (equivalent result).
# ----------------------------------------------------------------------------
def _maxpool3_relu_kernel(x_ref, o_ref):
    _, Dp, Hp, Wp, C = x_ref.shape
    D, H, W = Dp - 2, Hp - 2, Wp - 2
    x = x_ref[0]
    m = jnp.maximum(jnp.maximum(x[:, :, 0:W, :], x[:, :, 1:W + 1, :]),
                    x[:, :, 2:W + 2, :])                          # along W
    m = jnp.maximum(jnp.maximum(m[:, 0:H, :, :], m[:, 1:H + 1, :, :]),
                    m[:, 2:H + 2, :, :])                          # along H
    m = jnp.maximum(jnp.maximum(m[0:D], m[1:D + 1]), m[2:D + 2])  # along D
    o_ref[0] = jnp.maximum(m, 0.0)                                # fused ReLU


def maxpool3d_relu(x):
    B, D, H, W, C = x.shape
    neg = jnp.asarray(-jnp.inf, x.dtype)
    xp = jnp.pad(x, ((0, 0), (1, 1), (1, 1), (1, 1), (0, 0)), constant_values=neg)
    Dp, Hp, Wp = D + 2, H + 2, W + 2
    # TODO(synk): for large volumes, tile over D with a halo and emit only the
    # stride-2 positions in-kernel; at 8^3 the dense+subsample path is tiny.
    dense = pl.pallas_call(
        _maxpool3_relu_kernel,
        out_shape=jax.ShapeDtypeStruct((B, D, H, W, C), jnp.float32),
        grid=(B,),
        in_specs=[pl.BlockSpec((1, Dp, Hp, Wp, C), lambda b: (b, 0, 0, 0, 0))],
        out_specs=pl.BlockSpec((1, D, H, W, C), lambda b: (b, 0, 0, 0, 0)),
        compiler_params=pltpu.CompilerParams(dimension_semantics=("parallel",)),
    )(xp)
    # stride-2 subsample of the dense pooled volume == stride-2 max pooling
    return dense[:, ::2, ::2, ::2, :]


# ----------------------------------------------------------------------------
# Fused tabular MLP: tab_lin1..4 (+ReLU) in a single pallas_call.
# Activation stays resident in VMEM; weights streamed one layer per grid step
# (layer axis is sequential -> "arbitrary"); weight DMA double-buffered.
# ----------------------------------------------------------------------------
def _tab_mlp_kernel(x_ref, w_ref, b_ref, o_ref, act_ref):
    l = pl.program_id(0)

    @pl.when(l == 0)
    def _():
        act_ref[...] = x_ref[...]            # load (zero-padded) tab input once

    y = jnp.dot(act_ref[...], w_ref[0], preferred_element_type=jnp.float32)
    y = jnp.maximum(y + b_ref[0], 0.0)       # bias + ReLU epilogue
    act_ref[...] = y
    o_ref[...] = y                           # last layer's write lands in HBM


def tab_mlp(tab, w_stack, b_stack):
    """tab:(B,479)  w_stack:(4,1024,1024) f32  b_stack:(4,1,1024) f32."""
    B, K = tab.shape
    L, Kp, N = w_stack.shape
    x = jnp.pad(tab.astype(jnp.float32), ((0, 0), (0, Kp - K)))
    return pl.pallas_call(
        _tab_mlp_kernel,
        out_shape=jax.ShapeDtypeStruct((B, N), jnp.float32),
        grid=(L,),
        in_specs=[
            pl.BlockSpec((B, Kp), lambda l: (0, 0)),
            pl.BlockSpec((1, Kp, N), lambda l: (l, 0, 0)),
            pl.BlockSpec((1, 1, N), lambda l: (l, 0, 0)),
        ],
        out_specs=pl.BlockSpec((B, N), lambda l: (0, 0)),
        scratch_shapes=[pltpu.VMEM((B, N), jnp.float32)],
        compiler_params=pltpu.CompilerParams(
            dimension_semantics=("arbitrary",)),   # layers are sequential
    )(x, w_stack, b_stack)


# ----------------------------------------------------------------------------
# Head kernel: global-avg-pool + img_out Linear + concat + final out Linear,
# all fused into one tiny pallas_call.  Output N padded to 128 (lane-dense).
# ----------------------------------------------------------------------------
def _head_kernel(pool_ref, wio_ref, bio_ref, tab_ref, woi_ref, wot_ref,
                 bo_ref, o_ref):
    n_vox = pool_ref.shape[1]
    gap = jnp.sum(pool_ref[...], axis=1) * (1.0 / n_vox)          # (B, 128)
    img = jnp.dot(gap, wio_ref[...],
                  preferred_element_type=jnp.float32) + bio_ref[...]
    out = jnp.dot(img, woi_ref[...], preferred_element_type=jnp.float32)
    out = out + jnp.dot(tab_ref[...], wot_ref[...],
                        preferred_element_type=jnp.float32)
    o_ref[...] = out + bo_ref[...]


def head(pooled, w_img_out, b_img_out, tab_feat, w_out_img, w_out_tab, b_out):
    B = pooled.shape[0]
    N = w_out_img.shape[1]
    return pl.pallas_call(
        _head_kernel,
        out_shape=jax.ShapeDtypeStruct((B, N), jnp.float32),
    )(pooled, w_img_out, b_img_out.reshape(1, -1), tab_feat,
      w_out_img, w_out_tab, b_out.reshape(1, -1))


# ----------------------------------------------------------------------------
# Deterministic synthetic parameters (shapes from BaselineTab.__init__),
# stored in "math" layout (fan_in, fan_out) and zero-padded to lane-dense
# TPU-friendly shapes (padding keeps the math identical to the unpadded net).
# ----------------------------------------------------------------------------
def init_params(key):
    ks = jax.random.split(key, 8)

    def dense(k, fan_in, fan_out):
        kw, kb = jax.random.split(k)
        bound = 1.0 / jnp.sqrt(jnp.float32(fan_in))
        w = jax.random.uniform(kw, (fan_in, fan_out), jnp.float32, -bound, bound)
        b = jax.random.uniform(kb, (fan_out,), jnp.float32, -bound, bound)
        return w, b

    p = {}
    # Conv3d(1, 32, 3, p=1): (27, 32) -> padded (32, 128)
    w, b = dense(ks[0], 27 * 1, 32)
    p["conv1_w"] = jnp.zeros((32, 128), jnp.float32).at[:27, :32].set(w)
    p["conv1_b"] = jnp.zeros((128,), jnp.float32).at[:32].set(b)
    # Conv3d(32, 64, 3, p=1): (27*32, 64) -> padded (27*128, 128)
    w, b = dense(ks[1], 27 * 32, 64)
    p["conv2_w"] = (jnp.zeros((27, 128, 128), jnp.float32)
                    .at[:, :32, :64].set(w.reshape(27, 32, 64))
                    .reshape(27 * 128, 128))
    p["conv2_b"] = jnp.zeros((128,), jnp.float32).at[:64].set(b)
    # Linear(64, 128): fan_in padded to the 128-wide padded GAP features
    w, b = dense(ks[2], 64, 128)
    p["img_out_w"] = jnp.zeros((128, 128), jnp.float32).at[:64, :].set(w)
    p["img_out_b"] = b
    # tab_lin1..4 stacked; lin1 fan_in 479 zero-padded to 1024
    w1, b1 = dense(ks[3], 479, 1024)
    w2, b2 = dense(ks[4], 1024, 1024)
    w3, b3 = dense(ks[5], 1024, 1024)
    w4, b4 = dense(ks[6], 1024, 1024)
    w1 = jnp.zeros((1024, 1024), jnp.float32).at[:479, :].set(w1)
    p["tab_w"] = jnp.stack([w1, w2, w3, w4])                 # (4,1024,1024) f32
    p["tab_b"] = jnp.stack([b1, b2, b3, b4]).reshape(4, 1, 1024)
    # Linear(1024+128, 5): split into img/tab halves, pad N 5 -> 128
    w, b = dense(ks[7], 1024 + 128, 5)
    p["out_w_img"] = jnp.zeros((128, 128), jnp.float32).at[:, :5].set(w[:128])
    p["out_w_tab"] = jnp.zeros((1024, 128), jnp.float32).at[:, :5].set(w[128:])
    p["out_b"] = jnp.zeros((128,), jnp.float32).at[:5].set(b)
    return p


# ----------------------------------------------------------------------------
# Forward pass (mirrors BaselineTab.forward exactly).
# ----------------------------------------------------------------------------
def baseline_tab_forward(params, img_ncdhw, tab):
    # NCDHW -> NDHWC so channels map to TPU lanes
    img = jnp.transpose(img_ncdhw, (0, 2, 3, 4, 1)).astype(jnp.float32)

    img = conv3d_3x3x3_same(img, params["conv1_w"], params["conv1_b"], k_pad=32)
    img = maxpool3d_relu(img)                         # maxpool + relu
    img = conv3d_3x3x3_same(img, params["conv2_w"], params["conv2_b"])
    img = maxpool3d_relu(img)                         # maxpool + relu
    B, _, _, _, C = img.shape
    pooled = img.reshape(B, -1, C)                    # glue for in-kernel GAP

    tab_feat = tab_mlp(tab, params["tab_w"], params["tab_b"])      # (B, 1024)

    out = head(pooled, params["img_out_w"], params["img_out_b"],
               tab_feat, params["out_w_img"], params["out_w_tab"],
               params["out_b"])                       # (B, 128) lane-dense
    return out[:, :5]                                 # the 5 real logits


if __name__ == "__main__":
    key = jax.random.PRNGKey(0)
    k_img, k_tab, k_par = jax.random.split(key, 3)

    B = 2
    img = jax.random.normal(k_img, (B, 1, 8, 8, 8), jnp.float32)   # NCDHW
    tab = jax.random.normal(k_tab, (B, 479), jnp.float32)
    params = init_params(k_par)

    fwd = jax.jit(baseline_tab_forward)
    out = jax.block_until_ready(fwd(params, img, tab))

    assert out.shape == (B, 5), out.shape
    assert bool(jnp.all(jnp.isfinite(out)))
    print("KERNEL_OK")
</pallas_src>

<mosaic_0001>
module attributes {stable_mosaic.version = 11 : i64} {
  func.func @_linear_kernel(%arg0: i32, %arg1: memref<512x32xf32, #tpu.memory_space<vmem>>, %arg2: memref<32x128xf32, #tpu.memory_space<vmem>>, %arg3: memref<1x128xf32, #tpu.memory_space<vmem>>, %arg4: memref<512x128xf32, #tpu.memory_space<vmem>>) attributes {dimension_semantics = [#tpu.dimension_semantics<parallel>], iteration_bounds = array<i64: 2>, scalar_prefetch = 0 : i64, scratch_operands = 0 : i64, tpu.core_type = #tpu.core_type<tc>, window_params = [{transform_indices = @transform_0, window_bounds = array<i64: 512, 32>}, {pipeline_mode = #tpu.pipeline_mode<synchronous>, transform_indices = @transform_1, window_bounds = array<i64: 32, 128>}, {pipeline_mode = #tpu.pipeline_mode<synchronous>, transform_indices = @transform_2, window_bounds = array<i64: 1, 128>}, {transform_indices = @transform_3, window_bounds = array<i64: 512, 128>}]} {
    %c0 = arith.constant 0 : index
    %c0_0 = arith.constant 0 : index
    %0 = vector.load %arg1[%c0, %c0_0] : memref<512x32xf32, #tpu.memory_space<vmem>>, vector<512x32xf32>
    %c0_1 = arith.constant 0 : index
    %c0_2 = arith.constant 0 : index
    %1 = vector.load %arg2[%c0_1, %c0_2] : memref<32x128xf32, #tpu.memory_space<vmem>>, vector<32x128xf32>
    %cst = arith.constant dense<0.000000e+00> : vector<512x128xf32>
    %2 = tpu.matmul %0, %1, %cst {dimension_numbers = #tpu.dot_dimension_numbers<[1], [0], [0], [1], [0, 0, 1, 1], [], []>} : vector<512x32xf32>, vector<32x128xf32>, vector<512x128xf32> -> vector<512x128xf32>
    %c0_3 = arith.constant 0 : index
    %c0_4 = arith.constant 0 : index
    %3 = vector.load %arg3[%c0_3, %c0_4] : memref<1x128xf32, #tpu.memory_space<vmem>>, vector<1x128xf32>
    %4 = vector.broadcast %3 : vector<1x128xf32> to vector<512x128xf32>
    %5 = arith.addf %2, %4 : vector<512x128xf32>
    %c0_5 = arith.constant 0 : index
    %c0_6 = arith.constant 0 : index
    %6 = vector.load %arg4[%c0_5, %c0_6] : memref<512x128xf32, #tpu.memory_space<vmem>>, vector<512x128xf32>
    tpu.vector_store %arg4[%c0_5, %c0_6], %5 {strides = array<i32>} : memref<512x128xf32, #tpu.memory_space<vmem>>, vector<512x128xf32>,
    return
  }
  func.func @transform_0(%arg0: i32) -> (i32, i32) {
    %c0_i32 = arith.constant 0 : i32
    %c0_i32_0 = arith.constant 0 : i32
    return %arg0, %c0_i32 : i32, i32
  }
  func.func @transform_1(%arg0: i32) -> (i32, i32) {
    %c0_i32 = arith.constant 0 : i32
    %c0_i32_0 = arith.constant 0 : i32
    %c0_i32_1 = arith.constant 0 : i32
    return %c0_i32, %c0_i32_0 : i32, i32
  }
  func.func @transform_2(%arg0: i32) -> (i32, i32) {
    %c0_i32 = arith.constant 0 : i32
    %c0_i32_0 = arith.constant 0 : i32
    %c0_i32_1 = arith.constant 0 : i32
    return %c0_i32, %c0_i32_0 : i32, i32
  }
  func.func @transform_3(%arg0: i32) -> (i32, i32) {
    %c0_i32 = arith.constant 0 : i32
    %c0_i32_0 = arith.constant 0 : i32
    return %arg0, %c0_i32 : i32, i32
  }
}

module attributes {stable_mosaic.version = 11 : i64} {
  func.func @_maxpool3_relu_kernel(%arg0: i32, %arg1: memref<1x10x10x10x128xf32, #tpu.memory_space<vmem>>, %arg2: memref<1x8x8x8x128xf32, #tpu.memory_space<vmem>>) attributes {dimension_semantics = [#tpu.dimension_semantics<parallel>], iteration_bounds = array<i64: 2>, scalar_prefetch = 0 : i64, scratch_operands = 0 : i64, tpu.core_type = #tpu.core_type<tc>, window_params = [{transform_indices = @transform_0, window_bounds = array<i64: 1, 10, 10, 10, 128>}, {transform_indices = @transform_1, window_bounds = array<i64: 1, 8, 8, 8, 128>}]} {
    %c0 = arith.constant 0 : index
    %c0_0 = arith.constant 0 : index
    %c0_1 = arith.constant 0 : index
    %c0_2 = arith.constant 0 : index
    %c0_3 = arith.constant 0 : index
    %0 = vector.load %arg1[%c0, %c0_0, %c0_1, %c0_2, %c0_3] : memref<1x10x10x10x128xf32, #tpu.memory_space<vmem>>, vector<1x10x10x10x128xf32>
    %1 = vector.shape_cast %0 : vector<1x10x10x10x128xf32> to vector<10x10x10x128xf32>
    %2 = vector.extract_strided_slice %1 {offsets = [0, 0, 0, 0], sizes = [10, 10, 8, 128], strides = [1, 1, 1, 1]} : vector<10x10x10x128xf32> to vector<10x10x8x128xf32>
    %3 = vector.extract_strided_slice %1 {offsets = [0, 0, 1, 0], sizes = [10, 10, 8, 128], strides = [1, 1, 1, 1]} : vector<10x10x10x128xf32> to vector<10x10x8x128xf32>
    %4 = arith.maximumf %2, %3 : vector<10x10x8x128xf32>
    %5 = vector.extract_strided_slice %1 {offsets = [0, 0, 2, 0], sizes = [10, 10, 8, 128], strides = [1, 1, 1, 1]} : vector<10x10x10x128xf32> to vector<10x10x8x128xf32>
    %6 = arith.maximumf %4, %5 : vector<10x10x8x128xf32>
    %7 = vector.extract_strided_slice %6 {offsets = [0, 0, 0, 0], sizes = [10, 8, 8, 128], strides = [1, 1, 1, 1]} : vector<10x10x8x128xf32> to vector<10x8x8x128xf32>
    %8 = vector.extract_strided_slice %6 {offsets = [0, 1, 0, 0], sizes = [10, 8, 8, 128], strides = [1, 1, 1, 1]} : vector<10x10x8x128xf32> to vector<10x8x8x128xf32>
    %9 = arith.maximumf %7, %8 : vector<10x8x8x128xf32>
    %10 = vector.extract_strided_slice %6 {offsets = [0, 2, 0, 0], sizes = [10, 8, 8, 128], strides = [1, 1, 1, 1]} : vector<10x10x8x128xf32> to vector<10x8x8x128xf32>
    %11 = arith.maximumf %9, %10 : vector<10x8x8x128xf32>
    %12 = vector.extract_strided_slice %11 {offsets = [0, 0, 0, 0], sizes = [8, 8, 8, 128], strides = [1, 1, 1, 1]} : vector<10x8x8x128xf32> to vector<8x8x8x128xf32>
    %13 = vector.extract_strided_slice %11 {offsets = [1, 0, 0, 0], sizes = [8, 8, 8, 128], strides = [1, 1, 1, 1]} : vector<10x8x8x128xf32> to vector<8x8x8x128xf32>
    %14 = arith.maximumf %12, %13 : vector<8x8x8x128xf32>
    %15 = vector.extract_strided_slice %11 {offsets = [2, 0, 0, 0], sizes = [8, 8, 8, 128], strides = [1, 1, 1, 1]} : vector<10x8x8x128xf32> to vector<8x8x8x128xf32>
    %16 = arith.maximumf %14, %15 : vector<8x8x8x128xf32>
    %cst = arith.constant 0.000000e+00 : f32
    %17 = vector.broadcast %cst : f32 to vector<8x8x8x128xf32>
    %18 = arith.maximumf %16, %17 : vector<8x8x8x128xf32>
    %c0_4 = arith.constant 0 : index
    %c0_5 = arith.constant 0 : index
    %c0_6 = arith.constant 0 : index
    %c0_7 = arith.constant 0 : index
    %c0_8 = arith.constant 0 : index
    %19 = vector.load %arg2[%c0_4, %c0_5, %c0_6, %c0_7, %c0_8] : memref<1x8x8x8x128xf32, #tpu.memory_space<vmem>>, vector<1x8x8x8x128xf32>
    %20 = vector.shape_cast %19 : vector<1x8x8x8x128xf32> to vector<8x8x8x128xf32>
    %21 = vector.shape_cast %18 : vector<8x8x8x128xf32> to vector<1x8x8x8x128xf32>
    tpu.vector_store %arg2[%c0_4, %c0_5, %c0_6, %c0_7, %c0_8], %21 {strides = array<i32>} : memref<1x8x8x8x128xf32, #tpu.memory_space<vmem>>, vector<1x8x8x8x128xf32>,
    return
  }
  func.func @transform_0(%arg0: i32) -> (i32, i32, i32, i32, i32) {
    %c0_i32 = arith.constant 0 : i32
    %c0_i32_0 = arith.constant 0 : i32
    %c0_i32_1 = arith.constant 0 : i32
    %c0_i32_2 = arith.constant 0 : i32
    %c0_i32_3 = arith.constant 0 : i32
    return %arg0, %c0_i32, %c0_i32_0, %c0_i32_1, %c0_i32_2 : i32, i32, i32, i32, i32
  }
  func.func @transform_1(%arg0: i32) -> (i32, i32, i32, i32, i32) {
    %c0_i32 = arith.constant 0 : i32
    %c0_i32_0 = arith.constant 0 : i32
    %c0_i32_1 = arith.constant 0 : i32
    %c0_i32_2 = arith.constant 0 : i32
    %c0_i32_3 = arith.constant 0 : i32
    return %arg0, %c0_i32, %c0_i32_0, %c0_i32_1, %c0_i32_2 : i32, i32, i32, i32, i32
  }
}

module attributes {stable_mosaic.version = 11 : i64} {
  func.func @_linear_kernel(%arg0: i32, %arg1: memref<128x3456xf32, #tpu.memory_space<vmem>>, %arg2: memref<3456x128xf32, #tpu.memory_space<vmem>>, %arg3: memref<1x128xf32, #tpu.memory_space<vmem>>, %arg4: memref<128x128xf32, #tpu.memory_space<vmem>>) attributes {dimension_semantics = [#tpu.dimension_semantics<parallel>], iteration_bounds = array<i64: 1>, scalar_prefetch = 0 : i64, scratch_operands = 0 : i64, tpu.core_type = #tpu.core_type<tc>, window_params = [{transform_indices = @transform_0, window_bounds = array<i64: 128, 3456>}, {pipeline_mode = #tpu.pipeline_mode<synchronous>, transform_indices = @transform_1, window_bounds = array<i64: 3456, 128>}, {pipeline_mode = #tpu.pipeline_mode<synchronous>, transform_indices = @transform_2, window_bounds = array<i64: 1, 128>}, {transform_indices = @transform_3, window_bounds = array<i64: 128, 128>}]} {
    %c0 = arith.constant 0 : index
    %c0_0 = arith.constant 0 : index
    %0 = vector.load %arg1[%c0, %c0_0] : memref<128x3456xf32, #tpu.memory_space<vmem>>, vector<128x3456xf32>
    %c0_1 = arith.constant 0 : index
    %c0_2 = arith.constant 0 : index
    %1 = vector.load %arg2[%c0_1, %c0_2] : memref<3456x128xf32, #tpu.memory_space<vmem>>, vector<3456x128xf32>
    %cst = arith.constant dense<0.000000e+00> : vector<128x128xf32>
    %2 = tpu.matmul %0, %1, %cst {dimension_numbers = #tpu.dot_dimension_numbers<[1], [0], [0], [1], [0, 0, 1, 1], [], []>} : vector<128x3456xf32>, vector<3456x128xf32>, vector<128x128xf32> -> vector<128x128xf32>
    %c0_3 = arith.constant 0 : index
    %c0_4 = arith.constant 0 : index
    %3 = vector.load %arg3[%c0_3, %c0_4] : memref<1x128xf32, #tpu.memory_space<vmem>>, vector<1x128xf32>
    %4 = vector.broadcast %3 : vector<1x128xf32> to vector<128x128xf32>
    %5 = arith.addf %2, %4 : vector<128x128xf32>
    %c0_5 = arith.constant 0 : index
    %c0_6 = arith.constant 0 : index
    %6 = vector.load %arg4[%c0_5, %c0_6] : memref<128x128xf32, #tpu.memory_space<vmem>>, vector<128x128xf32>
    tpu.vector_store %arg4[%c0_5, %c0_6], %5 {strides = array<i32>} : memref<128x128xf32, #tpu.memory_space<vmem>>, vector<128x128xf32>,
    return
  }
  func.func @transform_0(%arg0: i32) -> (i32, i32) {
    %c0_i32 = arith.constant 0 : i32
    %c0_i32_0 = arith.constant 0 : i32
    return %arg0, %c0_i32 : i32, i32
  }
  func.func @transform_1(%arg0: i32) -> (i32, i32) {
    %c0_i32 = arith.constant 0 : i32
    %c0_i32_0 = arith.constant 0 : i32
    %c0_i32_1 = arith.constant 0 : i32
    return %c0_i32, %c0_i32_0 : i32, i32
  }
  func.func @transform_2(%arg0: i32) -> (i32, i32) {
    %c0_i32 = arith.constant 0 : i32
    %c0_i32_0 = arith.constant 0 : i32
    %c0_i32_1 = arith.constant 0 : i32
    return %c0_i32, %c0_i32_0 : i32, i32
  }
  func.func @transform_3(%arg0: i32) -> (i32, i32) {
    %c0_i32 = arith.constant 0 : i32
    %c0_i32_0 = arith.constant 0 : i32
    return %arg0, %c0_i32 : i32, i32
  }
}

module attributes {stable_mosaic.version = 11 : i64} {
  func.func @_maxpool3_relu_kernel(%arg0: i32, %arg1: memref<1x6x6x6x128xf32, #tpu.memory_space<vmem>>, %arg2: memref<1x4x4x4x128xf32, #tpu.memory_space<vmem>>) attributes {dimension_semantics = [#tpu.dimension_semantics<parallel>], iteration_bounds = array<i64: 2>, scalar_prefetch = 0 : i64, scratch_operands = 0 : i64, tpu.core_type = #tpu.core_type<tc>, window_params = [{transform_indices = @transform_0, window_bounds = array<i64: 1, 6, 6, 6, 128>}, {transform_indices = @transform_1, window_bounds = array<i64: 1, 4, 4, 4, 128>}]} {
    %c0 = arith.constant 0 : index
    %c0_0 = arith.constant 0 : index
    %c0_1 = arith.constant 0 : index
    %c0_2 = arith.constant 0 : index
    %c0_3 = arith.constant 0 : index
    %0 = vector.load %arg1[%c0, %c0_0, %c0_1, %c0_2, %c0_3] : memref<1x6x6x6x128xf32, #tpu.memory_space<vmem>>, vector<1x6x6x6x128xf32>
    %1 = vector.shape_cast %0 : vector<1x6x6x6x128xf32> to vector<6x6x6x128xf32>
    %2 = vector.extract_strided_slice %1 {offsets = [0, 0, 0, 0], sizes = [6, 6, 4, 128], strides = [1, 1, 1, 1]} : vector<6x6x6x128xf32> to vector<6x6x4x128xf32>
    %3 = vector.extract_strided_slice %1 {offsets = [0, 0, 1, 0], sizes = [6, 6, 4, 128], strides = [1, 1, 1, 1]} : vector<6x6x6x128xf32> to vector<6x6x4x128xf32>
    %4 = arith.maximumf %2, %3 : vector<6x6x4x128xf32>
    %5 = vector.extract_strided_slice %1 {offsets = [0, 0, 2, 0], sizes = [6, 6, 4, 128], strides = [1, 1, 1, 1]} : vector<6x6x6x128xf32> to vector<6x6x4x128xf32>
    %6 = arith.maximumf %4, %5 : vector<6x6x4x128xf32>
    %7 = vector.extract_strided_slice %6 {offsets = [0, 0, 0, 0], sizes = [6, 4, 4, 128], strides = [1, 1, 1, 1]} : vector<6x6x4x128xf32> to vector<6x4x4x128xf32>
    %8 = vector.extract_strided_slice %6 {offsets = [0, 1, 0, 0], sizes = [6, 4, 4, 128], strides = [1, 1, 1, 1]} : vector<6x6x4x128xf32> to vector<6x4x4x128xf32>
    %9 = arith.maximumf %7, %8 : vector<6x4x4x128xf32>
    %10 = vector.extract_strided_slice %6 {offsets = [0, 2, 0, 0], sizes = [6, 4, 4, 128], strides = [1, 1, 1, 1]} : vector<6x6x4x128xf32> to vector<6x4x4x128xf32>
    %11 = arith.maximumf %9, %10 : vector<6x4x4x128xf32>
    %12 = vector.extract_strided_slice %11 {offsets = [0, 0, 0, 0], sizes = [4, 4, 4, 128], strides = [1, 1, 1, 1]} : vector<6x4x4x128xf32> to vector<4x4x4x128xf32>
    %13 = vector.extract_strided_slice %11 {offsets = [1, 0, 0, 0], sizes = [4, 4, 4, 128], strides = [1, 1, 1, 1]} : vector<6x4x4x128xf32> to vector<4x4x4x128xf32>
    %14 = arith.maximumf %12, %13 : vector<4x4x4x128xf32>
    %15 = vector.extract_strided_slice %11 {offsets = [2, 0, 0, 0], sizes = [4, 4, 4, 128], strides = [1, 1, 1, 1]} : vector<6x4x4x128xf32> to vector<4x4x4x128xf32>
    %16 = arith.maximumf %14, %15 : vector<4x4x4x128xf32>
    %cst = arith.constant 0.000000e+00 : f32
    %17 = vector.broadcast %cst : f32 to vector<4x4x4x128xf32>
    %18 = arith.maximumf %16, %17 : vector<4x4x4x128xf32>
    %c0_4 = arith.constant 0 : index
    %c0_5 = arith.constant 0 : index
    %c0_6 = arith.constant 0 : index
    %c0_7 = arith.constant 0 : index
    %c0_8 = arith.constant 0 : index
    %19 = vector.load %arg2[%c0_4, %c0_5, %c0_6, %c0_7, %c0_8] : memref<1x4x4x4x128xf32, #tpu.memory_space<vmem>>, vector<1x4x4x4x128xf32>
    %20 = vector.shape_cast %19 : vector<1x4x4x4x128xf32> to vector<4x4x4x128xf32>
    %21 = vector.shape_cast %18 : vector<4x4x4x128xf32> to vector<1x4x4x4x128xf32>
    tpu.vector_store %arg2[%c0_4, %c0_5, %c0_6, %c0_7, %c0_8], %21 {strides = array<i32>} : memref<1x4x4x4x128xf32, #tpu.memory_space<vmem>>, vector<1x4x4x4x128xf32>,
    return
  }
  func.func @transform_0(%arg0: i32) -> (i32, i32, i32, i32, i32) {
    %c0_i32 = arith.constant 0 : i32
    %c0_i32_0 = arith.constant 0 : i32
    %c0_i32_1 = arith.constant 0 : i32
    %c0_i32_2 = arith.constant 0 : i32
    %c0_i32_3 = arith.constant 0 : i32
    return %arg0, %c0_i32, %c0_i32_0, %c0_i32_1, %c0_i32_2 : i32, i32, i32, i32, i32
  }
  func.func @transform_1(%arg0: i32) -> (i32, i32, i32, i32, i32) {
    %c0_i32 = arith.constant 0 : i32
    %c0_i32_0 = arith.constant 0 : i32
    %c0_i32_1 = arith.constant 0 : i32
    %c0_i32_2 = arith.constant 0 : i32
    %c0_i32_3 = arith.constant 0 : i32
    return %arg0, %c0_i32, %c0_i32_0, %c0_i32_1, %c0_i32_2 : i32, i32, i32, i32, i32
  }
}

module attributes {stable_mosaic.version = 11 : i64} {
  func.func @_tab_mlp_kernel(%arg0: i32, %arg1: memref<2x1024xf32, #tpu.memory_space<vmem>>, %arg2: memref<1x1024x1024xf32, #tpu.memory_space<vmem>>, %arg3: memref<1x1x1024xf32, #tpu.memory_space<vmem>>, %arg4: memref<2x1024xf32, #tpu.memory_space<vmem>>, %arg5: memref<2x1024xf32, #tpu.memory_space<vmem>>) attributes {dimension_semantics = [#tpu.dimension_semantics<arbitrary>], iteration_bounds = array<i64: 4>, scalar_prefetch = 0 : i64, scratch_operands = 1 : i64, tpu.core_type = #tpu.core_type<tc>, window_params = [{pipeline_mode = #tpu.pipeline_mode<synchronous>, transform_indices = @transform_0, window_bounds = array<i64: 2, 1024>}, {transform_indices = @transform_1, window_bounds = array<i64: 1, 1024, 1024>}, {transform_indices = @transform_2, window_bounds = array<i64: 1, 1, 1024>}, {pipeline_mode = #tpu.pipeline_mode<synchronous>, transform_indices = @transform_3, window_bounds = array<i64: 2, 1024>}]} {
    %c0_i32 = arith.constant 0 : i32
    %0 = arith.cmpi eq, %arg0, %c0_i32 : i32
    %1 = arith.extui %0 : i1 to i32
    %c0_i32_0 = arith.constant 0 : i32
    %2 = arith.cmpi ne, %1, %c0_i32_0 : i32
    scf.if %2 {
      %c0_13 = arith.constant 0 : index
      %c0_14 = arith.constant 0 : index
      %15 = vector.load %arg1[%c0_13, %c0_14] : memref<2x1024xf32, #tpu.memory_space<vmem>>, vector<2x1024xf32>
      %c0_15 = arith.constant 0 : index
      %c0_16 = arith.constant 0 : index
      %16 = vector.load %arg5[%c0_15, %c0_16] : memref<2x1024xf32, #tpu.memory_space<vmem>>, vector<2x1024xf32>
      tpu.vector_store %arg5[%c0_15, %c0_16], %15 {strides = array<i32>} : memref<2x1024xf32, #tpu.memory_space<vmem>>, vector<2x1024xf32>,
    } else {
    }
    %c0 = arith.constant 0 : index
    %c0_1 = arith.constant 0 : index
    %3 = vector.load %arg5[%c0, %c0_1] : memref<2x1024xf32, #tpu.memory_space<vmem>>, vector<2x1024xf32>
    %c0_2 = arith.constant 0 : index
    %c0_3 = arith.constant 0 : index
    %c0_4 = arith.constant 0 : index
    %4 = vector.load %arg2[%c0_2, %c0_3, %c0_4] : memref<1x1024x1024xf32, #tpu.memory_space<vmem>>, vector<1x1024x1024xf32>
    %5 = vector.shape_cast %4 : vector<1x1024x1024xf32> to vector<1024x1024xf32>
    %cst = arith.constant dense<0.000000e+00> : vector<2x1024xf32>
    %6 = tpu.matmul %3, %5, %cst {dimension_numbers = #tpu.dot_dimension_numbers<[1], [0], [0], [1], [0, 0, 1, 1], [], []>} : vector<2x1024xf32>, vector<1024x1024xf32>, vector<2x1024xf32> -> vector<2x1024xf32>
    %c0_5 = arith.constant 0 : index
    %c0_6 = arith.constant 0 : index
    %c0_7 = arith.constant 0 : index
    %7 = vector.load %arg3[%c0_5, %c0_6, %c0_7] : memref<1x1x1024xf32, #tpu.memory_space<vmem>>, vector<1x1x1024xf32>
    %8 = vector.shape_cast %7 : vector<1x1x1024xf32> to vector<1x1024xf32>
    %9 = vector.broadcast %8 : vector<1x1024xf32> to vector<2x1024xf32>
    %10 = arith.addf %6, %9 : vector<2x1024xf32>
    %cst_8 = arith.constant 0.000000e+00 : f32
    %11 = vector.broadcast %cst_8 : f32 to vector<2x1024xf32>
    %12 = arith.maximumf %10, %11 : vector<2x1024xf32>
    %c0_9 = arith.constant 0 : index
    %c0_10 = arith.constant 0 : index
    %13 = vector.load %arg5[%c0_9, %c0_10] : memref<2x1024xf32, #tpu.memory_space<vmem>>, vector<2x1024xf32>
    tpu.vector_store %arg5[%c0_9, %c0_10], %12 {strides = array<i32>} : memref<2x1024xf32, #tpu.memory_space<vmem>>, vector<2x1024xf32>,
    %c0_11 = arith.constant 0 : index
    %c0_12 = arith.constant 0 : index
    %14 = vector.load %arg4[%c0_11, %c0_12] : memref<2x1024xf32, #tpu.memory_space<vmem>>, vector<2x1024xf32>
    tpu.vector_store %arg4[%c0_11, %c0_12], %12 {strides = array<i32>} : memref<2x1024xf32, #tpu.memory_space<vmem>>, vector<2x1024xf32>,
    return
  }
  func.func @transform_0(%arg0: i32) -> (i32, i32) {
    %c0_i32 = arith.constant 0 : i32
    %c0_i32_0 = arith.constant 0 : i32
    %c0_i32_1 = arith.constant 0 : i32
    return %c0_i32, %c0_i32_0 : i32, i32
  }
  func.func @transform_1(%arg0: i32) -> (i32, i32, i32) {
    %c0_i32 = arith.constant 0 : i32
    %c0_i32_0 = arith.constant 0 : i32
    %c0_i32_1 = arith.constant 0 : i32
    return %arg0, %c0_i32, %c0_i32_0 : i32, i32, i32
  }
  func.func @transform_2(%arg0: i32) -> (i32, i32, i32) {
    %c0_i32 = arith.constant 0 : i32
    %c0_i32_0 = arith.constant 0 : i32
    %c0_i32_1 = arith.constant 0 : i32
    return %arg0, %c0_i32, %c0_i32_0 : i32, i32, i32
  }
  func.func @transform_3(%arg0: i32) -> (i32, i32) {
    %c0_i32 = arith.constant 0 : i32
    %c0_i32_0 = arith.constant 0 : i32
    %c0_i32_1 = arith.constant 0 : i32
    return %c0_i32, %c0_i32_0 : i32, i32
  }
}

module attributes {stable_mosaic.version = 11 : i64} {
  func.func @_head_kernel(%arg0: memref<2x8x128xf32, #tpu.memory_space<vmem>>, %arg1: memref<128x128xf32, #tpu.memory_space<vmem>>, %arg2: memref<1x128xf32, #tpu.memory_space<vmem>>, %arg3: memref<2x1024xf32, #tpu.memory_space<vmem>>, %arg4: memref<128x128xf32, #tpu.memory_space<vmem>>, %arg5: memref<1024x128xf32, #tpu.memory_space<vmem>>, %arg6: memref<1x128xf32, #tpu.memory_space<vmem>>, %arg7: memref<2x128xf32, #tpu.memory_space<vmem>>) attributes {dimension_semantics = [], scalar_prefetch = 0 : i64, scratch_operands = 0 : i64, tpu.core_type = #tpu.core_type<tc>} {
    %c0 = arith.constant 0 : index
    %c0_0 = arith.constant 0 : index
    %c0_1 = arith.constant 0 : index
    %0 = vector.load %arg0[%c0, %c0_0, %c0_1] : memref<2x8x128xf32, #tpu.memory_space<vmem>>, vector<2x8x128xf32>
    %cst = arith.constant dense<0.000000e+00> : vector<2x128xf32>
    %1 = vector.multi_reduction <add>, %0, %cst [1] : vector<2x8x128xf32> to vector<2x128xf32>
    %cst_2 = arith.constant 1.250000e-01 : f32
    %2 = vector.broadcast %cst_2 : f32 to vector<2x128xf32>
    %3 = arith.mulf %1, %2 : vector<2x128xf32>
    %c0_3 = arith.constant 0 : index
    %c0_4 = arith.constant 0 : index
    %4 = vector.load %arg1[%c0_3, %c0_4] : memref<128x128xf32, #tpu.memory_space<vmem>>, vector<128x128xf32>
    %cst_5 = arith.constant dense<0.000000e+00> : vector<2x128xf32>
    %5 = tpu.matmul %3, %4, %cst_5 {dimension_numbers = #tpu.dot_dimension_numbers<[1], [0], [0], [1], [0, 0, 1, 1], [], []>} : vector<2x128xf32>, vector<128x128xf32>, vector<2x128xf32> -> vector<2x128xf32>
    %c0_6 = arith.constant 0 : index
    %c0_7 = arith.constant 0 : index
    %6 = vector.load %arg2[%c0_6, %c0_7] : memref<1x128xf32, #tpu.memory_space<vmem>>, vector<1x128xf32>
    %7 = vector.broadcast %6 : vector<1x128xf32> to vector<2x128xf32>
    %8 = arith.addf %5, %7 : vector<2x128xf32>
    %c0_8 = arith.constant 0 : index
    %c0_9 = arith.constant 0 : index
    %9 = vector.load %arg4[%c0_8, %c0_9] : memref<128x128xf32, #tpu.memory_space<vmem>>, vector<128x128xf32>
    %cst_10 = arith.constant dense<0.000000e+00> : vector<2x128xf32>
    %10 = tpu.matmul %8, %9, %cst_10 {dimension_numbers = #tpu.dot_dimension_numbers<[1], [0], [0], [1], [0, 0, 1, 1], [], []>} : vector<2x128xf32>, vector<128x128xf32>, vector<2x128xf32> -> vector<2x128xf32>
    %c0_11 = arith.constant 0 : index
    %c0_12 = arith.constant 0 : index
    %11 = vector.load %arg3[%c0_11, %c0_12] : memref<2x1024xf32, #tpu.memory_space<vmem>>, vector<2x1024xf32>
    %c0_13 = arith.constant 0 : index
    %c0_14 = arith.constant 0 : index
    %12 = vector.load %arg5[%c0_13, %c0_14] : memref<1024x128xf32, #tpu.memory_space<vmem>>, vector<1024x128xf32>
    %cst_15 = arith.constant dense<0.000000e+00> : vector<2x128xf32>
    %13 = tpu.matmul %11, %12, %cst_15 {dimension_numbers = #tpu.dot_dimension_numbers<[1], [0], [0], [1], [0, 0, 1, 1], [], []>} : vector<2x1024xf32>, vector<1024x128xf32>, vector<2x128xf32> -> vector<2x128xf32>
    %14 = arith.addf %10, %13 : vector<2x128xf32>
    %c0_16 = arith.constant 0 : index
    %c0_17 = arith.constant 0 : index
    %15 = vector.load %arg6[%c0_16, %c0_17] : memref<1x128xf32, #tpu.memory_space<vmem>>, vector<1x128xf32>
    %16 = vector.broadcast %15 : vector<1x128xf32> to vector<2x128xf32>
    %17 = arith.addf %14, %16 : vector<2x128xf32>
    %c0_18 = arith.constant 0 : index
    %c0_19 = arith.constant 0 : index
    %18 = vector.load %arg7[%c0_18, %c0_19] : memref<2x128xf32, #tpu.memory_space<vmem>>, vector<2x128xf32>
    tpu.vector_store %arg7[%c0_18, %c0_19], %17 {strides = array<i32>} : memref<2x128xf32, #tpu.memory_space<vmem>>, vector<2x128xf32>,
    return
  }
}

</mosaic_0001>

<llo_original>
// kernel: baseline_tab_forward.6
$region0: #{baseline_tab_forward.6}
  #allocation0 [shape = 'u32[]', space=smem, size = 0x4, offset = 0x4, fixed_abs, tag = 'smem constant byte address 0x4 - core index']
  #allocation1 [shape = 'u32[144,128]{1,0:T(1,128)}', space=vmem, size = 0x12000, scoped, tag = 'internal scratch']
  %s0 = inlined_call_operand.vmem [shape: f32[1024,32], index: 0, kind: input, shape index: {}]
  %s1 = inlined_call_operand.vmem [shape: f32[32,128], index: 1, kind: input, shape index: {}]
  %s2 = inlined_call_operand.vmem [shape: f32[1,128], index: 2, kind: input, shape index: {}]
  %s3 = inlined_call_operand.vmem [shape: f32[1024,128], index: 3, kind: output, shape index: {}]
  %s4 = sld [smem:[#allocation0]]
  $region45: #{baseline_tab_forward.6} parent=0
    _
  %s6 = ssub.s32 1, %s4
  %s7 = scalar_select 0, %s6, %s4
  loop: start=0, step=1, limit=4
  $region2: #{baseline_tab_forward.6} parent=0 // loop_pre_header
    _
  $region3: #{baseline_tab_forward.6} parent=0 // loop_header
    %s9 = sphi 0, %s13
    %p10 = scmp.ge.s32.totalorder %s9, 4
    %s19 = sphi 0, %s21
    %s22 = sphi 0, %s19
    %s23 = sphi 0, %s22
    %s39 = sphi 0, %s23
    %s43 = sphi 0, %s43
    %s45 = sphi 0, %s43
    %s46 = sphi 0, %s45
    %s60 = sphi 0, %s46
    %s64 = sphi 0, %s64
    %s66 = sphi 0, %s64
    %s67 = sphi 0, %s66
    %s81 = sphi 0, %s67
    %s87 = sphi 0, %s89
    %s90 = sphi 0, %s87
    %s91 = sphi 0, %s90
    %s107 = sphi 0, %s91
  $region4: #{baseline_tab_forward.6} parent=0 // loop_header_branch
    %12 = sbr.rel (%p10) target = $region8
  $region5: #{baseline_tab_forward.6} parent=0 // loop_body
    %s14 = ssub.s32 %s9, 1
    %s15 = ssub.s32 %s9, 2
    %s16 = sadd.s32 %s9, 1
    %s17 = ssub.s32 %s9, %s16
    %p18 = scmp.eq.s32.totalorder %s17, 0
    %s20 = sadd.s32 %s19, 1
    %s21 = scalar_select %p18, %s19, %s20
    %p24 = pneg %p18
    %p25 = scmp.eq.s32.totalorder %s9, 1
    %p26 = por %p24, %p25
    %p27 = scmp.ne.s32.totalorder %s19, %s22
    %p28 = scmp.eq.s32.totalorder %s9, 0
    %p29 = por %p27, %p28
    %p30 = scmp.ne.s32.totalorder %s19, %s22
    %p31 = scmp.eq.s32.totalorder %s14, 1
    %p32 = por %p30, %p31
    %p33 = scmp.ne.s32.totalorder %s22, %s23
    %p34 = scmp.eq.s32.totalorder %s14, 0
    %p35 = por %p33, %p34
    %p36 = scmp.ne.s32.totalorder %s22, %s23
    %p37 = scmp.eq.s32.totalorder %s15, 1
    %p38 = por %p36, %p37
    %p40 = scmp.ne.s32.totalorder %s23, %s39
    %p41 = scmp.eq.s32.totalorder %s15, 0
    %p42 = por %p40, %p41
    %s44 = sadd.s32 %s43, 1
    %p47 = scmp.eq.s32.totalorder %s9, 1
    %p48 = scmp.ne.s32.totalorder %s43, %s45
    %p49 = scmp.eq.s32.totalorder %s9, 0
    %p50 = por %p48, %p49
    %p51 = scmp.ne.s32.totalorder %s43, %s45
    %p52 = scmp.eq.s32.totalorder %s14, 1
    %p53 = por %p51, %p52
    %p54 = scmp.ne.s32.totalorder %s45, %s46
    %p55 = scmp.eq.s32.totalorder %s14, 0
    %p56 = por %p54, %p55
    %p57 = scmp.ne.s32.totalorder %s45, %s46
    %p58 = scmp.eq.s32.totalorder %s15, 1
    %p59 = por %p57, %p58
    %p61 = scmp.ne.s32.totalorder %s46, %s60
    %p62 = scmp.eq.s32.totalorder %s15, 0
    %p63 = por %p61, %p62
    %s65 = sadd.s32 %s64, 1
    %p68 = scmp.eq.s32.totalorder %s9, 1
    %p69 = scmp.ne.s32.totalorder %s64, %s66
    %p70 = scmp.eq.s32.totalorder %s9, 0
    %p71 = por %p69, %p70
    %p72 = scmp.ne.s32.totalorder %s64, %s66
    %p73 = scmp.eq.s32.totalorder %s14, 1
    %p74 = por %p72, %p73
    %p75 = scmp.ne.s32.totalorder %s66, %s67
    %p76 = scmp.eq.s32.totalorder %s14, 0
    %p77 = por %p75, %p76
    %p78 = scmp.ne.s32.totalorder %s66, %s67
    %p79 = scmp.eq.s32.totalorder %s15, 1
    %p80 = por %p78, %p79
    %p82 = scmp.ne.s32.totalorder %s67, %s81
    %p83 = scmp.eq.s32.totalorder %s15, 0
    %p84 = por %p82, %p83
    %s85 = ssub.s32 %s9, %s16
    %p86 = scmp.eq.s32.totalorder %s85, 0
    %s88 = sadd.s32 %s87, 1
    %s89 = scalar_select %p86, %s87, %s88
    %p92 = pneg %p86
    %p93 = scmp.eq.s32.totalorder %s9, 1
    %p94 = por %p92, %p93
    %p95 = scmp.ne.s32.totalorder %s87, %s90
    %p96 = scmp.eq.s32.totalorder %s9, 0
    %p97 = por %p95, %p96
    %p98 = scmp.ne.s32.totalorder %s87, %s90
    %p99 = scmp.eq.s32.totalorder %s14, 1
    %p100 = por %p98, %p99
    %p101 = scmp.ne.s32.totalorder %s90, %s91
    %p102 = scmp.eq.s32.totalorder %s14, 0
    %p103 = por %p101, %p102
    %p104 = scmp.ne.s32.totalorder %s90, %s91
    %p105 = scmp.eq.s32.totalorder %s15, 1
    %p106 = por %p104, %p105
    %p108 = scmp.ne.s32.totalorder %s91, %s107
    %p109 = scmp.eq.s32.totalorder %s15, 0
    %p110 = por %p108, %p109
    %p111 = scmp.le.s32.totalorder 1, %s9
    %p112 = scmp.lt.s32.totalorder %s9, 3
    %p113 = pnand %p111, %p112
    %p114 = pneg %p113
    // Predicated region
    $region9: #{baseline_tab_forward.6} parent=5 // pred_check
      _
    $region10: #{baseline_tab_forward.6} parent=5 // pred_check_branch
      %116 = sbr.rel (%p113) target = $region12
    $region11: #{baseline_tab_forward.6} parent=5 // pred_region
      %s117 = ssub.s32 %s9, 1
      // Predicated region
      $region13: #{baseline_tab_forward.6} parent=11 // pred_check
        %p118 = pneg %p56
      $region14: #{baseline_tab_forward.6} parent=11 // pred_check_branch
        %120 = sbr.rel (%p118) target = $region16
      $region15: #{baseline_tab_forward.6} parent=11 // pred_region
        _
      $region16: #{baseline_tab_forward.6} parent=11 // pred_fallthru
        _
      // Predicated region
      $region17: #{baseline_tab_forward.6} parent=11 // pred_check
        %p121 = pneg %p77
      $region18: #{baseline_tab_forward.6} parent=11 // pred_check_branch
        %123 = sbr.rel (%p121) target = $region20
      $region19: #{baseline_tab_forward.6} parent=11 // pred_region
        _
      $region20: #{baseline_tab_forward.6} parent=11 // pred_fallthru
        _
    $region12: #{baseline_tab_forward.6} parent=5 // pred_fallthru
      _
    %p124 = scmp.lt.s32.totalorder %s9, 2
    // Predicated region
    $region21: #{baseline_tab_forward.6} parent=5 // pred_check
      %p125 = pneg %p124
    $region22: #{baseline_tab_forward.6} parent=5 // pred_check_branch
      %127 = sbr.rel (%p125) target = $region24
    $region23: #{baseline_tab_forward.6} parent=5 // pred_region
      // Predicated region
      $region25: #{baseline_tab_forward.6} parent=23 // pred_check
        %p128 = pneg %p29
      $region26: #{baseline_tab_forward.6} parent=23 // pred_check_branch
        %130 = sbr.rel (%p128) target = $region28
      $region27: #{baseline_tab_forward.6} parent=23 // pred_region
        %s131 = smul.u32 64, %s9
        %p132 = scmp.lt.s32.totalorder %s131, 127
        %s133 = scalar_select %p132, %s131, 127
        %s134 = smul.addr %s133, 8
        %s135 = scalar_lea.vmem %s0, %s134
        %s136 = smul.u32 64, %s9
      $region28: #{baseline_tab_forward.6} parent=23 // pred_fallthru
        _
    $region24: #{baseline_tab_forward.6} parent=5 // pred_fallthru
      _
    %p137 = scmp.le.s32.totalorder 1, %s9
    %p138 = scmp.lt.s32.totalorder %s9, 3
    %p139 = pnand %p137, %p138
    %p140 = pneg %p139
    // Predicated region
    $region29: #{baseline_tab_forward.6} parent=5 // pred_check
      _
    $region30: #{baseline_tab_forward.6} parent=5 // pred_check_branch
      %142 = sbr.rel (%p139) target = $region32
    $region31: #{baseline_tab_forward.6} parent=5 // pred_region
      %s143 = ssub.s32 %s9, 1
      %s144 = smul.u32 64, %s14
      %p145 = scmp.lt.s32.totalorder %s144, 127
      %s146 = scalar_select %p145, %s144, 127
      %s147 = smul.addr %s146, 8
      %s148 = scalar_lea.vmem %s0, %s147
      %p149 = pneg %p35
      %p150 = pneg %p32
      %p151 = pneg %p56
      %p152 = pneg %p53
      %p153 = pneg %p77
      %p154 = pneg %p74
      %p155 = pneg %p103
      %p156 = pneg %p100
      %s157 = smul.u32 64, %s14
      %p158 = scmp.lt.s32.totalorder %s157, 127
      %s159 = scalar_select %p158, %s157, 127
      %s160 = smul.addr %s159, 8
      %s161 = scalar_lea.vmem %s3, %s160
      %s162 = smul.u32 64, %s14
      %p163 = scmp.lt.s32.totalorder %s162, 127
      %s164 = scalar_select %p163, %s162, 127
      %s165 = smul.addr %s164, 8
      %s166 = scalar_lea.vmem %s0, %s165
      %s167 = smul.u32 64, %s14
      %s168 = smul.u32 64, %s14
      %p169 = scmp.lt.s32.totalorder %s168, 127
      %s170 = scalar_select %p169, %s168, 127
      %s171 = smul.addr %s170, 8
      %s172 = scalar_lea.vmem %s3, %s171
      %s173 = smul.u32 64, %s14
      %v174 = vld [vmem:[%s166] sm:$0xff]
      %v175 = vld [vmem:[%s166 + $0x8] sm:$0xff]
      %v176 = vld [vmem:[%s166 + $0x10] sm:$0xff]
      %v177 = vld [vmem:[%s166 + $0x18] sm:$0xff]
      %v178 = vld [vmem:[%s166 + $0x20] sm:$0xff]
      %v179 = vld [vmem:[%s166 + $0x28] sm:$0xff]
      %v180 = vld [vmem:[%s166 + $0x30] sm:$0xff]
      %v181 = vld [vmem:[%s166 + $0x38] sm:$0xff]
      %v182 = vld [vmem:[%s166 + $0x40] sm:$0xff]
      %v183 = vld [vmem:[%s166 + $0x48] sm:$0xff]
      %v184 = vld [vmem:[%s166 + $0x50] sm:$0xff]
      %v185 = vld [vmem:[%s166 + $0x58] sm:$0xff]
      %v186 = vld [vmem:[%s166 + $0x60] sm:$0xff]
      %v187 = vld [vmem:[%s166 + $0x68] sm:$0xff]
      %v188 = vld [vmem:[%s166 + $0x70] sm:$0xff]
      %v189 = vld [vmem:[%s166 + $0x78] sm:$0xff]
      %v190 = vld [vmem:[%s166 + $0x80] sm:$0xff]
      %v191 = vld [vmem:[%s166 + $0x88] sm:$0xff]
      %v192 = vld [vmem:[%s166 + $0x90] sm:$0xff]
      %v193 = vld [vmem:[%s166 + $0x98] sm:$0xff]
      %v194 = vld [vmem:[%s166 + $0xa0] sm:$0xff]
      %v195 = vld [vmem:[%s166 + $0xa8] sm:$0xff]
      %v196 = vld [vmem:[%s166 + $0xb0] sm:$0xff]
      %v197 = vld [vmem:[%s166 + $0xb8] sm:$0xff]
      %v198 = vld [vmem:[%s166 + $0xc0] sm:$0xff]
      %v199 = vld [vmem:[%s166 + $0xc8] sm:$0xff]
      %v200 = vld [vmem:[%s166 + $0xd0] sm:$0xff]
      %v201 = vld [vmem:[%s166 + $0xd8] sm:$0xff]
      %v202 = vld [vmem:[%s166 + $0xe0] sm:$0xff]
      %v203 = vld [vmem:[%s166 + $0xe8] sm:$0xff]
      %v204 = vld [vmem:[%s166 + $0xf0] sm:$0xff]
      %v205 = vld [vmem:[%s166 + $0xf8] sm:$0xff]
      %v206 = vld [vmem:[%s166 + $0x100] sm:$0xff]
      %v207 = vld [vmem:[%s166 + $0x108] sm:$0xff]
      %v208 = vld [vmem:[%s166 + $0x110] sm:$0xff]
      %v209 = vld [vmem:[%s166 + $0x118] sm:$0xff]
      %v210 = vld [vmem:[%s166 + $0x120] sm:$0xff]
      %v211 = vld [vmem:[%s166 + $0x128] sm:$0xff]
      %v212 = vld [vmem:[%s166 + $0x130] sm:$0xff]
      %v213 = vld [vmem:[%s166 + $0x138] sm:$0xff]
      %v214 = vld [vmem:[%s166 + $0x140] sm:$0xff]
      %v215 = vld [vmem:[%s166 + $0x148] sm:$0xff]
      %v216 = vld [vmem:[%s166 + $0x150] sm:$0xff]
      %v217 = vld [vmem:[%s166 + $0x158] sm:$0xff]
      %v218 = vld [vmem:[%s166 + $0x160] sm:$0xff]
      %v219 = vld [vmem:[%s166 + $0x168] sm:$0xff]
      %v220 = vld [vmem:[%s166 + $0x170] sm:$0xff]
      %v221 = vld [vmem:[%s166 + $0x178] sm:$0xff]
      %v222 = vld [vmem:[%s166 + $0x180] sm:$0xff]
      %v223 = vld [vmem:[%s166 + $0x188] sm:$0xff]
      %v224 = vld [vmem:[%s166 + $0x190] sm:$0xff]
      %v225 = vld [vmem:[%s166 + $0x198] sm:$0xff]
      %v226 = vld [vmem:[%s166 + $0x1a0] sm:$0xff]
      %v227 = vld [vmem:[%s166 + $0x1a8] sm:$0xff]
      %v228 = vld [vmem:[%s166 + $0x1b0] sm:$0xff]
      %v229 = vld [vmem:[%s166 + $0x1b8] sm:$0xff]
      %v230 = vld [vmem:[%s166 + $0x1c0] sm:$0xff]
      %v231 = vld [vmem:[%s166 + $0x1c8] sm:$0xff]
      %v232 = vld [vmem:[%s166 + $0x1d0] sm:$0xff]
      %v233 = vld [vmem:[%s166 + $0x1d8] sm:$0xff]
      %v234 = vld [vmem:[%s166 + $0x1e0] sm:$0xff]
      %v235 = vld [vmem:[%s166 + $0x1e8] sm:$0xff]
      %v236 = vld [vmem:[%s166 + $0x1f0] sm:$0xff]
      %v237 = vld [vmem:[%s166 + $0x1f8] sm:$0xff]
      %v238 = vld [vmem:[%s1] sm:$0xff]
      %v239 = vld [vmem:[%s1 + $0x8] sm:$0xff]
      %v240 = vld [vmem:[%s1 + $0x10] sm:$0xff]
      %v241 = vld [vmem:[%s1 + $0x18] sm:$0xff]
      %v242 = vld [vmem:[%s2] sm:$0x1]
      %v244 = vlaneseq
      %v245 = vshrl.u32 %v244, 7
      %v246 = vsub.s32 0, %v245
      %v247 = vrot.slane %v242, %v246
      %vm249 = vcmask 261120
      %v251 = vsel %vm249, %v174, 0
      %v254 = vsel %vm249, %v175, 0
      %v257 = vsel %vm249, %v176, 0
      %v260 = vsel %vm249, %v177, 0
      %v263 = vsel %vm249, %v178, 0
      %v266 = vsel %vm249, %v179, 0
      %v269 = vsel %vm249, %v180, 0
      %v272 = vsel %vm249, %v181, 0
      %v275 = vsel %vm249, %v182, 0
      %v278 = vsel %vm249, %v183, 0
      %v281 = vsel %vm249, %v184, 0
      %v284 = vsel %vm249, %v185, 0
      %v287 = vsel %vm249, %v186, 0
      %v290 = vsel %vm249, %v187, 0
      %v293 = vsel %vm249, %v188, 0
      %v296 = vsel %vm249, %v189, 0
      %v299 = vsel %vm249, %v190, 0
      %v302 = vsel %vm249, %v191, 0
      %v305 = vsel %vm249, %v192, 0
      %v308 = vsel %vm249, %v193, 0
      %v311 = vsel %vm249, %v194, 0
      %v314 = vsel %vm249, %v195, 0
      %v317 = vsel %vm249, %v196, 0
      %v320 = vsel %vm249, %v197, 0
      %v323 = vsel %vm249, %v198, 0
      %v326 = vsel %vm249, %v199, 0
      %v329 = vsel %vm249, %v200, 0
      %v332 = vsel %vm249, %v201, 0
      %v335 = vsel %vm249, %v202, 0
      %v338 = vsel %vm249, %v203, 0
      %v341 = vsel %vm249, %v204, 0
      %v344 = vsel %vm249, %v205, 0
      %v347 = vsel %vm249, %v206, 0
      %v350 = vsel %vm249, %v207, 0
      %v353 = vsel %vm249, %v208, 0
      %v356 = vsel %vm249, %v209, 0
      %v359 = vsel %vm249, %v210, 0
      %v362 = vsel %vm249, %v211, 0
      %v365 = vsel %vm249, %v212, 0
      %v368 = vsel %vm249, %v213, 0
      %v371 = vsel %vm249, %v214, 0
      %v374 = vsel %vm249, %v215, 0
      %v377 = vsel %vm249, %v216, 0
      %v380 = vsel %vm249, %v217, 0
      %v383 = vsel %vm249, %v218, 0
      %v386 = vsel %vm249, %v219, 0
      %v389 = vsel %vm249, %v220, 0
      %v392 = vsel %vm249, %v221, 0
      %v395 = vsel %vm249, %v222, 0
      %v398 = vsel %vm249, %v223, 0
      %v401 = vsel %vm249, %v224, 0
      %v404 = vsel %vm249, %v225, 0
      %v407 = vsel %vm249, %v226, 0
      %v410 = vsel %vm249, %v227, 0
      %v413 = vsel %vm249, %v228, 0
      %v416 = vsel %vm249, %v229, 0
      %v419 = vsel %vm249, %v230, 0
      %v422 = vsel %vm249, %v231, 0
      %v425 = vsel %vm249, %v232, 0
      %v428 = vsel %vm249, %v233, 0
      %v431 = vsel %vm249, %v234, 0
      %v434 = vsel %vm249, %v235, 0
      %v437 = vsel %vm249, %v236, 0
      %v440 = vsel %vm249, %v237, 0
      %442 = vmatprep.subr.mxu0 0.0
      %443 = vmatpush1.msra.mxu0 %v238
      %444 = vmatprep.subr.mxu0 0.0
      %445 = vmatpush1.msra.mxu0 %v239
      %446 = vmatprep.subr.mxu0 0.0
      %447 = vmatpush1.msra.mxu0 %v240
      %448 = vmatprep.subr.mxu0 0.0
      %449 = vmatpush1.msra.mxu0 %v241
      %450 = vmatprep.subr.mxu0 0.0
      %451 = vmatpush1.msra.mxu0 0.0
      %452 = vmatprep.subr.mxu0 0.0
      %453 = vmatpush1.msra.mxu0 0.0
      %454 = vmatprep.subr.mxu0 0.0
      %455 = vmatpush1.msra.mxu0 0.0
      %456 = vmatprep.subr.mxu0 0.0
      %457 = vmatpush1.msra.mxu0 0.0
      %458 = vmatprep.subr.mxu0 0.0
      %459 = vmatpush1.msra.mxu0 0.0
      %460 = vmatprep.subr.mxu0 0.0
      %461 = vmatpush1.msra.mxu0 0.0
      %462 = vmatprep.subr.mxu0 0.0
      %463 = vmatpush1.msra.mxu0 0.0
      %464 = vmatprep.subr.mxu0 0.0
      %465 = vmatpush1.msra.mxu0 0.0
      %466 = vmatprep.subr.mxu0 0.0
      %467 = vmatpush1.msra.mxu0 0.0
      %468 = vmatprep.subr.mxu0 0.0
      %469 = vmatpush1.msra.mxu0 0.0
      %470 = vmatprep.subr.mxu0 0.0
      %471 = vmatpush1.msra.mxu0 0.0
      %472 = vmatprep.subr.mxu0 0.0
      %473 = vmatpush1.msra.mxu0 0.0
      %474 = vmatprep.subr.mxu0 0.0
      %475 = vmatpush1.msra.mxu0 0.0
      %476 = vmatprep.subr.mxu0 0.0
      %477 = vmatpush1.msra.mxu0 0.0
      %478 = vmatprep.subr.mxu0 0.0
      %479 = vmatpush1.msra.mxu0 0.0
      %480 = vmatprep.subr.mxu0 0.0
      %481 = vmatpush1.msra.mxu0 0.0
      %482 = vmatprep.subr.mxu0 0.0
      %483 = vmatpush1.msra.mxu0 0.0
      %484 = vmatprep.subr.mxu0 0.0
      %485 = vmatpush1.msra.mxu0 0.0
      %486 = vmatprep.subr.mxu0 0.0
      %487 = vmatpush1.msra.mxu0 0.0
      %488 = vmatprep.subr.mxu0 0.0
      %489 = vmatpush1.msra.mxu0 0.0
      %490 = vmatprep.subr.mxu0 0.0
      %491 = vmatpush1.msra.mxu0 0.0
      %492 = vmatprep.subr.mxu0 0.0
      %493 = vmatpush1.msra.mxu0 0.0
      %494 = vmatprep.subr.mxu0 0.0
      %495 = vmatpush1.msra.mxu0 0.0
      %496 = vmatprep.subr.mxu0 0.0
      %497 = vmatpush1.msra.mxu0 0.0
      %498 = vmatprep.subr.mxu0 0.0
      %499 = vmatpush1.msra.mxu0 0.0
      %500 = vmatprep.subr.mxu0 0.0
      %501 = vmatpush1.msra.mxu0 0.0
      %502 = vmatprep.subr.mxu0 0.0
      %503 = vmatpush1.msra.mxu0 0.0
      %504 = vmatprep.subr.mxu0 0.0
      %505 = vmatpush1.msra.mxu0 0.0
      %506 = vmatprep.mubr.f32.mxu0 0.0
      %507 = vmatmul.mubr.f32.gmra.mrb[0].mxu0 %v251
      %v508 = vpop.f32.mrb[0].mxu0
      %v509 = vadd.f32 %v247, %v508
      %v510 = vpop.f32.mrb[0].mxu0
      %511 = vmatprep.mubr.f32.mxu0 0.0
      %512 = vmatmul.mubr.f32.gmra.mrb[0].mxu0 %v254
      %v513 = vpop.f32.mrb[0].mxu0
      %v514 = vadd.f32 %v247, %v513
      %v515 = vpop.f32.mrb[0].mxu0
      %516 = vmatprep.mubr.f32.mxu0 0.0
      %517 = vmatmul.mubr.f32.gmra.mrb[0].mxu0 %v257
      %v518 = vpop.f32.mrb[0].mxu0
      %v519 = vadd.f32 %v247, %v518
      %v520 = vpop.f32.mrb[0].mxu0
      %521 = vmatprep.mubr.f32.mxu0 0.0
      %522 = vmatmul.mubr.f32.gmra.mrb[0].mxu0 %v260
      %v523 = vpop.f32.mrb[0].mxu0
      %v524 = vadd.f32 %v247, %v523
      %v525 = vpop.f32.mrb[0].mxu0
      %526 = vmatprep.mubr.f32.mxu0 0.0
      %527 = vmatmul.mubr.f32.gmra.mrb[0].mxu0 %v263
      %v528 = vpop.f32.mrb[0].mxu0
      %v529 = vadd.f32 %v247, %v528
      %v530 = vpop.f32.mrb[0].mxu0
      %531 = vmatprep.mubr.f32.mxu0 0.0
      %532 = vmatmul.mubr.f32.gmra.mrb[0].mxu0 %v266
      %v533 = vpop.f32.mrb[0].mxu0
      %v534 = vadd.f32 %v247, %v533
      %v535 = vpop.f32.mrb[0].mxu0
      %536 = vmatprep.mubr.f32.mxu0 0.0
      %537 = vmatmul.mubr.f32.gmra.mrb[0].mxu0 %v269
      %v538 = vpop.f32.mrb[0].mxu0
      %v539 = vadd.f32 %v247, %v538
      %v540 = vpop.f32.mrb[0].mxu0
      %541 = vmatprep.mubr.f32.mxu0 0.0
      %542 = vmatmul.mubr.f32.gmra.mrb[0].mxu0 %v272
      %v543 = vpop.f32.mrb[0].mxu0
      %v544 = vadd.f32 %v247, %v543
      %v545 = vpop.f32.mrb[0].mxu0
      %546 = vmatprep.mubr.f32.mxu0 0.0
      %547 = vmatmul.mubr.f32.gmra.mrb[0].mxu0 %v275
      %v548 = vpop.f32.mrb[0].mxu0
      %v549 = vadd.f32 %v247, %v548
      %v550 = vpop.f32.mrb[0].mxu0
      %551 = vmatprep.mubr.f32.mxu0 0.0
      %552 = vmatmul.mubr.f32.gmra.mrb[0].mxu0 %v278
      %v553 = vpop.f32.mrb[0].mxu0
      %v554 = vadd.f32 %v247, %v553
      %v555 = vpop.f32.mrb[0].mxu0
      %556 = vmatprep.mubr.f32.mxu0 0.0
      %557 = vmatmul.mubr.f32.gmra.mrb[0].mxu0 %v281
      %v558 = vpop.f32.mrb[0].mxu0
      %v559 = vadd.f32 %v247, %v558
      %v560 = vpop.f32.mrb[0].mxu0
      %561 = vmatprep.mubr.f32.mxu0 0.0
      %562 = vmatmul.mubr.f32.gmra.mrb[0].mxu0 %v284
      %v563 = vpop.f32.mrb[0].mxu0
      %v564 = vadd.f32 %v247, %v563
      %v565 = vpop.f32.mrb[0].mxu0
      %566 = vmatprep.mubr.f32.mxu0 0.0
      %567 = vmatmul.mubr.f32.gmra.mrb[0].mxu0 %v287
      %v568 = vpop.f32.mrb[0].mxu0
      %v569 = vadd.f32 %v247, %v568
      %v570 = vpop.f32.mrb[0].mxu0
      %571 = vmatprep.mubr.f32.mxu0 0.0
      %572 = vmatmul.mubr.f32.gmra.mrb[0].mxu0 %v290
      %v573 = vpop.f32.mrb[0].mxu0
      %v574 = vadd.f32 %v247, %v573
      %v575 = vpop.f32.mrb[0].mxu0
      %576 = vmatprep.mubr.f32.mxu0 0.0
      %577 = vmatmul.mubr.f32.gmra.mrb[0].mxu0 %v293
      %v578 = vpop.f32.mrb[0].mxu0
      %v579 = vadd.f32 %v247, %v578
      %v580 = vpop.f32.mrb[0].mxu0
      %581 = vmatprep.mubr.f32.mxu0 0.0
      %582 = vmatmul.mubr.f32.gmra.mrb[0].mxu0 %v296
      %v583 = vpop.f32.mrb[0].mxu0
      %v584 = vadd.f32 %v247, %v583
      %v585 = vpop.f32.mrb[0].mxu0
      %586 = vmatprep.mubr.f32.mxu0 0.0
      %587 = vmatmul.mubr.f32.gmra.mrb[0].mxu0 %v299
      %v588 = vpop.f32.mrb[0].mxu0
      %v589 = vadd.f32 %v247, %v588
      %v590 = vpop.f32.mrb[0].mxu0
      %591 = vmatprep.mubr.f32.mxu0 0.0
      %592 = vmatmul.mubr.f32.gmra.mrb[0].mxu0 %v302
      %v593 = vpop.f32.mrb[0].mxu0
      %v594 = vadd.f32 %v247, %v593
      %v595 = vpop.f32.mrb[0].mxu0
      %596 = vmatprep.mubr.f32.mxu0 0.0
      %597 = vmatmul.mubr.f32.gmra.mrb[0].mxu0 %v305
      %v598 = vpop.f32.mrb[0].mxu0
      %v599 = vadd.f32 %v247, %v598
      %v600 = vpop.f32.mrb[0].mxu0
      %601 = vmatprep.mubr.f32.mxu0 0.0
      %602 = vmatmul.mubr.f32.gmra.mrb[0].mxu0 %v308
      %v603 = vpop.f32.mrb[0].mxu0
      %v604 = vadd.f32 %v247, %v603
      %v605 = vpop.f32.mrb[0].mxu0
      %606 = vmatprep.mubr.f32.mxu0 0.0
      %607 = vmatmul.mubr.f32.gmra.mrb[0].mxu0 %v311
      %v608 = vpop.f32.mrb[0].mxu0
      %v609 = vadd.f32 %v247, %v608
      %v610 = vpop.f32.mrb[0].mxu0
      %611 = vmatprep.mubr.f32.mxu0 0.0
      %612 = vmatmul.mubr.f32.gmra.mrb[0].mxu0 %v314
      %v613 = vpop.f32.mrb[0].mxu0
      %v614 = vadd.f32 %v247, %v613
      %v615 = vpop.f32.mrb[0].mxu0
      %616 = vmatprep.mubr.f32.mxu0 0.0
      %617 = vmatmul.mubr.f32.gmra.mrb[0].mxu0 %v317
      %v618 = vpop.f32.mrb[0].mxu0
      %v619 = vadd.f32 %v247, %v618
      %v620 = vpop.f32.mrb[0].mxu0
      %621 = vmatprep.mubr.f32.mxu0 0.0
      %622 = vmatmul.mubr.f32.gmra.mrb[0].mxu0 %v320
      %v623 = vpop.f32.mrb[0].mxu0
      %v624 = vadd.f32 %v247, %v623
      %v625 = vpop.f32.mrb[0].mxu0
      %626 = vmatprep.mubr.f32.mxu0 0.0
      %627 = vmatmul.mubr.f32.gmra.mrb[0].mxu0 %v323
      %v628 = vpop.f32.mrb[0].mxu0
      %v629 = vadd.f32 %v247, %v628
      %v630 = vpop.f32.mrb[0].mxu0
      %631 = vmatprep.mubr.f32.mxu0 0.0
      %632 = vmatmul.mubr.f32.gmra.mrb[0].mxu0 %v326
      %v633 = vpop.f32.mrb[0].mxu0
      %v634 = vadd.f32 %v247, %v633
      %v635 = vpop.f32.mrb[0].mxu0
      %636 = vmatprep.mubr.f32.mxu0 0.0
      %637 = vmatmul.mubr.f32.gmra.mrb[0].mxu0 %v329
      %v638 = vpop.f32.mrb[0].mxu0
      %v639 = vadd.f32 %v247, %v638
      %v640 = vpop.f32.mrb[0].mxu0
      %641 = vmatprep.mubr.f32.mxu0 0.0
      %642 = vmatmul.mubr.f32.gmra.mrb[0].mxu0 %v332
      %v643 = vpop.f32.mrb[0].mxu0
      %v644 = vadd.f32 %v247, %v643
      %v645 = vpop.f32.mrb[0].mxu0
      %646 = vmatprep.mubr.f32.mxu0 0.0
      %647 = vmatmul.mubr.f32.gmra.mrb[0].mxu0 %v335
      %v648 = vpop.f32.mrb[0].mxu0
      %v649 = vadd.f32 %v247, %v648
      %v650 = vpop.f32.mrb[0].mxu0
      %651 = vmatprep.mubr.f32.mxu0 0.0
      %652 = vmatmul.mubr.f32.gmra.mrb[0].mxu0 %v338
      %v653 = vpop.f32.mrb[0].mxu0
      %v654 = vadd.f32 %v247, %v653
      %v655 = vpop.f32.mrb[0].mxu0
      %656 = vmatprep.mubr.f32.mxu0 0.0
      %657 = vmatmul.mubr.f32.gmra.mrb[0].mxu0 %v341
      %v658 = vpop.f32.mrb[0].mxu0
      %v659 = vadd.f32 %v247, %v658
      %v660 = vpop.f32.mrb[0].mxu0
      %661 = vmatprep.mubr.f32.mxu0 0.0
      %662 = vmatmul.mubr.f32.gmra.mrb[0].mxu0 %v344
      %v663 = vpop.f32.mrb[0].mxu0
      %v664 = vadd.f32 %v247, %v663
      %v665 = vpop.f32.mrb[0].mxu0
      %666 = vmatprep.mubr.f32.mxu0 0.0
      %667 = vmatmul.mubr.f32.gmra.mrb[0].mxu0 %v347
      %v668 = vpop.f32.mrb[0].mxu0
      %v669 = vadd.f32 %v247, %v668
      %v670 = vpop.f32.mrb[0].mxu0
      %671 = vmatprep.mubr.f32.mxu0 0.0
      %672 = vmatmul.mubr.f32.gmra.mrb[0].mxu0 %v350
      %v673 = vpop.f32.mrb[0].mxu0
      %v674 = vadd.f32 %v247, %v673
      %v675 = vpop.f32.mrb[0].mxu0
      %676 = vmatprep.mubr.f32.mxu0 0.0
      %677 = vmatmul.mubr.f32.gmra.mrb[0].mxu0 %v353
      %v678 = vpop.f32.mrb[0].mxu0
      %v679 = vadd.f32 %v247, %v678
      %v680 = vpop.f32.mrb[0].mxu0
      %681 = vmatprep.mubr.f32.mxu0 0.0
      %682 = vmatmul.mubr.f32.gmra.mrb[0].mxu0 %v356
      %v683 = vpop.f32.mrb[0].mxu0
      %v684 = vadd.f32 %v247, %v683
      %v685 = vpop.f32.mrb[0].mxu0
      %686 = vmatprep.mubr.f32.mxu0 0.0
      %687 = vmatmul.mubr.f32.gmra.mrb[0].mxu0 %v359
      %v688 = vpop.f32.mrb[0].mxu0
      %v689 = vadd.f32 %v247, %v688
      %v690 = vpop.f32.mrb[0].mxu0
      %691 = vmatprep.mubr.f32.mxu0 0.0
      %692 = vmatmul.mubr.f32.gmra.mrb[0].mxu0 %v362
      %v693 = vpop.f32.mrb[0].mxu0
      %v694 = vadd.f32 %v247, %v693
      %v695 = vpop.f32.mrb[0].mxu0
      %696 = vmatprep.mubr.f32.mxu0 0.0
      %697 = vmatmul.mubr.f32.gmra.mrb[0].mxu0 %v365
      %v698 = vpop.f32.mrb[0].mxu0
      %v699 = vadd.f32 %v247, %v698
      %v700 = vpop.f32.mrb[0].mxu0
      %701 = vmatprep.mubr.f32.mxu0 0.0
      %702 = vmatmul.mubr.f32.gmra.mrb[0].mxu0 %v368
      %v703 = vpop.f32.mrb[0].mxu0
      %v704 = vadd.f32 %v247, %v703
      %v705 = vpop.f32.mrb[0].mxu0
      %706 = vmatprep.mubr.f32.mxu0 0.0
      %707 = vmatmul.mubr.f32.gmra.mrb[0].mxu0 %v371
      %v708 = vpop.f32.mrb[0].mxu0
      %v709 = vadd.f32 %v247, %v708
      %v710 = vpop.f32.mrb[0].mxu0
      %711 = vmatprep.mubr.f32.mxu0 0.0
      %712 = vmatmul.mubr.f32.gmra.mrb[0].mxu0 %v374
      %v713 = vpop.f32.mrb[0].mxu0
      %v714 = vadd.f32 %v247, %v713
      %v715 = vpop.f32.mrb[0].mxu0
      %716 = vmatprep.mubr.f32.mxu0 0.0
      %717 = vmatmul.mubr.f32.gmra.mrb[0].mxu0 %v377
      %v718 = vpop.f32.mrb[0].mxu0
      %v719 = vadd.f32 %v247, %v718
      %v720 = vpop.f32.mrb[0].mxu0
      %721 = vmatprep.mubr.f32.mxu0 0.0
      %722 = vmatmul.mubr.f32.gmra.mrb[0].mxu0 %v380
      %v723 = vpop.f32.mrb[0].mxu0
      %v724 = vadd.f32 %v247, %v723
      %v725 = vpop.f32.mrb[0].mxu0
      %726 = vmatprep.mubr.f32.mxu0 0.0
      %727 = vmatmul.mubr.f32.gmra.mrb[0].mxu0 %v383
      %v728 = vpop.f32.mrb[0].mxu0
      %v729 = vadd.f32 %v247, %v728
      %v730 = vpop.f32.mrb[0].mxu0
      %731 = vmatprep.mubr.f32.mxu0 0.0
      %732 = vmatmul.mubr.f32.gmra.mrb[0].mxu0 %v386
      %v733 = vpop.f32.mrb[0].mxu0
      %v734 = vadd.f32 %v247, %v733
      %v735 = vpop.f32.mrb[0].mxu0
      %736 = vmatprep.mubr.f32.mxu0 0.0
      %737 = vmatmul.mubr.f32.gmra.mrb[0].mxu0 %v389
      %v738 = vpop.f32.mrb[0].mxu0
      %v739 = vadd.f32 %v247, %v738
      %v740 = vpop.f32.mrb[0].mxu0
      %741 = vmatprep.mubr.f32.mxu0 0.0
      %742 = vmatmul.mubr.f32.gmra.mrb[0].mxu0 %v392
      %v743 = vpop.f32.mrb[0].mxu0
      %v744 = vadd.f32 %v247, %v743
      %v745 = vpop.f32.mrb[0].mxu0
      %746 = vmatprep.mubr.f32.mxu0 0.0
      %747 = vmatmul.mubr.f32.gmra.mrb[0].mxu0 %v395
      %v748 = vpop.f32.mrb[0].mxu0
      %v749 = vadd.f32 %v247, %v748
      %v750 = vpop.f32.mrb[0].mxu0
      %751 = vmatprep.mubr.f32.mxu0 0.0
      %752 = vmatmul.mubr.f32.gmra.mrb[0].mxu0 %v398
      %v753 = vpop.f32.mrb[0].mxu0
      %v754 = vadd.f32 %v247, %v753
      %v755 = vpop.f32.mrb[0].mxu0
      %756 = vmatprep.mubr.f32.mxu0 0.0
      %757 = vmatmul.mubr.f32.gmra.mrb[0].mxu0 %v401
      %v758 = vpop.f32.mrb[0].mxu0
      %v759 = vadd.f32 %v247, %v758
      %v760 = vpop.f32.mrb[0].mxu0
      %761 = vmatprep.mubr.f32.mxu0 0.0
      %762 = vmatmul.mubr.f32.gmra.mrb[0].mxu0 %v404
      %v763 = vpop.f32.mrb[0].mxu0
      %v764 = vadd.f32 %v247, %v763
      %v765 = vpop.f32.mrb[0].mxu0
      %766 = vmatprep.mubr.f32.mxu0 0.0
      %767 = vmatmul.mubr.f32.gmra.mrb[0].mxu0 %v407
      %v768 = vpop.f32.mrb[0].mxu0
      %v769 = vadd.f32 %v247, %v768
      %v770 = vpop.f32.mrb[0].mxu0
      %771 = vmatprep.mubr.f32.mxu0 0.0
      %772 = vmatmul.mubr.f32.gmra.mrb[0].mxu0 %v410
      %v773 = vpop.f32.mrb[0].mxu0
      %v774 = vadd.f32 %v247, %v773
      %v775 = vpop.f32.mrb[0].mxu0
      %776 = vmatprep.mubr.f32.mxu0 0.0
      %777 = vmatmul.mubr.f32.gmra.mrb[0].mxu0 %v413
      %v778 = vpop.f32.mrb[0].mxu0
      %v779 = vadd.f32 %v247, %v778
      %v780 = vpop.f32.mrb[0].mxu0
      %781 = vmatprep.mubr.f32.mxu0 0.0
      %782 = vmatmul.mubr.f32.gmra.mrb[0].mxu0 %v416
      %v783 = vpop.f32.mrb[0].mxu0
      %v784 = vadd.f32 %v247, %v783
      %v785 = vpop.f32.mrb[0].mxu0
      %786 = vmatprep.mubr.f32.mxu0 0.0
      %787 = vmatmul.mubr.f32.gmra.mrb[0].mxu0 %v419
      %v788 = vpop.f32.mrb[0].mxu0
      %v789 = vadd.f32 %v247, %v788
      %v790 = vpop.f32.mrb[0].mxu0
      %791 = vmatprep.mubr.f32.mxu0 0.0
      %792 = vmatmul.mubr.f32.gmra.mrb[0].mxu0 %v422
      %v793 = vpop.f32.mrb[0].mxu0
      %v794 = vadd.f32 %v247, %v793
      %v795 = vpop.f32.mrb[0].mxu0
      %796 = vmatprep.mubr.f32.mxu0 0.0
      %797 = vmatmul.mubr.f32.gmra.mrb[0].mxu0 %v425
      %v798 = vpop.f32.mrb[0].mxu0
      %v799 = vadd.f32 %v247, %v798
      %v800 = vpop.f32.mrb[0].mxu0
      %801 = vmatprep.mubr.f32.mxu0 0.0
      %802 = vmatmul.mubr.f32.gmra.mrb[0].mxu0 %v428
      %v803 = vpop.f32.mrb[0].mxu0
      %v804 = vadd.f32 %v247, %v803
      %v805 = vpop.f32.mrb[0].mxu0
      %806 = vmatprep.mubr.f32.mxu0 0.0
      %807 = vmatmul.mubr.f32.gmra.mrb[0].mxu0 %v431
      %v808 = vpop.f32.mrb[0].mxu0
      %v809 = vadd.f32 %v247, %v808
      %v810 = vpop.f32.mrb[0].mxu0
      %811 = vmatprep.mubr.f32.mxu0 0.0
      %812 = vmatmul.mubr.f32.gmra.mrb[0].mxu0 %v434
      %v813 = vpop.f32.mrb[0].mxu0
      %v814 = vadd.f32 %v247, %v813
      %v815 = vpop.f32.mrb[0].mxu0
      %816 = vmatprep.mubr.f32.mxu0 0.0
      %817 = vmatmul.mubr.f32.gmra.mrb[0].mxu0 %v437
      %v818 = vpop.f32.mrb[0].mxu0
      %v819 = vadd.f32 %v247, %v818
      %v820 = vpop.f32.mrb[0].mxu0
      %821 = vmatprep.mubr.f32.mxu0 0.0
      %822 = vmatmul.mubr.f32.gmra.mrb[0].mxu0 %v440
      %v823 = vpop.f32.mrb[0].mxu0
      %v824 = vadd.f32 %v247, %v823
      %v825 = vpop.f32.mrb[0].mxu0
      %826 = vdwg.mxu0
      %827 = vst [vmem:[%s172] sm:$0xff] %v509
      %828 = vst [vmem:[%s172 + $0x8] sm:$0xff] %v514
      %829 = vst [vmem:[%s172 + $0x10] sm:$0xff] %v519
      %830 = vst [vmem:[%s172 + $0x18] sm:$0xff] %v524
      %831 = vst [vmem:[%s172 + $0x20] sm:$0xff] %v529
      %832 = vst [vmem:[%s172 + $0x28] sm:$0xff] %v534
      %833 = vst [vmem:[%s172 + $0x30] sm:$0xff] %v539
      %834 = vst [vmem:[%s172 + $0x38] sm:$0xff] %v544
      %835 = vst [vmem:[%s172 + $0x40] sm:$0xff] %v549
      %836 = vst [vmem:[%s172 + $0x48] sm:$0xff] %v554
      %837 = vst [vmem:[%s172 + $0x50] sm:$0xff] %v559
      %838 = vst [vmem:[%s172 + $0x58] sm:$0xff] %v564
      %839 = vst [vmem:[%s172 + $0x60] sm:$0xff] %v569
      %840 = vst [vmem:[%s172 + $0x68] sm:$0xff] %v574
      %841 = vst [vmem:[%s172 + $0x70] sm:$0xff] %v579
      %842 = vst [vmem:[%s172 + $0x78] sm:$0xff] %v584
      %843 = vst [vmem:[%s172 + $0x80] sm:$0xff] %v589
      %844 = vst [vmem:[%s172 + $0x88] sm:$0xff] %v594
      %845 = vst [vmem:[%s172 + $0x90] sm:$0xff] %v599
      %846 = vst [vmem:[%s172 + $0x98] sm:$0xff] %v604
      %847 = vst [vmem:[%s172 + $0xa0] sm:$0xff] %v609
      %848 = vst [vmem:[%s172 + $0xa8] sm:$0xff] %v614
      %849 = vst [vmem:[%s172 + $0xb0] sm:$0xff] %v619
      %850 = vst [vmem:[%s172 + $0xb8] sm:$0xff] %v624
      %851 = vst [vmem:[%s172 + $0xc0] sm:$0xff] %v629
      %852 = vst [vmem:[%s172 + $0xc8] sm:$0xff] %v634
      %853 = vst [vmem:[%s172 + $0xd0] sm:$0xff] %v639
      %854 = vst [vmem:[%s172 + $0xd8] sm:$0xff] %v644
      %855 = vst [vmem:[%s172 + $0xe0] sm:$0xff] %v649
      %856 = vst [vmem:[%s172 + $0xe8] sm:$0xff] %v654
      %857 = vst [vmem:[%s172 + $0xf0] sm:$0xff] %v659
      %858 = vst [vmem:[%s172 + $0xf8] sm:$0xff] %v664
      %859 = vst [vmem:[%s172 + $0x100] sm:$0xff] %v669
      %860 = vst [vmem:[%s172 + $0x108] sm:$0xff] %v674
      %861 = vst [vmem:[%s172 + $0x110] sm:$0xff] %v679
      %862 = vst [vmem:[%s172 + $0x118] sm:$0xff] %v684
      %863 = vst [vmem:[%s172 + $0x120] sm:$0xff] %v689
      %864 = vst [vmem:[%s172 + $0x128] sm:$0xff] %v694
      %865 = vst [vmem:[%s172 + $0x130] sm:$0xff] %v699
      %866 = vst [vmem:[%s172 + $0x138] sm:$0xff] %v704
      %867 = vst [vmem:[%s172 + $0x140] sm:$0xff] %v709
      %868 = vst [vmem:[%s172 + $0x148] sm:$0xff] %v714
      %869 = vst [vmem:[%s172 + $0x150] sm:$0xff] %v719
      %870 = vst [vmem:[%s172 + $0x158] sm:$0xff] %v724
      %871 = vst [vmem:[%s172 + $0x160] sm:$0xff] %v729
      %872 = vst [vmem:[%s172 + $0x168] sm:$0xff] %v734
      %873 = vst [vmem:[%s172 + $0x170] sm:$0xff] %v739
      %874 = vst [vmem:[%s172 + $0x178] sm:$0xff] %v744
      %875 = vst [vmem:[%s172 + $0x180] sm:$0xff] %v749
      %876 = vst [vmem:[%s172 + $0x188] sm:$0xff] %v754
      %877 = vst [vmem:[%s172 + $0x190] sm:$0xff] %v759
      %878 = vst [vmem:[%s172 + $0x198] sm:$0xff] %v764
      %879 = vst [vmem:[%s172 + $0x1a0] sm:$0xff] %v769
      %880 = vst [vmem:[%s172 + $0x1a8] sm:$0xff] %v774
      %881 = vst [vmem:[%s172 + $0x1b0] sm:$0xff] %v779
      %882 = vst [vmem:[%s172 + $0x1b8] sm:$0xff] %v784
      %883 = vst [vmem:[%s172 + $0x1c0] sm:$0xff] %v789
      %884 = vst [vmem:[%s172 + $0x1c8] sm:$0xff] %v794
      %885 = vst [vmem:[%s172 + $0x1d0] sm:$0xff] %v799
      %886 = vst [vmem:[%s172 + $0x1d8] sm:$0xff] %v804
      %887 = vst [vmem:[%s172 + $0x1e0] sm:$0xff] %v809
      %888 = vst [vmem:[%s172 + $0x1e8] sm:$0xff] %v814
      %889 = vst [vmem:[%s172 + $0x1f0] sm:$0xff] %v819
      %890 = vst [vmem:[%s172 + $0x1f8] sm:$0xff] %v824
      %s891 = smul.u32 64, %s14
      %p892 = scmp.lt.s32.totalorder %s891, 127
      %s893 = scalar_select %p892, %s891, 127
      %s894 = smul.addr %s893, 8
      %s895 = scalar_lea.vmem %s3, %s894
      // Predicated region
      $region33: #{baseline_tab_forward.6} parent=31 // pred_check
        %p896 = pneg %p100
      $region34: #{baseline_tab_forward.6} parent=31 // pred_check_branch
        %898 = sbr.rel (%p896) target = $region36
      $region35: #{baseline_tab_forward.6} parent=31 // pred_region
        %s899 = smul.u32 64, %s14
      $region36: #{baseline_tab_forward.6} parent=31 // pred_fallthru
        _
    $region32: #{baseline_tab_forward.6} parent=5 // pred_fallthru
      _
    %p900 = scmp.le.s32.totalorder 2, %s9
    // Predicated region
    $region37: #{baseline_tab_forward.6} parent=5 // pred_check
      %p901 = pneg %p900
    $region38: #{baseline_tab_forward.6} parent=5 // pred_check_branch
      %903 = sbr.rel (%p901) target = $region40
    $region39: #{baseline_tab_forward.6} parent=5 // pred_region
      %s904 = ssub.s32 %s9, 2
      // Predicated region
      $region41: #{baseline_tab_forward.6} parent=39 // pred_check
        %p905 = pneg %p106
      $region42: #{baseline_tab_forward.6} parent=39 // pred_check_branch
        %907 = sbr.rel (%p905) target = $region44
      $region43: #{baseline_tab_forward.6} parent=39 // pred_region
        %s908 = smul.u32 64, %s15
        %p909 = scmp.lt.s32.totalorder %s908, 127
        %s910 = scalar_select %p909, %s908, 127
        %s911 = smul.addr %s910, 8
        %s912 = scalar_lea.vmem %s3, %s911
      $region44: #{baseline_tab_forward.6} parent=39 // pred_fallthru
        _
    $region40: #{baseline_tab_forward.6} parent=5 // pred_fallthru
      _
  $region6: #{baseline_tab_forward.6} parent=0 // loop_footer
    %s13 = sadd.s32 1, %s9
  $region7: #{baseline_tab_forward.6} parent=0 // loop_footer_branch
    %8 = sbr.rel target = $region3
  $region8: #{baseline_tab_forward.6} parent=0 // loop_exit
    _

// kernel: baseline_tab_forward.7
$region0: #{baseline_tab_forward.7}
  #allocation0 [shape = 'u32[]', space=smem, size = 0x4, offset = 0x4, fixed_abs, tag = 'smem constant byte address 0x4 - core index']
  #allocation1 [shape = 'u32[144,128]{1,0:T(1,128)}', space=vmem, size = 0x12000, scoped, tag = 'internal scratch']
  %s0 = inlined_call_operand.vmem [shape: f32[2,10,10,10,128], index: 0, kind: input, shape index: {}]
  %s1 = inlined_call_operand.vmem [shape: f32[2,8,8,8,128], index: 1, kind: output, shape index: {}]
  %s2 = sld [smem:[#allocation0]]
  $region37: #{baseline_tab_forward.7} parent=0
    _
  %s4 = ssub.s32 1, %s2
  %s5 = scalar_select 0, %s4, %s2
  loop: start=0, step=1, limit=4
  $region2: #{baseline_tab_forward.7} parent=0 // loop_pre_header
    _
  $region3: #{baseline_tab_forward.7} parent=0 // loop_header
    %s7 = sphi 0, %s11
    %p8 = scmp.ge.s32.totalorder %s7, 4
    %s17 = sphi 0, %s19
    %s20 = sphi 0, %s17
    %s21 = sphi 0, %s20
    %s37 = sphi 0, %s21
    %s43 = sphi 0, %s45
    %s46 = sphi 0, %s43
    %s47 = sphi 0, %s46
    %s63 = sphi 0, %s47
  $region4: #{baseline_tab_forward.7} parent=0 // loop_header_branch
    %10 = sbr.rel (%p8) target = $region8
  $region5: #{baseline_tab_forward.7} parent=0 // loop_body
    %s12 = ssub.s32 %s7, 1
    %s13 = ssub.s32 %s7, 2
    %s14 = sadd.s32 %s7, 1
    %s15 = ssub.s32 %s7, %s14
    %p16 = scmp.eq.s32.totalorder %s15, 0
    %s18 = sadd.s32 %s17, 1
    %s19 = scalar_select %p16, %s17, %s18
    %p22 = pneg %p16
    %p23 = scmp.eq.s32.totalorder %s7, 1
    %p24 = por %p22, %p23
    %p25 = scmp.ne.s32.totalorder %s17, %s20
    %p26 = scmp.eq.s32.totalorder %s7, 0
    %p27 = por %p25, %p26
    %p28 = scmp.ne.s32.totalorder %s17, %s20
    %p29 = scmp.eq.s32.totalorder %s12, 1
    %p30 = por %p28, %p29
    %p31 = scmp.ne.s32.totalorder %s20, %s21
    %p32 = scmp.eq.s32.totalorder %s12, 0
    %p33 = por %p31, %p32
    %p34 = scmp.ne.s32.totalorder %s20, %s21
    %p35 = scmp.eq.s32.totalorder %s13, 1
    %p36 = por %p34, %p35
    %p38 = scmp.ne.s32.totalorder %s21, %s37
    %p39 = scmp.eq.s32.totalorder %s13, 0
    %p40 = por %p38, %p39
    %s41 = ssub.s32 %s7, %s14
    %p42 = scmp.eq.s32.totalorder %s41, 0
    %s44 = sadd.s32 %s43, 1
    %s45 = scalar_select %p42, %s43, %s44
    %p48 = pneg %p42
    %p49 = scmp.eq.s32.totalorder %s7, 1
    %p50 = por %p48, %p49
    %p51 = scmp.ne.s32.totalorder %s43, %s46
    %p52 = scmp.eq.s32.totalorder %s7, 0
    %p53 = por %p51, %p52
    %p54 = scmp.ne.s32.totalorder %s43, %s46
    %p55 = scmp.eq.s32.totalorder %s12, 1
    %p56 = por %p54, %p55
    %p57 = scmp.ne.s32.totalorder %s46, %s47
    %p58 = scmp.eq.s32.totalorder %s12, 0
    %p59 = por %p57, %p58
    %p60 = scmp.ne.s32.totalorder %s46, %s47
    %p61 = scmp.eq.s32.totalorder %s13, 1
    %p62 = por %p60, %p61
    %p64 = scmp.ne.s32.totalorder %s47, %s63
    %p65 = scmp.eq.s32.totalorder %s13, 0
    %p66 = por %p64, %p65
    %p67 = scmp.le.s32.totalorder 1, %s7
    %p68 = scmp.lt.s32.totalorder %s7, 3
    %p69 = pnand %p67, %p68
    %p70 = pneg %p69
    // Predicated region
    $region9: #{baseline_tab_forward.7} parent=5 // pred_check
      _
    $region10: #{baseline_tab_forward.7} parent=5 // pred_check_branch
      %72 = sbr.rel (%p69) target = $region12
    $region11: #{baseline_tab_forward.7} parent=5 // pred_region
      %s73 = ssub.s32 %s7, 1
    $region12: #{baseline_tab_forward.7} parent=5 // pred_fallthru
      _
    %p74 = scmp.lt.s32.totalorder %s7, 2
    // Predicated region
    $region13: #{baseline_tab_forward.7} parent=5 // pred_check
      %p75 = pneg %p74
    $region14: #{baseline_tab_forward.7} parent=5 // pred_check_branch
      %77 = sbr.rel (%p75) target = $region16
    $region15: #{baseline_tab_forward.7} parent=5 // pred_region
      // Predicated region
      $region17: #{baseline_tab_forward.7} parent=15 // pred_check
        %p78 = pneg %p27
      $region18: #{baseline_tab_forward.7} parent=15 // pred_check_branch
        %80 = sbr.rel (%p78) target = $region20
      $region19: #{baseline_tab_forward.7} parent=15 // pred_region
        %p81 = scmp.lt.s32.totalorder %s7, 1
        %s82 = scalar_select %p81, %s7, 1
        %s83 = smul.addr %s82, 200
        %s84 = smul.addr %s83, 8
        %s85 = scalar_lea.vmem %s0, %s84
      $region20: #{baseline_tab_forward.7} parent=15 // pred_fallthru
        _
    $region16: #{baseline_tab_forward.7} parent=5 // pred_fallthru
      _
    %p86 = scmp.le.s32.totalorder 1, %s7
    %p87 = scmp.lt.s32.totalorder %s7, 3
    %p88 = pnand %p86, %p87
    %p89 = pneg %p88
    // Predicated region
    $region21: #{baseline_tab_forward.7} parent=5 // pred_check
      _
    $region22: #{baseline_tab_forward.7} parent=5 // pred_check_branch
      %91 = sbr.rel (%p88) target = $region24
    $region23: #{baseline_tab_forward.7} parent=5 // pred_region
      %s92 = ssub.s32 %s7, 1
      %p93 = scmp.lt.s32.totalorder %s12, 1
      %s94 = scalar_select %p93, %s12, 1
      %s95 = smul.addr %s94, 200
      %s96 = smul.addr %s95, 8
      %s97 = scalar_lea.vmem %s0, %s96
      %p98 = pneg %p33
      %p99 = pneg %p30
      %p100 = pneg %p59
      %p101 = pneg %p56
      %p102 = scmp.lt.s32.totalorder %s12, 1
      %s103 = scalar_select %p102, %s12, 1
      %s104 = smul.addr %s103, 64
      %s105 = smul.addr %s104, 8
      %s106 = scalar_lea.vmem %s1, %s105
      %p107 = scmp.lt.s32.totalorder %s12, 1
      %s108 = scalar_select %p107, %s12, 1
      %s109 = smul.addr %s108, 200
      %s110 = smul.addr %s109, 8
      %s111 = scalar_lea.vmem %s0, %s110
      %p112 = scmp.lt.s32.totalorder %s12, 1
      %s113 = scalar_select %p112, %s12, 1
      %s114 = smul.addr %s113, 64
      %s115 = smul.addr %s114, 8
      %s116 = scalar_lea.vmem %s1, %s115
      %v117 = vld [vmem:[%s111] sm:$0xff]
      %v118 = vld [vmem:[%s111 + $0x8] sm:$0x3]
      %v119 = vld [vmem:[%s111 + $0x10] sm:$0xff]
      %v120 = vld [vmem:[%s111 + $0x18] sm:$0x3]
      %v121 = vld [vmem:[%s111 + $0x20] sm:$0xff]
      %v122 = vld [vmem:[%s111 + $0x28] sm:$0x3]
      %v123 = vld [vmem:[%s111 + $0x30] sm:$0xff]
      %v124 = vld [vmem:[%s111 + $0x38] sm:$0x3]
      %v125 = vld [vmem:[%s111 + $0x40] sm:$0xff]
      %v126 = vld [vmem:[%s111 + $0x48] sm:$0x3]
      %v127 = vld [vmem:[%s111 + $0x50] sm:$0xff]
      %v128 = vld [vmem:[%s111 + $0x58] sm:$0x3]
      %v129 = vld [vmem:[%s111 + $0x60] sm:$0xff]
      %v130 = vld [vmem:[%s111 + $0x68] sm:$0x3]
      %v131 = vld [vmem:[%s111 + $0x70] sm:$0xff]
      %v132 = vld [vmem:[%s111 + $0x78] sm:$0x3]
      %v133 = vld [vmem:[%s111 + $0x80] sm:$0xff]
      %v134 = vld [vmem:[%s111 + $0x88] sm:$0x3]
      %v135 = vld [vmem:[%s111 + $0x90] sm:$0xff]
      %v136 = vld [vmem:[%s111 + $0x98] sm:$0x3]
      %v137 = vld [vmem:[%s111 + $0xa0] sm:$0xff]
      %v138 = vld [vmem:[%s111 + $0xa8] sm:$0x3]
      %v139 = vld [vmem:[%s111 + $0xb0] sm:$0xff]
      %v140 = vld [vmem:[%s111 + $0xb8] sm:$0x3]
      %v141 = vld [vmem:[%s111 + $0xc0] sm:$0xff]
      %v142 = vld [vmem:[%s111 + $0xc8] sm:$0x3]
      %v143 = vld [vmem:[%s111 + $0xd0] sm:$0xff]
      %v144 = vld [vmem:[%s111 + $0xd8] sm:$0x3]
      %v145 = vld [vmem:[%s111 + $0xe0] sm:$0xff]
      %v146 = vld [vmem:[%s111 + $0xe8] sm:$0x3]
      %v147 = vld [vmem:[%s111 + $0xf0] sm:$0xff]
      %v148 = vld [vmem:[%s111 + $0xf8] sm:$0x3]
      %v149 = vld [vmem:[%s111 + $0x100] sm:$0xff]
      %v150 = vld [vmem:[%s111 + $0x108] sm:$0x3]
      %v151 = vld [vmem:[%s111 + $0x110] sm:$0xff]
      %v152 = vld [vmem:[%s111 + $0x118] sm:$0x3]
      %v153 = vld [vmem:[%s111 + $0x120] sm:$0xff]
      %v154 = vld [vmem:[%s111 + $0x128] sm:$0x3]
      %v155 = vld [vmem:[%s111 + $0x130] sm:$0xff]
      %v156 = vld [vmem:[%s111 + $0x138] sm:$0x3]
      %v157 = vld [vmem:[%s111 + $0x140] sm:$0xff]
      %v158 = vld [vmem:[%s111 + $0x148] sm:$0x3]
      %v159 = vld [vmem:[%s111 + $0x150] sm:$0xff]
      %v160 = vld [vmem:[%s111 + $0x158] sm:$0x3]
      %v161 = vld [vmem:[%s111 + $0x160] sm:$0xff]
      %v162 = vld [vmem:[%s111 + $0x168] sm:$0x3]
      %v163 = vld [vmem:[%s111 + $0x170] sm:$0xff]
      %v164 = vld [vmem:[%s111 + $0x178] sm:$0x3]
      %v165 = vld [vmem:[%s111 + $0x180] sm:$0xff]
      %v166 = vld [vmem:[%s111 + $0x188] sm:$0x3]
      %v167 = vld [vmem:[%s111 + $0x190] sm:$0xff]
      %v168 = vld [vmem:[%s111 + $0x198] sm:$0x3]
      %v169 = vld [vmem:[%s111 + $0x1a0] sm:$0xff]
      %v170 = vld [vmem:[%s111 + $0x1a8] sm:$0x3]
      %v171 = vld [vmem:[%s111 + $0x1b0] sm:$0xff]
      %v172 = vld [vmem:[%s111 + $0x1b8] sm:$0x3]
      %v173 = vld [vmem:[%s111 + $0x1c0] sm:$0xff]
      %v174 = vld [vmem:[%s111 + $0x1c8] sm:$0x3]
      %v175 = vld [vmem:[%s111 + $0x1d0] sm:$0xff]
      %v176 = vld [vmem:[%s111 + $0x1d8] sm:$0x3]
      %v177 = vld [vmem:[%s111 + $0x1e0] sm:$0xff]
      %v178 = vld [vmem:[%s111 + $0x1e8] sm:$0x3]
      %v179 = vld [vmem:[%s111 + $0x1f0] sm:$0xff]
      %v180 = vld [vmem:[%s111 + $0x1f8] sm:$0x3]
      %v181 = vld [vmem:[%s111 + $0x200] sm:$0xff]
      %v182 = vld [vmem:[%s111 + $0x208] sm:$0x3]
      %v183 = vld [vmem:[%s111 + $0x210] sm:$0xff]
      %v184 = vld [vmem:[%s111 + $0x218] sm:$0x3]
      %v185 = vld [vmem:[%s111 + $0x220] sm:$0xff]
      %v186 = vld [vmem:[%s111 + $0x228] sm:$0x3]
      %v187 = vld [vmem:[%s111 + $0x230] sm:$0xff]
      %v188 = vld [vmem:[%s111 + $0x238] sm:$0x3]
      %v189 = vld [vmem:[%s111 + $0x240] sm:$0xff]
      %v190 = vld [vmem:[%s111 + $0x248] sm:$0x3]
      %v191 = vld [vmem:[%s111 + $0x250] sm:$0xff]
      %v192 = vld [vmem:[%s111 + $0x258] sm:$0x3]
      %v193 = vld [vmem:[%s111 + $0x260] sm:$0xff]
      %v194 = vld [vmem:[%s111 + $0x268] sm:$0x3]
      %v195 = vld [vmem:[%s111 + $0x270] sm:$0xff]
      %v196 = vld [vmem:[%s111 + $0x278] sm:$0x3]
      %v197 = vld [vmem:[%s111 + $0x280] sm:$0xff]
      %v198 = vld [vmem:[%s111 + $0x288] sm:$0x3]
      %v199 = vld [vmem:[%s111 + $0x290] sm:$0xff]
      %v200 = vld [vmem:[%s111 + $0x298] sm:$0x3]
      %v201 = vld [vmem:[%s111 + $0x2a0] sm:$0xff]
      %v202 = vld [vmem:[%s111 + $0x2a8] sm:$0x3]
      %v203 = vld [vmem:[%s111 + $0x2b0] sm:$0xff]
      %v204 = vld [vmem:[%s111 + $0x2b8] sm:$0x3]
      %v205 = vld [vmem:[%s111 + $0x2c0] sm:$0xff]
      %v206 = vld [vmem:[%s111 + $0x2c8] sm:$0x3]
      %v207 = vld [vmem:[%s111 + $0x2d0] sm:$0xff]
      %v208 = vld [vmem:[%s111 + $0x2d8] sm:$0x3]
      %v209 = vld [vmem:[%s111 + $0x2e0] sm:$0xff]
      %v210 = vld [vmem:[%s111 + $0x2e8] sm:$0x3]
      %v211 = vld [vmem:[%s111 + $0x2f0] sm:$0xff]
      %v212 = vld [vmem:[%s111 + $0x2f8] sm:$0x3]
      %v213 = vld [vmem:[%s111 + $0x300] sm:$0xff]
      %v214 = vld [vmem:[%s111 + $0x308] sm:$0x3]
      %v215 = vld [vmem:[%s111 + $0x310] sm:$0xff]
      %v216 = vld [vmem:[%s111 + $0x318] sm:$0x3]
      %v217 = vld [vmem:[%s111 + $0x320] sm:$0xff]
      %v218 = vld [vmem:[%s111 + $0x328] sm:$0x3]
      %v219 = vld [vmem:[%s111 + $0x330] sm:$0xff]
      %v220 = vld [vmem:[%s111 + $0x338] sm:$0x3]
      %v221 = vld [vmem:[%s111 + $0x340] sm:$0xff]
      %v222 = vld [vmem:[%s111 + $0x348] sm:$0x3]
      %v223 = vld [vmem:[%s111 + $0x350] sm:$0xff]
      %v224 = vld [vmem:[%s111 + $0x358] sm:$0x3]
      %v225 = vld [vmem:[%s111 + $0x360] sm:$0xff]
      %v226 = vld [vmem:[%s111 + $0x368] sm:$0x3]
      %v227 = vld [vmem:[%s111 + $0x370] sm:$0xff]
      %v228 = vld [vmem:[%s111 + $0x378] sm:$0x3]
      %v229 = vld [vmem:[%s111 + $0x380] sm:$0xff]
      %v230 = vld [vmem:[%s111 + $0x388] sm:$0x3]
      %v231 = vld [vmem:[%s111 + $0x390] sm:$0xff]
      %v232 = vld [vmem:[%s111 + $0x398] sm:$0x3]
      %v233 = vld [vmem:[%s111 + $0x3a0] sm:$0xff]
      %v234 = vld [vmem:[%s111 + $0x3a8] sm:$0x3]
      %v235 = vld [vmem:[%s111 + $0x3b0] sm:$0xff]
      %v236 = vld [vmem:[%s111 + $0x3b8] sm:$0x3]
      %v237 = vld [vmem:[%s111 + $0x3c0] sm:$0xff]
      %v238 = vld [vmem:[%s111 + $0x3c8] sm:$0x3]
      %v239 = vld [vmem:[%s111 + $0x3d0] sm:$0xff]
      %v240 = vld [vmem:[%s111 + $0x3d8] sm:$0x3]
      %v241 = vld [vmem:[%s111 + $0x3e0] sm:$0xff]
      %v242 = vld [vmem:[%s111 + $0x3e8] sm:$0x3]
      %v243 = vld [vmem:[%s111 + $0x3f0] sm:$0xff]
      %v244 = vld [vmem:[%s111 + $0x3f8] sm:$0x3]
      %v245 = vld [vmem:[%s111 + $0x400] sm:$0xff]
      %v246 = vld [vmem:[%s111 + $0x408] sm:$0x3]
      %v247 = vld [vmem:[%s111 + $0x410] sm:$0xff]
      %v248 = vld [vmem:[%s111 + $0x418] sm:$0x3]
      %v249 = vld [vmem:[%s111 + $0x420] sm:$0xff]
      %v250 = vld [vmem:[%s111 + $0x428] sm:$0x3]
      %v251 = vld [vmem:[%s111 + $0x430] sm:$0xff]
      %v252 = vld [vmem:[%s111 + $0x438] sm:$0x3]
      %v253 = vld [vmem:[%s111 + $0x440] sm:$0xff]
      %v254 = vld [vmem:[%s111 + $0x448] sm:$0x3]
      %v255 = vld [vmem:[%s111 + $0x450] sm:$0xff]
      %v256 = vld [vmem:[%s111 + $0x458] sm:$0x3]
      %v257 = vld [vmem:[%s111 + $0x460] sm:$0xff]
      %v258 = vld [vmem:[%s111 + $0x468] sm:$0x3]
      %v259 = vld [vmem:[%s111 + $0x470] sm:$0xff]
      %v260 = vld [vmem:[%s111 + $0x478] sm:$0x3]
      %v261 = vld [vmem:[%s111 + $0x480] sm:$0xff]
      %v262 = vld [vmem:[%s111 + $0x488] sm:$0x3]
      %v263 = vld [vmem:[%s111 + $0x490] sm:$0xff]
      %v264 = vld [vmem:[%s111 + $0x498] sm:$0x3]
      %v265 = vld [vmem:[%s111 + $0x4a0] sm:$0xff]
      %v266 = vld [vmem:[%s111 + $0x4a8] sm:$0x3]
      %v267 = vld [vmem:[%s111 + $0x4b0] sm:$0xff]
      %v268 = vld [vmem:[%s111 + $0x4b8] sm:$0x3]
      %v269 = vld [vmem:[%s111 + $0x4c0] sm:$0xff]
      %v270 = vld [vmem:[%s111 + $0x4c8] sm:$0x3]
      %v271 = vld [vmem:[%s111 + $0x4d0] sm:$0xff]
      %v272 = vld [vmem:[%s111 + $0x4d8] sm:$0x3]
      %v273 = vld [vmem:[%s111 + $0x4e0] sm:$0xff]
      %v274 = vld [vmem:[%s111 + $0x4e8] sm:$0x3]
      %v275 = vld [vmem:[%s111 + $0x4f0] sm:$0xff]
      %v276 = vld [vmem:[%s111 + $0x4f8] sm:$0x3]
      %v277 = vld [vmem:[%s111 + $0x500] sm:$0xff]
      %v278 = vld [vmem:[%s111 + $0x508] sm:$0x3]
      %v279 = vld [vmem:[%s111 + $0x510] sm:$0xff]
      %v280 = vld [vmem:[%s111 + $0x518] sm:$0x3]
      %v281 = vld [vmem:[%s111 + $0x520] sm:$0xff]
      %v282 = vld [vmem:[%s111 + $0x528] sm:$0x3]
      %v283 = vld [vmem:[%s111 + $0x530] sm:$0xff]
      %v284 = vld [vmem:[%s111 + $0x538] sm:$0x3]
      %v285 = vld [vmem:[%s111 + $0x540] sm:$0xff]
      %v286 = vld [vmem:[%s111 + $0x548] sm:$0x3]
      %v287 = vld [vmem:[%s111 + $0x550] sm:$0xff]
      %v288 = vld [vmem:[%s111 + $0x558] sm:$0x3]
      %v289 = vld [vmem:[%s111 + $0x560] sm:$0xff]
      %v290 = vld [vmem:[%s111 + $0x568] sm:$0x3]
      %v291 = vld [vmem:[%s111 + $0x570] sm:$0xff]
      %v292 = vld [vmem:[%s111 + $0x578] sm:$0x3]
      %v293 = vld [vmem:[%s111 + $0x580] sm:$0xff]
      %v294 = vld [vmem:[%s111 + $0x588] sm:$0x3]
      %v295 = vld [vmem:[%s111 + $0x590] sm:$0xff]
      %v296 = vld [vmem:[%s111 + $0x598] sm:$0x3]
      %v297 = vld [vmem:[%s111 + $0x5a0] sm:$0xff]
      %v298 = vld [vmem:[%s111 + $0x5a8] sm:$0x3]
      %v299 = vld [vmem:[%s111 + $0x5b0] sm:$0xff]
      %v300 = vld [vmem:[%s111 + $0x5b8] sm:$0x3]
      %v301 = vld [vmem:[%s111 + $0x5c0] sm:$0xff]
      %v302 = vld [vmem:[%s111 + $0x5c8] sm:$0x3]
      %v303 = vld [vmem:[%s111 + $0x5d0] sm:$0xff]
      %v304 = vld [vmem:[%s111 + $0x5d8] sm:$0x3]
      %v305 = vld [vmem:[%s111 + $0x5e0] sm:$0xff]
      %v306 = vld [vmem:[%s111 + $0x5e8] sm:$0x3]
      %v307 = vld [vmem:[%s111 + $0x5f0] sm:$0xff]
      %v308 = vld [vmem:[%s111 + $0x5f8] sm:$0x3]
      %v309 = vld [vmem:[%s111 + $0x600] sm:$0xff]
      %v310 = vld [vmem:[%s111 + $0x608] sm:$0x3]
      %v311 = vld [vmem:[%s111 + $0x610] sm:$0xff]
      %v312 = vld [vmem:[%s111 + $0x618] sm:$0x3]
      %v313 = vld [vmem:[%s111 + $0x620] sm:$0xff]
      %v314 = vld [vmem:[%s111 + $0x628] sm:$0x3]
      %v315 = vld [vmem:[%s111 + $0x630] sm:$0xff]
      %v316 = vld [vmem:[%s111 + $0x638] sm:$0x3]
      %vm517 = vcmask 1046528
      %v518 = vrot.slane %v117, 1
      %v519 = vrot.slane %v118, 1
      %v520 = vsel %vm517, %v518, %v519
      %v521 = vrot.slane %v119, 1
      %v522 = vrot.slane %v120, 1
      %v523 = vsel %vm517, %v521, %v522
      %v524 = vrot.slane %v121, 1
      %v525 = vrot.slane %v122, 1
      %v526 = vsel %vm517, %v524, %v525
      %v527 = vrot.slane %v123, 1
      %v528 = vrot.slane %v124, 1
      %v529 = vsel %vm517, %v527, %v528
      %v530 = vrot.slane %v125, 1
      %v531 = vrot.slane %v126, 1
      %v532 = vsel %vm517, %v530, %v531
      %v533 = vrot.slane %v127, 1
      %v534 = vrot.slane %v128, 1
      %v535 = vsel %vm517, %v533, %v534
      %v536 = vrot.slane %v129, 1
      %v537 = vrot.slane %v130, 1
      %v538 = vsel %vm517, %v536, %v537
      %v539 = vrot.slane %v131, 1
      %v540 = vrot.slane %v132, 1
      %v541 = vsel %vm517, %v539, %v540
      %v542 = vrot.slane %v133, 1
      %v543 = vrot.slane %v134, 1
      %v544 = vsel %vm517, %v542, %v543
      %v545 = vrot.slane %v135, 1
      %v546 = vrot.slane %v136, 1
      %v547 = vsel %vm517, %v545, %v546
      %v548 = vrot.slane %v137, 1
      %v549 = vrot.slane %v138, 1
      %v550 = vsel %vm517, %v548, %v549
      %v551 = vrot.slane %v139, 1
      %v552 = vrot.slane %v140, 1
      %v553 = vsel %vm517, %v551, %v552
      %v554 = vrot.slane %v141, 1
      %v555 = vrot.slane %v142, 1
      %v556 = vsel %vm517, %v554, %v555
      %v557 = vrot.slane %v143, 1
      %v558 = vrot.slane %v144, 1
      %v559 = vsel %vm517, %v557, %v558
      %v560 = vrot.slane %v145, 1
      %v561 = vrot.slane %v146, 1
      %v562 = vsel %vm517, %v560, %v561
      %v563 = vrot.slane %v147, 1
      %v564 = vrot.slane %v148, 1
      %v565 = vsel %vm517, %v563, %v564
      %v566 = vrot.slane %v149, 1
      %v567 = vrot.slane %v150, 1
      %v568 = vsel %vm517, %v566, %v567
      %v569 = vrot.slane %v151, 1
      %v570 = vrot.slane %v152, 1
      %v571 = vsel %vm517, %v569, %v570
      %v572 = vrot.slane %v153, 1
      %v573 = vrot.slane %v154, 1
      %v574 = vsel %vm517, %v572, %v573
      %v575 = vrot.slane %v155, 1
      %v576 = vrot.slane %v156, 1
      %v577 = vsel %vm517, %v575, %v576
      %v578 = vrot.slane %v157, 1
      %v579 = vrot.slane %v158, 1
      %v580 = vsel %vm517, %v578, %v579
      %v581 = vrot.slane %v159, 1
      %v582 = vrot.slane %v160, 1
      %v583 = vsel %vm517, %v581, %v582
      %v584 = vrot.slane %v161, 1
      %v585 = vrot.slane %v162, 1
      %v586 = vsel %vm517, %v584, %v585
      %v587 = vrot.slane %v163, 1
      %v588 = vrot.slane %v164, 1
      %v589 = vsel %vm517, %v587, %v588
      %v590 = vrot.slane %v165, 1
      %v591 = vrot.slane %v166, 1
      %v592 = vsel %vm517, %v590, %v591
      %v593 = vrot.slane %v167, 1
      %v594 = vrot.slane %v168, 1
      %v595 = vsel %vm517, %v593, %v594
      %v596 = vrot.slane %v169, 1
      %v597 = vrot.slane %v170, 1
      %v598 = vsel %vm517, %v596, %v597
      %v599 = vrot.slane %v171, 1
      %v600 = vrot.slane %v172, 1
      %v601 = vsel %vm517, %v599, %v600
      %v602 = vrot.slane %v173, 1
      %v603 = vrot.slane %v174, 1
      %v604 = vsel %vm517, %v602, %v603
      %v605 = vrot.slane %v175, 1
      %v606 = vrot.slane %v176, 1
      %v607 = vsel %vm517, %v605, %v606
      %v608 = vrot.slane %v177, 1
      %v609 = vrot.slane %v178, 1
      %v610 = vsel %vm517, %v608, %v609
      %v611 = vrot.slane %v179, 1
      %v612 = vrot.slane %v180, 1
      %v613 = vsel %vm517, %v611, %v612
      %v614 = vrot.slane %v181, 1
      %v615 = vrot.slane %v182, 1
      %v616 = vsel %vm517, %v614, %v615
      %v617 = vrot.slane %v183, 1
      %v618 = vrot.slane %v184, 1
      %v619 = vsel %vm517, %v617, %v618
      %v620 = vrot.slane %v185, 1
      %v621 = vrot.slane %v186, 1
      %v622 = vsel %vm517, %v620, %v621
      %v623 = vrot.slane %v187, 1
      %v624 = vrot.slane %v188, 1
      %v625 = vsel %vm517, %v623, %v624
      %v626 = vrot.slane %v189, 1
      %v627 = vrot.slane %v190, 1
      %v628 = vsel %vm517, %v626, %v627
      %v629 = vrot.slane %v191, 1
      %v630 = vrot.slane %v192, 1
      %v631 = vsel %vm517, %v629, %v630
      %v632 = vrot.slane %v193, 1
      %v633 = vrot.slane %v194, 1
      %v634 = vsel %vm517, %v632, %v633
      %v635 = vrot.slane %v195, 1
      %v636 = vrot.slane %v196, 1
      %v637 = vsel %vm517, %v635, %v636
      %v638 = vrot.slane %v197, 1
      %v639 = vrot.slane %v198, 1
      %v640 = vsel %vm517, %v638, %v639
      %v641 = vrot.slane %v199, 1
      %v642 = vrot.slane %v200, 1
      %v643 = vsel %vm517, %v641, %v642
      %v644 = vrot.slane %v201, 1
      %v645 = vrot.slane %v202, 1
      %v646 = vsel %vm517, %v644, %v645
      %v647 = vrot.slane %v203, 1
      %v648 = vrot.slane %v204, 1
      %v649 = vsel %vm517, %v647, %v648
      %v650 = vrot.slane %v205, 1
      %v651 = vrot.slane %v206, 1
      %v652 = vsel %vm517, %v650, %v651
      %v653 = vrot.slane %v207, 1
      %v654 = vrot.slane %v208, 1
      %v655 = vsel %vm517, %v653, %v654
      %v656 = vrot.slane %v209, 1
      %v657 = vrot.slane %v210, 1
      %v658 = vsel %vm517, %v656, %v657
      %v659 = vrot.slane %v211, 1
      %v660 = vrot.slane %v212, 1
      %v661 = vsel %vm517, %v659, %v660
      %v662 = vrot.slane %v213, 1
      %v663 = vrot.slane %v214, 1
      %v664 = vsel %vm517, %v662, %v663
      %v665 = vrot.slane %v215, 1
      %v666 = vrot.slane %v216, 1
      %v667 = vsel %vm517, %v665, %v666
      %v668 = vrot.slane %v217, 1
      %v669 = vrot.slane %v218, 1
      %v670 = vsel %vm517, %v668, %v669
      %v671 = vrot.slane %v219, 1
      %v672 = vrot.slane %v220, 1
      %v673 = vsel %vm517, %v671, %v672
      %v674 = vrot.slane %v221, 1
      %v675 = vrot.slane %v222, 1
      %v676 = vsel %vm517, %v674, %v675
      %v677 = vrot.slane %v223, 1
      %v678 = vrot.slane %v224, 1
      %v679 = vsel %vm517, %v677, %v678
      %v680 = vrot.slane %v225, 1
      %v681 = vrot.slane %v226, 1
      %v682 = vsel %vm517, %v680, %v681
      %v683 = vrot.slane %v227, 1
      %v684 = vrot.slane %v228, 1
      %v685 = vsel %vm517, %v683, %v684
      %v686 = vrot.slane %v229, 1
      %v687 = vrot.slane %v230, 1
      %v688 = vsel %vm517, %v686, %v687
      %v689 = vrot.slane %v231, 1
      %v690 = vrot.slane %v232, 1
      %v691 = vsel %vm517, %v689, %v690
      %v692 = vrot.slane %v233, 1
      %v693 = vrot.slane %v234, 1
      %v694 = vsel %vm517, %v692, %v693
      %v695 = vrot.slane %v235, 1
      %v696 = vrot.slane %v236, 1
      %v697 = vsel %vm517, %v695, %v696
      %v698 = vrot.slane %v237, 1
      %v699 = vrot.slane %v238, 1
      %v700 = vsel %vm517, %v698, %v699
      %v701 = vrot.slane %v239, 1
      %v702 = vrot.slane %v240, 1
      %v703 = vsel %vm517, %v701, %v702
      %v704 = vrot.slane %v241, 1
      %v705 = vrot.slane %v242, 1
      %v706 = vsel %vm517, %v704, %v705
      %v707 = vrot.slane %v243, 1
      %v708 = vrot.slane %v244, 1
      %v709 = vsel %vm517, %v707, %v708
      %v710 = vrot.slane %v245, 1
      %v711 = vrot.slane %v246, 1
      %v712 = vsel %vm517, %v710, %v711
      %v713 = vrot.slane %v247, 1
      %v714 = vrot.slane %v248, 1
      %v715 = vsel %vm517, %v713, %v714
      %v716 = vrot.slane %v249, 1
      %v717 = vrot.slane %v250, 1
      %v718 = vsel %vm517, %v716, %v717
      %v719 = vrot.slane %v251, 1
      %v720 = vrot.slane %v252, 1
      %v721 = vsel %vm517, %v719, %v720
      %v722 = vrot.slane %v253, 1
      %v723 = vrot.slane %v254, 1
      %v724 = vsel %vm517, %v722, %v723
      %v725 = vrot.slane %v255, 1
      %v726 = vrot.slane %v256, 1
      %v727 = vsel %vm517, %v725, %v726
      %v728 = vrot.slane %v257, 1
      %v729 = vrot.slane %v258, 1
      %v730 = vsel %vm517, %v728, %v729
      %v731 = vrot.slane %v259, 1
      %v732 = vrot.slane %v260, 1
      %v733 = vsel %vm517, %v731, %v732
      %v734 = vrot.slane %v261, 1
      %v735 = vrot.slane %v262, 1
      %v736 = vsel %vm517, %v734, %v735
      %v737 = vrot.slane %v263, 1
      %v738 = vrot.slane %v264, 1
      %v739 = vsel %vm517, %v737, %v738
      %v740 = vrot.slane %v265, 1
      %v741 = vrot.slane %v266, 1
      %v742 = vsel %vm517, %v740, %v741
      %v743 = vrot.slane %v267, 1
      %v744 = vrot.slane %v268, 1
      %v745 = vsel %vm517, %v743, %v744
      %v746 = vrot.slane %v269, 1
      %v747 = vrot.slane %v270, 1
      %v748 = vsel %vm517, %v746, %v747
      %v749 = vrot.slane %v271, 1
      %v750 = vrot.slane %v272, 1
      %v751 = vsel %vm517, %v749, %v750
      %v752 = vrot.slane %v273, 1
      %v753 = vrot.slane %v274, 1
      %v754 = vsel %vm517, %v752, %v753
      %v755 = vrot.slane %v275, 1
      %v756 = vrot.slane %v276, 1
      %v757 = vsel %vm517, %v755, %v756
      %v758 = vrot.slane %v277, 1
      %v759 = vrot.slane %v278, 1
      %v760 = vsel %vm517, %v758, %v759
      %v761 = vrot.slane %v279, 1
      %v762 = vrot.slane %v280, 1
      %v763 = vsel %vm517, %v761, %v762
      %v764 = vrot.slane %v281, 1
      %v765 = vrot.slane %v282, 1
      %v766 = vsel %vm517, %v764, %v765
      %v767 = vrot.slane %v283, 1
      %v768 = vrot.slane %v284, 1
      %v769 = vsel %vm517, %v767, %v768
      %v770 = vrot.slane %v285, 1
      %v771 = vrot.slane %v286, 1
      %v772 = vsel %vm517, %v770, %v771
      %v773 = vrot.slane %v287, 1
      %v774 = vrot.slane %v288, 1
      %v775 = vsel %vm517, %v773, %v774
      %v776 = vrot.slane %v289, 1
      %v777 = vrot.slane %v290, 1
      %v778 = vsel %vm517, %v776, %v777
      %v779 = vrot.slane %v291, 1
      %v780 = vrot.slane %v292, 1
      %v781 = vsel %vm517, %v779, %v780
      %v782 = vrot.slane %v293, 1
      %v783 = vrot.slane %v294, 1
      %v784 = vsel %vm517, %v782, %v783
      %v785 = vrot.slane %v295, 1
      %v786 = vrot.slane %v296, 1
      %v787 = vsel %vm517, %v785, %v786
      %v788 = vrot.slane %v297, 1
      %v789 = vrot.slane %v298, 1
      %v790 = vsel %vm517, %v788, %v789
      %v791 = vrot.slane %v299, 1
      %v792 = vrot.slane %v300, 1
      %v793 = vsel %vm517, %v791, %v792
      %v794 = vrot.slane %v301, 1
      %v795 = vrot.slane %v302, 1
      %v796 = vsel %vm517, %v794, %v795
      %v797 = vrot.slane %v303, 1
      %v798 = vrot.slane %v304, 1
      %v799 = vsel %vm517, %v797, %v798
      %v800 = vrot.slane %v305, 1
      %v801 = vrot.slane %v306, 1
      %v802 = vsel %vm517, %v800, %v801
      %v803 = vrot.slane %v307, 1
      %v804 = vrot.slane %v308, 1
      %v805 = vsel %vm517, %v803, %v804
      %v806 = vrot.slane %v309, 1
      %v807 = vrot.slane %v310, 1
      %v808 = vsel %vm517, %v806, %v807
      %v809 = vrot.slane %v311, 1
      %v810 = vrot.slane %v312, 1
      %v811 = vsel %vm517, %v809, %v810
      %v812 = vrot.slane %v313, 1
      %v813 = vrot.slane %v314, 1
      %v814 = vsel %vm517, %v812, %v813
      %v815 = vrot.slane %v315, 1
      %v816 = vrot.slane %v316, 1
      %v817 = vsel %vm517, %v815, %v816
      %v918 = vmax.f32 %v117, %v520
      %v919 = vmax.f32 %v119, %v523
      %v920 = vmax.f32 %v121, %v526
      %v921 = vmax.f32 %v123, %v529
      %v922 = vmax.f32 %v125, %v532
      %v923 = vmax.f32 %v127, %v535
      %v924 = vmax.f32 %v129, %v538
      %v925 = vmax.f32 %v131, %v541
      %v926 = vmax.f32 %v133, %v544
      %v927 = vmax.f32 %v135, %v547
      %v928 = vmax.f32 %v137, %v550
      %v929 = vmax.f32 %v139, %v553
      %v930 = vmax.f32 %v141, %v556
      %v931 = vmax.f32 %v143, %v559
      %v932 = vmax.f32 %v145, %v562
      %v933 = vmax.f32 %v147, %v565
      %v934 = vmax.f32 %v149, %v568
      %v935 = vmax.f32 %v151, %v571
      %v936 = vmax.f32 %v153, %v574
      %v937 = vmax.f32 %v155, %v577
      %v938 = vmax.f32 %v157, %v580
      %v939 = vmax.f32 %v159, %v583
      %v940 = vmax.f32 %v161, %v586
      %v941 = vmax.f32 %v163, %v589
      %v942 = vmax.f32 %v165, %v592
      %v943 = vmax.f32 %v167, %v595
      %v944 = vmax.f32 %v169, %v598
      %v945 = vmax.f32 %v171, %v601
      %v946 = vmax.f32 %v173, %v604
      %v947 = vmax.f32 %v175, %v607
      %v948 = vmax.f32 %v177, %v610
      %v949 = vmax.f32 %v179, %v613
      %v950 = vmax.f32 %v181, %v616
      %v951 = vmax.f32 %v183, %v619
      %v952 = vmax.f32 %v185, %v622
      %v953 = vmax.f32 %v187, %v625
      %v954 = vmax.f32 %v189, %v628
      %v955 = vmax.f32 %v191, %v631
      %v956 = vmax.f32 %v193, %v634
      %v957 = vmax.f32 %v195, %v637
      %v958 = vmax.f32 %v197, %v640
      %v959 = vmax.f32 %v199, %v643
      %v960 = vmax.f32 %v201, %v646
      %v961 = vmax.f32 %v203, %v649
      %v962 = vmax.f32 %v205, %v652
      %v963 = vmax.f32 %v207, %v655
      %v964 = vmax.f32 %v209, %v658
      %v965 = vmax.f32 %v211, %v661
      %v966 = vmax.f32 %v213, %v664
      %v967 = vmax.f32 %v215, %v667
      %v968 = vmax.f32 %v217, %v670
      %v969 = vmax.f32 %v219, %v673
      %v970 = vmax.f32 %v221, %v676
      %v971 = vmax.f32 %v223, %v679
      %v972 = vmax.f32 %v225, %v682
      %v973 = vmax.f32 %v227, %v685
      %v974 = vmax.f32 %v229, %v688
      %v975 = vmax.f32 %v231, %v691
      %v976 = vmax.f32 %v233, %v694
      %v977 = vmax.f32 %v235, %v697
      %v978 = vmax.f32 %v237, %v700
      %v979 = vmax.f32 %v239, %v703
      %v980 = vmax.f32 %v241, %v706
      %v981 = vmax.f32 %v243, %v709
      %v982 = vmax.f32 %v245, %v712
      %v983 = vmax.f32 %v247, %v715
      %v984 = vmax.f32 %v249, %v718
      %v985 = vmax.f32 %v251, %v721
      %v986 = vmax.f32 %v253, %v724
      %v987 = vmax.f32 %v255, %v727
      %v988 = vmax.f32 %v257, %v730
      %v989 = vmax.f32 %v259, %v733
      %v990 = vmax.f32 %v261, %v736
      %v991 = vmax.f32 %v263, %v739
      %v992 = vmax.f32 %v265, %v742
      %v993 = vmax.f32 %v267, %v745
      %v994 = vmax.f32 %v269, %v748
      %v995 = vmax.f32 %v271, %v751
      %v996 = vmax.f32 %v273, %v754
      %v997 = vmax.f32 %v275, %v757
      %v998 = vmax.f32 %v277, %v760
      %v999 = vmax.f32 %v279, %v763
      %v1000 = vmax.f32 %v281, %v766
      %v1001 = vmax.f32 %v283, %v769
      %v1002 = vmax.f32 %v285, %v772
      %v1003 = vmax.f32 %v287, %v775
      %v1004 = vmax.f32 %v289, %v778
      %v1005 = vmax.f32 %v291, %v781
      %v1006 = vmax.f32 %v293, %v784
      %v1007 = vmax.f32 %v295, %v787
      %v1008 = vmax.f32 %v297, %v790
      %v1009 = vmax.f32 %v299, %v793
      %v1010 = vmax.f32 %v301, %v796
      %v1011 = vmax.f32 %v303, %v799
      %v1012 = vmax.f32 %v305, %v802
      %v1013 = vmax.f32 %v307, %v805
      %v1014 = vmax.f32 %v309, %v808
      %v1015 = vmax.f32 %v311, %v811
      %v1016 = vmax.f32 %v313, %v814
      %v1017 = vmax.f32 %v315, %v817
      %vm1018 = vcmask 1045504
      %v1019 = vrot.slane %v117, 2
      %v1020 = vrot.slane %v118, 2
      %v1021 = vsel %vm1018, %v1019, %v1020
      %v1022 = vrot.slane %v119, 2
      %v1023 = vrot.slane %v120, 2
      %v1024 = vsel %vm1018, %v1022, %v1023
      %v1025 = vrot.slane %v121, 2
      %v1026 = vrot.slane %v122, 2
      %v1027 = vsel %vm1018, %v1025, %v1026
      %v1028 = vrot.slane %v123, 2
      %v1029 = vrot.slane %v124, 2
      %v1030 = vsel %vm1018, %v1028, %v1029
      %v1031 = vrot.slane %v125, 2
      %v1032 = vrot.slane %v126, 2
      %v1033 = vsel %vm1018, %v1031, %v1032
      %v1034 = vrot.slane %v127, 2
      %v1035 = vrot.slane %v128, 2
      %v1036 = vsel %vm1018, %v1034, %v1035
      %v1037 = vrot.slane %v129, 2
      %v1038 = vrot.slane %v130, 2
      %v1039 = vsel %vm1018, %v1037, %v1038
      %v1040 = vrot.slane %v131, 2
      %v1041 = vrot.slane %v132, 2
      %v1042 = vsel %vm1018, %v1040, %v1041
      %v1043 = vrot.slane %v133, 2
      %v1044 = vrot.slane %v134, 2
      %v1045 = vsel %vm1018, %v1043, %v1044
      %v1046 = vrot.slane %v135, 2
      %v1047 = vrot.slane %v136, 2
      %v1048 = vsel %vm1018, %v1046, %v1047
      %v1049 = vrot.slane %v137, 2
      %v1050 = vrot.slane %v138, 2
      %v1051 = vsel %vm1018, %v1049, %v1050
      %v1052 = vrot.slane %v139, 2
      %v1053 = vrot.slane %v140, 2
      %v1054 = vsel %vm1018, %v1052, %v1053
      %v1055 = vrot.slane %v141, 2
      %v1056 = vrot.slane %v142, 2
      %v1057 = vsel %vm1018, %v1055, %v1056
      %v1058 = vrot.slane %v143, 2
      %v1059 = vrot.slane %v144, 2
      %v1060 = vsel %vm1018, %v1058, %v1059
      %v1061 = vrot.slane %v145, 2
      %v1062 = vrot.slane %v146, 2
      %v1063 = vsel %vm1018, %v1061, %v1062
      %v1064 = vrot.slane %v147, 2
      %v1065 = vrot.slane %v148, 2
      %v1066 = vsel %vm1018, %v1064, %v1065
      %v1067 = vrot.slane %v149, 2
      %v1068 = vrot.slane %v150, 2
      %v1069 = vsel %vm1018, %v1067, %v1068
      %v1070 = vrot.slane %v151, 2
      %v1071 = vrot.slane %v152, 2
      %v1072 = vsel %vm1018, %v1070, %v1071
      %v1073 = vrot.slane %v153, 2
      %v1074 = vrot.slane %v154, 2
      %v1075 = vsel %vm1018, %v1073, %v1074
      %v1076 = vrot.slane %v155, 2
      %v1077 = vrot.slane %v156, 2
      %v1078 = vsel %vm1018, %v1076, %v1077
      %v1079 = vrot.slane %v157, 2
      %v1080 = vrot.slane %v158, 2
      %v1081 = vsel %vm1018, %v1079, %v1080
      %v1082 = vrot.slane %v159, 2
      %v1083 = vrot.slane %v160, 2
      %v1084 = vsel %vm1018, %v1082, %v1083
      %v1085 = vrot.slane %v161, 2
      %v1086 = vrot.slane %v162, 2
      %v1087 = vsel %vm1018, %v1085, %v1086
      %v1088 = vrot.slane %v163, 2
      %v1089 = vrot.slane %v164, 2
      %v1090 = vsel %vm1018, %v1088, %v1089
      %v1091 = vrot.slane %v165, 2
      %v1092 = vrot.slane %v166, 2
      %v1093 = vsel %vm1018, %v1091, %v1092
      %v1094 = vrot.slane %v167, 2
      %v1095 = vrot.slane %v168, 2
      %v1096 = vsel %vm1018, %v1094, %v1095
      %v1097 = vrot.slane %v169, 2
      %v1098 = vrot.slane %v170, 2
      %v1099 = vsel %vm1018, %v1097, %v1098
      %v1100 = vrot.slane %v171, 2
      %v1101 = vrot.slane %v172, 2
      %v1102 = vsel %vm1018, %v1100, %v1101
      %v1103 = vrot.slane %v173, 2
      %v1104 = vrot.slane %v174, 2
      %v1105 = vsel %vm1018, %v1103, %v1104
      %v1106 = vrot.slane %v175, 2
      %v1107 = vrot.slane %v176, 2
      %v1108 = vsel %vm1018, %v1106, %v1107
      %v1109 = vrot.slane %v177, 2
      %v1110 = vrot.slane %v178, 2
      %v1111 = vsel %vm1018, %v1109, %v1110
      %v1112 = vrot.slane %v179, 2
      %v1113 = vrot.slane %v180, 2
      %v1114 = vsel %vm1018, %v1112, %v1113
      %v1115 = vrot.slane %v181, 2
      %v1116 = vrot.slane %v182, 2
      %v1117 = vsel %vm1018, %v1115, %v1116
      %v1118 = vrot.slane %v183, 2
      %v1119 = vrot.slane %v184, 2
      %v1120 = vsel %vm1018, %v1118, %v1119
      %v1121 = vrot.slane %v185, 2
      %v1122 = vrot.slane %v186, 2
      %v1123 = vsel %vm1018, %v1121, %v1122
      %v1124 = vrot.slane %v187, 2
      %v1125 = vrot.slane %v188, 2
      %v1126 = vsel %vm1018, %v1124, %v1125
      %v1127 = vrot.slane %v189, 2
      %v1128 = vrot.slane %v190, 2
      %v1129 = vsel %vm1018, %v1127, %v1128
      %v1130 = vrot.slane %v191, 2
      %v1131 = vrot.slane %v192, 2
      %v1132 = vsel %vm1018, %v1130, %v1131
      %v1133 = vrot.slane %v193, 2
      %v1134 = vrot.slane %v194, 2
      %v1135 = vsel %vm1018, %v1133, %v1134
      %v1136 = vrot.slane %v195, 2
      %v1137 = vrot.slane %v196, 2
      %v1138 = vsel %vm1018, %v1136, %v1137
      %v1139 = vrot.slane %v197, 2
      %v1140 = vrot.slane %v198, 2
      %v1141 = vsel %vm1018, %v1139, %v1140
      %v1142 = vrot.slane %v199, 2
      %v1143 = vrot.slane %v200, 2
      %v1144 = vsel %vm1018, %v1142, %v1143
      %v1145 = vrot.slane %v201, 2
      %v1146 = vrot.slane %v202, 2
      %v1147 = vsel %vm1018, %v1145, %v1146
      %v1148 = vrot.slane %v203, 2
      %v1149 = vrot.slane %v204, 2
      %v1150 = vsel %vm1018, %v1148, %v1149
      %v1151 = vrot.slane %v205, 2
      %v1152 = vrot.slane %v206, 2
      %v1153 = vsel %vm1018, %v1151, %v1152
      %v1154 = vrot.slane %v207, 2
      %v1155 = vrot.slane %v208, 2
      %v1156 = vsel %vm1018, %v1154, %v1155
      %v1157 = vrot.slane %v209, 2
      %v1158 = vrot.slane %v210, 2
      %v1159 = vsel %vm1018, %v1157, %v1158
      %v1160 = vrot.slane %v211, 2
      %v1161 = vrot.slane %v212, 2
      %v1162 = vsel %vm1018, %v1160, %v1161
      %v1163 = vrot.slane %v213, 2
      %v1164 = vrot.slane %v214, 2
      %v1165 = vsel %vm1018, %v1163, %v1164
      %v1166 = vrot.slane %v215, 2
      %v1167 = vrot.slane %v216, 2
      %v1168 = vsel %vm1018, %v1166, %v1167
      %v1169 = vrot.slane %v217, 2
      %v1170 = vrot.slane %v218, 2
      %v1171 = vsel %vm1018, %v1169, %v1170
      %v1172 = vrot.slane %v219, 2
      %v1173 = vrot.slane %v220, 2
      %v1174 = vsel %vm1018, %v1172, %v1173
      %v1175 = vrot.slane %v221, 2
      %v1176 = vrot.slane %v222, 2
      %v1177 = vsel %vm1018, %v1175, %v1176
      %v1178 = vrot.slane %v223, 2
      %v1179 = vrot.slane %v224, 2
      %v1180 = vsel %vm1018, %v1178, %v1179
      %v1181 = vrot.slane %v225, 2
      %v1182 = vrot.slane %v226, 2
      %v1183 = vsel %vm1018, %v1181, %v1182
      %v1184 = vrot.slane %v227, 2
      %v1185 = vrot.slane %v228, 2
      %v1186 = vsel %vm1018, %v1184, %v1185
      %v1187 = vrot.slane %v229, 2
      %v1188 = vrot.slane %v230, 2
      %v1189 = vsel %vm1018, %v1187, %v1188
      %v1190 = vrot.slane %v231, 2
      %v1191 = vrot.slane %v232, 2
      %v1192 = vsel %vm1018, %v1190, %v1191
      %v1193 = vrot.slane %v233, 2
      %v1194 = vrot.slane %v234, 2
      %v1195 = vsel %vm1018, %v1193, %v1194
      %v1196 = vrot.slane %v235, 2
      %v1197 = vrot.slane %v236, 2
      %v1198 = vsel %vm1018, %v1196, %v1197
      %v1199 = vrot.slane %v237, 2
      %v1200 = vrot.slane %v238, 2
      %v1201 = vsel %vm1018, %v1199, %v1200
      %v1202 = vrot.slane %v239, 2
      %v1203 = vrot.slane %v240, 2
      %v1204 = vsel %vm1018, %v1202, %v1203
      %v1205 = vrot.slane %v241, 2
      %v1206 = vrot.slane %v242, 2
      %v1207 = vsel %vm1018, %v1205, %v1206
      %v1208 = vrot.slane %v243, 2
      %v1209 = vrot.slane %v244, 2
      %v1210 = vsel %vm1018, %v1208, %v1209
      %v1211 = vrot.slane %v245, 2
      %v1212 = vrot.slane %v246, 2
      %v1213 = vsel %vm1018, %v1211, %v1212
      %v1214 = vrot.slane %v247, 2
      %v1215 = vrot.slane %v248, 2
      %v1216 = vsel %vm1018, %v1214, %v1215
      %v1217 = vrot.slane %v249, 2
      %v1218 = vrot.slane %v250, 2
      %v1219 = vsel %vm1018, %v1217, %v1218
      %v1220 = vrot.slane %v251, 2
      %v1221 = vrot.slane %v252, 2
      %v1222 = vsel %vm1018, %v1220, %v1221
      %v1223 = vrot.slane %v253, 2
      %v1224 = vrot.slane %v254, 2
      %v1225 = vsel %vm1018, %v1223, %v1224
      %v1226 = vrot.slane %v255, 2
      %v1227 = vrot.slane %v256, 2
      %v1228 = vsel %vm1018, %v1226, %v1227
      %v1229 = vrot.slane %v257, 2
      %v1230 = vrot.slane %v258, 2
      %v1231 = vsel %vm1018, %v1229, %v1230
      %v1232 = vrot.slane %v259, 2
      %v1233 = vrot.slane %v260, 2
      %v1234 = vsel %vm1018, %v1232, %v1233
      %v1235 = vrot.slane %v261, 2
      %v1236 = vrot.slane %v262, 2
      %v1237 = vsel %vm1018, %v1235, %v1236
      %v1238 = vrot.slane %v263, 2
      %v1239 = vrot.slane %v264, 2
      %v1240 = vsel %vm1018, %v1238, %v1239
      %v1241 = vrot.slane %v265, 2
      %v1242 = vrot.slane %v266, 2
      %v1243 = vsel %vm1018, %v1241, %v1242
      %v1244 = vrot.slane %v267, 2
      %v1245 = vrot.slane %v268, 2
      %v1246 = vsel %vm1018, %v1244, %v1245
      %v1247 = vrot.slane %v269, 2
      %v1248 = vrot.slane %v270, 2
      %v1249 = vsel %vm1018, %v1247, %v1248
      %v1250 = vrot.slane %v271, 2
      %v1251 = vrot.slane %v272, 2
      %v1252 = vsel %vm1018, %v1250, %v1251
      %v1253 = vrot.slane %v273, 2
      %v1254 = vrot.slane %v274, 2
      %v1255 = vsel %vm1018, %v1253, %v1254
      %v1256 = vrot.slane %v275, 2
      %v1257 = vrot.slane %v276, 2
      %v1258 = vsel %vm1018, %v1256, %v1257
      %v1259 = vrot.slane %v277, 2
      %v1260 = vrot.slane %v278, 2
      %v1261 = vsel %vm1018, %v1259, %v1260
      %v1262 = vrot.slane %v279, 2
      %v1263 = vrot.slane %v280, 2
      %v1264 = vsel %vm1018, %v1262, %v1263
      %v1265 = vrot.slane %v281, 2
      %v1266 = vrot.slane %v282, 2
      %v1267 = vsel %vm1018, %v1265, %v1266
      %v1268 = vrot.slane %v283, 2
      %v1269 = vrot.slane %v284, 2
      %v1270 = vsel %vm1018, %v1268, %v1269
      %v1271 = vrot.slane %v285, 2
      %v1272 = vrot.slane %v286, 2
      %v1273 = vsel %vm1018, %v1271, %v1272
      %v1274 = vrot.slane %v287, 2
      %v1275 = vrot.slane %v288, 2
      %v1276 = vsel %vm1018, %v1274, %v1275
      %v1277 = vrot.slane %v289, 2
      %v1278 = vrot.slane %v290, 2
      %v1279 = vsel %vm1018, %v1277, %v1278
      %v1280 = vrot.slane %v291, 2
      %v1281 = vrot.slane %v292, 2
      %v1282 = vsel %vm1018, %v1280, %v1281
      %v1283 = vrot.slane %v293, 2
      %v1284 = vrot.slane %v294, 2
      %v1285 = vsel %vm1018, %v1283, %v1284
      %v1286 = vrot.slane %v295, 2
      %v1287 = vrot.slane %v296, 2
      %v1288 = vsel %vm1018, %v1286, %v1287
      %v1289 = vrot.slane %v297, 2
      %v1290 = vrot.slane %v298, 2
      %v1291 = vsel %vm1018, %v1289, %v1290
      %v1292 = vrot.slane %v299, 2
      %v1293 = vrot.slane %v300, 2
      %v1294 = vsel %vm1018, %v1292, %v1293
      %v1295 = vrot.slane %v301, 2
      %v1296 = vrot.slane %v302, 2
      %v1297 = vsel %vm1018, %v1295, %v1296
      %v1298 = vrot.slane %v303, 2
      %v1299 = vrot.slane %v304, 2
      %v1300 = vsel %vm1018, %v1298, %v1299
      %v1301 = vrot.slane %v305, 2
      %v1302 = vrot.slane %v306, 2
      %v1303 = vsel %vm1018, %v1301, %v1302
      %v1304 = vrot.slane %v307, 2
      %v1305 = vrot.slane %v308, 2
      %v1306 = vsel %vm1018, %v1304, %v1305
      %v1307 = vrot.slane %v309, 2
      %v1308 = vrot.slane %v310, 2
      %v1309 = vsel %vm1018, %v1307, %v1308
      %v1310 = vrot.slane %v311, 2
      %v1311 = vrot.slane %v312, 2
      %v1312 = vsel %vm1018, %v1310, %v1311
      %v1313 = vrot.slane %v313, 2
      %v1314 = vrot.slane %v314, 2
      %v1315 = vsel %vm1018, %v1313, %v1314
      %v1316 = vrot.slane %v315, 2
      %v1317 = vrot.slane %v316, 2
      %v1318 = vsel %vm1018, %v1316, %v1317
      %v1419 = vmax.f32 %v918, %v1021
      %v1420 = vmax.f32 %v919, %v1024
      %v1421 = vmax.f32 %v920, %v1027
      %v1422 = vmax.f32 %v921, %v1030
      %v1423 = vmax.f32 %v922, %v1033
      %v1424 = vmax.f32 %v923, %v1036
      %v1425 = vmax.f32 %v924, %v1039
      %v1426 = vmax.f32 %v925, %v1042
      %v1427 = vmax.f32 %v926, %v1045
      %v1428 = vmax.f32 %v927, %v1048
      %v1429 = vmax.f32 %v928, %v1051
      %v1430 = vmax.f32 %v929, %v1054
      %v1431 = vmax.f32 %v930, %v1057
      %v1432 = vmax.f32 %v931, %v1060
      %v1433 = vmax.f32 %v932, %v1063
      %v1434 = vmax.f32 %v933, %v1066
      %v1435 = vmax.f32 %v934, %v1069
      %v1436 = vmax.f32 %v935, %v1072
      %v1437 = vmax.f32 %v936, %v1075
      %v1438 = vmax.f32 %v937, %v1078
      %v1439 = vmax.f32 %v938, %v1081
      %v1440 = vmax.f32 %v939, %v1084
      %v1441 = vmax.f32 %v940, %v1087
      %v1442 = vmax.f32 %v941, %v1090
      %v1443 = vmax.f32 %v942, %v1093
      %v1444 = vmax.f32 %v943, %v1096
      %v1445 = vmax.f32 %v944, %v1099
      %v1446 = vmax.f32 %v945, %v1102
      %v1447 = vmax.f32 %v946, %v1105
      %v1448 = vmax.f32 %v947, %v1108
      %v1449 = vmax.f32 %v948, %v1111
      %v1450 = vmax.f32 %v949, %v1114
      %v1451 = vmax.f32 %v950, %v1117
      %v1452 = vmax.f32 %v951, %v1120
      %v1453 = vmax.f32 %v952, %v1123
      %v1454 = vmax.f32 %v953, %v1126
      %v1455 = vmax.f32 %v954, %v1129
      %v1456 = vmax.f32 %v955, %v1132
      %v1457 = vmax.f32 %v956, %v1135
      %v1458 = vmax.f32 %v957, %v1138
      %v1459 = vmax.f32 %v958, %v1141
      %v1460 = vmax.f32 %v959, %v1144
      %v1461 = vmax.f32 %v960, %v1147
      %v1462 = vmax.f32 %v961, %v1150
      %v1463 = vmax.f32 %v962, %v1153
      %v1464 = vmax.f32 %v963, %v1156
      %v1465 = vmax.f32 %v964, %v1159
      %v1466 = vmax.f32 %v965, %v1162
      %v1467 = vmax.f32 %v966, %v1165
      %v1468 = vmax.f32 %v967, %v1168
      %v1469 = vmax.f32 %v968, %v1171
      %v1470 = vmax.f32 %v969, %v1174
      %v1471 = vmax.f32 %v970, %v1177
      %v1472 = vmax.f32 %v971, %v1180
      %v1473 = vmax.f32 %v972, %v1183
      %v1474 = vmax.f32 %v973, %v1186
      %v1475 = vmax.f32 %v974, %v1189
      %v1476 = vmax.f32 %v975, %v1192
      %v1477 = vmax.f32 %v976, %v1195
      %v1478 = vmax.f32 %v977, %v1198
      %v1479 = vmax.f32 %v978, %v1201
      %v1480 = vmax.f32 %v979, %v1204
      %v1481 = vmax.f32 %v980, %v1207
      %v1482 = vmax.f32 %v981, %v1210
      %v1483 = vmax.f32 %v982, %v1213
      %v1484 = vmax.f32 %v983, %v1216
      %v1485 = vmax.f32 %v984, %v1219
      %v1486 = vmax.f32 %v985, %v1222
      %v1487 = vmax.f32 %v986, %v1225
      %v1488 = vmax.f32 %v987, %v1228
      %v1489 = vmax.f32 %v988, %v1231
      %v1490 = vmax.f32 %v989, %v1234
      %v1491 = vmax.f32 %v990, %v1237
      %v1492 = vmax.f32 %v991, %v1240
      %v1493 = vmax.f32 %v992, %v1243
      %v1494 = vmax.f32 %v993, %v1246
      %v1495 = vmax.f32 %v994, %v1249
      %v1496 = vmax.f32 %v995, %v1252
      %v1497 = vmax.f32 %v996, %v1255
      %v1498 = vmax.f32 %v997, %v1258
      %v1499 = vmax.f32 %v998, %v1261
      %v1500 = vmax.f32 %v999, %v1264
      %v1501 = vmax.f32 %v1000, %v1267
      %v1502 = vmax.f32 %v1001, %v1270
      %v1503 = vmax.f32 %v1002, %v1273
      %v1504 = vmax.f32 %v1003, %v1276
      %v1505 = vmax.f32 %v1004, %v1279
      %v1506 = vmax.f32 %v1005, %v1282
      %v1507 = vmax.f32 %v1006, %v1285
      %v1508 = vmax.f32 %v1007, %v1288
      %v1509 = vmax.f32 %v1008, %v1291
      %v1510 = vmax.f32 %v1009, %v1294
      %v1511 = vmax.f32 %v1010, %v1297
      %v1512 = vmax.f32 %v1011, %v1300
      %v1513 = vmax.f32 %v1012, %v1303
      %v1514 = vmax.f32 %v1013, %v1306
      %v1515 = vmax.f32 %v1014, %v1309
      %v1516 = vmax.f32 %v1015, %v1312
      %v1517 = vmax.f32 %v1016, %v1315
      %v1518 = vmax.f32 %v1017, %v1318
      %v1519 = vmax.f32 %v1419, %v1420
      %v1520 = vmax.f32 %v1420, %v1421
      %v1521 = vmax.f32 %v1421, %v1422
      %v1522 = vmax.f32 %v1422, %v1423
      %v1523 = vmax.f32 %v1423, %v1424
      %v1524 = vmax.f32 %v1424, %v1425
      %v1525 = vmax.f32 %v1425, %v1426
      %v1526 = vmax.f32 %v1426, %v1427
      %v1527 = vmax.f32 %v1429, %v1430
      %v1528 = vmax.f32 %v1430, %v1431
      %v1529 = vmax.f32 %v1431, %v1432
      %v1530 = vmax.f32 %v1432, %v1433
      %v1531 = vmax.f32 %v1433, %v1434
      %v1532 = vmax.f32 %v1434, %v1435
      %v1533 = vmax.f32 %v1435, %v1436
      %v1534 = vmax.f32 %v1436, %v1437
      %v1535 = vmax.f32 %v1439, %v1440
      %v1536 = vmax.f32 %v1440, %v1441
      %v1537 = vmax.f32 %v1441, %v1442
      %v1538 = vmax.f32 %v1442, %v1443
      %v1539 = vmax.f32 %v1443, %v1444
      %v1540 = vmax.f32 %v1444, %v1445
      %v1541 = vmax.f32 %v1445, %v1446
      %v1542 = vmax.f32 %v1446, %v1447
      %v1543 = vmax.f32 %v1449, %v1450
      %v1544 = vmax.f32 %v1450, %v1451
      %v1545 = vmax.f32 %v1451, %v1452
      %v1546 = vmax.f32 %v1452, %v1453
      %v1547 = vmax.f32 %v1453, %v1454
      %v1548 = vmax.f32 %v1454, %v1455
      %v1549 = vmax.f32 %v1455, %v1456
      %v1550 = vmax.f32 %v1456, %v1457
      %v1551 = vmax.f32 %v1459, %v1460
      %v1552 = vmax.f32 %v1460, %v1461
      %v1553 = vmax.f32 %v1461, %v1462
      %v1554 = vmax.f32 %v1462, %v1463
      %v1555 = vmax.f32 %v1463, %v1464
      %v1556 = vmax.f32 %v1464, %v1465
      %v1557 = vmax.f32 %v1465, %v1466
      %v1558 = vmax.f32 %v1466, %v1467
      %v1559 = vmax.f32 %v1469, %v1470
      %v1560 = vmax.f32 %v1470, %v1471
      %v1561 = vmax.f32 %v1471, %v1472
      %v1562 = vmax.f32 %v1472, %v1473
      %v1563 = vmax.f32 %v1473, %v1474
      %v1564 = vmax.f32 %v1474, %v1475
      %v1565 = vmax.f32 %v1475, %v1476
      %v1566 = vmax.f32 %v1476, %v1477
      %v1567 = vmax.f32 %v1479, %v1480
      %v1568 = vmax.f32 %v1480, %v1481
      %v1569 = vmax.f32 %v1481, %v1482
      %v1570 = vmax.f32 %v1482, %v1483
      %v1571 = vmax.f32 %v1483, %v1484
      %v1572 = vmax.f32 %v1484, %v1485
      %v1573 = vmax.f32 %v1485, %v1486
      %v1574 = vmax.f32 %v1486, %v1487
      %v1575 = vmax.f32 %v1489, %v1490
      %v1576 = vmax.f32 %v1490, %v1491
      %v1577 = vmax.f32 %v1491, %v1492
      %v1578 = vmax.f32 %v1492, %v1493
      %v1579 = vmax.f32 %v1493, %v1494
      %v1580 = vmax.f32 %v1494, %v1495
      %v1581 = vmax.f32 %v1495, %v1496
      %v1582 = vmax.f32 %v1496, %v1497
      %v1583 = vmax.f32 %v1499, %v1500
      %v1584 = vmax.f32 %v1500, %v1501
      %v1585 = vmax.f32 %v1501, %v1502
      %v1586 = vmax.f32 %v1502, %v1503
      %v1587 = vmax.f32 %v1503, %v1504
      %v1588 = vmax.f32 %v1504, %v1505
      %v1589 = vmax.f32 %v1505, %v1506
      %v1590 = vmax.f32 %v1506, %v1507
      %v1591 = vmax.f32 %v1509, %v1510
      %v1592 = vmax.f32 %v1510, %v1511
      %v1593 = vmax.f32 %v1511, %v1512
      %v1594 = vmax.f32 %v1512, %v1513
      %v1595 = vmax.f32 %v1513, %v1514
      %v1596 = vmax.f32 %v1514, %v1515
      %v1597 = vmax.f32 %v1515, %v1516
      %v1598 = vmax.f32 %v1516, %v1517
      %v1599 = vmax.f32 %v1519, %v1421
      %v1600 = vmax.f32 %v1520, %v1422
      %v1601 = vmax.f32 %v1521, %v1423
      %v1602 = vmax.f32 %v1522, %v1424
      %v1603 = vmax.f32 %v1523, %v1425
      %v1604 = vmax.f32 %v1524, %v1426
      %v1605 = vmax.f32 %v1525, %v1427
      %v1606 = vmax.f32 %v1526, %v1428
      %v1607 = vmax.f32 %v1527, %v1431
      %v1608 = vmax.f32 %v1528, %v1432
      %v1609 = vmax.f32 %v1529, %v1433
      %v1610 = vmax.f32 %v1530, %v1434
      %v1611 = vmax.f32 %v1531, %v1435
      %v1612 = vmax.f32 %v1532, %v1436
      %v1613 = vmax.f32 %v1533, %v1437
      %v1614 = vmax.f32 %v1534, %v1438
      %v1615 = vmax.f32 %v1535, %v1441
      %v1616 = vmax.f32 %v1536, %v1442
      %v1617 = vmax.f32 %v1537, %v1443
      %v1618 = vmax.f32 %v1538, %v1444
      %v1619 = vmax.f32 %v1539, %v1445
      %v1620 = vmax.f32 %v1540, %v1446
      %v1621 = vmax.f32 %v1541, %v1447
      %v1622 = vmax.f32 %v1542, %v1448
      %v1623 = vmax.f32 %v1543, %v1451
      %v1624 = vmax.f32 %v1544, %v1452
      %v1625 = vmax.f32 %v1545, %v1453
      %v1626 = vmax.f32 %v1546, %v1454
      %v1627 = vmax.f32 %v1547, %v1455
      %v1628 = vmax.f32 %v1548, %v1456
      %v1629 = vmax.f32 %v1549, %v1457
      %v1630 = vmax.f32 %v1550, %v1458
      %v1631 = vmax.f32 %v1551, %v1461
      %v1632 = vmax.f32 %v1552, %v1462
      %v1633 = vmax.f32 %v1553, %v1463
      %v1634 = vmax.f32 %v1554, %v1464
      %v1635 = vmax.f32 %v1555, %v1465
      %v1636 = vmax.f32 %v1556, %v1466
      %v1637 = vmax.f32 %v1557, %v1467
      %v1638 = vmax.f32 %v1558, %v1468
      %v1639 = vmax.f32 %v1559, %v1471
      %v1640 = vmax.f32 %v1560, %v1472
      %v1641 = vmax.f32 %v1561, %v1473
      %v1642 = vmax.f32 %v1562, %v1474
      %v1643 = vmax.f32 %v1563, %v1475
      %v1644 = vmax.f32 %v1564, %v1476
      %v1645 = vmax.f32 %v1565, %v1477
      %v1646 = vmax.f32 %v1566, %v1478
      %v1647 = vmax.f32 %v1567, %v1481
      %v1648 = vmax.f32 %v1568, %v1482
      %v1649 = vmax.f32 %v1569, %v1483
      %v1650 = vmax.f32 %v1570, %v1484
      %v1651 = vmax.f32 %v1571, %v1485
      %v1652 = vmax.f32 %v1572, %v1486
      %v1653 = vmax.f32 %v1573, %v1487
      %v1654 = vmax.f32 %v1574, %v1488
      %v1655 = vmax.f32 %v1575, %v1491
      %v1656 = vmax.f32 %v1576, %v1492
      %v1657 = vmax.f32 %v1577, %v1493
      %v1658 = vmax.f32 %v1578, %v1494
      %v1659 = vmax.f32 %v1579, %v1495
      %v1660 = vmax.f32 %v1580, %v1496
      %v1661 = vmax.f32 %v1581, %v1497
      %v1662 = vmax.f32 %v1582, %v1498
      %v1663 = vmax.f32 %v1583, %v1501
      %v1664 = vmax.f32 %v1584, %v1502
      %v1665 = vmax.f32 %v1585, %v1503
      %v1666 = vmax.f32 %v1586, %v1504
      %v1667 = vmax.f32 %v1587, %v1505
      %v1668 = vmax.f32 %v1588, %v1506
      %v1669 = vmax.f32 %v1589, %v1507
      %v1670 = vmax.f32 %v1590, %v1508
      %v1671 = vmax.f32 %v1591, %v1511
      %v1672 = vmax.f32 %v1592, %v1512
      %v1673 = vmax.f32 %v1593, %v1513
      %v1674 = vmax.f32 %v1594, %v1514
      %v1675 = vmax.f32 %v1595, %v1515
      %v1676 = vmax.f32 %v1596, %v1516
      %v1677 = vmax.f32 %v1597, %v1517
      %v1678 = vmax.f32 %v1598, %v1518
      %v1679 = vmax.f32 %v1599, %v1607
      %v1680 = vmax.f32 %v1600, %v1608
      %v1681 = vmax.f32 %v1601, %v1609
      %v1682 = vmax.f32 %v1602, %v1610
      %v1683 = vmax.f32 %v1603, %v1611
      %v1684 = vmax.f32 %v1604, %v1612
      %v1685 = vmax.f32 %v1605, %v1613
      %v1686 = vmax.f32 %v1606, %v1614
      %v1687 = vmax.f32 %v1607, %v1615
      %v1688 = vmax.f32 %v1608, %v1616
      %v1689 = vmax.f32 %v1609, %v1617
      %v1690 = vmax.f32 %v1610, %v1618
      %v1691 = vmax.f32 %v1611, %v1619
      %v1692 = vmax.f32 %v1612, %v1620
      %v1693 = vmax.f32 %v1613, %v1621
      %v1694 = vmax.f32 %v1614, %v1622
      %v1695 = vmax.f32 %v1615, %v1623
      %v1696 = vmax.f32 %v1616, %v1624
      %v1697 = vmax.f32 %v1617, %v1625
      %v1698 = vmax.f32 %v1618, %v1626
      %v1699 = vmax.f32 %v1619, %v1627
      %v1700 = vmax.f32 %v1620, %v1628
      %v1701 = vmax.f32 %v1621, %v1629
      %v1702 = vmax.f32 %v1622, %v1630
      %v1703 = vmax.f32 %v1623, %v1631
      %v1704 = vmax.f32 %v1624, %v1632
      %v1705 = vmax.f32 %v1625, %v1633
      %v1706 = vmax.f32 %v1626, %v1634
      %v1707 = vmax.f32 %v1627, %v1635
      %v1708 = vmax.f32 %v1628, %v1636
      %v1709 = vmax.f32 %v1629, %v1637
      %v1710 = vmax.f32 %v1630, %v1638
      %v1711 = vmax.f32 %v1631, %v1639
      %v1712 = vmax.f32 %v1632, %v1640
      %v1713 = vmax.f32 %v1633, %v1641
      %v1714 = vmax.f32 %v1634, %v1642
      %v1715 = vmax.f32 %v1635, %v1643
      %v1716 = vmax.f32 %v1636, %v1644
      %v1717 = vmax.f32 %v1637, %v1645
      %v1718 = vmax.f32 %v1638, %v1646
      %v1719 = vmax.f32 %v1639, %v1647
      %v1720 = vmax.f32 %v1640, %v1648
      %v1721 = vmax.f32 %v1641, %v1649
      %v1722 = vmax.f32 %v1642, %v1650
      %v1723 = vmax.f32 %v1643, %v1651
      %v1724 = vmax.f32 %v1644, %v1652
      %v1725 = vmax.f32 %v1645, %v1653
      %v1726 = vmax.f32 %v1646, %v1654
      %v1727 = vmax.f32 %v1647, %v1655
      %v1728 = vmax.f32 %v1648, %v1656
      %v1729 = vmax.f32 %v1649, %v1657
      %v1730 = vmax.f32 %v1650, %v1658
      %v1731 = vmax.f32 %v1651, %v1659
      %v1732 = vmax.f32 %v1652, %v1660
      %v1733 = vmax.f32 %v1653, %v1661
      %v1734 = vmax.f32 %v1654, %v1662
      %v1735 = vmax.f32 %v1655, %v1663
      %v1736 = vmax.f32 %v1656, %v1664
      %v1737 = vmax.f32 %v1657, %v1665
      %v1738 = vmax.f32 %v1658, %v1666
      %v1739 = vmax.f32 %v1659, %v1667
      %v1740 = vmax.f32 %v1660, %v1668
      %v1741 = vmax.f32 %v1661, %v1669
      %v1742 = vmax.f32 %v1662, %v1670
      %v1743 = vmax.f32 %v1679, %v1615
      %v1744 = vmax.f32 %v1680, %v1616
      %v1745 = vmax.f32 %v1681, %v1617
      %v1746 = vmax.f32 %v1682, %v1618
      %v1747 = vmax.f32 %v1683, %v1619
      %v1748 = vmax.f32 %v1684, %v1620
      %v1749 = vmax.f32 %v1685, %v1621
      %v1750 = vmax.f32 %v1686, %v1622
      %v1751 = vmax.f32 %v1687, %v1623
      %v1752 = vmax.f32 %v1688, %v1624
      %v1753 = vmax.f32 %v1689, %v1625
      %v1754 = vmax.f32 %v1690, %v1626
      %v1755 = vmax.f32 %v1691, %v1627
      %v1756 = vmax.f32 %v1692, %v1628
      %v1757 = vmax.f32 %v1693, %v1629
      %v1758 = vmax.f32 %v1694, %v1630
      %v1759 = vmax.f32 %v1695, %v1631
      %v1760 = vmax.f32 %v1696, %v1632
      %v1761 = vmax.f32 %v1697, %v1633
      %v1762 = vmax.f32 %v1698, %v1634
      %v1763 = vmax.f32 %v1699, %v1635
      %v1764 = vmax.f32 %v1700, %v1636
      %v1765 = vmax.f32 %v1701, %v1637
      %v1766 = vmax.f32 %v1702, %v1638
      %v1767 = vmax.f32 %v1703, %v1639
      %v1768 = vmax.f32 %v1704, %v1640
      %v1769 = vmax.f32 %v1705, %v1641
      %v1770 = vmax.f32 %v1706, %v1642
      %v1771 = vmax.f32 %v1707, %v1643
      %v1772 = vmax.f32 %v1708, %v1644
      %v1773 = vmax.f32 %v1709, %v1645
      %v1774 = vmax.f32 %v1710, %v1646
      %v1775 = vmax.f32 %v1711, %v1647
      %v1776 = vmax.f32 %v1712, %v1648
      %v1777 = vmax.f32 %v1713, %v1649
      %v1778 = vmax.f32 %v1714, %v1650
      %v1779 = vmax.f32 %v1715, %v1651
      %v1780 = vmax.f32 %v1716, %v1652
      %v1781 = vmax.f32 %v1717, %v1653
      %v1782 = vmax.f32 %v1718, %v1654
      %v1783 = vmax.f32 %v1719, %v1655
      %v1784 = vmax.f32 %v1720, %v1656
      %v1785 = vmax.f32 %v1721, %v1657
      %v1786 = vmax.f32 %v1722, %v1658
      %v1787 = vmax.f32 %v1723, %v1659
      %v1788 = vmax.f32 %v1724, %v1660
      %v1789 = vmax.f32 %v1725, %v1661
      %v1790 = vmax.f32 %v1726, %v1662
      %v1791 = vmax.f32 %v1727, %v1663
      %v1792 = vmax.f32 %v1728, %v1664
      %v1793 = vmax.f32 %v1729, %v1665
      %v1794 = vmax.f32 %v1730, %v1666
      %v1795 = vmax.f32 %v1731, %v1667
      %v1796 = vmax.f32 %v1732, %v1668
      %v1797 = vmax.f32 %v1733, %v1669
      %v1798 = vmax.f32 %v1734, %v1670
      %v1799 = vmax.f32 %v1735, %v1671
      %v1800 = vmax.f32 %v1736, %v1672
      %v1801 = vmax.f32 %v1737, %v1673
      %v1802 = vmax.f32 %v1738, %v1674
      %v1803 = vmax.f32 %v1739, %v1675
      %v1804 = vmax.f32 %v1740, %v1676
      %v1805 = vmax.f32 %v1741, %v1677
      %v1806 = vmax.f32 %v1742, %v1678
      %v1807 = vmax.f32 %v1743, 0.0
      %v1808 = vmax.f32 %v1744, 0.0
      %v1809 = vmax.f32 %v1745, 0.0
      %v1810 = vmax.f32 %v1746, 0.0
      %v1811 = vmax.f32 %v1747, 0.0
      %v1812 = vmax.f32 %v1748, 0.0
      %v1813 = vmax.f32 %v1749, 0.0
      %v1814 = vmax.f32 %v1750, 0.0
      %v1815 = vmax.f32 %v1751, 0.0
      %v1816 = vmax.f32 %v1752, 0.0
      %v1817 = vmax.f32 %v1753, 0.0
      %v1818 = vmax.f32 %v1754, 0.0
      %v1819 = vmax.f32 %v1755, 0.0
      %v1820 = vmax.f32 %v1756, 0.0
      %v1821 = vmax.f32 %v1757, 0.0
      %v1822 = vmax.f32 %v1758, 0.0
      %v1823 = vmax.f32 %v1759, 0.0
      %v1824 = vmax.f32 %v1760, 0.0
      %v1825 = vmax.f32 %v1761, 0.0
      %v1826 = vmax.f32 %v1762, 0.0
      %v1827 = vmax.f32 %v1763, 0.0
      %v1828 = vmax.f32 %v1764, 0.0
      %v1829 = vmax.f32 %v1765, 0.0
      %v1830 = vmax.f32 %v1766, 0.0
      %v1831 = vmax.f32 %v1767, 0.0
      %v1832 = vmax.f32 %v1768, 0.0
      %v1833 = vmax.f32 %v1769, 0.0
      %v1834 = vmax.f32 %v1770, 0.0
      %v1835 = vmax.f32 %v1771, 0.0
      %v1836 = vmax.f32 %v1772, 0.0
      %v1837 = vmax.f32 %v1773, 0.0
      %v1838 = vmax.f32 %v1774, 0.0
      %v1839 = vmax.f32 %v1775, 0.0
      %v1840 = vmax.f32 %v1776, 0.0
      %v1841 = vmax.f32 %v1777, 0.0
      %v1842 = vmax.f32 %v1778, 0.0
      %v1843 = vmax.f32 %v1779, 0.0
      %v1844 = vmax.f32 %v1780, 0.0
      %v1845 = vmax.f32 %v1781, 0.0
      %v1846 = vmax.f32 %v1782, 0.0
      %v1847 = vmax.f32 %v1783, 0.0
      %v1848 = vmax.f32 %v1784, 0.0
      %v1849 = vmax.f32 %v1785, 0.0
      %v1850 = vmax.f32 %v1786, 0.0
      %v1851 = vmax.f32 %v1787, 0.0
      %v1852 = vmax.f32 %v1788, 0.0
      %v1853 = vmax.f32 %v1789, 0.0
      %v1854 = vmax.f32 %v1790, 0.0
      %v1855 = vmax.f32 %v1791, 0.0
      %v1856 = vmax.f32 %v1792, 0.0
      %v1857 = vmax.f32 %v1793, 0.0
      %v1858 = vmax.f32 %v1794, 0.0
      %v1859 = vmax.f32 %v1795, 0.0
      %v1860 = vmax.f32 %v1796, 0.0
      %v1861 = vmax.f32 %v1797, 0.0
      %v1862 = vmax.f32 %v1798, 0.0
      %v1863 = vmax.f32 %v1799, 0.0
      %v1864 = vmax.f32 %v1800, 0.0
      %v1865 = vmax.f32 %v1801, 0.0
      %v1866 = vmax.f32 %v1802, 0.0
      %v1867 = vmax.f32 %v1803, 0.0
      %v1868 = vmax.f32 %v1804, 0.0
      %v1869 = vmax.f32 %v1805, 0.0
      %v1870 = vmax.f32 %v1806, 0.0
      %1871 = vst [vmem:[%s116] sm:$0xff] %v1807
      %1872 = vst [vmem:[%s116 + $0x8] sm:$0xff] %v1808
      %1873 = vst [vmem:[%s116 + $0x10] sm:$0xff] %v1809
      %1874 = vst [vmem:[%s116 + $0x18] sm:$0xff] %v1810
      %1875 = vst [vmem:[%s116 + $0x20] sm:$0xff] %v1811
      %1876 = vst [vmem:[%s116 + $0x28] sm:$0xff] %v1812
      %1877 = vst [vmem:[%s116 + $0x30] sm:$0xff] %v1813
      %1878 = vst [vmem:[%s116 + $0x38] sm:$0xff] %v1814
      %1879 = vst [vmem:[%s116 + $0x40] sm:$0xff] %v1815
      %1880 = vst [vmem:[%s116 + $0x48] sm:$0xff] %v1816
      %1881 = vst [vmem:[%s116 + $0x50] sm:$0xff] %v1817
      %1882 = vst [vmem:[%s116 + $0x58] sm:$0xff] %v1818
      %1883 = vst [vmem:[%s116 + $0x60] sm:$0xff] %v1819
      %1884 = vst [vmem:[%s116 + $0x68] sm:$0xff] %v1820
      %1885 = vst [vmem:[%s116 + $0x70] sm:$0xff] %v1821
      %1886 = vst [vmem:[%s116 + $0x78] sm:$0xff] %v1822
      %1887 = vst [vmem:[%s116 + $0x80] sm:$0xff] %v1823
      %1888 = vst [vmem:[%s116 + $0x88] sm:$0xff] %v1824
      %1889 = vst [vmem:[%s116 + $0x90] sm:$0xff] %v1825
      %1890 = vst [vmem:[%s116 + $0x98] sm:$0xff] %v1826
      %1891 = vst [vmem:[%s116 + $0xa0] sm:$0xff] %v1827
      %1892 = vst [vmem:[%s116 + $0xa8] sm:$0xff] %v1828
      %1893 = vst [vmem:[%s116 + $0xb0] sm:$0xff] %v1829
      %1894 = vst [vmem:[%s116 + $0xb8] sm:$0xff] %v1830
      %1895 = vst [vmem:[%s116 + $0xc0] sm:$0xff] %v1831
      %1896 = vst [vmem:[%s116 + $0xc8] sm:$0xff] %v1832
      %1897 = vst [vmem:[%s116 + $0xd0] sm:$0xff] %v1833
      %1898 = vst [vmem:[%s116 + $0xd8] sm:$0xff] %v1834
      %1899 = vst [vmem:[%s116 + $0xe0] sm:$0xff] %v1835
      %1900 = vst [vmem:[%s116 + $0xe8] sm:$0xff] %v1836
      %1901 = vst [vmem:[%s116 + $0xf0] sm:$0xff] %v1837
      %1902 = vst [vmem:[%s116 + $0xf8] sm:$0xff] %v1838
      %1903 = vst [vmem:[%s116 + $0x100] sm:$0xff] %v1839
      %1904 = vst [vmem:[%s116 + $0x108] sm:$0xff] %v1840
      %1905 = vst [vmem:[%s116 + $0x110] sm:$0xff] %v1841
      %1906 = vst [vmem:[%s116 + $0x118] sm:$0xff] %v1842
      %1907 = vst [vmem:[%s116 + $0x120] sm:$0xff] %v1843
      %1908 = vst [vmem:[%s116 + $0x128] sm:$0xff] %v1844
      %1909 = vst [vmem:[%s116 + $0x130] sm:$0xff] %v1845
      %1910 = vst [vmem:[%s116 + $0x138] sm:$0xff] %v1846
      %1911 = vst [vmem:[%s116 + $0x140] sm:$0xff] %v1847
      %1912 = vst [vmem:[%s116 + $0x148] sm:$0xff] %v1848
      %1913 = vst [vmem:[%s116 + $0x150] sm:$0xff] %v1849
      %1914 = vst [vmem:[%s116 + $0x158] sm:$0xff] %v1850
      %1915 = vst [vmem:[%s116 + $0x160] sm:$0xff] %v1851
      %1916 = vst [vmem:[%s116 + $0x168] sm:$0xff] %v1852
      %1917 = vst [vmem:[%s116 + $0x170] sm:$0xff] %v1853
      %1918 = vst [vmem:[%s116 + $0x178] sm:$0xff] %v1854
      %1919 = vst [vmem:[%s116 + $0x180] sm:$0xff] %v1855
      %1920 = vst [vmem:[%s116 + $0x188] sm:$0xff] %v1856
      %1921 = vst [vmem:[%s116 + $0x190] sm:$0xff] %v1857
      %1922 = vst [vmem:[%s116 + $0x198] sm:$0xff] %v1858
      %1923 = vst [vmem:[%s116 + $0x1a0] sm:$0xff] %v1859
      %1924 = vst [vmem:[%s116 + $0x1a8] sm:$0xff] %v1860
      %1925 = vst [vmem:[%s116 + $0x1b0] sm:$0xff] %v1861
      %1926 = vst [vmem:[%s116 + $0x1b8] sm:$0xff] %v1862
      %1927 = vst [vmem:[%s116 + $0x1c0] sm:$0xff] %v1863
      %1928 = vst [vmem:[%s116 + $0x1c8] sm:$0xff] %v1864
      %1929 = vst [vmem:[%s116 + $0x1d0] sm:$0xff] %v1865
      %1930 = vst [vmem:[%s116 + $0x1d8] sm:$0xff] %v1866
      %1931 = vst [vmem:[%s116 + $0x1e0] sm:$0xff] %v1867
      %1932 = vst [vmem:[%s116 + $0x1e8] sm:$0xff] %v1868
      %1933 = vst [vmem:[%s116 + $0x1f0] sm:$0xff] %v1869
      %1934 = vst [vmem:[%s116 + $0x1f8] sm:$0xff] %v1870
      %p1935 = scmp.lt.s32.totalorder %s12, 1
      %s1936 = scalar_select %p1935, %s12, 1
      %s1937 = smul.addr %s1936, 64
      %s1938 = smul.addr %s1937, 8
      %s1939 = scalar_lea.vmem %s1, %s1938
      // Predicated region
      $region25: #{baseline_tab_forward.7} parent=23 // pred_check
        %p1940 = pneg %p56
      $region26: #{baseline_tab_forward.7} parent=23 // pred_check_branch
        %1942 = sbr.rel (%p1940) target = $region28
      $region27: #{baseline_tab_forward.7} parent=23 // pred_region
        _
      $region28: #{baseline_tab_forward.7} parent=23 // pred_fallthru
        _
    $region24: #{baseline_tab_forward.7} parent=5 // pred_fallthru
      _
    %p1943 = scmp.le.s32.totalorder 2, %s7
    // Predicated region
    $region29: #{baseline_tab_forward.7} parent=5 // pred_check
      %p1944 = pneg %p1943
    $region30: #{baseline_tab_forward.7} parent=5 // pred_check_branch
      %1946 = sbr.rel (%p1944) target = $region32
    $region31: #{baseline_tab_forward.7} parent=5 // pred_region
      %s1947 = ssub.s32 %s7, 2
      // Predicated region
      $region33: #{baseline_tab_forward.7} parent=31 // pred_check
        %p1948 = pneg %p62
      $region34: #{baseline_tab_forward.7} parent=31 // pred_check_branch
        %1950 = sbr.rel (%p1948) target = $region36
      $region35: #{baseline_tab_forward.7} parent=31 // pred_region
        %p1951 = scmp.lt.s32.totalorder %s13, 1
        %s1952 = scalar_select %p1951, %s13, 1
        %s1953 = smul.addr %s1952, 64
        %s1954 = smul.addr %s1953, 8
        %s1955 = scalar_lea.vmem %s1, %s1954
      $region36: #{baseline_tab_forward.7} parent=31 // pred_fallthru
        _
    $region32: #{baseline_tab_forward.7} parent=5 // pred_fallthru
      _
  $region6: #{baseline_tab_forward.7} parent=0 // loop_footer
    %s11 = sadd.s32 1, %s7
  $region7: #{baseline_tab_forward.7} parent=0 // loop_footer_branch
    %6 = sbr.rel target = $region3
  $region8: #{baseline_tab_forward.7} parent=0 // loop_exit
    _

// kernel: baseline_tab_forward.9
$region0: #{baseline_tab_forward.9}
  #allocation0 [shape = 'u32[]', space=smem, size = 0x4, offset = 0x4, fixed_abs, tag = 'smem constant byte address 0x4 - core index']
  #allocation1 [shape = 'u32[144,128]{1,0:T(1,128)}', space=vmem, size = 0x12000, scoped, tag = 'internal scratch']
  %s0 = inlined_call_operand.vmem [shape: f32[2,6,6,6,128], index: 0, kind: input, shape index: {}]
  %s1 = inlined_call_operand.vmem [shape: f32[2,4,4,4,128], index: 1, kind: output, shape index: {}]
  %s2 = sld [smem:[#allocation0]]
  $region37: #{baseline_tab_forward.9} parent=0
    _
  %s4 = ssub.s32 1, %s2
  %s5 = scalar_select 0, %s4, %s2
  loop: start=0, step=1, limit=4
  $region2: #{baseline_tab_forward.9} parent=0 // loop_pre_header
    _
  $region3: #{baseline_tab_forward.9} parent=0 // loop_header
    %s7 = sphi 0, %s11
    %p8 = scmp.ge.s32.totalorder %s7, 4
    %s17 = sphi 0, %s19
    %s20 = sphi 0, %s17
    %s21 = sphi 0, %s20
    %s37 = sphi 0, %s21
    %s43 = sphi 0, %s45
    %s46 = sphi 0, %s43
    %s47 = sphi 0, %s46
    %s63 = sphi 0, %s47
  $region4: #{baseline_tab_forward.9} parent=0 // loop_header_branch
    %10 = sbr.rel (%p8) target = $region8
  $region5: #{baseline_tab_forward.9} parent=0 // loop_body
    %s12 = ssub.s32 %s7, 1
    %s13 = ssub.s32 %s7, 2
    %s14 = sadd.s32 %s7, 1
    %s15 = ssub.s32 %s7, %s14
    %p16 = scmp.eq.s32.totalorder %s15, 0
    %s18 = sadd.s32 %s17, 1
    %s19 = scalar_select %p16, %s17, %s18
    %p22 = pneg %p16
    %p23 = scmp.eq.s32.totalorder %s7, 1
    %p24 = por %p22, %p23
    %p25 = scmp.ne.s32.totalorder %s17, %s20
    %p26 = scmp.eq.s32.totalorder %s7, 0
    %p27 = por %p25, %p26
    %p28 = scmp.ne.s32.totalorder %s17, %s20
    %p29 = scmp.eq.s32.totalorder %s12, 1
    %p30 = por %p28, %p29
    %p31 = scmp.ne.s32.totalorder %s20, %s21
    %p32 = scmp.eq.s32.totalorder %s12, 0
    %p33 = por %p31, %p32
    %p34 = scmp.ne.s32.totalorder %s20, %s21
    %p35 = scmp.eq.s32.totalorder %s13, 1
    %p36 = por %p34, %p35
    %p38 = scmp.ne.s32.totalorder %s21, %s37
    %p39 = scmp.eq.s32.totalorder %s13, 0
    %p40 = por %p38, %p39
    %s41 = ssub.s32 %s7, %s14
    %p42 = scmp.eq.s32.totalorder %s41, 0
    %s44 = sadd.s32 %s43, 1
    %s45 = scalar_select %p42, %s43, %s44
    %p48 = pneg %p42
    %p49 = scmp.eq.s32.totalorder %s7, 1
    %p50 = por %p48, %p49
    %p51 = scmp.ne.s32.totalorder %s43, %s46
    %p52 = scmp.eq.s32.totalorder %s7, 0
    %p53 = por %p51, %p52
    %p54 = scmp.ne.s32.totalorder %s43, %s46
    %p55 = scmp.eq.s32.totalorder %s12, 1
    %p56 = por %p54, %p55
    %p57 = scmp.ne.s32.totalorder %s46, %s47
    %p58 = scmp.eq.s32.totalorder %s12, 0
    %p59 = por %p57, %p58
    %p60 = scmp.ne.s32.totalorder %s46, %s47
    %p61 = scmp.eq.s32.totalorder %s13, 1
    %p62 = por %p60, %p61
    %p64 = scmp.ne.s32.totalorder %s47, %s63
    %p65 = scmp.eq.s32.totalorder %s13, 0
    %p66 = por %p64, %p65
    %p67 = scmp.le.s32.totalorder 1, %s7
    %p68 = scmp.lt.s32.totalorder %s7, 3
    %p69 = pnand %p67, %p68
    %p70 = pneg %p69
    // Predicated region
    $region9: #{baseline_tab_forward.9} parent=5 // pred_check
      _
    $region10: #{baseline_tab_forward.9} parent=5 // pred_check_branch
      %72 = sbr.rel (%p69) target = $region12
    $region11: #{baseline_tab_forward.9} parent=5 // pred_region
      %s73 = ssub.s32 %s7, 1
    $region12: #{baseline_tab_forward.9} parent=5 // pred_fallthru
      _
    %p74 = scmp.lt.s32.totalorder %s7, 2
    // Predicated region
    $region13: #{baseline_tab_forward.9} parent=5 // pred_check
      %p75 = pneg %p74
    $region14: #{baseline_tab_forward.9} parent=5 // pred_check_branch
      %77 = sbr.rel (%p75) target = $region16
    $region15: #{baseline_tab_forward.9} parent=5 // pred_region
      // Predicated region
      $region17: #{baseline_tab_forward.9} parent=15 // pred_check
        %p78 = pneg %p27
      $region18: #{baseline_tab_forward.9} parent=15 // pred_check_branch
        %80 = sbr.rel (%p78) target = $region20
      $region19: #{baseline_tab_forward.9} parent=15 // pred_region
        %p81 = scmp.lt.s32.totalorder %s7, 1
        %s82 = scalar_select %p81, %s7, 1
        %s83 = smul.addr %s82, 36
        %s84 = smul.addr %s83, 8
        %s85 = scalar_lea.vmem %s0, %s84
      $region20: #{baseline_tab_forward.9} parent=15 // pred_fallthru
        _
    $region16: #{baseline_tab_forward.9} parent=5 // pred_fallthru
      _
    %p86 = scmp.le.s32.totalorder 1, %s7
    %p87 = scmp.lt.s32.totalorder %s7, 3
    %p88 = pnand %p86, %p87
    %p89 = pneg %p88
    // Predicated region
    $region21: #{baseline_tab_forward.9} parent=5 // pred_check
      _
    $region22: #{baseline_tab_forward.9} parent=5 // pred_check_branch
      %91 = sbr.rel (%p88) target = $region24
    $region23: #{baseline_tab_forward.9} parent=5 // pred_region
      %s92 = ssub.s32 %s7, 1
      %p93 = scmp.lt.s32.totalorder %s12, 1
      %s94 = scalar_select %p93, %s12, 1
      %s95 = smul.addr %s94, 36
      %s96 = smul.addr %s95, 8
      %s97 = scalar_lea.vmem %s0, %s96
      %p98 = pneg %p33
      %p99 = pneg %p30
      %p100 = pneg %p59
      %p101 = pneg %p56
      %p102 = scmp.lt.s32.totalorder %s12, 1
      %s103 = scalar_select %p102, %s12, 1
      %s104 = smul.addr %s103, 16
      %s105 = smul.addr %s104, 4
      %s106 = scalar_lea.vmem %s1, %s105
      %p107 = scmp.lt.s32.totalorder %s12, 1
      %s108 = scalar_select %p107, %s12, 1
      %s109 = smul.addr %s108, 36
      %s110 = smul.addr %s109, 8
      %s111 = scalar_lea.vmem %s0, %s110
      %p112 = scmp.lt.s32.totalorder %s12, 1
      %s113 = scalar_select %p112, %s12, 1
      %s114 = smul.addr %s113, 16
      %s115 = smul.addr %s114, 4
      %s116 = scalar_lea.vmem %s1, %s115
      %v117 = vld [vmem:[%s111] sm:$0x3f]
      %v118 = vld [vmem:[%s111 + $0x8] sm:$0x3f]
      %v119 = vld [vmem:[%s111 + $0x10] sm:$0x3f]
      %v120 = vld [vmem:[%s111 + $0x18] sm:$0x3f]
      %v121 = vld [vmem:[%s111 + $0x20] sm:$0x3f]
      %v122 = vld [vmem:[%s111 + $0x28] sm:$0x3f]
      %v123 = vld [vmem:[%s111 + $0x30] sm:$0x3f]
      %v124 = vld [vmem:[%s111 + $0x38] sm:$0x3f]
      %v125 = vld [vmem:[%s111 + $0x40] sm:$0x3f]
      %v126 = vld [vmem:[%s111 + $0x48] sm:$0x3f]
      %v127 = vld [vmem:[%s111 + $0x50] sm:$0x3f]
      %v128 = vld [vmem:[%s111 + $0x58] sm:$0x3f]
      %v129 = vld [vmem:[%s111 + $0x60] sm:$0x3f]
      %v130 = vld [vmem:[%s111 + $0x68] sm:$0x3f]
      %v131 = vld [vmem:[%s111 + $0x70] sm:$0x3f]
      %v132 = vld [vmem:[%s111 + $0x78] sm:$0x3f]
      %v133 = vld [vmem:[%s111 + $0x80] sm:$0x3f]
      %v134 = vld [vmem:[%s111 + $0x88] sm:$0x3f]
      %v135 = vld [vmem:[%s111 + $0x90] sm:$0x3f]
      %v136 = vld [vmem:[%s111 + $0x98] sm:$0x3f]
      %v137 = vld [vmem:[%s111 + $0xa0] sm:$0x3f]
      %v138 = vld [vmem:[%s111 + $0xa8] sm:$0x3f]
      %v139 = vld [vmem:[%s111 + $0xb0] sm:$0x3f]
      %v140 = vld [vmem:[%s111 + $0xb8] sm:$0x3f]
      %v141 = vld [vmem:[%s111 + $0xc0] sm:$0x3f]
      %v142 = vld [vmem:[%s111 + $0xc8] sm:$0x3f]
      %v143 = vld [vmem:[%s111 + $0xd0] sm:$0x3f]
      %v144 = vld [vmem:[%s111 + $0xd8] sm:$0x3f]
      %v145 = vld [vmem:[%s111 + $0xe0] sm:$0x3f]
      %v146 = vld [vmem:[%s111 + $0xe8] sm:$0x3f]
      %v147 = vld [vmem:[%s111 + $0xf0] sm:$0x3f]
      %v148 = vld [vmem:[%s111 + $0xf8] sm:$0x3f]
      %v149 = vld [vmem:[%s111 + $0x100] sm:$0x3f]
      %v150 = vld [vmem:[%s111 + $0x108] sm:$0x3f]
      %v151 = vld [vmem:[%s111 + $0x110] sm:$0x3f]
      %v152 = vld [vmem:[%s111 + $0x118] sm:$0x3f]
      %v189 = vrot.slane %v117, 1
      %v190 = vrot.slane %v118, 1
      %v191 = vrot.slane %v119, 1
      %v192 = vrot.slane %v120, 1
      %v193 = vrot.slane %v121, 1
      %v194 = vrot.slane %v122, 1
      %v195 = vrot.slane %v123, 1
      %v196 = vrot.slane %v124, 1
      %v197 = vrot.slane %v125, 1
      %v198 = vrot.slane %v126, 1
      %v199 = vrot.slane %v127, 1
      %v200 = vrot.slane %v128, 1
      %v201 = vrot.slane %v129, 1
      %v202 = vrot.slane %v130, 1
      %v203 = vrot.slane %v131, 1
      %v204 = vrot.slane %v132, 1
      %v205 = vrot.slane %v133, 1
      %v206 = vrot.slane %v134, 1
      %v207 = vrot.slane %v135, 1
      %v208 = vrot.slane %v136, 1
      %v209 = vrot.slane %v137, 1
      %v210 = vrot.slane %v138, 1
      %v211 = vrot.slane %v139, 1
      %v212 = vrot.slane %v140, 1
      %v213 = vrot.slane %v141, 1
      %v214 = vrot.slane %v142, 1
      %v215 = vrot.slane %v143, 1
      %v216 = vrot.slane %v144, 1
      %v217 = vrot.slane %v145, 1
      %v218 = vrot.slane %v146, 1
      %v219 = vrot.slane %v147, 1
      %v220 = vrot.slane %v148, 1
      %v221 = vrot.slane %v149, 1
      %v222 = vrot.slane %v150, 1
      %v223 = vrot.slane %v151, 1
      %v224 = vrot.slane %v152, 1
      %v261 = vmax.f32 %v117, %v189
      %v262 = vmax.f32 %v118, %v190
      %v263 = vmax.f32 %v119, %v191
      %v264 = vmax.f32 %v120, %v192
      %v265 = vmax.f32 %v121, %v193
      %v266 = vmax.f32 %v122, %v194
      %v267 = vmax.f32 %v123, %v195
      %v268 = vmax.f32 %v124, %v196
      %v269 = vmax.f32 %v125, %v197
      %v270 = vmax.f32 %v126, %v198
      %v271 = vmax.f32 %v127, %v199
      %v272 = vmax.f32 %v128, %v200
      %v273 = vmax.f32 %v129, %v201
      %v274 = vmax.f32 %v130, %v202
      %v275 = vmax.f32 %v131, %v203
      %v276 = vmax.f32 %v132, %v204
      %v277 = vmax.f32 %v133, %v205
      %v278 = vmax.f32 %v134, %v206
      %v279 = vmax.f32 %v135, %v207
      %v280 = vmax.f32 %v136, %v208
      %v281 = vmax.f32 %v137, %v209
      %v282 = vmax.f32 %v138, %v210
      %v283 = vmax.f32 %v139, %v211
      %v284 = vmax.f32 %v140, %v212
      %v285 = vmax.f32 %v141, %v213
      %v286 = vmax.f32 %v142, %v214
      %v287 = vmax.f32 %v143, %v215
      %v288 = vmax.f32 %v144, %v216
      %v289 = vmax.f32 %v145, %v217
      %v290 = vmax.f32 %v146, %v218
      %v291 = vmax.f32 %v147, %v219
      %v292 = vmax.f32 %v148, %v220
      %v293 = vmax.f32 %v149, %v221
      %v294 = vmax.f32 %v150, %v222
      %v295 = vmax.f32 %v151, %v223
      %v296 = vmax.f32 %v152, %v224
      %v297 = vrot.slane %v117, 2
      %v298 = vrot.slane %v118, 2
      %v299 = vrot.slane %v119, 2
      %v300 = vrot.slane %v120, 2
      %v301 = vrot.slane %v121, 2
      %v302 = vrot.slane %v122, 2
      %v303 = vrot.slane %v123, 2
      %v304 = vrot.slane %v124, 2
      %v305 = vrot.slane %v125, 2
      %v306 = vrot.slane %v126, 2
      %v307 = vrot.slane %v127, 2
      %v308 = vrot.slane %v128, 2
      %v309 = vrot.slane %v129, 2
      %v310 = vrot.slane %v130, 2
      %v311 = vrot.slane %v131, 2
      %v312 = vrot.slane %v132, 2
      %v313 = vrot.slane %v133, 2
      %v314 = vrot.slane %v134, 2
      %v315 = vrot.slane %v135, 2
      %v316 = vrot.slane %v136, 2
      %v317 = vrot.slane %v137, 2
      %v318 = vrot.slane %v138, 2
      %v319 = vrot.slane %v139, 2
      %v320 = vrot.slane %v140, 2
      %v321 = vrot.slane %v141, 2
      %v322 = vrot.slane %v142, 2
      %v323 = vrot.slane %v143, 2
      %v324 = vrot.slane %v144, 2
      %v325 = vrot.slane %v145, 2
      %v326 = vrot.slane %v146, 2
      %v327 = vrot.slane %v147, 2
      %v328 = vrot.slane %v148, 2
      %v329 = vrot.slane %v149, 2
      %v330 = vrot.slane %v150, 2
      %v331 = vrot.slane %v151, 2
      %v332 = vrot.slane %v152, 2
      %v369 = vmax.f32 %v261, %v297
      %v370 = vmax.f32 %v262, %v298
      %v371 = vmax.f32 %v263, %v299
      %v372 = vmax.f32 %v264, %v300
      %v373 = vmax.f32 %v265, %v301
      %v374 = vmax.f32 %v266, %v302
      %v375 = vmax.f32 %v267, %v303
      %v376 = vmax.f32 %v268, %v304
      %v377 = vmax.f32 %v269, %v305
      %v378 = vmax.f32 %v270, %v306
      %v379 = vmax.f32 %v271, %v307
      %v380 = vmax.f32 %v272, %v308
      %v381 = vmax.f32 %v273, %v309
      %v382 = vmax.f32 %v274, %v310
      %v383 = vmax.f32 %v275, %v311
      %v384 = vmax.f32 %v276, %v312
      %v385 = vmax.f32 %v277, %v313
      %v386 = vmax.f32 %v278, %v314
      %v387 = vmax.f32 %v279, %v315
      %v388 = vmax.f32 %v280, %v316
      %v389 = vmax.f32 %v281, %v317
      %v390 = vmax.f32 %v282, %v318
      %v391 = vmax.f32 %v283, %v319
      %v392 = vmax.f32 %v284, %v320
      %v393 = vmax.f32 %v285, %v321
      %v394 = vmax.f32 %v286, %v322
      %v395 = vmax.f32 %v287, %v323
      %v396 = vmax.f32 %v288, %v324
      %v397 = vmax.f32 %v289, %v325
      %v398 = vmax.f32 %v290, %v326
      %v399 = vmax.f32 %v291, %v327
      %v400 = vmax.f32 %v292, %v328
      %v401 = vmax.f32 %v293, %v329
      %v402 = vmax.f32 %v294, %v330
      %v403 = vmax.f32 %v295, %v331
      %v404 = vmax.f32 %v296, %v332
      %v405 = vmax.f32 %v369, %v370
      %v406 = vmax.f32 %v370, %v371
      %v407 = vmax.f32 %v371, %v372
      %v408 = vmax.f32 %v372, %v373
      %v409 = vmax.f32 %v375, %v376
      %v410 = vmax.f32 %v376, %v377
      %v411 = vmax.f32 %v377, %v378
      %v412 = vmax.f32 %v378, %v379
      %v413 = vmax.f32 %v381, %v382
      %v414 = vmax.f32 %v382, %v383
      %v415 = vmax.f32 %v383, %v384
      %v416 = vmax.f32 %v384, %v385
      %v417 = vmax.f32 %v387, %v388
      %v418 = vmax.f32 %v388, %v389
      %v419 = vmax.f32 %v389, %v390
      %v420 = vmax.f32 %v390, %v391
      %v421 = vmax.f32 %v393, %v394
      %v422 = vmax.f32 %v394, %v395
      %v423 = vmax.f32 %v395, %v396
      %v424 = vmax.f32 %v396, %v397
      %v425 = vmax.f32 %v399, %v400
      %v426 = vmax.f32 %v400, %v401
      %v427 = vmax.f32 %v401, %v402
      %v428 = vmax.f32 %v402, %v403
      %v429 = vmax.f32 %v405, %v371
      %v430 = vmax.f32 %v406, %v372
      %v431 = vmax.f32 %v407, %v373
      %v432 = vmax.f32 %v408, %v374
      %v433 = vmax.f32 %v409, %v377
      %v434 = vmax.f32 %v410, %v378
      %v435 = vmax.f32 %v411, %v379
      %v436 = vmax.f32 %v412, %v380
      %v437 = vmax.f32 %v413, %v383
      %v438 = vmax.f32 %v414, %v384
      %v439 = vmax.f32 %v415, %v385
      %v440 = vmax.f32 %v416, %v386
      %v441 = vmax.f32 %v417, %v389
      %v442 = vmax.f32 %v418, %v390
      %v443 = vmax.f32 %v419, %v391
      %v444 = vmax.f32 %v420, %v392
      %v445 = vmax.f32 %v421, %v395
      %v446 = vmax.f32 %v422, %v396
      %v447 = vmax.f32 %v423, %v397
      %v448 = vmax.f32 %v424, %v398
      %v449 = vmax.f32 %v425, %v401
      %v450 = vmax.f32 %v426, %v402
      %v451 = vmax.f32 %v427, %v403
      %v452 = vmax.f32 %v428, %v404
      %v453 = vmax.f32 %v429, %v433
      %v454 = vmax.f32 %v430, %v434
      %v455 = vmax.f32 %v431, %v435
      %v456 = vmax.f32 %v432, %v436
      %v457 = vmax.f32 %v433, %v437
      %v458 = vmax.f32 %v434, %v438
      %v459 = vmax.f32 %v435, %v439
      %v460 = vmax.f32 %v436, %v440
      %v461 = vmax.f32 %v437, %v441
      %v462 = vmax.f32 %v438, %v442
      %v463 = vmax.f32 %v439, %v443
      %v464 = vmax.f32 %v440, %v444
      %v465 = vmax.f32 %v441, %v445
      %v466 = vmax.f32 %v442, %v446
      %v467 = vmax.f32 %v443, %v447
      %v468 = vmax.f32 %v444, %v448
      %v469 = vmax.f32 %v453, %v437
      %v470 = vmax.f32 %v454, %v438
      %v471 = vmax.f32 %v455, %v439
      %v472 = vmax.f32 %v456, %v440
      %v473 = vmax.f32 %v457, %v441
      %v474 = vmax.f32 %v458, %v442
      %v475 = vmax.f32 %v459, %v443
      %v476 = vmax.f32 %v460, %v444
      %v477 = vmax.f32 %v461, %v445
      %v478 = vmax.f32 %v462, %v446
      %v479 = vmax.f32 %v463, %v447
      %v480 = vmax.f32 %v464, %v448
      %v481 = vmax.f32 %v465, %v449
      %v482 = vmax.f32 %v466, %v450
      %v483 = vmax.f32 %v467, %v451
      %v484 = vmax.f32 %v468, %v452
      %v485 = vmax.f32 %v469, 0.0
      %v486 = vmax.f32 %v470, 0.0
      %v487 = vmax.f32 %v471, 0.0
      %v488 = vmax.f32 %v472, 0.0
      %v489 = vmax.f32 %v473, 0.0
      %v490 = vmax.f32 %v474, 0.0
      %v491 = vmax.f32 %v475, 0.0
      %v492 = vmax.f32 %v476, 0.0
      %v493 = vmax.f32 %v477, 0.0
      %v494 = vmax.f32 %v478, 0.0
      %v495 = vmax.f32 %v479, 0.0
      %v496 = vmax.f32 %v480, 0.0
      %v497 = vmax.f32 %v481, 0.0
      %v498 = vmax.f32 %v482, 0.0
      %v499 = vmax.f32 %v483, 0.0
      %v500 = vmax.f32 %v484, 0.0
      %501 = vst [vmem:[%s116] sm:$0xf] %v485
      %502 = vst [vmem:[%s116 + $0x4] sm:$0xf] %v486
      %503 = vst [vmem:[%s116 + $0x8] sm:$0xf] %v487
      %504 = vst [vmem:[%s116 + $0xc] sm:$0xf] %v488
      %505 = vst [vmem:[%s116 + $0x10] sm:$0xf] %v489
      %506 = vst [vmem:[%s116 + $0x14] sm:$0xf] %v490
      %507 = vst [vmem:[%s116 + $0x18] sm:$0xf] %v491
      %508 = vst [vmem:[%s116 + $0x1c] sm:$0xf] %v492
      %509 = vst [vmem:[%s116 + $0x20] sm:$0xf] %v493
      %510 = vst [vmem:[%s116 + $0x24] sm:$0xf] %v494
      %511 = vst [vmem:[%s116 + $0x28] sm:$0xf] %v495
      %512 = vst [vmem:[%s116 + $0x2c] sm:$0xf] %v496
      %513 = vst [vmem:[%s116 + $0x30] sm:$0xf] %v497
      %514 = vst [vmem:[%s116 + $0x34] sm:$0xf] %v498
      %515 = vst [vmem:[%s116 + $0x38] sm:$0xf] %v499
      %516 = vst [vmem:[%s116 + $0x3c] sm:$0xf] %v500
      %p517 = scmp.lt.s32.totalorder %s12, 1
      %s518 = scalar_select %p517, %s12, 1
      %s519 = smul.addr %s518, 16
      %s520 = smul.addr %s519, 4
      %s521 = scalar_lea.vmem %s1, %s520
      // Predicated region
      $region25: #{baseline_tab_forward.9} parent=23 // pred_check
        %p522 = pneg %p56
      $region26: #{baseline_tab_forward.9} parent=23 // pred_check_branch
        %524 = sbr.rel (%p522) target = $region28
      $region27: #{baseline_tab_forward.9} parent=23 // pred_region
        _
      $region28: #{baseline_tab_forward.9} parent=23 // pred_fallthru
        _
    $region24: #{baseline_tab_forward.9} parent=5 // pred_fallthru
      _
    %p525 = scmp.le.s32.totalorder 2, %s7
    // Predicated region
    $region29: #{baseline_tab_forward.9} parent=5 // pred_check
      %p526 = pneg %p525
    $region30: #{baseline_tab_forward.9} parent=5 // pred_check_branch
      %528 = sbr.rel (%p526) target = $region32
    $region31: #{baseline_tab_forward.9} parent=5 // pred_region
      %s529 = ssub.s32 %s7, 2
      // Predicated region
      $region33: #{baseline_tab_forward.9} parent=31 // pred_check
        %p530 = pneg %p62
      $region34: #{baseline_tab_forward.9} parent=31 // pred_check_branch
        %532 = sbr.rel (%p530) target = $region36
      $region35: #{baseline_tab_forward.9} parent=31 // pred_region
        %p533 = scmp.lt.s32.totalorder %s13, 1
        %s534 = scalar_select %p533, %s13, 1
        %s535 = smul.addr %s534, 16
        %s536 = smul.addr %s535, 4
        %s537 = scalar_lea.vmem %s1, %s536
      $region36: #{baseline_tab_forward.9} parent=31 // pred_fallthru
        _
    $region32: #{baseline_tab_forward.9} parent=5 // pred_fallthru
      _
  $region6: #{baseline_tab_forward.9} parent=0 // loop_footer
    %s11 = sadd.s32 1, %s7
  $region7: #{baseline_tab_forward.9} parent=0 // loop_footer_branch
    %6 = sbr.rel target = $region3
  $region8: #{baseline_tab_forward.9} parent=0 // loop_exit
    _

// kernel: baseline_tab_forward.8
$region0: #{baseline_tab_forward.8}
  #allocation0 [shape = 'u32[]', space=smem, size = 0x4, offset = 0x4, fixed_abs, tag = 'smem constant byte address 0x4 - core index']
  #allocation1 [shape = 'u32[144,128]{1,0:T(1,128)}', space=vmem, size = 0x12000, scoped, tag = 'internal scratch']
  %s0 = inlined_call_operand.vmem [shape: f32[128,3456], index: 0, kind: input, shape index: {}]
  %s1 = inlined_call_operand.vmem [shape: f32[3456,128], index: 1, kind: input, shape index: {}]
  %s2 = inlined_call_operand.vmem [shape: f32[1,128], index: 2, kind: input, shape index: {}]
  %s3 = inlined_call_operand.vmem [shape: f32[128,128], index: 3, kind: output, shape index: {}]
  %s4 = sld [smem:[#allocation0]]
  $region22: #{baseline_tab_forward.8} parent=0
    _
  %s6 = ssub.s32 1, %s4
  %s7 = scalar_select 0, %s6, %s4
  // Predicated region
  $region2: #{baseline_tab_forward.8} parent=0 // pred_check
    _
  $region3: #{baseline_tab_forward.8} parent=0 // pred_check_branch
    %9 = sbr.rel (0) target = $region5
  $region4: #{baseline_tab_forward.8} parent=0 // pred_region
    _
  $region5: #{baseline_tab_forward.8} parent=0 // pred_fallthru
    _
  // Predicated region
  $region6: #{baseline_tab_forward.8} parent=0 // pred_check
    _
  $region7: #{baseline_tab_forward.8} parent=0 // pred_check_branch
    %11 = sbr.rel (0) target = $region9
  $region8: #{baseline_tab_forward.8} parent=0 // pred_region
    _
  $region9: #{baseline_tab_forward.8} parent=0 // pred_fallthru
    _
  // Predicated region
  $region10: #{baseline_tab_forward.8} parent=0 // pred_check
    _
  $region11: #{baseline_tab_forward.8} parent=0 // pred_check_branch
    %13 = sbr.rel (0) target = $region13
  $region12: #{baseline_tab_forward.8} parent=0 // pred_region
    _
  $region13: #{baseline_tab_forward.8} parent=0 // pred_fallthru
    _
  %v14 = vld [vmem:[%s0] sm:$0xff]
  %v15 = vld [vmem:[%s0 + $0x8] sm:$0xff]
  %v16 = vld [vmem:[%s0 + $0x10] sm:$0xff]
  %v17 = vld [vmem:[%s0 + $0x18] sm:$0xff]
  %v18 = vld [vmem:[%s0 + $0x20] sm:$0xff]
  %v19 = vld [vmem:[%s0 + $0x28] sm:$0xff]
  %v20 = vld [vmem:[%s0 + $0x30] sm:$0xff]
  %v21 = vld [vmem:[%s0 + $0x38] sm:$0xff]
  %v22 = vld [vmem:[%s0 + $0x40] sm:$0xff]
  %v23 = vld [vmem:[%s0 + $0x48] sm:$0xff]
  %v24 = vld [vmem:[%s0 + $0x50] sm:$0xff]
  %v25 = vld [vmem:[%s0 + $0x58] sm:$0xff]
  %v26 = vld [vmem:[%s0 + $0x60] sm:$0xff]
  %v27 = vld [vmem:[%s0 + $0x68] sm:$0xff]
  %v28 = vld [vmem:[%s0 + $0x70] sm:$0xff]
  %v29 = vld [vmem:[%s0 + $0x78] sm:$0xff]
  %v30 = vld [vmem:[%s0 + $0x80] sm:$0xff]
  %v31 = vld [vmem:[%s0 + $0x88] sm:$0xff]
  %v32 = vld [vmem:[%s0 + $0x90] sm:$0xff]
  %v33 = vld [vmem:[%s0 + $0x98] sm:$0xff]
  %v34 = vld [vmem:[%s0 + $0xa0] sm:$0xff]
  %v35 = vld [vmem:[%s0 + $0xa8] sm:$0xff]
  %v36 = vld [vmem:[%s0 + $0xb0] sm:$0xff]
  %v37 = vld [vmem:[%s0 + $0xb8] sm:$0xff]
  %v38 = vld [vmem:[%s0 + $0xc0] sm:$0xff]
  %v39 = vld [vmem:[%s0 + $0xc8] sm:$0xff]
  %v40 = vld [vmem:[%s0 + $0xd0] sm:$0xff]
  %v41 = vld [vmem:[%s0 + $0xd8] sm:$0xff]
  %v42 = vld [vmem:[%s0 + $0xe0] sm:$0xff]
  %v43 = vld [vmem:[%s0 + $0xe8] sm:$0xff]
  %v44 = vld [vmem:[%s0 + $0xf0] sm:$0xff]
  %v45 = vld [vmem:[%s0 + $0xf8] sm:$0xff]
  %v46 = vld [vmem:[%s0 + $0x100] sm:$0xff]
  %v47 = vld [vmem:[%s0 + $0x108] sm:$0xff]
  %v48 = vld [vmem:[%s0 + $0x110] sm:$0xff]
  %v49 = vld [vmem:[%s0 + $0x118] sm:$0xff]
  %v50 = vld [vmem:[%s0 + $0x120] sm:$0xff]
  %v51 = vld [vmem:[%s0 + $0x128] sm:$0xff]
  %v52 = vld [vmem:[%s0 + $0x130] sm:$0xff]
  %v53 = vld [vmem:[%s0 + $0x138] sm:$0xff]
  %v54 = vld [vmem:[%s0 + $0x140] sm:$0xff]
  %v55 = vld [vmem:[%s0 + $0x148] sm:$0xff]
  %v56 = vld [vmem:[%s0 + $0x150] sm:$0xff]
  %v57 = vld [vmem:[%s0 + $0x158] sm:$0xff]
  %v58 = vld [vmem:[%s0 + $0x160] sm:$0xff]
  %v59 = vld [vmem:[%s0 + $0x168] sm:$0xff]
  %v60 = vld [vmem:[%s0 + $0x170] sm:$0xff]
  %v61 = vld [vmem:[%s0 + $0x178] sm:$0xff]
  %v62 = vld [vmem:[%s0 + $0x180] sm:$0xff]
  %v63 = vld [vmem:[%s0 + $0x188] sm:$0xff]
  %v64 = vld [vmem:[%s0 + $0x190] sm:$0xff]
  %v65 = vld [vmem:[%s0 + $0x198] sm:$0xff]
  %v66 = vld [vmem:[%s0 + $0x1a0] sm:$0xff]
  %v67 = vld [vmem:[%s0 + $0x1a8] sm:$0xff]
  %v68 = vld [vmem:[%s0 + $0x1b0] sm:$0xff]
  %v69 = vld [vmem:[%s0 + $0x1b8] sm:$0xff]
  %v70 = vld [vmem:[%s0 + $0x1c0] sm:$0xff]
  %v71 = vld [vmem:[%s0 + $0x1c8] sm:$0xff]
  %v72 = vld [vmem:[%s0 + $0x1d0] sm:$0xff]
  %v73 = vld [vmem:[%s0 + $0x1d8] sm:$0xff]
  %v74 = vld [vmem:[%s0 + $0x1e0] sm:$0xff]
  %v75 = vld [vmem:[%s0 + $0x1e8] sm:$0xff]
  %v76 = vld [vmem:[%s0 + $0x1f0] sm:$0xff]
  %v77 = vld [vmem:[%s0 + $0x1f8] sm:$0xff]
  %v78 = vld [vmem:[%s0 + $0x200] sm:$0xff]
  %v79 = vld [vmem:[%s0 + $0x208] sm:$0xff]
  %v80 = vld [vmem:[%s0 + $0x210] sm:$0xff]
  %v81 = vld [vmem:[%s0 + $0x218] sm:$0xff]
  %v82 = vld [vmem:[%s0 + $0x220] sm:$0xff]
  %v83 = vld [vmem:[%s0 + $0x228] sm:$0xff]
  %v84 = vld [vmem:[%s0 + $0x230] sm:$0xff]
  %v85 = vld [vmem:[%s0 + $0x238] sm:$0xff]
  %v86 = vld [vmem:[%s0 + $0x240] sm:$0xff]
  %v87 = vld [vmem:[%s0 + $0x248] sm:$0xff]
  %v88 = vld [vmem:[%s0 + $0x250] sm:$0xff]
  %v89 = vld [vmem:[%s0 + $0x258] sm:$0xff]
  %v90 = vld [vmem:[%s0 + $0x260] sm:$0xff]
  %v91 = vld [vmem:[%s0 + $0x268] sm:$0xff]
  %v92 = vld [vmem:[%s0 + $0x270] sm:$0xff]
  %v93 = vld [vmem:[%s0 + $0x278] sm:$0xff]
  %v94 = vld [vmem:[%s0 + $0x280] sm:$0xff]
  %v95 = vld [vmem:[%s0 + $0x288] sm:$0xff]
  %v96 = vld [vmem:[%s0 + $0x290] sm:$0xff]
  %v97 = vld [vmem:[%s0 + $0x298] sm:$0xff]
  %v98 = vld [vmem:[%s0 + $0x2a0] sm:$0xff]
  %v99 = vld [vmem:[%s0 + $0x2a8] sm:$0xff]
  %v100 = vld [vmem:[%s0 + $0x2b0] sm:$0xff]
  %v101 = vld [vmem:[%s0 + $0x2b8] sm:$0xff]
  %v102 = vld [vmem:[%s0 + $0x2c0] sm:$0xff]
  %v103 = vld [vmem:[%s0 + $0x2c8] sm:$0xff]
  %v104 = vld [vmem:[%s0 + $0x2d0] sm:$0xff]
  %v105 = vld [vmem:[%s0 + $0x2d8] sm:$0xff]
  %v106 = vld [vmem:[%s0 + $0x2e0] sm:$0xff]
  %v107 = vld [vmem:[%s0 + $0x2e8] sm:$0xff]
  %v108 = vld [vmem:[%s0 + $0x2f0] sm:$0xff]
  %v109 = vld [vmem:[%s0 + $0x2f8] sm:$0xff]
  %v110 = vld [vmem:[%s0 + $0x300] sm:$0xff]
  %v111 = vld [vmem:[%s0 + $0x308] sm:$0xff]
  %v112 = vld [vmem:[%s0 + $0x310] sm:$0xff]
  %v113 = vld [vmem:[%s0 + $0x318] sm:$0xff]
  %v114 = vld [vmem:[%s0 + $0x320] sm:$0xff]
  %v115 = vld [vmem:[%s0 + $0x328] sm:$0xff]
  %v116 = vld [vmem:[%s0 + $0x330] sm:$0xff]
  %v117 = vld [vmem:[%s0 + $0x338] sm:$0xff]
  %v118 = vld [vmem:[%s0 + $0x340] sm:$0xff]
  %v119 = vld [vmem:[%s0 + $0x348] sm:$0xff]
  %v120 = vld [vmem:[%s0 + $0x350] sm:$0xff]
  %v121 = vld [vmem:[%s0 + $0x358] sm:$0xff]
  %v122 = vld [vmem:[%s0 + $0x360] sm:$0xff]
  %v123 = vld [vmem:[%s0 + $0x368] sm:$0xff]
  %v124 = vld [vmem:[%s0 + $0x370] sm:$0xff]
  %v125 = vld [vmem:[%s0 + $0x378] sm:$0xff]
  %v126 = vld [vmem:[%s0 + $0x380] sm:$0xff]
  %v127 = vld [vmem:[%s0 + $0x388] sm:$0xff]
  %v128 = vld [vmem:[%s0 + $0x390] sm:$0xff]
  %v129 = vld [vmem:[%s0 + $0x398] sm:$0xff]
  %v130 = vld [vmem:[%s0 + $0x3a0] sm:$0xff]
  %v131 = vld [vmem:[%s0 + $0x3a8] sm:$0xff]
  %v132 = vld [vmem:[%s0 + $0x3b0] sm:$0xff]
  %v133 = vld [vmem:[%s0 + $0x3b8] sm:$0xff]
  %v134 = vld [vmem:[%s0 + $0x3c0] sm:$0xff]
  %v135 = vld [vmem:[%s0 + $0x3c8] sm:$0xff]
  %v136 = vld [vmem:[%s0 + $0x3d0] sm:$0xff]
  %v137 = vld [vmem:[%s0 + $0x3d8] sm:$0xff]
  %v138 = vld [vmem:[%s0 + $0x3e0] sm:$0xff]
  %v139 = vld [vmem:[%s0 + $0x3e8] sm:$0xff]
  %v140 = vld [vmem:[%s0 + $0x3f0] sm:$0xff]
  %v141 = vld [vmem:[%s0 + $0x3f8] sm:$0xff]
  %v142 = vld [vmem:[%s0 + $0x400] sm:$0xff]
  %v143 = vld [vmem:[%s0 + $0x408] sm:$0xff]
  %v144 = vld [vmem:[%s0 + $0x410] sm:$0xff]
  %v145 = vld [vmem:[%s0 + $0x418] sm:$0xff]
  %v146 = vld [vmem:[%s0 + $0x420] sm:$0xff]
  %v147 = vld [vmem:[%s0 + $0x428] sm:$0xff]
  %v148 = vld [vmem:[%s0 + $0x430] sm:$0xff]
  %v149 = vld [vmem:[%s0 + $0x438] sm:$0xff]
  %v150 = vld [vmem:[%s0 + $0x440] sm:$0xff]
  %v151 = vld [vmem:[%s0 + $0x448] sm:$0xff]
  %v152 = vld [vmem:[%s0 + $0x450] sm:$0xff]
  %v153 = vld [vmem:[%s0 + $0x458] sm:$0xff]
  %v154 = vld [vmem:[%s0 + $0x460] sm:$0xff]
  %v155 = vld [vmem:[%s0 + $0x468] sm:$0xff]
  %v156 = vld [vmem:[%s0 + $0x470] sm:$0xff]
  %v157 = vld [vmem:[%s0 + $0x478] sm:$0xff]
  %v158 = vld [vmem:[%s0 + $0x480] sm:$0xff]
  %v159 = vld [vmem:[%s0 + $0x488] sm:$0xff]
  %v160 = vld [vmem:[%s0 + $0x490] sm:$0xff]
  %v161 = vld [vmem:[%s0 + $0x498] sm:$0xff]
  %v162 = vld [vmem:[%s0 + $0x4a0] sm:$0xff]
  %v163 = vld [vmem:[%s0 + $0x4a8] sm:$0xff]
  %v164 = vld [vmem:[%s0 + $0x4b0] sm:$0xff]
  %v165 = vld [vmem:[%s0 + $0x4b8] sm:$0xff]
  %v166 = vld [vmem:[%s0 + $0x4c0] sm:$0xff]
  %v167 = vld [vmem:[%s0 + $0x4c8] sm:$0xff]
  %v168 = vld [vmem:[%s0 + $0x4d0] sm:$0xff]
  %v169 = vld [vmem:[%s0 + $0x4d8] sm:$0xff]
  %v170 = vld [vmem:[%s0 + $0x4e0] sm:$0xff]
  %v171 = vld [vmem:[%s0 + $0x4e8] sm:$0xff]
  %v172 = vld [vmem:[%s0 + $0x4f0] sm:$0xff]
  %v173 = vld [vmem:[%s0 + $0x4f8] sm:$0xff]
  %v174 = vld [vmem:[%s0 + $0x500] sm:$0xff]
  %v175 = vld [vmem:[%s0 + $0x508] sm:$0xff]
  %v176 = vld [vmem:[%s0 + $0x510] sm:$0xff]
  %v177 = vld [vmem:[%s0 + $0x518] sm:$0xff]
  %v178 = vld [vmem:[%s0 + $0x520] sm:$0xff]
  %v179 = vld [vmem:[%s0 + $0x528] sm:$0xff]
  %v180 = vld [vmem:[%s0 + $0x530] sm:$0xff]
  %v181 = vld [vmem:[%s0 + $0x538] sm:$0xff]
  %v182 = vld [vmem:[%s0 + $0x540] sm:$0xff]
  %v183 = vld [vmem:[%s0 + $0x548] sm:$0xff]
  %v184 = vld [vmem:[%s0 + $0x550] sm:$0xff]
  %v185 = vld [vmem:[%s0 + $0x558] sm:$0xff]
  %v186 = vld [vmem:[%s0 + $0x560] sm:$0xff]
  %v187 = vld [vmem:[%s0 + $0x568] sm:$0xff]
  %v188 = vld [vmem:[%s0 + $0x570] sm:$0xff]
  %v189 = vld [vmem:[%s0 + $0x578] sm:$0xff]
  %v190 = vld [vmem:[%s0 + $0x580] sm:$0xff]
  %v191 = vld [vmem:[%s0 + $0x588] sm:$0xff]
  %v192 = vld [vmem:[%s0 + $0x590] sm:$0xff]
  %v193 = vld [vmem:[%s0 + $0x598] sm:$0xff]
  %v194 = vld [vmem:[%s0 + $0x5a0] sm:$0xff]
  %v195 = vld [vmem:[%s0 + $0x5a8] sm:$0xff]
  %v196 = vld [vmem:[%s0 + $0x5b0] sm:$0xff]
  %v197 = vld [vmem:[%s0 + $0x5b8] sm:$0xff]
  %v198 = vld [vmem:[%s0 + $0x5c0] sm:$0xff]
  %v199 = vld [vmem:[%s0 + $0x5c8] sm:$0xff]
  %v200 = vld [vmem:[%s0 + $0x5d0] sm:$0xff]
  %v201 = vld [vmem:[%s0 + $0x5d8] sm:$0xff]
  %v202 = vld [vmem:[%s0 + $0x5e0] sm:$0xff]
  %v203 = vld [vmem:[%s0 + $0x5e8] sm:$0xff]
  %v204 = vld [vmem:[%s0 + $0x5f0] sm:$0xff]
  %v205 = vld [vmem:[%s0 + $0x5f8] sm:$0xff]
  %v206 = vld [vmem:[%s0 + $0x600] sm:$0xff]
  %v207 = vld [vmem:[%s0 + $0x608] sm:$0xff]
  %v208 = vld [vmem:[%s0 + $0x610] sm:$0xff]
  %v209 = vld [vmem:[%s0 + $0x618] sm:$0xff]
  %v210 = vld [vmem:[%s0 + $0x620] sm:$0xff]
  %v211 = vld [vmem:[%s0 + $0x628] sm:$0xff]
  %v212 = vld [vmem:[%s0 + $0x630] sm:$0xff]
  %v213 = vld [vmem:[%s0 + $0x638] sm:$0xff]
  %v214 = vld [vmem:[%s0 + $0x640] sm:$0xff]
  %v215 = vld [vmem:[%s0 + $0x648] sm:$0xff]
  %v216 = vld [vmem:[%s0 + $0x650] sm:$0xff]
  %v217 = vld [vmem:[%s0 + $0x658] sm:$0xff]
  %v218 = vld [vmem:[%s0 + $0x660] sm:$0xff]
  %v219 = vld [vmem:[%s0 + $0x668] sm:$0xff]
  %v220 = vld [vmem:[%s0 + $0x670] sm:$0xff]
  %v221 = vld [vmem:[%s0 + $0x678] sm:$0xff]
  %v222 = vld [vmem:[%s0 + $0x680] sm:$0xff]
  %v223 = vld [vmem:[%s0 + $0x688] sm:$0xff]
  %v224 = vld [vmem:[%s0 + $0x690] sm:$0xff]
  %v225 = vld [vmem:[%s0 + $0x698] sm:$0xff]
  %v226 = vld [vmem:[%s0 + $0x6a0] sm:$0xff]
  %v227 = vld [vmem:[%s0 + $0x6a8] sm:$0xff]
  %v228 = vld [vmem:[%s0 + $0x6b0] sm:$0xff]
  %v229 = vld [vmem:[%s0 + $0x6b8] sm:$0xff]
  %v230 = vld [vmem:[%s0 + $0x6c0] sm:$0xff]
  %v231 = vld [vmem:[%s0 + $0x6c8] sm:$0xff]
  %v232 = vld [vmem:[%s0 + $0x6d0] sm:$0xff]
  %v233 = vld [vmem:[%s0 + $0x6d8] sm:$0xff]
  %v234 = vld [vmem:[%s0 + $0x6e0] sm:$0xff]
  %v235 = vld [vmem:[%s0 + $0x6e8] sm:$0xff]
  %v236 = vld [vmem:[%s0 + $0x6f0] sm:$0xff]
  %v237 = vld [vmem:[%s0 + $0x6f8] sm:$0xff]
  %v238 = vld [vmem:[%s0 + $0x700] sm:$0xff]
  %v239 = vld [vmem:[%s0 + $0x708] sm:$0xff]
  %v240 = vld [vmem:[%s0 + $0x710] sm:$0xff]
  %v241 = vld [vmem:[%s0 + $0x718] sm:$0xff]
  %v242 = vld [vmem:[%s0 + $0x720] sm:$0xff]
  %v243 = vld [vmem:[%s0 + $0x728] sm:$0xff]
  %v244 = vld [vmem:[%s0 + $0x730] sm:$0xff]
  %v245 = vld [vmem:[%s0 + $0x738] sm:$0xff]
  %v246 = vld [vmem:[%s0 + $0x740] sm:$0xff]
  %v247 = vld [vmem:[%s0 + $0x748] sm:$0xff]
  %v248 = vld [vmem:[%s0 + $0x750] sm:$0xff]
  %v249 = vld [vmem:[%s0 + $0x758] sm:$0xff]
  %v250 = vld [vmem:[%s0 + $0x760] sm:$0xff]
  %v251 = vld [vmem:[%s0 + $0x768] sm:$0xff]
  %v252 = vld [vmem:[%s0 + $0x770] sm:$0xff]
  %v253 = vld [vmem:[%s0 + $0x778] sm:$0xff]
  %v254 = vld [vmem:[%s0 + $0x780] sm:$0xff]
  %v255 = vld [vmem:[%s0 + $0x788] sm:$0xff]
  %v256 = vld [vmem:[%s0 + $0x790] sm:$0xff]
  %v257 = vld [vmem:[%s0 + $0x798] sm:$0xff]
  %v258 = vld [vmem:[%s0 + $0x7a0] sm:$0xff]
  %v259 = vld [vmem:[%s0 + $0x7a8] sm:$0xff]
  %v260 = vld [vmem:[%s0 + $0x7b0] sm:$0xff]
  %v261 = vld [vmem:[%s0 + $0x7b8] sm:$0xff]
  %v262 = vld [vmem:[%s0 + $0x7c0] sm:$0xff]
  %v263 = vld [vmem:[%s0 + $0x7c8] sm:$0xff]
  %v264 = vld [vmem:[%s0 + $0x7d0] sm:$0xff]
  %v265 = vld [vmem:[%s0 + $0x7d8] sm:$0xff]
  %v266 = vld [vmem:[%s0 + $0x7e0] sm:$0xff]
  %v267 = vld [vmem:[%s0 + $0x7e8] sm:$0xff]
  %v268 = vld [vmem:[%s0 + $0x7f0] sm:$0xff]
  %v269 = vld [vmem:[%s0 + $0x7f8] sm:$0xff]
  %v270 = vld [vmem:[%s0 + $0x800] sm:$0xff]
  %v271 = vld [vmem:[%s0 + $0x808] sm:$0xff]
  %v272 = vld [vmem:[%s0 + $0x810] sm:$0xff]
  %v273 = vld [vmem:[%s0 + $0x818] sm:$0xff]
  %v274 = vld [vmem:[%s0 + $0x820] sm:$0xff]
  %v275 = vld [vmem:[%s0 + $0x828] sm:$0xff]
  %v276 = vld [vmem:[%s0 + $0x830] sm:$0xff]
  %v277 = vld [vmem:[%s0 + $0x838] sm:$0xff]
  %v278 = vld [vmem:[%s0 + $0x840] sm:$0xff]
  %v279 = vld [vmem:[%s0 + $0x848] sm:$0xff]
  %v280 = vld [vmem:[%s0 + $0x850] sm:$0xff]
  %v281 = vld [vmem:[%s0 + $0x858] sm:$0xff]
  %v282 = vld [vmem:[%s0 + $0x860] sm:$0xff]
  %v283 = vld [vmem:[%s0 + $0x868] sm:$0xff]
  %v284 = vld [vmem:[%s0 + $0x870] sm:$0xff]
  %v285 = vld [vmem:[%s0 + $0x878] sm:$0xff]
  %v286 = vld [vmem:[%s0 + $0x880] sm:$0xff]
  %v287 = vld [vmem:[%s0 + $0x888] sm:$0xff]
  %v288 = vld [vmem:[%s0 + $0x890] sm:$0xff]
  %v289 = vld [vmem:[%s0 + $0x898] sm:$0xff]
  %v290 = vld [vmem:[%s0 + $0x8a0] sm:$0xff]
  %v291 = vld [vmem:[%s0 + $0x8a8] sm:$0xff]
  %v292 = vld [vmem:[%s0 + $0x8b0] sm:$0xff]
  %v293 = vld [vmem:[%s0 + $0x8b8] sm:$0xff]
  %v294 = vld [vmem:[%s0 + $0x8c0] sm:$0xff]
  %v295 = vld [vmem:[%s0 + $0x8c8] sm:$0xff]
  %v296 = vld [vmem:[%s0 + $0x8d0] sm:$0xff]
  %v297 = vld [vmem:[%s0 + $0x8d8] sm:$0xff]
  %v298 = vld [vmem:[%s0 + $0x8e0] sm:$0xff]
  %v299 = vld [vmem:[%s0 + $0x8e8] sm:$0xff]
  %v300 = vld [vmem:[%s0 + $0x8f0] sm:$0xff]
  %v301 = vld [vmem:[%s0 + $0x8f8] sm:$0xff]
  %v302 = vld [vmem:[%s0 + $0x900] sm:$0xff]
  %v303 = vld [vmem:[%s0 + $0x908] sm:$0xff]
  %v304 = vld [vmem:[%s0 + $0x910] sm:$0xff]
  %v305 = vld [vmem:[%s0 + $0x918] sm:$0xff]
  %v306 = vld [vmem:[%s0 + $0x920] sm:$0xff]
  %v307 = vld [vmem:[%s0 + $0x928] sm:$0xff]
  %v308 = vld [vmem:[%s0 + $0x930] sm:$0xff]
  %v309 = vld [vmem:[%s0 + $0x938] sm:$0xff]
  %v310 = vld [vmem:[%s0 + $0x940] sm:$0xff]
  %v311 = vld [vmem:[%s0 + $0x948] sm:$0xff]
  %v312 = vld [vmem:[%s0 + $0x950] sm:$0xff]
  %v313 = vld [vmem:[%s0 + $0x958] sm:$0xff]
  %v314 = vld [vmem:[%s0 + $0x960] sm:$0xff]
  %v315 = vld [vmem:[%s0 + $0x968] sm:$0xff]
  %v316 = vld [vmem:[%s0 + $0x970] sm:$0xff]
  %v317 = vld [vmem:[%s0 + $0x978] sm:$0xff]
  %v318 = vld [vmem:[%s0 + $0x980] sm:$0xff]
  %v319 = vld [vmem:[%s0 + $0x988] sm:$0xff]
  %v320 = vld [vmem:[%s0 + $0x990] sm:$0xff]
  %v321 = vld [vmem:[%s0 + $0x998] sm:$0xff]
  %v322 = vld [vmem:[%s0 + $0x9a0] sm:$0xff]
  %v323 = vld [vmem:[%s0 + $0x9a8] sm:$0xff]
  %v324 = vld [vmem:[%s0 + $0x9b0] sm:$0xff]
  %v325 = vld [vmem:[%s0 + $0x9b8] sm:$0xff]
  %v326 = vld [vmem:[%s0 + $0x9c0] sm:$0xff]
  %v327 = vld [vmem:[%s0 + $0x9c8] sm:$0xff]
  %v328 = vld [vmem:[%s0 + $0x9d0] sm:$0xff]
  %v329 = vld [vmem:[%s0 + $0x9d8] sm:$0xff]
  %v330 = vld [vmem:[%s0 + $0x9e0] sm:$0xff]
  %v331 = vld [vmem:[%s0 + $0x9e8] sm:$0xff]
  %v332 = vld [vmem:[%s0 + $0x9f0] sm:$0xff]
  %v333 = vld [vmem:[%s0 + $0x9f8] sm:$0xff]
  %v334 = vld [vmem:[%s0 + $0xa00] sm:$0xff]
  %v335 = vld [vmem:[%s0 + $0xa08] sm:$0xff]
  %v336 = vld [vmem:[%s0 + $0xa10] sm:$0xff]
  %v337 = vld [vmem:[%s0 + $0xa18] sm:$0xff]
  %v338 = vld [vmem:[%s0 + $0xa20] sm:$0xff]
  %v339 = vld [vmem:[%s0 + $0xa28] sm:$0xff]
  %v340 = vld [vmem:[%s0 + $0xa30] sm:$0xff]
  %v341 = vld [vmem:[%s0 + $0xa38] sm:$0xff]
  %v342 = vld [vmem:[%s0 + $0xa40] sm:$0xff]
  %v343 = vld [vmem:[%s0 + $0xa48] sm:$0xff]
  %v344 = vld [vmem:[%s0 + $0xa50] sm:$0xff]
  %v345 = vld [vmem:[%s0 + $0xa58] sm:$0xff]
  %v346 = vld [vmem:[%s0 + $0xa60] sm:$0xff]
  %v347 = vld [vmem:[%s0 + $0xa68] sm:$0xff]
  %v348 = vld [vmem:[%s0 + $0xa70] sm:$0xff]
  %v349 = vld [vmem:[%s0 + $0xa78] sm:$0xff]
  %v350 = vld [vmem:[%s0 + $0xa80] sm:$0xff]
  %v351 = vld [vmem:[%s0 + $0xa88] sm:$0xff]
  %v352 = vld [vmem:[%s0 + $0xa90] sm:$0xff]
  %v353 = vld [vmem:[%s0 + $0xa98] sm:$0xff]
  %v354 = vld [vmem:[%s0 + $0xaa0] sm:$0xff]
  %v355 = vld [vmem:[%s0 + $0xaa8] sm:$0xff]
  %v356 = vld [vmem:[%s0 + $0xab0] sm:$0xff]
  %v357 = vld [vmem:[%s0 + $0xab8] sm:$0xff]
  %v358 = vld [vmem:[%s0 + $0xac0] sm:$0xff]
  %v359 = vld [vmem:[%s0 + $0xac8] sm:$0xff]
  %v360 = vld [vmem:[%s0 + $0xad0] sm:$0xff]
  %v361 = vld [vmem:[%s0 + $0xad8] sm:$0xff]
  %v362 = vld [vmem:[%s0 + $0xae0] sm:$0xff]
  %v363 = vld [vmem:[%s0 + $0xae8] sm:$0xff]
  %v364 = vld [vmem:[%s0 + $0xaf0] sm:$0xff]
  %v365 = vld [vmem:[%s0 + $0xaf8] sm:$0xff]
  %v366 = vld [vmem:[%s0 + $0xb00] sm:$0xff]
  %v367 = vld [vmem:[%s0 + $0xb08] sm:$0xff]
  %v368 = vld [vmem:[%s0 + $0xb10] sm:$0xff]
  %v369 = vld [vmem:[%s0 + $0xb18] sm:$0xff]
  %v370 = vld [vmem:[%s0 + $0xb20] sm:$0xff]
  %v371 = vld [vmem:[%s0 + $0xb28] sm:$0xff]
  %v372 = vld [vmem:[%s0 + $0xb30] sm:$0xff]
  %v373 = vld [vmem:[%s0 + $0xb38] sm:$0xff]
  %v374 = vld [vmem:[%s0 + $0xb40] sm:$0xff]
  %v375 = vld [vmem:[%s0 + $0xb48] sm:$0xff]
  %v376 = vld [vmem:[%s0 + $0xb50] sm:$0xff]
  %v377 = vld [vmem:[%s0 + $0xb58] sm:$0xff]
  %v378 = vld [vmem:[%s0 + $0xb60] sm:$0xff]
  %v379 = vld [vmem:[%s0 + $0xb68] sm:$0xff]
  %v380 = vld [vmem:[%s0 + $0xb70] sm:$0xff]
  %v381 = vld [vmem:[%s0 + $0xb78] sm:$0xff]
  %v382 = vld [vmem:[%s0 + $0xb80] sm:$0xff]
  %v383 = vld [vmem:[%s0 + $0xb88] sm:$0xff]
  %v384 = vld [vmem:[%s0 + $0xb90] sm:$0xff]
  %v385 = vld [vmem:[%s0 + $0xb98] sm:$0xff]
  %v386 = vld [vmem:[%s0 + $0xba0] sm:$0xff]
  %v387 = vld [vmem:[%s0 + $0xba8] sm:$0xff]
  %v388 = vld [vmem:[%s0 + $0xbb0] sm:$0xff]
  %v389 = vld [vmem:[%s0 + $0xbb8] sm:$0xff]
  %v390 = vld [vmem:[%s0 + $0xbc0] sm:$0xff]
  %v391 = vld [vmem:[%s0 + $0xbc8] sm:$0xff]
  %v392 = vld [vmem:[%s0 + $0xbd0] sm:$0xff]
  %v393 = vld [vmem:[%s0 + $0xbd8] sm:$0xff]
  %v394 = vld [vmem:[%s0 + $0xbe0] sm:$0xff]
  %v395 = vld [vmem:[%s0 + $0xbe8] sm:$0xff]
  %v396 = vld [vmem:[%s0 + $0xbf0] sm:$0xff]
  %v397 = vld [vmem:[%s0 + $0xbf8] sm:$0xff]
  %v398 = vld [vmem:[%s0 + $0xc00] sm:$0xff]
  %v399 = vld [vmem:[%s0 + $0xc08] sm:$0xff]
  %v400 = vld [vmem:[%s0 + $0xc10] sm:$0xff]
  %v401 = vld [vmem:[%s0 + $0xc18] sm:$0xff]
  %v402 = vld [vmem:[%s0 + $0xc20] sm:$0xff]
  %v403 = vld [vmem:[%s0 + $0xc28] sm:$0xff]
  %v404 = vld [vmem:[%s0 + $0xc30] sm:$0xff]
  %v405 = vld [vmem:[%s0 + $0xc38] sm:$0xff]
  %v406 = vld [vmem:[%s0 + $0xc40] sm:$0xff]
  %v407 = vld [vmem:[%s0 + $0xc48] sm:$0xff]
  %v408 = vld [vmem:[%s0 + $0xc50] sm:$0xff]
  %v409 = vld [vmem:[%s0 + $0xc58] sm:$0xff]
  %v410 = vld [vmem:[%s0 + $0xc60] sm:$0xff]
  %v411 = vld [vmem:[%s0 + $0xc68] sm:$0xff]
  %v412 = vld [vmem:[%s0 + $0xc70] sm:$0xff]
  %v413 = vld [vmem:[%s0 + $0xc78] sm:$0xff]
  %v414 = vld [vmem:[%s0 + $0xc80] sm:$0xff]
  %v415 = vld [vmem:[%s0 + $0xc88] sm:$0xff]
  %v416 = vld [vmem:[%s0 + $0xc90] sm:$0xff]
  %v417 = vld [vmem:[%s0 + $0xc98] sm:$0xff]
  %v418 = vld [vmem:[%s0 + $0xca0] sm:$0xff]
  %v419 = vld [vmem:[%s0 + $0xca8] sm:$0xff]
  %v420 = vld [vmem:[%s0 + $0xcb0] sm:$0xff]
  %v421 = vld [vmem:[%s0 + $0xcb8] sm:$0xff]
  %v422 = vld [vmem:[%s0 + $0xcc0] sm:$0xff]
  %v423 = vld [vmem:[%s0 + $0xcc8] sm:$0xff]
  %v424 = vld [vmem:[%s0 + $0xcd0] sm:$0xff]
  %v425 = vld [vmem:[%s0 + $0xcd8] sm:$0xff]
  %v426 = vld [vmem:[%s0 + $0xce0] sm:$0xff]
  %v427 = vld [vmem:[%s0 + $0xce8] sm:$0xff]
  %v428 = vld [vmem:[%s0 + $0xcf0] sm:$0xff]
  %v429 = vld [vmem:[%s0 + $0xcf8] sm:$0xff]
  %v430 = vld [vmem:[%s0 + $0xd00] sm:$0xff]
  %v431 = vld [vmem:[%s0 + $0xd08] sm:$0xff]
  %v432 = vld [vmem:[%s0 + $0xd10] sm:$0xff]
  %v433 = vld [vmem:[%s0 + $0xd18] sm:$0xff]
  %v434 = vld [vmem:[%s0 + $0xd20] sm:$0xff]
  %v435 = vld [vmem:[%s0 + $0xd28] sm:$0xff]
  %v436 = vld [vmem:[%s0 + $0xd30] sm:$0xff]
  %v437 = vld [vmem:[%s0 + $0xd38] sm:$0xff]
  %v438 = vld [vmem:[%s0 + $0xd40] sm:$0xff]
  %v439 = vld [vmem:[%s0 + $0xd48] sm:$0xff]
  %v440 = vld [vmem:[%s0 + $0xd50] sm:$0xff]
  %v441 = vld [vmem:[%s0 + $0xd58] sm:$0xff]
  %v442 = vld [vmem:[%s0 + $0xd60] sm:$0xff]
  %v443 = vld [vmem:[%s0 + $0xd68] sm:$0xff]
  %v444 = vld [vmem:[%s0 + $0xd70] sm:$0xff]
  %v445 = vld [vmem:[%s0 + $0xd78] sm:$0xff]
  %v446 = vld [vmem:[%s1] sm:$0xff]
  %v447 = vld [vmem:[%s1 + $0x8] sm:$0xff]
  %v448 = vld [vmem:[%s1 + $0x10] sm:$0xff]
  %v449 = vld [vmem:[%s1 + $0x18] sm:$0xff]
  %v450 = vld [vmem:[%s1 + $0x20] sm:$0xff]
  %v451 = vld [vmem:[%s1 + $0x28] sm:$0xff]
  %v452 = vld [vmem:[%s1 + $0x30] sm:$0xff]
  %v453 = vld [vmem:[%s1 + $0x38] sm:$0xff]
  %v454 = vld [vmem:[%s1 + $0x40] sm:$0xff]
  %v455 = vld [vmem:[%s1 + $0x48] sm:$0xff]
  %v456 = vld [vmem:[%s1 + $0x50] sm:$0xff]
  %v457 = vld [vmem:[%s1 + $0x58] sm:$0xff]
  %v458 = vld [vmem:[%s1 + $0x60] sm:$0xff]
  %v459 = vld [vmem:[%s1 + $0x68] sm:$0xff]
  %v460 = vld [vmem:[%s1 + $0x70] sm:$0xff]
  %v461 = vld [vmem:[%s1 + $0x78] sm:$0xff]
  %v462 = vld [vmem:[%s1 + $0x80] sm:$0xff]
  %v463 = vld [vmem:[%s1 + $0x88] sm:$0xff]
  %v464 = vld [vmem:[%s1 + $0x90] sm:$0xff]
  %v465 = vld [vmem:[%s1 + $0x98] sm:$0xff]
  %v466 = vld [vmem:[%s1 + $0xa0] sm:$0xff]
  %v467 = vld [vmem:[%s1 + $0xa8] sm:$0xff]
  %v468 = vld [vmem:[%s1 + $0xb0] sm:$0xff]
  %v469 = vld [vmem:[%s1 + $0xb8] sm:$0xff]
  %v470 = vld [vmem:[%s1 + $0xc0] sm:$0xff]
  %v471 = vld [vmem:[%s1 + $0xc8] sm:$0xff]
  %v472 = vld [vmem:[%s1 + $0xd0] sm:$0xff]
  %v473 = vld [vmem:[%s1 + $0xd8] sm:$0xff]
  %v474 = vld [vmem:[%s1 + $0xe0] sm:$0xff]
  %v475 = vld [vmem:[%s1 + $0xe8] sm:$0xff]
  %v476 = vld [vmem:[%s1 + $0xf0] sm:$0xff]
  %v477 = vld [vmem:[%s1 + $0xf8] sm:$0xff]
  %v478 = vld [vmem:[%s1 + $0x100] sm:$0xff]
  %v479 = vld [vmem:[%s1 + $0x108] sm:$0xff]
  %v480 = vld [vmem:[%s1 + $0x110] sm:$0xff]
  %v481 = vld [vmem:[%s1 + $0x118] sm:$0xff]
  %v482 = vld [vmem:[%s1 + $0x120] sm:$0xff]
  %v483 = vld [vmem:[%s1 + $0x128] sm:$0xff]
  %v484 = vld [vmem:[%s1 + $0x130] sm:$0xff]
  %v485 = vld [vmem:[%s1 + $0x138] sm:$0xff]
  %v486 = vld [vmem:[%s1 + $0x140] sm:$0xff]
  %v487 = vld [vmem:[%s1 + $0x148] sm:$0xff]
  %v488 = vld [vmem:[%s1 + $0x150] sm:$0xff]
  %v489 = vld [vmem:[%s1 + $0x158] sm:$0xff]
  %v490 = vld [vmem:[%s1 + $0x160] sm:$0xff]
  %v491 = vld [vmem:[%s1 + $0x168] sm:$0xff]
  %v492 = vld [vmem:[%s1 + $0x170] sm:$0xff]
  %v493 = vld [vmem:[%s1 + $0x178] sm:$0xff]
  %v494 = vld [vmem:[%s1 + $0x180] sm:$0xff]
  %v495 = vld [vmem:[%s1 + $0x188] sm:$0xff]
  %v496 = vld [vmem:[%s1 + $0x190] sm:$0xff]
  %v497 = vld [vmem:[%s1 + $0x198] sm:$0xff]
  %v498 = vld [vmem:[%s1 + $0x1a0] sm:$0xff]
  %v499 = vld [vmem:[%s1 + $0x1a8] sm:$0xff]
  %v500 = vld [vmem:[%s1 + $0x1b0] sm:$0xff]
  %v501 = vld [vmem:[%s1 + $0x1b8] sm:$0xff]
  %v502 = vld [vmem:[%s1 + $0x1c0] sm:$0xff]
  %v503 = vld [vmem:[%s1 + $0x1c8] sm:$0xff]
  %v504 = vld [vmem:[%s1 + $0x1d0] sm:$0xff]
  %v505 = vld [vmem:[%s1 + $0x1d8] sm:$0xff]
  %v506 = vld [vmem:[%s1 + $0x1e0] sm:$0xff]
  %v507 = vld [vmem:[%s1 + $0x1e8] sm:$0xff]
  %v508 = vld [vmem:[%s1 + $0x1f0] sm:$0xff]
  %v509 = vld [vmem:[%s1 + $0x1f8] sm:$0xff]
  %v510 = vld [vmem:[%s1 + $0x200] sm:$0xff]
  %v511 = vld [vmem:[%s1 + $0x208] sm:$0xff]
  %v512 = vld [vmem:[%s1 + $0x210] sm:$0xff]
  %v513 = vld [vmem:[%s1 + $0x218] sm:$0xff]
  %v514 = vld [vmem:[%s1 + $0x220] sm:$0xff]
  %v515 = vld [vmem:[%s1 + $0x228] sm:$0xff]
  %v516 = vld [vmem:[%s1 + $0x230] sm:$0xff]
  %v517 = vld [vmem:[%s1 + $0x238] sm:$0xff]
  %v518 = vld [vmem:[%s1 + $0x240] sm:$0xff]
  %v519 = vld [vmem:[%s1 + $0x248] sm:$0xff]
  %v520 = vld [vmem:[%s1 + $0x250] sm:$0xff]
  %v521 = vld [vmem:[%s1 + $0x258] sm:$0xff]
  %v522 = vld [vmem:[%s1 + $0x260] sm:$0xff]
  %v523 = vld [vmem:[%s1 + $0x268] sm:$0xff]
  %v524 = vld [vmem:[%s1 + $0x270] sm:$0xff]
  %v525 = vld [vmem:[%s1 + $0x278] sm:$0xff]
  %v526 = vld [vmem:[%s1 + $0x280] sm:$0xff]
  %v527 = vld [vmem:[%s1 + $0x288] sm:$0xff]
  %v528 = vld [vmem:[%s1 + $0x290] sm:$0xff]
  %v529 = vld [vmem:[%s1 + $0x298] sm:$0xff]
  %v530 = vld [vmem:[%s1 + $0x2a0] sm:$0xff]
  %v531 = vld [vmem:[%s1 + $0x2a8] sm:$0xff]
  %v532 = vld [vmem:[%s1 + $0x2b0] sm:$0xff]
  %v533 = vld [vmem:[%s1 + $0x2b8] sm:$0xff]
  %v534 = vld [vmem:[%s1 + $0x2c0] sm:$0xff]
  %v535 = vld [vmem:[%s1 + $0x2c8] sm:$0xff]
  %v536 = vld [vmem:[%s1 + $0x2d0] sm:$0xff]
  %v537 = vld [vmem:[%s1 + $0x2d8] sm:$0xff]
  %v538 = vld [vmem:[%s1 + $0x2e0] sm:$0xff]
  %v539 = vld [vmem:[%s1 + $0x2e8] sm:$0xff]
  %v540 = vld [vmem:[%s1 + $0x2f0] sm:$0xff]
  %v541 = vld [vmem:[%s1 + $0x2f8] sm:$0xff]
  %v542 = vld [vmem:[%s1 + $0x300] sm:$0xff]
  %v543 = vld [vmem:[%s1 + $0x308] sm:$0xff]
  %v544 = vld [vmem:[%s1 + $0x310] sm:$0xff]
  %v545 = vld [vmem:[%s1 + $0x318] sm:$0xff]
  %v546 = vld [vmem:[%s1 + $0x320] sm:$0xff]
  %v547 = vld [vmem:[%s1 + $0x328] sm:$0xff]
  %v548 = vld [vmem:[%s1 + $0x330] sm:$0xff]
  %v549 = vld [vmem:[%s1 + $0x338] sm:$0xff]
  %v550 = vld [vmem:[%s1 + $0x340] sm:$0xff]
  %v551 = vld [vmem:[%s1 + $0x348] sm:$0xff]
  %v552 = vld [vmem:[%s1 + $0x350] sm:$0xff]
  %v553 = vld [vmem:[%s1 + $0x358] sm:$0xff]
  %v554 = vld [vmem:[%s1 + $0x360] sm:$0xff]
  %v555 = vld [vmem:[%s1 + $0x368] sm:$0xff]
  %v556 = vld [vmem:[%s1 + $0x370] sm:$0xff]
  %v557 = vld [vmem:[%s1 + $0x378] sm:$0xff]
  %v558 = vld [vmem:[%s1 + $0x380] sm:$0xff]
  %v559 = vld [vmem:[%s1 + $0x388] sm:$0xff]
  %v560 = vld [vmem:[%s1 + $0x390] sm:$0xff]
  %v561 = vld [vmem:[%s1 + $0x398] sm:$0xff]
  %v562 = vld [vmem:[%s1 + $0x3a0] sm:$0xff]
  %v563 = vld [vmem:[%s1 + $0x3a8] sm:$0xff]
  %v564 = vld [vmem:[%s1 + $0x3b0] sm:$0xff]
  %v565 = vld [vmem:[%s1 + $0x3b8] sm:$0xff]
  %v566 = vld [vmem:[%s1 + $0x3c0] sm:$0xff]
  %v567 = vld [vmem:[%s1 + $0x3c8] sm:$0xff]
  %v568 = vld [vmem:[%s1 + $0x3d0] sm:$0xff]
  %v569 = vld [vmem:[%s1 + $0x3d8] sm:$0xff]
  %v570 = vld [vmem:[%s1 + $0x3e0] sm:$0xff]
  %v571 = vld [vmem:[%s1 + $0x3e8] sm:$0xff]
  %v572 = vld [vmem:[%s1 + $0x3f0] sm:$0xff]
  %v573 = vld [vmem:[%s1 + $0x3f8] sm:$0xff]
  %v574 = vld [vmem:[%s1 + $0x400] sm:$0xff]
  %v575 = vld [vmem:[%s1 + $0x408] sm:$0xff]
  %v576 = vld [vmem:[%s1 + $0x410] sm:$0xff]
  %v577 = vld [vmem:[%s1 + $0x418] sm:$0xff]
  %v578 = vld [vmem:[%s1 + $0x420] sm:$0xff]
  %v579 = vld [vmem:[%s1 + $0x428] sm:$0xff]
  %v580 = vld [vmem:[%s1 + $0x430] sm:$0xff]
  %v581 = vld [vmem:[%s1 + $0x438] sm:$0xff]
  %v582 = vld [vmem:[%s1 + $0x440] sm:$0xff]
  %v583 = vld [vmem:[%s1 + $0x448] sm:$0xff]
  %v584 = vld [vmem:[%s1 + $0x450] sm:$0xff]
  %v585 = vld [vmem:[%s1 + $0x458] sm:$0xff]
  %v586 = vld [vmem:[%s1 + $0x460] sm:$0xff]
  %v587 = vld [vmem:[%s1 + $0x468] sm:$0xff]
  %v588 = vld [vmem:[%s1 + $0x470] sm:$0xff]
  %v589 = vld [vmem:[%s1 + $0x478] sm:$0xff]
  %v590 = vld [vmem:[%s1 + $0x480] sm:$0xff]
  %v591 = vld [vmem:[%s1 + $0x488] sm:$0xff]
  %v592 = vld [vmem:[%s1 + $0x490] sm:$0xff]
  %v593 = vld [vmem:[%s1 + $0x498] sm:$0xff]
  %v594 = vld [vmem:[%s1 + $0x4a0] sm:$0xff]
  %v595 = vld [vmem:[%s1 + $0x4a8] sm:$0xff]
  %v596 = vld [vmem:[%s1 + $0x4b0] sm:$0xff]
  %v597 = vld [vmem:[%s1 + $0x4b8] sm:$0xff]
  %v598 = vld [vmem:[%s1 + $0x4c0] sm:$0xff]
  %v599 = vld [vmem:[%s1 + $0x4c8] sm:$0xff]
  %v600 = vld [vmem:[%s1 + $0x4d0] sm:$0xff]
  %v601 = vld [vmem:[%s1 + $0x4d8] sm:$0xff]
  %v602 = vld [vmem:[%s1 + $0x4e0] sm:$0xff]
  %v603 = vld [vmem:[%s1 + $0x4e8] sm:$0xff]
  %v604 = vld [vmem:[%s1 + $0x4f0] sm:$0xff]
  %v605 = vld [vmem:[%s1 + $0x4f8] sm:$0xff]
  %v606 = vld [vmem:[%s1 + $0x500] sm:$0xff]
  %v607 = vld [vmem:[%s1 + $0x508] sm:$0xff]
  %v608 = vld [vmem:[%s1 + $0x510] sm:$0xff]
  %v609 = vld [vmem:[%s1 + $0x518] sm:$0xff]
  %v610 = vld [vmem:[%s1 + $0x520] sm:$0xff]
  %v611 = vld [vmem:[%s1 + $0x528] sm:$0xff]
  %v612 = vld [vmem:[%s1 + $0x530] sm:$0xff]
  %v613 = vld [vmem:[%s1 + $0x538] sm:$0xff]
  %v614 = vld [vmem:[%s1 + $0x540] sm:$0xff]
  %v615 = vld [vmem:[%s1 + $0x548] sm:$0xff]
  %v616 = vld [vmem:[%s1 + $0x550] sm:$0xff]
  %v617 = vld [vmem:[%s1 + $0x558] sm:$0xff]
  %v618 = vld [vmem:[%s1 + $0x560] sm:$0xff]
  %v619 = vld [vmem:[%s1 + $0x568] sm:$0xff]
  %v620 = vld [vmem:[%s1 + $0x570] sm:$0xff]
  %v621 = vld [vmem:[%s1 + $0x578] sm:$0xff]
  %v622 = vld [vmem:[%s1 + $0x580] sm:$0xff]
  %v623 = vld [vmem:[%s1 + $0x588] sm:$0xff]
  %v624 = vld [vmem:[%s1 + $0x590] sm:$0xff]
  %v625 = vld [vmem:[%s1 + $0x598] sm:$0xff]
  %v626 = vld [vmem:[%s1 + $0x5a0] sm:$0xff]
  %v627 = vld [vmem:[%s1 + $0x5a8] sm:$0xff]
  %v628 = vld [vmem:[%s1 + $0x5b0] sm:$0xff]
  %v629 = vld [vmem:[%s1 + $0x5b8] sm:$0xff]
  %v630 = vld [vmem:[%s1 + $0x5c0] sm:$0xff]
  %v631 = vld [vmem:[%s1 + $0x5c8] sm:$0xff]
  %v632 = vld [vmem:[%s1 + $0x5d0] sm:$0xff]
  %v633 = vld [vmem:[%s1 + $0x5d8] sm:$0xff]
  %v634 = vld [vmem:[%s1 + $0x5e0] sm:$0xff]
  %v635 = vld [vmem:[%s1 + $0x5e8] sm:$0xff]
  %v636 = vld [vmem:[%s1 + $0x5f0] sm:$0xff]
  %v637 = vld [vmem:[%s1 + $0x5f8] sm:$0xff]
  %v638 = vld [vmem:[%s1 + $0x600] sm:$0xff]
  %v639 = vld [vmem:[%s1 + $0x608] sm:$0xff]
  %v640 = vld [vmem:[%s1 + $0x610] sm:$0xff]
  %v641 = vld [vmem:[%s1 + $0x618] sm:$0xff]
  %v642 = vld [vmem:[%s1 + $0x620] sm:$0xff]
  %v643 = vld [vmem:[%s1 + $0x628] sm:$0xff]
  %v644 = vld [vmem:[%s1 + $0x630] sm:$0xff]
  %v645 = vld [vmem:[%s1 + $0x638] sm:$0xff]
  %v646 = vld [vmem:[%s1 + $0x640] sm:$0xff]
  %v647 = vld [vmem:[%s1 + $0x648] sm:$0xff]
  %v648 = vld [vmem:[%s1 + $0x650] sm:$0xff]
  %v649 = vld [vmem:[%s1 + $0x658] sm:$0xff]
  %v650 = vld [vmem:[%s1 + $0x660] sm:$0xff]
  %v651 = vld [vmem:[%s1 + $0x668] sm:$0xff]
  %v652 = vld [vmem:[%s1 + $0x670] sm:$0xff]
  %v653 = vld [vmem:[%s1 + $0x678] sm:$0xff]
  %v654 = vld [vmem:[%s1 + $0x680] sm:$0xff]
  %v655 = vld [vmem:[%s1 + $0x688] sm:$0xff]
  %v656 = vld [vmem:[%s1 + $0x690] sm:$0xff]
  %v657 = vld [vmem:[%s1 + $0x698] sm:$0xff]
  %v658 = vld [vmem:[%s1 + $0x6a0] sm:$0xff]
  %v659 = vld [vmem:[%s1 + $0x6a8] sm:$0xff]
  %v660 = vld [vmem:[%s1 + $0x6b0] sm:$0xff]
  %v661 = vld [vmem:[%s1 + $0x6b8] sm:$0xff]
  %v662 = vld [vmem:[%s1 + $0x6c0] sm:$0xff]
  %v663 = vld [vmem:[%s1 + $0x6c8] sm:$0xff]
  %v664 = vld [vmem:[%s1 + $0x6d0] sm:$0xff]
  %v665 = vld [vmem:[%s1 + $0x6d8] sm:$0xff]
  %v666 = vld [vmem:[%s1 + $0x6e0] sm:$0xff]
  %v667 = vld [vmem:[%s1 + $0x6e8] sm:$0xff]
  %v668 = vld [vmem:[%s1 + $0x6f0] sm:$0xff]
  %v669 = vld [vmem:[%s1 + $0x6f8] sm:$0xff]
  %v670 = vld [vmem:[%s1 + $0x700] sm:$0xff]
  %v671 = vld [vmem:[%s1 + $0x708] sm:$0xff]
  %v672 = vld [vmem:[%s1 + $0x710] sm:$0xff]
  %v673 = vld [vmem:[%s1 + $0x718] sm:$0xff]
  %v674 = vld [vmem:[%s1 + $0x720] sm:$0xff]
  %v675 = vld [vmem:[%s1 + $0x728] sm:$0xff]
  %v676 = vld [vmem:[%s1 + $0x730] sm:$0xff]
  %v677 = vld [vmem:[%s1 + $0x738] sm:$0xff]
  %v678 = vld [vmem:[%s1 + $0x740] sm:$0xff]
  %v679 = vld [vmem:[%s1 + $0x748] sm:$0xff]
  %v680 = vld [vmem:[%s1 + $0x750] sm:$0xff]
  %v681 = vld [vmem:[%s1 + $0x758] sm:$0xff]
  %v682 = vld [vmem:[%s1 + $0x760] sm:$0xff]
  %v683 = vld [vmem:[%s1 + $0x768] sm:$0xff]
  %v684 = vld [vmem:[%s1 + $0x770] sm:$0xff]
  %v685 = vld [vmem:[%s1 + $0x778] sm:$0xff]
  %v686 = vld [vmem:[%s1 + $0x780] sm:$0xff]
  %v687 = vld [vmem:[%s1 + $0x788] sm:$0xff]
  %v688 = vld [vmem:[%s1 + $0x790] sm:$0xff]
  %v689 = vld [vmem:[%s1 + $0x798] sm:$0xff]
  %v690 = vld [vmem:[%s1 + $0x7a0] sm:$0xff]
  %v691 = vld [vmem:[%s1 + $0x7a8] sm:$0xff]
  %v692 = vld [vmem:[%s1 + $0x7b0] sm:$0xff]
  %v693 = vld [vmem:[%s1 + $0x7b8] sm:$0xff]
  %v694 = vld [vmem:[%s1 + $0x7c0] sm:$0xff]
  %v695 = vld [vmem:[%s1 + $0x7c8] sm:$0xff]
  %v696 = vld [vmem:[%s1 + $0x7d0] sm:$0xff]
  %v697 = vld [vmem:[%s1 + $0x7d8] sm:$0xff]
  %v698 = vld [vmem:[%s1 + $0x7e0] sm:$0xff]
  %v699 = vld [vmem:[%s1 + $0x7e8] sm:$0xff]
  %v700 = vld [vmem:[%s1 + $0x7f0] sm:$0xff]
  %v701 = vld [vmem:[%s1 + $0x7f8] sm:$0xff]
  %v702 = vld [vmem:[%s1 + $0x800] sm:$0xff]
  %v703 = vld [vmem:[%s1 + $0x808] sm:$0xff]
  %v704 = vld [vmem:[%s1 + $0x810] sm:$0xff]
  %v705 = vld [vmem:[%s1 + $0x818] sm:$0xff]
  %v706 = vld [vmem:[%s1 + $0x820] sm:$0xff]
  %v707 = vld [vmem:[%s1 + $0x828] sm:$0xff]
  %v708 = vld [vmem:[%s1 + $0x830] sm:$0xff]
  %v709 = vld [vmem:[%s1 + $0x838] sm:$0xff]
  %v710 = vld [vmem:[%s1 + $0x840] sm:$0xff]
  %v711 = vld [vmem:[%s1 + $0x848] sm:$0xff]
  %v712 = vld [vmem:[%s1 + $0x850] sm:$0xff]
  %v713 = vld [vmem:[%s1 + $0x858] sm:$0xff]
  %v714 = vld [vmem:[%s1 + $0x860] sm:$0xff]
  %v715 = vld [vmem:[%s1 + $0x868] sm:$0xff]
  %v716 = vld [vmem:[%s1 + $0x870] sm:$0xff]
  %v717 = vld [vmem:[%s1 + $0x878] sm:$0xff]
  %v718 = vld [vmem:[%s1 + $0x880] sm:$0xff]
  %v719 = vld [vmem:[%s1 + $0x888] sm:$0xff]
  %v720 = vld [vmem:[%s1 + $0x890] sm:$0xff]
  %v721 = vld [vmem:[%s1 + $0x898] sm:$0xff]
  %v722 = vld [vmem:[%s1 + $0x8a0] sm:$0xff]
  %v723 = vld [vmem:[%s1 + $0x8a8] sm:$0xff]
  %v724 = vld [vmem:[%s1 + $0x8b0] sm:$0xff]
  %v725 = vld [vmem:[%s1 + $0x8b8] sm:$0xff]
  %v726 = vld [vmem:[%s1 + $0x8c0] sm:$0xff]
  %v727 = vld [vmem:[%s1 + $0x8c8] sm:$0xff]
  %v728 = vld [vmem:[%s1 + $0x8d0] sm:$0xff]
  %v729 = vld [vmem:[%s1 + $0x8d8] sm:$0xff]
  %v730 = vld [vmem:[%s1 + $0x8e0] sm:$0xff]
  %v731 = vld [vmem:[%s1 + $0x8e8] sm:$0xff]
  %v732 = vld [vmem:[%s1 + $0x8f0] sm:$0xff]
  %v733 = vld [vmem:[%s1 + $0x8f8] sm:$0xff]
  %v734 = vld [vmem:[%s1 + $0x900] sm:$0xff]
  %v735 = vld [vmem:[%s1 + $0x908] sm:$0xff]
  %v736 = vld [vmem:[%s1 + $0x910] sm:$0xff]
  %v737 = vld [vmem:[%s1 + $0x918] sm:$0xff]
  %v738 = vld [vmem:[%s1 + $0x920] sm:$0xff]
  %v739 = vld [vmem:[%s1 + $0x928] sm:$0xff]
  %v740 = vld [vmem:[%s1 + $0x930] sm:$0xff]
  %v741 = vld [vmem:[%s1 + $0x938] sm:$0xff]
  %v742 = vld [vmem:[%s1 + $0x940] sm:$0xff]
  %v743 = vld [vmem:[%s1 + $0x948] sm:$0xff]
  %v744 = vld [vmem:[%s1 + $0x950] sm:$0xff]
  %v745 = vld [vmem:[%s1 + $0x958] sm:$0xff]
  %v746 = vld [vmem:[%s1 + $0x960] sm:$0xff]
  %v747 = vld [vmem:[%s1 + $0x968] sm:$0xff]
  %v748 = vld [vmem:[%s1 + $0x970] sm:$0xff]
  %v749 = vld [vmem:[%s1 + $0x978] sm:$0xff]
  %v750 = vld [vmem:[%s1 + $0x980] sm:$0xff]
  %v751 = vld [vmem:[%s1 + $0x988] sm:$0xff]
  %v752 = vld [vmem:[%s1 + $0x990] sm:$0xff]
  %v753 = vld [vmem:[%s1 + $0x998] sm:$0xff]
  %v754 = vld [vmem:[%s1 + $0x9a0] sm:$0xff]
  %v755 = vld [vmem:[%s1 + $0x9a8] sm:$0xff]
  %v756 = vld [vmem:[%s1 + $0x9b0] sm:$0xff]
  %v757 = vld [vmem:[%s1 + $0x9b8] sm:$0xff]
  %v758 = vld [vmem:[%s1 + $0x9c0] sm:$0xff]
  %v759 = vld [vmem:[%s1 + $0x9c8] sm:$0xff]
  %v760 = vld [vmem:[%s1 + $0x9d0] sm:$0xff]
  %v761 = vld [vmem:[%s1 + $0x9d8] sm:$0xff]
  %v762 = vld [vmem:[%s1 + $0x9e0] sm:$0xff]
  %v763 = vld [vmem:[%s1 + $0x9e8] sm:$0xff]
  %v764 = vld [vmem:[%s1 + $0x9f0] sm:$0xff]
  %v765 = vld [vmem:[%s1 + $0x9f8] sm:$0xff]
  %v766 = vld [vmem:[%s1 + $0xa00] sm:$0xff]
  %v767 = vld [vmem:[%s1 + $0xa08] sm:$0xff]
  %v768 = vld [vmem:[%s1 + $0xa10] sm:$0xff]
  %v769 = vld [vmem:[%s1 + $0xa18] sm:$0xff]
  %v770 = vld [vmem:[%s1 + $0xa20] sm:$0xff]
  %v771 = vld [vmem:[%s1 + $0xa28] sm:$0xff]
  %v772 = vld [vmem:[%s1 + $0xa30] sm:$0xff]
  %v773 = vld [vmem:[%s1 + $0xa38] sm:$0xff]
  %v774 = vld [vmem:[%s1 + $0xa40] sm:$0xff]
  %v775 = vld [vmem:[%s1 + $0xa48] sm:$0xff]
  %v776 = vld [vmem:[%s1 + $0xa50] sm:$0xff]
  %v777 = vld [vmem:[%s1 + $0xa58] sm:$0xff]
  %v778 = vld [vmem:[%s1 + $0xa60] sm:$0xff]
  %v779 = vld [vmem:[%s1 + $0xa68] sm:$0xff]
  %v780 = vld [vmem:[%s1 + $0xa70] sm:$0xff]
  %v781 = vld [vmem:[%s1 + $0xa78] sm:$0xff]
  %v782 = vld [vmem:[%s1 + $0xa80] sm:$0xff]
  %v783 = vld [vmem:[%s1 + $0xa88] sm:$0xff]
  %v784 = vld [vmem:[%s1 + $0xa90] sm:$0xff]
  %v785 = vld [vmem:[%s1 + $0xa98] sm:$0xff]
  %v786 = vld [vmem:[%s1 + $0xaa0] sm:$0xff]
  %v787 = vld [vmem:[%s1 + $0xaa8] sm:$0xff]
  %v788 = vld [vmem:[%s1 + $0xab0] sm:$0xff]
  %v789 = vld [vmem:[%s1 + $0xab8] sm:$0xff]
  %v790 = vld [vmem:[%s1 + $0xac0] sm:$0xff]
  %v791 = vld [vmem:[%s1 + $0xac8] sm:$0xff]
  %v792 = vld [vmem:[%s1 + $0xad0] sm:$0xff]
  %v793 = vld [vmem:[%s1 + $0xad8] sm:$0xff]
  %v794 = vld [vmem:[%s1 + $0xae0] sm:$0xff]
  %v795 = vld [vmem:[%s1 + $0xae8] sm:$0xff]
  %v796 = vld [vmem:[%s1 + $0xaf0] sm:$0xff]
  %v797 = vld [vmem:[%s1 + $0xaf8] sm:$0xff]
  %v798 = vld [vmem:[%s1 + $0xb00] sm:$0xff]
  %v799 = vld [vmem:[%s1 + $0xb08] sm:$0xff]
  %v800 = vld [vmem:[%s1 + $0xb10] sm:$0xff]
  %v801 = vld [vmem:[%s1 + $0xb18] sm:$0xff]
  %v802 = vld [vmem:[%s1 + $0xb20] sm:$0xff]
  %v803 = vld [vmem:[%s1 + $0xb28] sm:$0xff]
  %v804 = vld [vmem:[%s1 + $0xb30] sm:$0xff]
  %v805 = vld [vmem:[%s1 + $0xb38] sm:$0xff]
  %v806 = vld [vmem:[%s1 + $0xb40] sm:$0xff]
  %v807 = vld [vmem:[%s1 + $0xb48] sm:$0xff]
  %v808 = vld [vmem:[%s1 + $0xb50] sm:$0xff]
  %v809 = vld [vmem:[%s1 + $0xb58] sm:$0xff]
  %v810 = vld [vmem:[%s1 + $0xb60] sm:$0xff]
  %v811 = vld [vmem:[%s1 + $0xb68] sm:$0xff]
  %v812 = vld [vmem:[%s1 + $0xb70] sm:$0xff]
  %v813 = vld [vmem:[%s1 + $0xb78] sm:$0xff]
  %v814 = vld [vmem:[%s1 + $0xb80] sm:$0xff]
  %v815 = vld [vmem:[%s1 + $0xb88] sm:$0xff]
  %v816 = vld [vmem:[%s1 + $0xb90] sm:$0xff]
  %v817 = vld [vmem:[%s1 + $0xb98] sm:$0xff]
  %v818 = vld [vmem:[%s1 + $0xba0] sm:$0xff]
  %v819 = vld [vmem:[%s1 + $0xba8] sm:$0xff]
  %v820 = vld [vmem:[%s1 + $0xbb0] sm:$0xff]
  %v821 = vld [vmem:[%s1 + $0xbb8] sm:$0xff]
  %v822 = vld [vmem:[%s1 + $0xbc0] sm:$0xff]
  %v823 = vld [vmem:[%s1 + $0xbc8] sm:$0xff]
  %v824 = vld [vmem:[%s1 + $0xbd0] sm:$0xff]
  %v825 = vld [vmem:[%s1 + $0xbd8] sm:$0xff]
  %v826 = vld [vmem:[%s1 + $0xbe0] sm:$0xff]
  %v827 = vld [vmem:[%s1 + $0xbe8] sm:$0xff]
  %v828 = vld [vmem:[%s1 + $0xbf0] sm:$0xff]
  %v829 = vld [vmem:[%s1 + $0xbf8] sm:$0xff]
  %v830 = vld [vmem:[%s1 + $0xc00] sm:$0xff]
  %v831 = vld [vmem:[%s1 + $0xc08] sm:$0xff]
  %v832 = vld [vmem:[%s1 + $0xc10] sm:$0xff]
  %v833 = vld [vmem:[%s1 + $0xc18] sm:$0xff]
  %v834 = vld [vmem:[%s1 + $0xc20] sm:$0xff]
  %v835 = vld [vmem:[%s1 + $0xc28] sm:$0xff]
  %v836 = vld [vmem:[%s1 + $0xc30] sm:$0xff]
  %v837 = vld [vmem:[%s1 + $0xc38] sm:$0xff]
  %v838 = vld [vmem:[%s1 + $0xc40] sm:$0xff]
  %v839 = vld [vmem:[%s1 + $0xc48] sm:$0xff]
  %v840 = vld [vmem:[%s1 + $0xc50] sm:$0xff]
  %v841 = vld [vmem:[%s1 + $0xc58] sm:$0xff]
  %v842 = vld [vmem:[%s1 + $0xc60] sm:$0xff]
  %v843 = vld [vmem:[%s1 + $0xc68] sm:$0xff]
  %v844 = vld [vmem:[%s1 + $0xc70] sm:$0xff]
  %v845 = vld [vmem:[%s1 + $0xc78] sm:$0xff]
  %v846 = vld [vmem:[%s1 + $0xc80] sm:$0xff]
  %v847 = vld [vmem:[%s1 + $0xc88] sm:$0xff]
  %v848 = vld [vmem:[%s1 + $0xc90] sm:$0xff]
  %v849 = vld [vmem:[%s1 + $0xc98] sm:$0xff]
  %v850 = vld [vmem:[%s1 + $0xca0] sm:$0xff]
  %v851 = vld [vmem:[%s1 + $0xca8] sm:$0xff]
  %v852 = vld [vmem:[%s1 + $0xcb0] sm:$0xff]
  %v853 = vld [vmem:[%s1 + $0xcb8] sm:$0xff]
  %v854 = vld [vmem:[%s1 + $0xcc0] sm:$0xff]
  %v855 = vld [vmem:[%s1 + $0xcc8] sm:$0xff]
  %v856 = vld [vmem:[%s1 + $0xcd0] sm:$0xff]
  %v857 = vld [vmem:[%s1 + $0xcd8] sm:$0xff]
  %v858 = vld [vmem:[%s1 + $0xce0] sm:$0xff]
  %v859 = vld [vmem:[%s1 + $0xce8] sm:$0xff]
  %v860 = vld [vmem:[%s1 + $0xcf0] sm:$0xff]
  %v861 = vld [vmem:[%s1 + $0xcf8] sm:$0xff]
  %v862 = vld [vmem:[%s1 + $0xd00] sm:$0xff]
  %v863 = vld [vmem:[%s1 + $0xd08] sm:$0xff]
  %v864 = vld [vmem:[%s1 + $0xd10] sm:$0xff]
  %v865 = vld [vmem:[%s1 + $0xd18] sm:$0xff]
  %v866 = vld [vmem:[%s1 + $0xd20] sm:$0xff]
  %v867 = vld [vmem:[%s1 + $0xd28] sm:$0xff]
  %v868 = vld [vmem:[%s1 + $0xd30] sm:$0xff]
  %v869 = vld [vmem:[%s1 + $0xd38] sm:$0xff]
  %v870 = vld [vmem:[%s1 + $0xd40] sm:$0xff]
  %v871 = vld [vmem:[%s1 + $0xd48] sm:$0xff]
  %v872 = vld [vmem:[%s1 + $0xd50] sm:$0xff]
  %v873 = vld [vmem:[%s1 + $0xd58] sm:$0xff]
  %v874 = vld [vmem:[%s1 + $0xd60] sm:$0xff]
  %v875 = vld [vmem:[%s1 + $0xd68] sm:$0xff]
  %v876 = vld [vmem:[%s1 + $0xd70] sm:$0xff]
  %v877 = vld [vmem:[%s1 + $0xd78] sm:$0xff]
  %v878 = vld [vmem:[%s2] sm:$0x1]
  %v880 = vlaneseq
  %v881 = vshrl.u32 %v880, 7
  %v882 = vsub.s32 0, %v881
  %v883 = vrot.slane %v878, %v882
  %885 = vmatprep.subr.mxu0 0.0
  %886 = vmatpush1.msra.mxu0 %v446
  %887 = vmatprep.subr.mxu0 0.0
  %888 = vmatpush1.msra.mxu0 %v447
  %889 = vmatprep.subr.mxu0 0.0
  %890 = vmatpush1.msra.mxu0 %v448
  %891 = vmatprep.subr.mxu0 0.0
  %892 = vmatpush1.msra.mxu0 %v449
  %893 = vmatprep.subr.mxu0 0.0
  %894 = vmatpush1.msra.mxu0 %v450
  %895 = vmatprep.subr.mxu0 0.0
  %896 = vmatpush1.msra.mxu0 %v451
  %897 = vmatprep.subr.mxu0 0.0
  %898 = vmatpush1.msra.mxu0 %v452
  %899 = vmatprep.subr.mxu0 0.0
  %900 = vmatpush1.msra.mxu0 %v453
  %901 = vmatprep.subr.mxu0 0.0
  %902 = vmatpush1.msra.mxu0 %v454
  %903 = vmatprep.subr.mxu0 0.0
  %904 = vmatpush1.msra.mxu0 %v455
  %905 = vmatprep.subr.mxu0 0.0
  %906 = vmatpush1.msra.mxu0 %v456
  %907 = vmatprep.subr.mxu0 0.0
  %908 = vmatpush1.msra.mxu0 %v457
  %909 = vmatprep.subr.mxu0 0.0
  %910 = vmatpush1.msra.mxu0 %v458
  %911 = vmatprep.subr.mxu0 0.0
  %912 = vmatpush1.msra.mxu0 %v459
  %913 = vmatprep.subr.mxu0 0.0
  %914 = vmatpush1.msra.mxu0 %v460
  %915 = vmatprep.subr.mxu0 0.0
  %916 = vmatpush1.msra.mxu0 %v461
  %917 = vmatprep.subr.mxu0 0.0
  %918 = vmatpush1.msra.mxu0 %v462
  %919 = vmatprep.subr.mxu0 0.0
  %920 = vmatpush1.msra.mxu0 %v463
  %921 = vmatprep.subr.mxu0 0.0
  %922 = vmatpush1.msra.mxu0 %v464
  %923 = vmatprep.subr.mxu0 0.0
  %924 = vmatpush1.msra.mxu0 %v465
  %925 = vmatprep.subr.mxu0 0.0
  %926 = vmatpush1.msra.mxu0 %v466
  %927 = vmatprep.subr.mxu0 0.0
  %928 = vmatpush1.msra.mxu0 %v467
  %929 = vmatprep.subr.mxu0 0.0
  %930 = vmatpush1.msra.mxu0 %v468
  %931 = vmatprep.subr.mxu0 0.0
  %932 = vmatpush1.msra.mxu0 %v469
  %933 = vmatprep.subr.mxu0 0.0
  %934 = vmatpush1.msra.mxu0 %v470
  %935 = vmatprep.subr.mxu0 0.0
  %936 = vmatpush1.msra.mxu0 %v471
  %937 = vmatprep.subr.mxu0 0.0
  %938 = vmatpush1.msra.mxu0 %v472
  %939 = vmatprep.subr.mxu0 0.0
  %940 = vmatpush1.msra.mxu0 %v473
  %941 = vmatprep.subr.mxu0 0.0
  %942 = vmatpush1.msra.mxu0 %v474
  %943 = vmatprep.subr.mxu0 0.0
  %944 = vmatpush1.msra.mxu0 %v475
  %945 = vmatprep.subr.mxu0 0.0
  %946 = vmatpush1.msra.mxu0 %v476
  %947 = vmatprep.subr.mxu0 0.0
  %948 = vmatpush1.msra.mxu0 %v477
  %949 = vmatprep.mubr.f32.mxu0 %v15
  %950 = vmatmul.mubr.f32.gmra.mrb[0].mxu0 %v14
  %v951 = vpop.f32.mrb[0].mxu0
  %v952 = vadd.f32 %v883, %v951
  %v953 = vpop.f32.mrb[0].mxu0
  %954 = vmatprep.mubr.f32.mxu0 %v42
  %955 = vmatmul.mubr.f32.gmra.mrb[0].mxu0 %v41
  %v956 = vpop.f32.mrb[0].mxu0
  %v957 = vadd.f32 %v883, %v956
  %v958 = vpop.f32.mrb[0].mxu0
  %959 = vmatprep.mubr.f32.mxu0 %v69
  %960 = vmatmul.mubr.f32.gmra.mrb[0].mxu0 %v68
  %v961 = vpop.f32.mrb[0].mxu0
  %v962 = vadd.f32 %v883, %v961
  %v963 = vpop.f32.mrb[0].mxu0
  %964 = vmatprep.mubr.f32.mxu0 %v96
  %965 = vmatmul.mubr.f32.gmra.mrb[0].mxu0 %v95
  %v966 = vpop.f32.mrb[0].mxu0
  %v967 = vadd.f32 %v883, %v966
  %v968 = vpop.f32.mrb[0].mxu0
  %969 = vmatprep.mubr.f32.mxu0 %v123
  %970 = vmatmul.mubr.f32.gmra.mrb[0].mxu0 %v122
  %v971 = vpop.f32.mrb[0].mxu0
  %v972 = vadd.f32 %v883, %v971
  %v973 = vpop.f32.mrb[0].mxu0
  %974 = vmatprep.mubr.f32.mxu0 %v150
  %975 = vmatmul.mubr.f32.gmra.mrb[0].mxu0 %v149
  %v976 = vpop.f32.mrb[0].mxu0
  %v977 = vadd.f32 %v883, %v976
  %v978 = vpop.f32.mrb[0].mxu0
  %979 = vmatprep.mubr.f32.mxu0 %v177
  %980 = vmatmul.mubr.f32.gmra.mrb[0].mxu0 %v176
  %v981 = vpop.f32.mrb[0].mxu0
  %v982 = vadd.f32 %v883, %v981
  %v983 = vpop.f32.mrb[0].mxu0
  %984 = vmatprep.mubr.f32.mxu0 %v204
  %985 = vmatmul.mubr.f32.gmra.mrb[0].mxu0 %v203
  %v986 = vpop.f32.mrb[0].mxu0
  %v987 = vadd.f32 %v883, %v986
  %v988 = vpop.f32.mrb[0].mxu0
  %989 = vmatprep.mubr.f32.mxu0 %v231
  %990 = vmatmul.mubr.f32.gmra.mrb[0].mxu0 %v230
  %v991 = vpop.f32.mrb[0].mxu0
  %v992 = vadd.f32 %v883, %v991
  %v993 = vpop.f32.mrb[0].mxu0
  %994 = vmatprep.mubr.f32.mxu0 %v258
  %995 = vmatmul.mubr.f32.gmra.mrb[0].mxu0 %v257
  %v996 = vpop.f32.mrb[0].mxu0
  %v997 = vadd.f32 %v883, %v996
  %v998 = vpop.f32.mrb[0].mxu0
  %999 = vmatprep.mubr.f32.mxu0 %v285
  %1000 = vmatmul.mubr.f32.gmra.mrb[0].mxu0 %v284
  %v1001 = vpop.f32.mrb[0].mxu0
  %v1002 = vadd.f32 %v883, %v1001
  %v1003 = vpop.f32.mrb[0].mxu0
  %1004 = vmatprep.mubr.f32.mxu0 %v312
  %1005 = vmatmul.mubr.f32.gmra.mrb[0].mxu0 %v311
  %v1006 = vpop.f32.mrb[0].mxu0
  %v1007 = vadd.f32 %v883, %v1006
  %v1008 = vpop.f32.mrb[0].mxu0
  %1009 = vmatprep.mubr.f32.mxu0 %v339
  %1010 = vmatmul.mubr.f32.gmra.mrb[0].mxu0 %v338
  %v1011 = vpop.f32.mrb[0].mxu0
  %v1012 = vadd.f32 %v883, %v1011
  %v1013 = vpop.f32.mrb[0].mxu0
  %1014 = vmatprep.mubr.f32.mxu0 %v366
  %1015 = vmatmul.mubr.f32.gmra.mrb[0].mxu0 %v365
  %v1016 = vpop.f32.mrb[0].mxu0
  %v1017 = vadd.f32 %v883, %v1016
  %v1018 = vpop.f32.mrb[0].mxu0
  %1019 = vmatprep.mubr.f32.mxu0 %v393
  %1020 = vmatmul.mubr.f32.gmra.mrb[0].mxu0 %v392
  %v1021 = vpop.f32.mrb[0].mxu0
  %v1022 = vadd.f32 %v883, %v1021
  %v1023 = vpop.f32.mrb[0].mxu0
  %1024 = vmatprep.mubr.f32.mxu0 %v420
  %1025 = vmatmul.mubr.f32.gmra.mrb[0].mxu0 %v419
  %v1026 = vpop.f32.mrb[0].mxu0
  %v1027 = vadd.f32 %v883, %v1026
  %v1028 = vpop.f32.mrb[0].mxu0
  %1029 = vdwg.mxu0
  %1030 = vmatprep.subr.mxu0 0.0
  %1031 = vmatpush1.msra.mxu0 %v478
  %1032 = vmatprep.subr.mxu0 0.0
  %1033 = vmatpush1.msra.mxu0 %v479
  %1034 = vmatprep.subr.mxu0 0.0
  %1035 = vmatpush1.msra.mxu0 %v480
  %1036 = vmatprep.subr.mxu0 0.0
  %1037 = vmatpush1.msra.mxu0 %v481
  %1038 = vmatprep.subr.mxu0 0.0
  %1039 = vmatpush1.msra.mxu0 %v482
  %1040 = vmatprep.subr.mxu0 0.0
  %1041 = vmatpush1.msra.mxu0 %v483
  %1042 = vmatprep.subr.mxu0 0.0
  %1043 = vmatpush1.msra.mxu0 %v484
  %1044 = vmatprep.subr.mxu0 0.0
  %1045 = vmatpush1.msra.mxu0 %v485
  %1046 = vmatprep.subr.mxu0 0.0
  %1047 = vmatpush1.msra.mxu0 %v486
  %1048 = vmatprep.subr.mxu0 0.0
  %1049 = vmatpush1.msra.mxu0 %v487
  %1050 = vmatprep.subr.mxu0 0.0
  %1051 = vmatpush1.msra.mxu0 %v488
  %1052 = vmatprep.subr.mxu0 0.0
  %1053 = vmatpush1.msra.mxu0 %v489
  %1054 = vmatprep.subr.mxu0 0.0
  %1055 = vmatpush1.msra.mxu0 %v490
  %1056 = vmatprep.subr.mxu0 0.0
  %1057 = vmatpush1.msra.mxu0 %v491
  %1058 = vmatprep.subr.mxu0 0.0
  %1059 = vmatpush1.msra.mxu0 %v492
  %1060 = vmatprep.subr.mxu0 0.0
  %1061 = vmatpush1.msra.mxu0 %v493
  %1062 = vmatprep.subr.mxu0 0.0
  %1063 = vmatpush1.msra.mxu0 %v494
  %1064 = vmatprep.subr.mxu0 0.0
  %1065 = vmatpush1.msra.mxu0 %v495
  %1066 = vmatprep.subr.mxu0 0.0
  %1067 = vmatpush1.msra.mxu0 %v496
  %1068 = vmatprep.subr.mxu0 0.0
  %1069 = vmatpush1.msra.mxu0 %v497
  %1070 = vmatprep.subr.mxu0 0.0
  %1071 = vmatpush1.msra.mxu0 %v498
  %1072 = vmatprep.subr.mxu0 0.0
  %1073 = vmatpush1.msra.mxu0 %v499
  %1074 = vmatprep.subr.mxu0 0.0
  %1075 = vmatpush1.msra.mxu0 %v500
  %1076 = vmatprep.subr.mxu0 0.0
  %1077 = vmatpush1.msra.mxu0 %v501
  %1078 = vmatprep.subr.mxu0 0.0
  %1079 = vmatpush1.msra.mxu0 %v502
  %1080 = vmatprep.subr.mxu0 0.0
  %1081 = vmatpush1.msra.mxu0 %v503
  %1082 = vmatprep.subr.mxu0 0.0
  %1083 = vmatpush1.msra.mxu0 %v504
  %1084 = vmatprep.subr.mxu0 0.0
  %1085 = vmatpush1.msra.mxu0 %v505
  %1086 = vmatprep.subr.mxu0 0.0
  %1087 = vmatpush1.msra.mxu0 %v506
  %1088 = vmatprep.subr.mxu0 0.0
  %1089 = vmatpush1.msra.mxu0 %v507
  %1090 = vmatprep.subr.mxu0 0.0
  %1091 = vmatpush1.msra.mxu0 %v508
  %1092 = vmatprep.subr.mxu0 0.0
  %1093 = vmatpush1.msra.mxu0 %v509
  %1094 = vmatprep.mubr.f32.mxu0 %v17
  %1095 = vmatmul.mubr.f32.gmra.mrb[0].mxu0 %v16
  %v1096 = vpop.f32.mrb[0].mxu0
  %v1097 = vadd.f32 %v952, %v1096
  %v1098 = vpop.f32.mrb[0].mxu0
  %1099 = vmatprep.mubr.f32.mxu0 %v44
  %1100 = vmatmul.mubr.f32.gmra.mrb[0].mxu0 %v43
  %v1101 = vpop.f32.mrb[0].mxu0
  %v1102 = vadd.f32 %v957, %v1101
  %v1103 = vpop.f32.mrb[0].mxu0
  %1104 = vmatprep.mubr.f32.mxu0 %v71
  %1105 = vmatmul.mubr.f32.gmra.mrb[0].mxu0 %v70
  %v1106 = vpop.f32.mrb[0].mxu0
  %v1107 = vadd.f32 %v962, %v1106
  %v1108 = vpop.f32.mrb[0].mxu0
  %1109 = vmatprep.mubr.f32.mxu0 %v98
  %1110 = vmatmul.mubr.f32.gmra.mrb[0].mxu0 %v97
  %v1111 = vpop.f32.mrb[0].mxu0
  %v1112 = vadd.f32 %v967, %v1111
  %v1113 = vpop.f32.mrb[0].mxu0
  %1114 = vmatprep.mubr.f32.mxu0 %v125
  %1115 = vmatmul.mubr.f32.gmra.mrb[0].mxu0 %v124
  %v1116 = vpop.f32.mrb[0].mxu0
  %v1117 = vadd.f32 %v972, %v1116
  %v1118 = vpop.f32.mrb[0].mxu0
  %1119 = vmatprep.mubr.f32.mxu0 %v152
  %1120 = vmatmul.mubr.f32.gmra.mrb[0].mxu0 %v151
  %v1121 = vpop.f32.mrb[0].mxu0
  %v1122 = vadd.f32 %v977, %v1121
  %v1123 = vpop.f32.mrb[0].mxu0
  %1124 = vmatprep.mubr.f32.mxu0 %v179
  %1125 = vmatmul.mubr.f32.gmra.mrb[0].mxu0 %v178
  %v1126 = vpop.f32.mrb[0].mxu0
  %v1127 = vadd.f32 %v982, %v1126
  %v1128 = vpop.f32.mrb[0].mxu0
  %1129 = vmatprep.mubr.f32.mxu0 %v206
  %1130 = vmatmul.mubr.f32.gmra.mrb[0].mxu0 %v205
  %v1131 = vpop.f32.mrb[0].mxu0
  %v1132 = vadd.f32 %v987, %v1131
  %v1133 = vpop.f32.mrb[0].mxu0
  %1134 = vmatprep.mubr.f32.mxu0 %v233
  %1135 = vmatmul.mubr.f32.gmra.mrb[0].mxu0 %v232
  %v1136 = vpop.f32.mrb[0].mxu0
  %v1137 = vadd.f32 %v992, %v1136
  %v1138 = vpop.f32.mrb[0].mxu0
  %1139 = vmatprep.mubr.f32.mxu0 %v260
  %1140 = vmatmul.mubr.f32.gmra.mrb[0].mxu0 %v259
  %v1141 = vpop.f32.mrb[0].mxu0
  %v1142 = vadd.f32 %v997, %v1141
  %v1143 = vpop.f32.mrb[0].mxu0
  %1144 = vmatprep.mubr.f32.mxu0 %v287
  %1145 = vmatmul.mubr.f32.gmra.mrb[0].mxu0 %v286
  %v1146 = vpop.f32.mrb[0].mxu0
  %v1147 = vadd.f32 %v1002, %v1146
  %v1148 = vpop.f32.mrb[0].mxu0
  %1149 = vmatprep.mubr.f32.mxu0 %v314
  %1150 = vmatmul.mubr.f32.gmra.mrb[0].mxu0 %v313
  %v1151 = vpop.f32.mrb[0].mxu0
  %v1152 = vadd.f32 %v1007, %v1151
  %v1153 = vpop.f32.mrb[0].mxu0
  %1154 = vmatprep.mubr.f32.mxu0 %v341
  %1155 = vmatmul.mubr.f32.gmra.mrb[0].mxu0 %v340
  %v1156 = vpop.f32.mrb[0].mxu0
  %v1157 = vadd.f32 %v1012, %v1156
  %v1158 = vpop.f32.mrb[0].mxu0
  %1159 = vmatprep.mubr.f32.mxu0 %v368
  %1160 = vmatmul.mubr.f32.gmra.mrb[0].mxu0 %v367
  %v1161 = vpop.f32.mrb[0].mxu0
  %v1162 = vadd.f32 %v1017, %v1161
  %v1163 = vpop.f32.mrb[0].mxu0
  %1164 = vmatprep.mubr.f32.mxu0 %v395
  %1165 = vmatmul.mubr.f32.gmra.mrb[0].mxu0 %v394
  %v1166 = vpop.f32.mrb[0].mxu0
  %v1167 = vadd.f32 %v1022, %v1166
  %v1168 = vpop.f32.mrb[0].mxu0
  %1169 = vmatprep.mubr.f32.mxu0 %v422
  %1170 = vmatmul.mubr.f32.gmra.mrb[0].mxu0 %v421
  %v1171 = vpop.f32.mrb[0].mxu0
  %v1172 = vadd.f32 %v1027, %v1171
  %v1173 = vpop.f32.mrb[0].mxu0
  %1174 = vdwg.mxu0
  %1175 = vmatprep.subr.mxu0 0.0
  %1176 = vmatpush1.msra.mxu0 %v510
  %1177 = vmatprep.subr.mxu0 0.0
  %1178 = vmatpush1.msra.mxu0 %v511
  %1179 = vmatprep.subr.mxu0 0.0
  %1180 = vmatpush1.msra.mxu0 %v512
  %1181 = vmatprep.subr.mxu0 0.0
  %1182 = vmatpush1.msra.mxu0 %v513
  %1183 = vmatprep.subr.mxu0 0.0
  %1184 = vmatpush1.msra.mxu0 %v514
  %1185 = vmatprep.subr.mxu0 0.0
  %1186 = vmatpush1.msra.mxu0 %v515
  %1187 = vmatprep.subr.mxu0 0.0
  %1188 = vmatpush1.msra.mxu0 %v516
  %1189 = vmatprep.subr.mxu0 0.0
  %1190 = vmatpush1.msra.mxu0 %v517
  %1191 = vmatprep.subr.mxu0 0.0
  %1192 = vmatpush1.msra.mxu0 %v518
  %1193 = vmatprep.subr.mxu0 0.0
  %1194 = vmatpush1.msra.mxu0 %v519
  %1195 = vmatprep.subr.mxu0 0.0
  %1196 = vmatpush1.msra.mxu0 %v520
  %1197 = vmatprep.subr.mxu0 0.0
  %1198 = vmatpush1.msra.mxu0 %v521
  %1199 = vmatprep.subr.mxu0 0.0
  %1200 = vmatpush1.msra.mxu0 %v522
  %1201 = vmatprep.subr.mxu0 0.0
  %1202 = vmatpush1.msra.mxu0 %v523
  %1203 = vmatprep.subr.mxu0 0.0
  %1204 = vmatpush1.msra.mxu0 %v524
  %1205 = vmatprep.subr.mxu0 0.0
  %1206 = vmatpush1.msra.mxu0 %v525
  %1207 = vmatprep.subr.mxu0 0.0
  %1208 = vmatpush1.msra.mxu0 %v526
  %1209 = vmatprep.subr.mxu0 0.0
  %1210 = vmatpush1.msra.mxu0 %v527
  %1211 = vmatprep.subr.mxu0 0.0
  %1212 = vmatpush1.msra.mxu0 %v528
  %1213 = vmatprep.subr.mxu0 0.0
  %1214 = vmatpush1.msra.mxu0 %v529
  %1215 = vmatprep.subr.mxu0 0.0
  %1216 = vmatpush1.msra.mxu0 %v530
  %1217 = vmatprep.subr.mxu0 0.0
  %1218 = vmatpush1.msra.mxu0 %v531
  %1219 = vmatprep.subr.mxu0 0.0
  %1220 = vmatpush1.msra.mxu0 %v532
  %1221 = vmatprep.subr.mxu0 0.0
  %1222 = vmatpush1.msra.mxu0 %v533
  %1223 = vmatprep.subr.mxu0 0.0
  %1224 = vmatpush1.msra.mxu0 %v534
  %1225 = vmatprep.subr.mxu0 0.0
  %1226 = vmatpush1.msra.mxu0 %v535
  %1227 = vmatprep.subr.mxu0 0.0
  %1228 = vmatpush1.msra.mxu0 %v536
  %1229 = vmatprep.subr.mxu0 0.0
  %1230 = vmatpush1.msra.mxu0 %v537
  %1231 = vmatprep.subr.mxu0 0.0
  %1232 = vmatpush1.msra.mxu0 %v538
  %1233 = vmatprep.subr.mxu0 0.0
  %1234 = vmatpush1.msra.mxu0 %v539
  %1235 = vmatprep.subr.mxu0 0.0
  %1236 = vmatpush1.msra.mxu0 %v540
  %1237 = vmatprep.subr.mxu0 0.0
  %1238 = vmatpush1.msra.mxu0 %v541
  %1239 = vmatprep.mubr.f32.mxu0 %v19
  %1240 = vmatmul.mubr.f32.gmra.mrb[0].mxu0 %v18
  %v1241 = vpop.f32.mrb[0].mxu0
  %v1242 = vadd.f32 %v1097, %v1241
  %v1243 = vpop.f32.mrb[0].mxu0
  %1244 = vmatprep.mubr.f32.mxu0 %v46
  %1245 = vmatmul.mubr.f32.gmra.mrb[0].mxu0 %v45
  %v1246 = vpop.f32.mrb[0].mxu0
  %v1247 = vadd.f32 %v1102, %v1246
  %v1248 = vpop.f32.mrb[0].mxu0
  %1249 = vmatprep.mubr.f32.mxu0 %v73
  %1250 = vmatmul.mubr.f32.gmra.mrb[0].mxu0 %v72
  %v1251 = vpop.f32.mrb[0].mxu0
  %v1252 = vadd.f32 %v1107, %v1251
  %v1253 = vpop.f32.mrb[0].mxu0
  %1254 = vmatprep.mubr.f32.mxu0 %v100
  %1255 = vmatmul.mubr.f32.gmra.mrb[0].mxu0 %v99
  %v1256 = vpop.f32.mrb[0].mxu0
  %v1257 = vadd.f32 %v1112, %v1256
  %v1258 = vpop.f32.mrb[0].mxu0
  %1259 = vmatprep.mubr.f32.mxu0 %v127
  %1260 = vmatmul.mubr.f32.gmra.mrb[0].mxu0 %v126
  %v1261 = vpop.f32.mrb[0].mxu0
  %v1262 = vadd.f32 %v1117, %v1261
  %v1263 = vpop.f32.mrb[0].mxu0
  %1264 = vmatprep.mubr.f32.mxu0 %v154
  %1265 = vmatmul.mubr.f32.gmra.mrb[0].mxu0 %v153
  %v1266 = vpop.f32.mrb[0].mxu0
  %v1267 = vadd.f32 %v1122, %v1266
  %v1268 = vpop.f32.mrb[0].mxu0
  %1269 = vmatprep.mubr.f32.mxu0 %v181
  %1270 = vmatmul.mubr.f32.gmra.mrb[0].mxu0 %v180
  %v1271 = vpop.f32.mrb[0].mxu0
  %v1272 = vadd.f32 %v1127, %v1271
  %v1273 = vpop.f32.mrb[0].mxu0
  %1274 = vmatprep.mubr.f32.mxu0 %v208
  %1275 = vmatmul.mubr.f32.gmra.mrb[0].mxu0 %v207
  %v1276 = vpop.f32.mrb[0].mxu0
  %v1277 = vadd.f32 %v1132, %v1276
  %v1278 = vpop.f32.mrb[0].mxu0
  %1279 = vmatprep.mubr.f32.mxu0 %v235
  %1280 = vmatmul.mubr.f32.gmra.mrb[0].mxu0 %v234
  %v1281 = vpop.f32.mrb[0].mxu0
  %v1282 = vadd.f32 %v1137, %v1281
  %v1283 = vpop.f32.mrb[0].mxu0
  %1284 = vmatprep.mubr.f32.mxu0 %v262
  %1285 = vmatmul.mubr.f32.gmra.mrb[0].mxu0 %v261
  %v1286 = vpop.f32.mrb[0].mxu0
  %v1287 = vadd.f32 %v1142, %v1286
  %v1288 = vpop.f32.mrb[0].mxu0
  %1289 = vmatprep.mubr.f32.mxu0 %v289
  %1290 = vmatmul.mubr.f32.gmra.mrb[0].mxu0 %v288
  %v1291 = vpop.f32.mrb[0].mxu0
  %v1292 = vadd.f32 %v1147, %v1291
  %v1293 = vpop.f32.mrb[0].mxu0
  %1294 = vmatprep.mubr.f32.mxu0 %v316
  %1295 = vmatmul.mubr.f32.gmra.mrb[0].mxu0 %v315
  %v1296 = vpop.f32.mrb[0].mxu0
  %v1297 = vadd.f32 %v1152, %v1296
  %v1298 = vpop.f32.mrb[0].mxu0
  %1299 = vmatprep.mubr.f32.mxu0 %v343
  %1300 = vmatmul.mubr.f32.gmra.mrb[0].mxu0 %v342
  %v1301 = vpop.f32.mrb[0].mxu0
  %v1302 = vadd.f32 %v1157, %v1301
  %v1303 = vpop.f32.mrb[0].mxu0
  %1304 = vmatprep.mubr.f32.mxu0 %v370
  %1305 = vmatmul.mubr.f32.gmra.mrb[0].mxu0 %v369
  %v1306 = vpop.f32.mrb[0].mxu0
  %v1307 = vadd.f32 %v1162, %v1306
  %v1308 = vpop.f32.mrb[0].mxu0
  %1309 = vmatprep.mubr.f32.mxu0 %v397
  %1310 = vmatmul.mubr.f32.gmra.mrb[0].mxu0 %v396
  %v1311 = vpop.f32.mrb[0].mxu0
  %v1312 = vadd.f32 %v1167, %v1311
  %v1313 = vpop.f32.mrb[0].mxu0
  %1314 = vmatprep.mubr.f32.mxu0 %v424
  %1315 = vmatmul.mubr.f32.gmra.mrb[0].mxu0 %v423
  %v1316 = vpop.f32.mrb[0].mxu0
  %v1317 = vadd.f32 %v1172, %v1316
  %v1318 = vpop.f32.mrb[0].mxu0
  %1319 = vdwg.mxu0
  %1320 = vmatprep.subr.mxu0 0.0
  %1321 = vmatpush1.msra.mxu0 %v542
  %1322 = vmatprep.subr.mxu0 0.0
  %1323 = vmatpush1.msra.mxu0 %v543
  %1324 = vmatprep.subr.mxu0 0.0
  %1325 = vmatpush1.msra.mxu0 %v544
  %1326 = vmatprep.subr.mxu0 0.0
  %1327 = vmatpush1.msra.mxu0 %v545
  %1328 = vmatprep.subr.mxu0 0.0
  %1329 = vmatpush1.msra.mxu0 %v546
  %1330 = vmatprep.subr.mxu0 0.0
  %1331 = vmatpush1.msra.mxu0 %v547
  %1332 = vmatprep.subr.mxu0 0.0
  %1333 = vmatpush1.msra.mxu0 %v548
  %1334 = vmatprep.subr.mxu0 0.0
  %1335 = vmatpush1.msra.mxu0 %v549
  %1336 = vmatprep.subr.mxu0 0.0
  %1337 = vmatpush1.msra.mxu0 %v550
  %1338 = vmatprep.subr.mxu0 0.0
  %1339 = vmatpush1.msra.mxu0 %v551
  %1340 = vmatprep.subr.mxu0 0.0
  %1341 = vmatpush1.msra.mxu0 %v552
  %1342 = vmatprep.subr.mxu0 0.0
  %1343 = vmatpush1.msra.mxu0 %v553
  %1344 = vmatprep.subr.mxu0 0.0
  %1345 = vmatpush1.msra.mxu0 %v554
  %1346 = vmatprep.subr.mxu0 0.0
  %1347 = vmatpush1.msra.mxu0 %v555
  %1348 = vmatprep.subr.mxu0 0.0
  %1349 = vmatpush1.msra.mxu0 %v556
  %1350 = vmatprep.subr.mxu0 0.0
  %1351 = vmatpush1.msra.mxu0 %v557
  %1352 = vmatprep.subr.mxu0 0.0
  %1353 = vmatpush1.msra.mxu0 %v558
  %1354 = vmatprep.subr.mxu0 0.0
  %1355 = vmatpush1.msra.mxu0 %v559
  %1356 = vmatprep.subr.mxu0 0.0
  %1357 = vmatpush1.msra.mxu0 %v560
  %1358 = vmatprep.subr.mxu0 0.0
  %1359 = vmatpush1.msra.mxu0 %v561
  %1360 = vmatprep.subr.mxu0 0.0
  %1361 = vmatpush1.msra.mxu0 %v562
  %1362 = vmatprep.subr.mxu0 0.0
  %1363 = vmatpush1.msra.mxu0 %v563
  %1364 = vmatprep.subr.mxu0 0.0
  %1365 = vmatpush1.msra.mxu0 %v564
  %1366 = vmatprep.subr.mxu0 0.0
  %1367 = vmatpush1.msra.mxu0 %v565
  %1368 = vmatprep.subr.mxu0 0.0
  %1369 = vmatpush1.msra.mxu0 %v566
  %1370 = vmatprep.subr.mxu0 0.0
  %1371 = vmatpush1.msra.mxu0 %v567
  %1372 = vmatprep.subr.mxu0 0.0
  %1373 = vmatpush1.msra.mxu0 %v568
  %1374 = vmatprep.subr.mxu0 0.0
  %1375 = vmatpush1.msra.mxu0 %v569
  %1376 = vmatprep.subr.mxu0 0.0
  %1377 = vmatpush1.msra.mxu0 %v570
  %1378 = vmatprep.subr.mxu0 0.0
  %1379 = vmatpush1.msra.mxu0 %v571
  %1380 = vmatprep.subr.mxu0 0.0
  %1381 = vmatpush1.msra.mxu0 %v572
  %1382 = vmatprep.subr.mxu0 0.0
  %1383 = vmatpush1.msra.mxu0 %v573
  %1384 = vmatprep.mubr.f32.mxu0 %v21
  %1385 = vmatmul.mubr.f32.gmra.mrb[0].mxu0 %v20
  %v1386 = vpop.f32.mrb[0].mxu0
  %v1387 = vadd.f32 %v1242, %v1386
  %v1388 = vpop.f32.mrb[0].mxu0
  %1389 = vmatprep.mubr.f32.mxu0 %v48
  %1390 = vmatmul.mubr.f32.gmra.mrb[0].mxu0 %v47
  %v1391 = vpop.f32.mrb[0].mxu0
  %v1392 = vadd.f32 %v1247, %v1391
  %v1393 = vpop.f32.mrb[0].mxu0
  %1394 = vmatprep.mubr.f32.mxu0 %v75
  %1395 = vmatmul.mubr.f32.gmra.mrb[0].mxu0 %v74
  %v1396 = vpop.f32.mrb[0].mxu0
  %v1397 = vadd.f32 %v1252, %v1396
  %v1398 = vpop.f32.mrb[0].mxu0
  %1399 = vmatprep.mubr.f32.mxu0 %v102
  %1400 = vmatmul.mubr.f32.gmra.mrb[0].mxu0 %v101
  %v1401 = vpop.f32.mrb[0].mxu0
  %v1402 = vadd.f32 %v1257, %v1401
  %v1403 = vpop.f32.mrb[0].mxu0
  %1404 = vmatprep.mubr.f32.mxu0 %v129
  %1405 = vmatmul.mubr.f32.gmra.mrb[0].mxu0 %v128
  %v1406 = vpop.f32.mrb[0].mxu0
  %v1407 = vadd.f32 %v1262, %v1406
  %v1408 = vpop.f32.mrb[0].mxu0
  %1409 = vmatprep.mubr.f32.mxu0 %v156
  %1410 = vmatmul.mubr.f32.gmra.mrb[0].mxu0 %v155
  %v1411 = vpop.f32.mrb[0].mxu0
  %v1412 = vadd.f32 %v1267, %v1411
  %v1413 = vpop.f32.mrb[0].mxu0
  %1414 = vmatprep.mubr.f32.mxu0 %v183
  %1415 = vmatmul.mubr.f32.gmra.mrb[0].mxu0 %v182
  %v1416 = vpop.f32.mrb[0].mxu0
  %v1417 = vadd.f32 %v1272, %v1416
  %v1418 = vpop.f32.mrb[0].mxu0
  %1419 = vmatprep.mubr.f32.mxu0 %v210
  %1420 = vmatmul.mubr.f32.gmra.mrb[0].mxu0 %v209
  %v1421 = vpop.f32.mrb[0].mxu0
  %v1422 = vadd.f32 %v1277, %v1421
  %v1423 = vpop.f32.mrb[0].mxu0
  %1424 = vmatprep.mubr.f32.mxu0 %v237
  %1425 = vmatmul.mubr.f32.gmra.mrb[0].mxu0 %v236
  %v1426 = vpop.f32.mrb[0].mxu0
  %v1427 = vadd.f32 %v1282, %v1426
  %v1428 = vpop.f32.mrb[0].mxu0
  %1429 = vmatprep.mubr.f32.mxu0 %v264
  %1430 = vmatmul.mubr.f32.gmra.mrb[0].mxu0 %v263
  %v1431 = vpop.f32.mrb[0].mxu0
  %v1432 = vadd.f32 %v1287, %v1431
  %v1433 = vpop.f32.mrb[0].mxu0
  %1434 = vmatprep.mubr.f32.mxu0 %v291
  %1435 = vmatmul.mubr.f32.gmra.mrb[0].mxu0 %v290
  %v1436 = vpop.f32.mrb[0].mxu0
  %v1437 = vadd.f32 %v1292, %v1436
  %v1438 = vpop.f32.mrb[0].mxu0
  %1439 = vmatprep.mubr.f32.mxu0 %v318
  %1440 = vmatmul.mubr.f32.gmra.mrb[0].mxu0 %v317
  %v1441 = vpop.f32.mrb[0].mxu0
  %v1442 = vadd.f32 %v1297, %v1441
  %v1443 = vpop.f32.mrb[0].mxu0
  %1444 = vmatprep.mubr.f32.mxu0 %v345
  %1445 = vmatmul.mubr.f32.gmra.mrb[0].mxu0 %v344
  %v1446 = vpop.f32.mrb[0].mxu0
  %v1447 = vadd.f32 %v1302, %v1446
  %v1448 = vpop.f32.mrb[0].mxu0
  %1449 = vmatprep.mubr.f32.mxu0 %v372
  %1450 = vmatmul.mubr.f32.gmra.mrb[0].mxu0 %v371
  %v1451 = vpop.f32.mrb[0].mxu0
  %v1452 = vadd.f32 %v1307, %v1451
  %v1453 = vpop.f32.mrb[0].mxu0
  %1454 = vmatprep.mubr.f32.mxu0 %v399
  %1455 = vmatmul.mubr.f32.gmra.mrb[0].mxu0 %v398
  %v1456 = vpop.f32.mrb[0].mxu0
  %v1457 = vadd.f32 %v1312, %v1456
  %v1458 = vpop.f32.mrb[0].mxu0
  %1459 = vmatprep.mubr.f32.mxu0 %v426
  %1460 = vmatmul.mubr.f32.gmra.mrb[0].mxu0 %v425
  %v1461 = vpop.f32.mrb[0].mxu0
  %v1462 = vadd.f32 %v1317, %v1461
  %v1463 = vpop.f32.mrb[0].mxu0
  %1464 = vdwg.mxu0
  %1465 = vmatprep.subr.mxu0 0.0
  %1466 = vmatpush1.msra.mxu0 %v574
  %1467 = vmatprep.subr.mxu0 0.0
  %1468 = vmatpush1.msra.mxu0 %v575
  %1469 = vmatprep.subr.mxu0 0.0
  %1470 = vmatpush1.msra.mxu0 %v576
  %1471 = vmatprep.subr.mxu0 0.0
  %1472 = vmatpush1.msra.mxu0 %v577
  %1473 = vmatprep.subr.mxu0 0.0
  %1474 = vmatpush1.msra.mxu0 %v578
  %1475 = vmatprep.subr.mxu0 0.0
  %1476 = vmatpush1.msra.mxu0 %v579
  %1477 = vmatprep.subr.mxu0 0.0
  %1478 = vmatpush1.msra.mxu0 %v580
  %1479 = vmatprep.subr.mxu0 0.0
  %1480 = vmatpush1.msra.mxu0 %v581
  %1481 = vmatprep.subr.mxu0 0.0
  %1482 = vmatpush1.msra.mxu0 %v582
  %1483 = vmatprep.subr.mxu0 0.0
  %1484 = vmatpush1.msra.mxu0 %v583
  %1485 = vmatprep.subr.mxu0 0.0
  %1486 = vmatpush1.msra.mxu0 %v584
  %1487 = vmatprep.subr.mxu0 0.0
  %1488 = vmatpush1.msra.mxu0 %v585
  %1489 = vmatprep.subr.mxu0 0.0
  %1490 = vmatpush1.msra.mxu0 %v586
  %1491 = vmatprep.subr.mxu0 0.0
  %1492 = vmatpush1.msra.mxu0 %v587
  %1493 = vmatprep.subr.mxu0 0.0
  %1494 = vmatpush1.msra.mxu0 %v588
  %1495 = vmatprep.subr.mxu0 0.0
  %1496 = vmatpush1.msra.mxu0 %v589
  %1497 = vmatprep.subr.mxu0 0.0
  %1498 = vmatpush1.msra.mxu0 %v590
  %1499 = vmatprep.subr.mxu0 0.0
  %1500 = vmatpush1.msra.mxu0 %v591
  %1501 = vmatprep.subr.mxu0 0.0
  %1502 = vmatpush1.msra.mxu0 %v592
  %1503 = vmatprep.subr.mxu0 0.0
  %1504 = vmatpush1.msra.mxu0 %v593
  %1505 = vmatprep.subr.mxu0 0.0
  %1506 = vmatpush1.msra.mxu0 %v594
  %1507 = vmatprep.subr.mxu0 0.0
  %1508 = vmatpush1.msra.mxu0 %v595
  %1509 = vmatprep.subr.mxu0 0.0
  %1510 = vmatpush1.msra.mxu0 %v596
  %1511 = vmatprep.subr.mxu0 0.0
  %1512 = vmatpush1.msra.mxu0 %v597
  %1513 = vmatprep.subr.mxu0 0.0
  %1514 = vmatpush1.msra.mxu0 %v598
  %1515 = vmatprep.subr.mxu0 0.0
  %1516 = vmatpush1.msra.mxu0 %v599
  %1517 = vmatprep.subr.mxu0 0.0
  %1518 = vmatpush1.msra.mxu0 %v600
  %1519 = vmatprep.subr.mxu0 0.0
  %1520 = vmatpush1.msra.mxu0 %v601
  %1521 = vmatprep.subr.mxu0 0.0
  %1522 = vmatpush1.msra.mxu0 %v602
  %1523 = vmatprep.subr.mxu0 0.0
  %1524 = vmatpush1.msra.mxu0 %v603
  %1525 = vmatprep.subr.mxu0 0.0
  %1526 = vmatpush1.msra.mxu0 %v604
  %1527 = vmatprep.subr.mxu0 0.0
  %1528 = vmatpush1.msra.mxu0 %v605
  %1529 = vmatprep.mubr.f32.mxu0 %v23
  %1530 = vmatmul.mubr.f32.gmra.mrb[0].mxu0 %v22
  %v1531 = vpop.f32.mrb[0].mxu0
  %v1532 = vadd.f32 %v1387, %v1531
  %v1533 = vpop.f32.mrb[0].mxu0
  %1534 = vmatprep.mubr.f32.mxu0 %v50
  %1535 = vmatmul.mubr.f32.gmra.mrb[0].mxu0 %v49
  %v1536 = vpop.f32.mrb[0].mxu0
  %v1537 = vadd.f32 %v1392, %v1536
  %v1538 = vpop.f32.mrb[0].mxu0
  %1539 = vmatprep.mubr.f32.mxu0 %v77
  %1540 = vmatmul.mubr.f32.gmra.mrb[0].mxu0 %v76
  %v1541 = vpop.f32.mrb[0].mxu0
  %v1542 = vadd.f32 %v1397, %v1541
  %v1543 = vpop.f32.mrb[0].mxu0
  %1544 = vmatprep.mubr.f32.mxu0 %v104
  %1545 = vmatmul.mubr.f32.gmra.mrb[0].mxu0 %v103
  %v1546 = vpop.f32.mrb[0].mxu0
  %v1547 = vadd.f32 %v1402, %v1546
  %v1548 = vpop.f32.mrb[0].mxu0
  %1549 = vmatprep.mubr.f32.mxu0 %v131
  %1550 = vmatmul.mubr.f32.gmra.mrb[0].mxu0 %v130
  %v1551 = vpop.f32.mrb[0].mxu0
  %v1552 = vadd.f32 %v1407, %v1551
  %v1553 = vpop.f32.mrb[0].mxu0
  %1554 = vmatprep.mubr.f32.mxu0 %v158
  %1555 = vmatmul.mubr.f32.gmra.mrb[0].mxu0 %v157
  %v1556 = vpop.f32.mrb[0].mxu0
  %v1557 = vadd.f32 %v1412, %v1556
  %v1558 = vpop.f32.mrb[0].mxu0
  %1559 = vmatprep.mubr.f32.mxu0 %v185
  %1560 = vmatmul.mubr.f32.gmra.mrb[0].mxu0 %v184
  %v1561 = vpop.f32.mrb[0].mxu0
  %v1562 = vadd.f32 %v1417, %v1561
  %v1563 = vpop.f32.mrb[0].mxu0
  %1564 = vmatprep.mubr.f32.mxu0 %v212
  %1565 = vmatmul.mubr.f32.gmra.mrb[0].mxu0 %v211
  %v1566 = vpop.f32.mrb[0].mxu0
  %v1567 = vadd.f32 %v1422, %v1566
  %v1568 = vpop.f32.mrb[0].mxu0
  %1569 = vmatprep.mubr.f32.mxu0 %v239
  %1570 = vmatmul.mubr.f32.gmra.mrb[0].mxu0 %v238
  %v1571 = vpop.f32.mrb[0].mxu0
  %v1572 = vadd.f32 %v1427, %v1571
  %v1573 = vpop.f32.mrb[0].mxu0
  %1574 = vmatprep.mubr.f32.mxu0 %v266
  %1575 = vmatmul.mubr.f32.gmra.mrb[0].mxu0 %v265
  %v1576 = vpop.f32.mrb[0].mxu0
  %v1577 = vadd.f32 %v1432, %v1576
  %v1578 = vpop.f32.mrb[0].mxu0
  %1579 = vmatprep.mubr.f32.mxu0 %v293
  %1580 = vmatmul.mubr.f32.gmra.mrb[0].mxu0 %v292
  %v1581 = vpop.f32.mrb[0].mxu0
  %v1582 = vadd.f32 %v1437, %v1581
  %v1583 = vpop.f32.mrb[0].mxu0
  %1584 = vmatprep.mubr.f32.mxu0 %v320
  %1585 = vmatmul.mubr.f32.gmra.mrb[0].mxu0 %v319
  %v1586 = vpop.f32.mrb[0].mxu0
  %v1587 = vadd.f32 %v1442, %v1586
  %v1588 = vpop.f32.mrb[0].mxu0
  %1589 = vmatprep.mubr.f32.mxu0 %v347
  %1590 = vmatmul.mubr.f32.gmra.mrb[0].mxu0 %v346
  %v1591 = vpop.f32.mrb[0].mxu0
  %v1592 = vadd.f32 %v1447, %v1591
  %v1593 = vpop.f32.mrb[0].mxu0
  %1594 = vmatprep.mubr.f32.mxu0 %v374
  %1595 = vmatmul.mubr.f32.gmra.mrb[0].mxu0 %v373
  %v1596 = vpop.f32.mrb[0].mxu0
  %v1597 = vadd.f32 %v1452, %v1596
  %v1598 = vpop.f32.mrb[0].mxu0
  %1599 = vmatprep.mubr.f32.mxu0 %v401
  %1600 = vmatmul.mubr.f32.gmra.mrb[0].mxu0 %v400
  %v1601 = vpop.f32.mrb[0].mxu0
  %v1602 = vadd.f32 %v1457, %v1601
  %v1603 = vpop.f32.mrb[0].mxu0
  %1604 = vmatprep.mubr.f32.mxu0 %v428
  %1605 = vmatmul.mubr.f32.gmra.mrb[0].mxu0 %v427
  %v1606 = vpop.f32.mrb[0].mxu0
  %v1607 = vadd.f32 %v1462, %v1606
  %v1608 = vpop.f32.mrb[0].mxu0
  %1609 = vdwg.mxu0
  %1610 = vmatprep.subr.mxu0 0.0
  %1611 = vmatpush1.msra.mxu0 %v606
  %1612 = vmatprep.subr.mxu0 0.0
  %1613 = vmatpush1.msra.mxu0 %v607
  %1614 = vmatprep.subr.mxu0 0.0
  %1615 = vmatpush1.msra.mxu0 %v608
  %1616 = vmatprep.subr.mxu0 0.0
  %1617 = vmatpush1.msra.mxu0 %v609
  %1618 = vmatprep.subr.mxu0 0.0
  %1619 = vmatpush1.msra.mxu0 %v610
  %1620 = vmatprep.subr.mxu0 0.0
  %1621 = vmatpush1.msra.mxu0 %v611
  %1622 = vmatprep.subr.mxu0 0.0
  %1623 = vmatpush1.msra.mxu0 %v612
  %1624 = vmatprep.subr.mxu0 0.0
  %1625 = vmatpush1.msra.mxu0 %v613
  %1626 = vmatprep.subr.mxu0 0.0
  %1627 = vmatpush1.msra.mxu0 %v614
  %1628 = vmatprep.subr.mxu0 0.0
  %1629 = vmatpush1.msra.mxu0 %v615
  %1630 = vmatprep.subr.mxu0 0.0
  %1631 = vmatpush1.msra.mxu0 %v616
  %1632 = vmatprep.subr.mxu0 0.0
  %1633 = vmatpush1.msra.mxu0 %v617
  %1634 = vmatprep.subr.mxu0 0.0
  %1635 = vmatpush1.msra.mxu0 %v618
  %1636 = vmatprep.subr.mxu0 0.0
  %1637 = vmatpush1.msra.mxu0 %v619
  %1638 = vmatprep.subr.mxu0 0.0
  %1639 = vmatpush1.msra.mxu0 %v620
  %1640 = vmatprep.subr.mxu0 0.0
  %1641 = vmatpush1.msra.mxu0 %v621
  %1642 = vmatprep.subr.mxu0 0.0
  %1643 = vmatpush1.msra.mxu0 %v622
  %1644 = vmatprep.subr.mxu0 0.0
  %1645 = vmatpush1.msra.mxu0 %v623
  %1646 = vmatprep.subr.mxu0 0.0
  %1647 = vmatpush1.msra.mxu0 %v624
  %1648 = vmatprep.subr.mxu0 0.0
  %1649 = vmatpush1.msra.mxu0 %v625
  %1650 = vmatprep.subr.mxu0 0.0
  %1651 = vmatpush1.msra.mxu0 %v626
  %1652 = vmatprep.subr.mxu0 0.0
  %1653 = vmatpush1.msra.mxu0 %v627
  %1654 = vmatprep.subr.mxu0 0.0
  %1655 = vmatpush1.msra.mxu0 %v628
  %1656 = vmatprep.subr.mxu0 0.0
  %1657 = vmatpush1.msra.mxu0 %v629
  %1658 = vmatprep.subr.mxu0 0.0
  %1659 = vmatpush1.msra.mxu0 %v630
  %1660 = vmatprep.subr.mxu0 0.0
  %1661 = vmatpush1.msra.mxu0 %v631
  %1662 = vmatprep.subr.mxu0 0.0
  %1663 = vmatpush1.msra.mxu0 %v632
  %1664 = vmatprep.subr.mxu0 0.0
  %1665 = vmatpush1.msra.mxu0 %v633
  %1666 = vmatprep.subr.mxu0 0.0
  %1667 = vmatpush1.msra.mxu0 %v634
  %1668 = vmatprep.subr.mxu0 0.0
  %1669 = vmatpush1.msra.mxu0 %v635
  %1670 = vmatprep.subr.mxu0 0.0
  %1671 = vmatpush1.msra.mxu0 %v636
  %1672 = vmatprep.subr.mxu0 0.0
  %1673 = vmatpush1.msra.mxu0 %v637
  %1674 = vmatprep.mubr.f32.mxu0 %v25
  %1675 = vmatmul.mubr.f32.gmra.mrb[0].mxu0 %v24
  %v1676 = vpop.f32.mrb[0].mxu0
  %v1677 = vadd.f32 %v1532, %v1676
  %v1678 = vpop.f32.mrb[0].mxu0
  %1679 = vmatprep.mubr.f32.mxu0 %v52
  %1680 = vmatmul.mubr.f32.gmra.mrb[0].mxu0 %v51
  %v1681 = vpop.f32.mrb[0].mxu0
  %v1682 = vadd.f32 %v1537, %v1681
  %v1683 = vpop.f32.mrb[0].mxu0
  %1684 = vmatprep.mubr.f32.mxu0 %v79
  %1685 = vmatmul.mubr.f32.gmra.mrb[0].mxu0 %v78
  %v1686 = vpop.f32.mrb[0].mxu0
  %v1687 = vadd.f32 %v1542, %v1686
  %v1688 = vpop.f32.mrb[0].mxu0
  %1689 = vmatprep.mubr.f32.mxu0 %v106
  %1690 = vmatmul.mubr.f32.gmra.mrb[0].mxu0 %v105
  %v1691 = vpop.f32.mrb[0].mxu0
  %v1692 = vadd.f32 %v1547, %v1691
  %v1693 = vpop.f32.mrb[0].mxu0
  %1694 = vmatprep.mubr.f32.mxu0 %v133
  %1695 = vmatmul.mubr.f32.gmra.mrb[0].mxu0 %v132
  %v1696 = vpop.f32.mrb[0].mxu0
  %v1697 = vadd.f32 %v1552, %v1696
  %v1698 = vpop.f32.mrb[0].mxu0
  %1699 = vmatprep.mubr.f32.mxu0 %v160
  %1700 = vmatmul.mubr.f32.gmra.mrb[0].mxu0 %v159
  %v1701 = vpop.f32.mrb[0].mxu0
  %v1702 = vadd.f32 %v1557, %v1701
  %v1703 = vpop.f32.mrb[0].mxu0
  %1704 = vmatprep.mubr.f32.mxu0 %v187
  %1705 = vmatmul.mubr.f32.gmra.mrb[0].mxu0 %v186
  %v1706 = vpop.f32.mrb[0].mxu0
  %v1707 = vadd.f32 %v1562, %v1706
  %v1708 = vpop.f32.mrb[0].mxu0
  %1709 = vmatprep.mubr.f32.mxu0 %v214
  %1710 = vmatmul.mubr.f32.gmra.mrb[0].mxu0 %v213
  %v1711 = vpop.f32.mrb[0].mxu0
  %v1712 = vadd.f32 %v1567, %v1711
  %v1713 = vpop.f32.mrb[0].mxu0
  %1714 = vmatprep.mubr.f32.mxu0 %v241
  %1715 = vmatmul.mubr.f32.gmra.mrb[0].mxu0 %v240
  %v1716 = vpop.f32.mrb[0].mxu0
  %v1717 = vadd.f32 %v1572, %v1716
  %v1718 = vpop.f32.mrb[0].mxu0
  %1719 = vmatprep.mubr.f32.mxu0 %v268
  %1720 = vmatmul.mubr.f32.gmra.mrb[0].mxu0 %v267
  %v1721 = vpop.f32.mrb[0].mxu0
  %v1722 = vadd.f32 %v1577, %v1721
  %v1723 = vpop.f32.mrb[0].mxu0
  %1724 = vmatprep.mubr.f32.mxu0 %v295
  %1725 = vmatmul.mubr.f32.gmra.mrb[0].mxu0 %v294
  %v1726 = vpop.f32.mrb[0].mxu0
  %v1727 = vadd.f32 %v1582, %v1726
  %v1728 = vpop.f32.mrb[0].mxu0
  %1729 = vmatprep.mubr.f32.mxu0 %v322
  %1730 = vmatmul.mubr.f32.gmra.mrb[0].mxu0 %v321
  %v1731 = vpop.f32.mrb[0].mxu0
  %v1732 = vadd.f32 %v1587, %v1731
  %v1733 = vpop.f32.mrb[0].mxu0
  %1734 = vmatprep.mubr.f32.mxu0 %v349
  %1735 = vmatmul.mubr.f32.gmra.mrb[0].mxu0 %v348
  %v1736 = vpop.f32.mrb[0].mxu0
  %v1737 = vadd.f32 %v1592, %v1736
  %v1738 = vpop.f32.mrb[0].mxu0
  %1739 = vmatprep.mubr.f32.mxu0 %v376
  %1740 = vmatmul.mubr.f32.gmra.mrb[0].mxu0 %v375
  %v1741 = vpop.f32.mrb[0].mxu0
  %v1742 = vadd.f32 %v1597, %v1741
  %v1743 = vpop.f32.mrb[0].mxu0
  %1744 = vmatprep.mubr.f32.mxu0 %v403
  %1745 = vmatmul.mubr.f32.gmra.mrb[0].mxu0 %v402
  %v1746 = vpop.f32.mrb[0].mxu0
  %v1747 = vadd.f32 %v1602, %v1746
  %v1748 = vpop.f32.mrb[0].mxu0
  %1749 = vmatprep.mubr.f32.mxu0 %v430
  %1750 = vmatmul.mubr.f32.gmra.mrb[0].mxu0 %v429
  %v1751 = vpop.f32.mrb[0].mxu0
  %v1752 = vadd.f32 %v1607, %v1751
  %v1753 = vpop.f32.mrb[0].mxu0
  %1754 = vdwg.mxu0
  %1755 = vmatprep.subr.mxu0 0.0
  %1756 = vmatpush1.msra.mxu0 %v638
  %1757 = vmatprep.subr.mxu0 0.0
  %1758 = vmatpush1.msra.mxu0 %v639
  %1759 = vmatprep.subr.mxu0 0.0
  %1760 = vmatpush1.msra.mxu0 %v640
  %1761 = vmatprep.subr.mxu0 0.0
  %1762 = vmatpush1.msra.mxu0 %v641
  %1763 = vmatprep.subr.mxu0 0.0
  %1764 = vmatpush1.msra.mxu0 %v642
  %1765 = vmatprep.subr.mxu0 0.0
  %1766 = vmatpush1.msra.mxu0 %v643
  %1767 = vmatprep.subr.mxu0 0.0
  %1768 = vmatpush1.msra.mxu0 %v644
  %1769 = vmatprep.subr.mxu0 0.0
  %1770 = vmatpush1.msra.mxu0 %v645
  %1771 = vmatprep.subr.mxu0 0.0
  %1772 = vmatpush1.msra.mxu0 %v646
  %1773 = vmatprep.subr.mxu0 0.0
  %1774 = vmatpush1.msra.mxu0 %v647
  %1775 = vmatprep.subr.mxu0 0.0
  %1776 = vmatpush1.msra.mxu0 %v648
  %1777 = vmatprep.subr.mxu0 0.0
  %1778 = vmatpush1.msra.mxu0 %v649
  %1779 = vmatprep.subr.mxu0 0.0
  %1780 = vmatpush1.msra.mxu0 %v650
  %1781 = vmatprep.subr.mxu0 0.0
  %1782 = vmatpush1.msra.mxu0 %v651
  %1783 = vmatprep.subr.mxu0 0.0
  %1784 = vmatpush1.msra.mxu0 %v652
  %1785 = vmatprep.subr.mxu0 0.0
  %1786 = vmatpush1.msra.mxu0 %v653
  %1787 = vmatprep.subr.mxu0 0.0
  %1788 = vmatpush1.msra.mxu0 %v654
  %1789 = vmatprep.subr.mxu0 0.0
  %1790 = vmatpush1.msra.mxu0 %v655
  %1791 = vmatprep.subr.mxu0 0.0
  %1792 = vmatpush1.msra.mxu0 %v656
  %1793 = vmatprep.subr.mxu0 0.0
  %1794 = vmatpush1.msra.mxu0 %v657
  %1795 = vmatprep.subr.mxu0 0.0
  %1796 = vmatpush1.msra.mxu0 %v658
  %1797 = vmatprep.subr.mxu0 0.0
  %1798 = vmatpush1.msra.mxu0 %v659
  %1799 = vmatprep.subr.mxu0 0.0
  %1800 = vmatpush1.msra.mxu0 %v660
  %1801 = vmatprep.subr.mxu0 0.0
  %1802 = vmatpush1.msra.mxu0 %v661
  %1803 = vmatprep.subr.mxu0 0.0
  %1804 = vmatpush1.msra.mxu0 %v662
  %1805 = vmatprep.subr.mxu0 0.0
  %1806 = vmatpush1.msra.mxu0 %v663
  %1807 = vmatprep.subr.mxu0 0.0
  %1808 = vmatpush1.msra.mxu0 %v664
  %1809 = vmatprep.subr.mxu0 0.0
  %1810 = vmatpush1.msra.mxu0 %v665
  %1811 = vmatprep.subr.mxu0 0.0
  %1812 = vmatpush1.msra.mxu0 %v666
  %1813 = vmatprep.subr.mxu0 0.0
  %1814 = vmatpush1.msra.mxu0 %v667
  %1815 = vmatprep.subr.mxu0 0.0
  %1816 = vmatpush1.msra.mxu0 %v668
  %1817 = vmatprep.subr.mxu0 0.0
  %1818 = vmatpush1.msra.mxu0 %v669
  %1819 = vmatprep.mubr.f32.mxu0 %v27
  %1820 = vmatmul.mubr.f32.gmra.mrb[0].mxu0 %v26
  %v1821 = vpop.f32.mrb[0].mxu0
  %v1822 = vadd.f32 %v1677, %v1821
  %v1823 = vpop.f32.mrb[0].mxu0
  %1824 = vmatprep.mubr.f32.mxu0 %v54
  %1825 = vmatmul.mubr.f32.gmra.mrb[0].mxu0 %v53
  %v1826 = vpop.f32.mrb[0].mxu0
  %v1827 = vadd.f32 %v1682, %v1826
  %v1828 = vpop.f32.mrb[0].mxu0
  %1829 = vmatprep.mubr.f32.mxu0 %v81
  %1830 = vmatmul.mubr.f32.gmra.mrb[0].mxu0 %v80
  %v1831 = vpop.f32.mrb[0].mxu0
  %v1832 = vadd.f32 %v1687, %v1831
  %v1833 = vpop.f32.mrb[0].mxu0
  %1834 = vmatprep.mubr.f32.mxu0 %v108
  %1835 = vmatmul.mubr.f32.gmra.mrb[0].mxu0 %v107
  %v1836 = vpop.f32.mrb[0].mxu0
  %v1837 = vadd.f32 %v1692, %v1836
  %v1838 = vpop.f32.mrb[0].mxu0
  %1839 = vmatprep.mubr.f32.mxu0 %v135
  %1840 = vmatmul.mubr.f32.gmra.mrb[0].mxu0 %v134
  %v1841 = vpop.f32.mrb[0].mxu0
  %v1842 = vadd.f32 %v1697, %v1841
  %v1843 = vpop.f32.mrb[0].mxu0
  %1844 = vmatprep.mubr.f32.mxu0 %v162
  %1845 = vmatmul.mubr.f32.gmra.mrb[0].mxu0 %v161
  %v1846 = vpop.f32.mrb[0].mxu0
  %v1847 = vadd.f32 %v1702, %v1846
  %v1848 = vpop.f32.mrb[0].mxu0
  %1849 = vmatprep.mubr.f32.mxu0 %v189
  %1850 = vmatmul.mubr.f32.gmra.mrb[0].mxu0 %v188
  %v1851 = vpop.f32.mrb[0].mxu0
  %v1852 = vadd.f32 %v1707, %v1851
  %v1853 = vpop.f32.mrb[0].mxu0
  %1854 = vmatprep.mubr.f32.mxu0 %v216
  %1855 = vmatmul.mubr.f32.gmra.mrb[0].mxu0 %v215
  %v1856 = vpop.f32.mrb[0].mxu0
  %v1857 = vadd.f32 %v1712, %v1856
  %v1858 = vpop.f32.mrb[0].mxu0
  %1859 = vmatprep.mubr.f32.mxu0 %v243
  %1860 = vmatmul.mubr.f32.gmra.mrb[0].mxu0 %v242
  %v1861 = vpop.f32.mrb[0].mxu0
  %v1862 = vadd.f32 %v1717, %v1861
  %v1863 = vpop.f32.mrb[0].mxu0
  %1864 = vmatprep.mubr.f32.mxu0 %v270
  %1865 = vmatmul.mubr.f32.gmra.mrb[0].mxu0 %v269
  %v1866 = vpop.f32.mrb[0].mxu0
  %v1867 = vadd.f32 %v1722, %v1866
  %v1868 = vpop.f32.mrb[0].mxu0
  %1869 = vmatprep.mubr.f32.mxu0 %v297
  %1870 = vmatmul.mubr.f32.gmra.mrb[0].mxu0 %v296
  %v1871 = vpop.f32.mrb[0].mxu0
  %v1872 = vadd.f32 %v1727, %v1871
  %v1873 = vpop.f32.mrb[0].mxu0
  %1874 = vmatprep.mubr.f32.mxu0 %v324
  %1875 = vmatmul.mubr.f32.gmra.mrb[0].mxu0 %v323
  %v1876 = vpop.f32.mrb[0].mxu0
  %v1877 = vadd.f32 %v1732, %v1876
  %v1878 = vpop.f32.mrb[0].mxu0
  %1879 = vmatprep.mubr.f32.mxu0 %v351
  %1880 = vmatmul.mubr.f32.gmra.mrb[0].mxu0 %v350
  %v1881 = vpop.f32.mrb[0].mxu0
  %v1882 = vadd.f32 %v1737, %v1881
  %v1883 = vpop.f32.mrb[0].mxu0
  %1884 = vmatprep.mubr.f32.mxu0 %v378
  %1885 = vmatmul.mubr.f32.gmra.mrb[0].mxu0 %v377
  %v1886 = vpop.f32.mrb[0].mxu0
  %v1887 = vadd.f32 %v1742, %v1886
  %v1888 = vpop.f32.mrb[0].mxu0
  %1889 = vmatprep.mubr.f32.mxu0 %v405
  %1890 = vmatmul.mubr.f32.gmra.mrb[0].mxu0 %v404
  %v1891 = vpop.f32.mrb[0].mxu0
  %v1892 = vadd.f32 %v1747, %v1891
  %v1893 = vpop.f32.mrb[0].mxu0
  %1894 = vmatprep.mubr.f32.mxu0 %v432
  %1895 = vmatmul.mubr.f32.gmra.mrb[0].mxu0 %v431
  %v1896 = vpop.f32.mrb[0].mxu0
  %v1897 = vadd.f32 %v1752, %v1896
  %v1898 = vpop.f32.mrb[0].mxu0
  %1899 = vdwg.mxu0
  %1900 = vmatprep.subr.mxu0 0.0
  %1901 = vmatpush1.msra.mxu0 %v670
  %1902 = vmatprep.subr.mxu0 0.0
  %1903 = vmatpush1.msra.mxu0 %v671
  %1904 = vmatprep.subr.mxu0 0.0
  %1905 = vmatpush1.msra.mxu0 %v672
  %1906 = vmatprep.subr.mxu0 0.0
  %1907 = vmatpush1.msra.mxu0 %v673
  %1908 = vmatprep.subr.mxu0 0.0
  %1909 = vmatpush1.msra.mxu0 %v674
  %1910 = vmatprep.subr.mxu0 0.0
  %1911 = vmatpush1.msra.mxu0 %v675
  %1912 = vmatprep.subr.mxu0 0.0
  %1913 = vmatpush1.msra.mxu0 %v676
  %1914 = vmatprep.subr.mxu0 0.0
  %1915 = vmatpush1.msra.mxu0 %v677
  %1916 = vmatprep.subr.mxu0 0.0
  %1917 = vmatpush1.msra.mxu0 %v678
  %1918 = vmatprep.subr.mxu0 0.0
  %1919 = vmatpush1.msra.mxu0 %v679
  %1920 = vmatprep.subr.mxu0 0.0
  %1921 = vmatpush1.msra.mxu0 %v680
  %1922 = vmatprep.subr.mxu0 0.0
  %1923 = vmatpush1.msra.mxu0 %v681
  %1924 = vmatprep.subr.mxu0 0.0
  %1925 = vmatpush1.msra.mxu0 %v682
  %1926 = vmatprep.subr.mxu0 0.0
  %1927 = vmatpush1.msra.mxu0 %v683
  %1928 = vmatprep.subr.mxu0 0.0
  %1929 = vmatpush1.msra.mxu0 %v684
  %1930 = vmatprep.subr.mxu0 0.0
  %1931 = vmatpush1.msra.mxu0 %v685
  %1932 = vmatprep.subr.mxu0 0.0
  %1933 = vmatpush1.msra.mxu0 %v686
  %1934 = vmatprep.subr.mxu0 0.0
  %1935 = vmatpush1.msra.mxu0 %v687
  %1936 = vmatprep.subr.mxu0 0.0
  %1937 = vmatpush1.msra.mxu0 %v688
  %1938 = vmatprep.subr.mxu0 0.0
  %1939 = vmatpush1.msra.mxu0 %v689
  %1940 = vmatprep.subr.mxu0 0.0
  %1941 = vmatpush1.msra.mxu0 %v690
  %1942 = vmatprep.subr.mxu0 0.0
  %1943 = vmatpush1.msra.mxu0 %v691
  %1944 = vmatprep.subr.mxu0 0.0
  %1945 = vmatpush1.msra.mxu0 %v692
  %1946 = vmatprep.subr.mxu0 0.0
  %1947 = vmatpush1.msra.mxu0 %v693
  %1948 = vmatprep.subr.mxu0 0.0
  %1949 = vmatpush1.msra.mxu0 %v694
  %1950 = vmatprep.subr.mxu0 0.0
  %1951 = vmatpush1.msra.mxu0 %v695
  %1952 = vmatprep.subr.mxu0 0.0
  %1953 = vmatpush1.msra.mxu0 %v696
  %1954 = vmatprep.subr.mxu0 0.0
  %1955 = vmatpush1.msra.mxu0 %v697
  %1956 = vmatprep.subr.mxu0 0.0
  %1957 = vmatpush1.msra.mxu0 %v698
  %1958 = vmatprep.subr.mxu0 0.0
  %1959 = vmatpush1.msra.mxu0 %v699
  %1960 = vmatprep.subr.mxu0 0.0
  %1961 = vmatpush1.msra.mxu0 %v700
  %1962 = vmatprep.subr.mxu0 0.0
  %1963 = vmatpush1.msra.mxu0 %v701
  %1964 = vmatprep.mubr.f32.mxu0 %v29
  %1965 = vmatmul.mubr.f32.gmra.mrb[0].mxu0 %v28
  %v1966 = vpop.f32.mrb[0].mxu0
  %v1967 = vadd.f32 %v1822, %v1966
  %v1968 = vpop.f32.mrb[0].mxu0
  %1969 = vmatprep.mubr.f32.mxu0 %v56
  %1970 = vmatmul.mubr.f32.gmra.mrb[0].mxu0 %v55
  %v1971 = vpop.f32.mrb[0].mxu0
  %v1972 = vadd.f32 %v1827, %v1971
  %v1973 = vpop.f32.mrb[0].mxu0
  %1974 = vmatprep.mubr.f32.mxu0 %v83
  %1975 = vmatmul.mubr.f32.gmra.mrb[0].mxu0 %v82
  %v1976 = vpop.f32.mrb[0].mxu0
  %v1977 = vadd.f32 %v1832, %v1976
  %v1978 = vpop.f32.mrb[0].mxu0
  %1979 = vmatprep.mubr.f32.mxu0 %v110
  %1980 = vmatmul.mubr.f32.gmra.mrb[0].mxu0 %v109
  %v1981 = vpop.f32.mrb[0].mxu0
  %v1982 = vadd.f32 %v1837, %v1981
  %v1983 = vpop.f32.mrb[0].mxu0
  %1984 = vmatprep.mubr.f32.mxu0 %v137
  %1985 = vmatmul.mubr.f32.gmra.mrb[0].mxu0 %v136
  %v1986 = vpop.f32.mrb[0].mxu0
  %v1987 = vadd.f32 %v1842, %v1986
  %v1988 = vpop.f32.mrb[0].mxu0
  %1989 = vmatprep.mubr.f32.mxu0 %v164
  %1990 = vmatmul.mubr.f32.gmra.mrb[0].mxu0 %v163
  %v1991 = vpop.f32.mrb[0].mxu0
  %v1992 = vadd.f32 %v1847, %v1991
  %v1993 = vpop.f32.mrb[0].mxu0
  %1994 = vmatprep.mubr.f32.mxu0 %v191
  %1995 = vmatmul.mubr.f32.gmra.mrb[0].mxu0 %v190
  %v1996 = vpop.f32.mrb[0].mxu0
  %v1997 = vadd.f32 %v1852, %v1996
  %v1998 = vpop.f32.mrb[0].mxu0
  %1999 = vmatprep.mubr.f32.mxu0 %v218
  %2000 = vmatmul.mubr.f32.gmra.mrb[0].mxu0 %v217
  %v2001 = vpop.f32.mrb[0].mxu0
  %v2002 = vadd.f32 %v1857, %v2001
  %v2003 = vpop.f32.mrb[0].mxu0
  %2004 = vmatprep.mubr.f32.mxu0 %v245
  %2005 = vmatmul.mubr.f32.gmra.mrb[0].mxu0 %v244
  %v2006 = vpop.f32.mrb[0].mxu0
  %v2007 = vadd.f32 %v1862, %v2006
  %v2008 = vpop.f32.mrb[0].mxu0
  %2009 = vmatprep.mubr.f32.mxu0 %v272
  %2010 = vmatmul.mubr.f32.gmra.mrb[0].mxu0 %v271
  %v2011 = vpop.f32.mrb[0].mxu0
  %v2012 = vadd.f32 %v1867, %v2011
  %v2013 = vpop.f32.mrb[0].mxu0
  %2014 = vmatprep.mubr.f32.mxu0 %v299
  %2015 = vmatmul.mubr.f32.gmra.mrb[0].mxu0 %v298
  %v2016 = vpop.f32.mrb[0].mxu0
  %v2017 = vadd.f32 %v1872, %v2016
  %v2018 = vpop.f32.mrb[0].mxu0
  %2019 = vmatprep.mubr.f32.mxu0 %v326
  %2020 = vmatmul.mubr.f32.gmra.mrb[0].mxu0 %v325
  %v2021 = vpop.f32.mrb[0].mxu0
  %v2022 = vadd.f32 %v1877, %v2021
  %v2023 = vpop.f32.mrb[0].mxu0
  %2024 = vmatprep.mubr.f32.mxu0 %v353
  %2025 = vmatmul.mubr.f32.gmra.mrb[0].mxu0 %v352
  %v2026 = vpop.f32.mrb[0].mxu0
  %v2027 = vadd.f32 %v1882, %v2026
  %v2028 = vpop.f32.mrb[0].mxu0
  %2029 = vmatprep.mubr.f32.mxu0 %v380
  %2030 = vmatmul.mubr.f32.gmra.mrb[0].mxu0 %v379
  %v2031 = vpop.f32.mrb[0].mxu0
  %v2032 = vadd.f32 %v1887, %v2031
  %v2033 = vpop.f32.mrb[0].mxu0
  %2034 = vmatprep.mubr.f32.mxu0 %v407
  %2035 = vmatmul.mubr.f32.gmra.mrb[0].mxu0 %v406
  %v2036 = vpop.f32.mrb[0].mxu0
  %v2037 = vadd.f32 %v1892, %v2036
  %v2038 = vpop.f32.mrb[0].mxu0
  %2039 = vmatprep.mubr.f32.mxu0 %v434
  %2040 = vmatmul.mubr.f32.gmra.mrb[0].mxu0 %v433
  %v2041 = vpop.f32.mrb[0].mxu0
  %v2042 = vadd.f32 %v1897, %v2041
  %v2043 = vpop.f32.mrb[0].mxu0
  %2044 = vdwg.mxu0
  %2045 = vmatprep.subr.mxu0 0.0
  %2046 = vmatpush1.msra.mxu0 %v702
  %2047 = vmatprep.subr.mxu0 0.0
  %2048 = vmatpush1.msra.mxu0 %v703
  %2049 = vmatprep.subr.mxu0 0.0
  %2050 = vmatpush1.msra.mxu0 %v704
  %2051 = vmatprep.subr.mxu0 0.0
  %2052 = vmatpush1.msra.mxu0 %v705
  %2053 = vmatprep.subr.mxu0 0.0
  %2054 = vmatpush1.msra.mxu0 %v706
  %2055 = vmatprep.subr.mxu0 0.0
  %2056 = vmatpush1.msra.mxu0 %v707
  %2057 = vmatprep.subr.mxu0 0.0
  %2058 = vmatpush1.msra.mxu0 %v708
  %2059 = vmatprep.subr.mxu0 0.0
  %2060 = vmatpush1.msra.mxu0 %v709
  %2061 = vmatprep.subr.mxu0 0.0
  %2062 = vmatpush1.msra.mxu0 %v710
  %2063 = vmatprep.subr.mxu0 0.0
  %2064 = vmatpush1.msra.mxu0 %v711
  %2065 = vmatprep.subr.mxu0 0.0
  %2066 = vmatpush1.msra.mxu0 %v712
  %2067 = vmatprep.subr.mxu0 0.0
  %2068 = vmatpush1.msra.mxu0 %v713
  %2069 = vmatprep.subr.mxu0 0.0
  %2070 = vmatpush1.msra.mxu0 %v714
  %2071 = vmatprep.subr.mxu0 0.0
  %2072 = vmatpush1.msra.mxu0 %v715
  %2073 = vmatprep.subr.mxu0 0.0
  %2074 = vmatpush1.msra.mxu0 %v716
  %2075 = vmatprep.subr.mxu0 0.0
  %2076 = vmatpush1.msra.mxu0 %v717
  %2077 = vmatprep.subr.mxu0 0.0
  %2078 = vmatpush1.msra.mxu0 %v718
  %2079 = vmatprep.subr.mxu0 0.0
  %2080 = vmatpush1.msra.mxu0 %v719
  %2081 = vmatprep.subr.mxu0 0.0
  %2082 = vmatpush1.msra.mxu0 %v720
  %2083 = vmatprep.subr.mxu0 0.0
  %2084 = vmatpush1.msra.mxu0 %v721
  %2085 = vmatprep.subr.mxu0 0.0
  %2086 = vmatpush1.msra.mxu0 %v722
  %2087 = vmatprep.subr.mxu0 0.0
  %2088 = vmatpush1.msra.mxu0 %v723
  %2089 = vmatprep.subr.mxu0 0.0
  %2090 = vmatpush1.msra.mxu0 %v724
  %2091 = vmatprep.subr.mxu0 0.0
  %2092 = vmatpush1.msra.mxu0 %v725
  %2093 = vmatprep.subr.mxu0 0.0
  %2094 = vmatpush1.msra.mxu0 %v726
  %2095 = vmatprep.subr.mxu0 0.0
  %2096 = vmatpush1.msra.mxu0 %v727
  %2097 = vmatprep.subr.mxu0 0.0
  %2098 = vmatpush1.msra.mxu0 %v728
  %2099 = vmatprep.subr.mxu0 0.0
  %2100 = vmatpush1.msra.mxu0 %v729
  %2101 = vmatprep.subr.mxu0 0.0
  %2102 = vmatpush1.msra.mxu0 %v730
  %2103 = vmatprep.subr.mxu0 0.0
  %2104 = vmatpush1.msra.mxu0 %v731
  %2105 = vmatprep.subr.mxu0 0.0
  %2106 = vmatpush1.msra.mxu0 %v732
  %2107 = vmatprep.subr.mxu0 0.0
  %2108 = vmatpush1.msra.mxu0 %v733
  %2109 = vmatprep.mubr.f32.mxu0 %v31
  %2110 = vmatmul.mubr.f32.gmra.mrb[0].mxu0 %v30
  %v2111 = vpop.f32.mrb[0].mxu0
  %v2112 = vadd.f32 %v1967, %v2111
  %v2113 = vpop.f32.mrb[0].mxu0
  %2114 = vmatprep.mubr.f32.mxu0 %v58
  %2115 = vmatmul.mubr.f32.gmra.mrb[0].mxu0 %v57
  %v2116 = vpop.f32.mrb[0].mxu0
  %v2117 = vadd.f32 %v1972, %v2116
  %v2118 = vpop.f32.mrb[0].mxu0
  %2119 = vmatprep.mubr.f32.mxu0 %v85
  %2120 = vmatmul.mubr.f32.gmra.mrb[0].mxu0 %v84
  %v2121 = vpop.f32.mrb[0].mxu0
  %v2122 = vadd.f32 %v1977, %v2121
  %v2123 = vpop.f32.mrb[0].mxu0
  %2124 = vmatprep.mubr.f32.mxu0 %v112
  %2125 = vmatmul.mubr.f32.gmra.mrb[0].mxu0 %v111
  %v2126 = vpop.f32.mrb[0].mxu0
  %v2127 = vadd.f32 %v1982, %v2126
  %v2128 = vpop.f32.mrb[0].mxu0
  %2129 = vmatprep.mubr.f32.mxu0 %v139
  %2130 = vmatmul.mubr.f32.gmra.mrb[0].mxu0 %v138
  %v2131 = vpop.f32.mrb[0].mxu0
  %v2132 = vadd.f32 %v1987, %v2131
  %v2133 = vpop.f32.mrb[0].mxu0
  %2134 = vmatprep.mubr.f32.mxu0 %v166
  %2135 = vmatmul.mubr.f32.gmra.mrb[0].mxu0 %v165
  %v2136 = vpop.f32.mrb[0].mxu0
  %v2137 = vadd.f32 %v1992, %v2136
  %v2138 = vpop.f32.mrb[0].mxu0
  %2139 = vmatprep.mubr.f32.mxu0 %v193
  %2140 = vmatmul.mubr.f32.gmra.mrb[0].mxu0 %v192
  %v2141 = vpop.f32.mrb[0].mxu0
  %v2142 = vadd.f32 %v1997, %v2141
  %v2143 = vpop.f32.mrb[0].mxu0
  %2144 = vmatprep.mubr.f32.mxu0 %v220
  %2145 = vmatmul.mubr.f32.gmra.mrb[0].mxu0 %v219
  %v2146 = vpop.f32.mrb[0].mxu0
  %v2147 = vadd.f32 %v2002, %v2146
  %v2148 = vpop.f32.mrb[0].mxu0
  %2149 = vmatprep.mubr.f32.mxu0 %v247
  %2150 = vmatmul.mubr.f32.gmra.mrb[0].mxu0 %v246
  %v2151 = vpop.f32.mrb[0].mxu0
  %v2152 = vadd.f32 %v2007, %v2151
  %v2153 = vpop.f32.mrb[0].mxu0
  %2154 = vmatprep.mubr.f32.mxu0 %v274
  %2155 = vmatmul.mubr.f32.gmra.mrb[0].mxu0 %v273
  %v2156 = vpop.f32.mrb[0].mxu0
  %v2157 = vadd.f32 %v2012, %v2156
  %v2158 = vpop.f32.mrb[0].mxu0
  %2159 = vmatprep.mubr.f32.mxu0 %v301
  %2160 = vmatmul.mubr.f32.gmra.mrb[0].mxu0 %v300
  %v2161 = vpop.f32.mrb[0].mxu0
  %v2162 = vadd.f32 %v2017, %v2161
  %v2163 = vpop.f32.mrb[0].mxu0
  %2164 = vmatprep.mubr.f32.mxu0 %v328
  %2165 = vmatmul.mubr.f32.gmra.mrb[0].mxu0 %v327
  %v2166 = vpop.f32.mrb[0].mxu0
  %v2167 = vadd.f32 %v2022, %v2166
  %v2168 = vpop.f32.mrb[0].mxu0
  %2169 = vmatprep.mubr.f32.mxu0 %v355
  %2170 = vmatmul.mubr.f32.gmra.mrb[0].mxu0 %v354
  %v2171 = vpop.f32.mrb[0].mxu0
  %v2172 = vadd.f32 %v2027, %v2171
  %v2173 = vpop.f32.mrb[0].mxu0
  %2174 = vmatprep.mubr.f32.mxu0 %v382
  %2175 = vmatmul.mubr.f32.gmra.mrb[0].mxu0 %v381
  %v2176 = vpop.f32.mrb[0].mxu0
  %v2177 = vadd.f32 %v2032, %v2176
  %v2178 = vpop.f32.mrb[0].mxu0
  %2179 = vmatprep.mubr.f32.mxu0 %v409
  %2180 = vmatmul.mubr.f32.gmra.mrb[0].mxu0 %v408
  %v2181 = vpop.f32.mrb[0].mxu0
  %v2182 = vadd.f32 %v2037, %v2181
  %v2183 = vpop.f32.mrb[0].mxu0
  %2184 = vmatprep.mubr.f32.mxu0 %v436
  %2185 = vmatmul.mubr.f32.gmra.mrb[0].mxu0 %v435
  %v2186 = vpop.f32.mrb[0].mxu0
  %v2187 = vadd.f32 %v2042, %v2186
  %v2188 = vpop.f32.mrb[0].mxu0
  %2189 = vdwg.mxu0
  %2190 = vmatprep.subr.mxu0 0.0
  %2191 = vmatpush1.msra.mxu0 %v734
  %2192 = vmatprep.subr.mxu0 0.0
  %2193 = vmatpush1.msra.mxu0 %v735
  %2194 = vmatprep.subr.mxu0 0.0
  %2195 = vmatpush1.msra.mxu0 %v736
  %2196 = vmatprep.subr.mxu0 0.0
  %2197 = vmatpush1.msra.mxu0 %v737
  %2198 = vmatprep.subr.mxu0 0.0
  %2199 = vmatpush1.msra.mxu0 %v738
  %2200 = vmatprep.subr.mxu0 0.0
  %2201 = vmatpush1.msra.mxu0 %v739
  %2202 = vmatprep.subr.mxu0 0.0
  %2203 = vmatpush1.msra.mxu0 %v740
  %2204 = vmatprep.subr.mxu0 0.0
  %2205 = vmatpush1.msra.mxu0 %v741
  %2206 = vmatprep.subr.mxu0 0.0
  %2207 = vmatpush1.msra.mxu0 %v742
  %2208 = vmatprep.subr.mxu0 0.0
  %2209 = vmatpush1.msra.mxu0 %v743
  %2210 = vmatprep.subr.mxu0 0.0
  %2211 = vmatpush1.msra.mxu0 %v744
  %2212 = vmatprep.subr.mxu0 0.0
  %2213 = vmatpush1.msra.mxu0 %v745
  %2214 = vmatprep.subr.mxu0 0.0
  %2215 = vmatpush1.msra.mxu0 %v746
  %2216 = vmatprep.subr.mxu0 0.0
  %2217 = vmatpush1.msra.mxu0 %v747
  %2218 = vmatprep.subr.mxu0 0.0
  %2219 = vmatpush1.msra.mxu0 %v748
  %2220 = vmatprep.subr.mxu0 0.0
  %2221 = vmatpush1.msra.mxu0 %v749
  %2222 = vmatprep.subr.mxu0 0.0
  %2223 = vmatpush1.msra.mxu0 %v750
  %2224 = vmatprep.subr.mxu0 0.0
  %2225 = vmatpush1.msra.mxu0 %v751
  %2226 = vmatprep.subr.mxu0 0.0
  %2227 = vmatpush1.msra.mxu0 %v752
  %2228 = vmatprep.subr.mxu0 0.0
  %2229 = vmatpush1.msra.mxu0 %v753
  %2230 = vmatprep.subr.mxu0 0.0
  %2231 = vmatpush1.msra.mxu0 %v754
  %2232 = vmatprep.subr.mxu0 0.0
  %2233 = vmatpush1.msra.mxu0 %v755
  %2234 = vmatprep.subr.mxu0 0.0
  %2235 = vmatpush1.msra.mxu0 %v756
  %2236 = vmatprep.subr.mxu0 0.0
  %2237 = vmatpush1.msra.mxu0 %v757
  %2238 = vmatprep.subr.mxu0 0.0
  %2239 = vmatpush1.msra.mxu0 %v758
  %2240 = vmatprep.subr.mxu0 0.0
  %2241 = vmatpush1.msra.mxu0 %v759
  %2242 = vmatprep.subr.mxu0 0.0
  %2243 = vmatpush1.msra.mxu0 %v760
  %2244 = vmatprep.subr.mxu0 0.0
  %2245 = vmatpush1.msra.mxu0 %v761
  %2246 = vmatprep.subr.mxu0 0.0
  %2247 = vmatpush1.msra.mxu0 %v762
  %2248 = vmatprep.subr.mxu0 0.0
  %2249 = vmatpush1.msra.mxu0 %v763
  %2250 = vmatprep.subr.mxu0 0.0
  %2251 = vmatpush1.msra.mxu0 %v764
  %2252 = vmatprep.subr.mxu0 0.0
  %2253 = vmatpush1.msra.mxu0 %v765
  %2254 = vmatprep.mubr.f32.mxu0 %v33
  %2255 = vmatmul.mubr.f32.gmra.mrb[0].mxu0 %v32
  %v2256 = vpop.f32.mrb[0].mxu0
  %v2257 = vadd.f32 %v2112, %v2256
  %v2258 = vpop.f32.mrb[0].mxu0
  %2259 = vmatprep.mubr.f32.mxu0 %v60
  %2260 = vmatmul.mubr.f32.gmra.mrb[0].mxu0 %v59
  %v2261 = vpop.f32.mrb[0].mxu0
  %v2262 = vadd.f32 %v2117, %v2261
  %v2263 = vpop.f32.mrb[0].mxu0
  %2264 = vmatprep.mubr.f32.mxu0 %v87
  %2265 = vmatmul.mubr.f32.gmra.mrb[0].mxu0 %v86
  %v2266 = vpop.f32.mrb[0].mxu0
  %v2267 = vadd.f32 %v2122, %v2266
  %v2268 = vpop.f32.mrb[0].mxu0
  %2269 = vmatprep.mubr.f32.mxu0 %v114
  %2270 = vmatmul.mubr.f32.gmra.mrb[0].mxu0 %v113
  %v2271 = vpop.f32.mrb[0].mxu0
  %v2272 = vadd.f32 %v2127, %v2271
  %v2273 = vpop.f32.mrb[0].mxu0
  %2274 = vmatprep.mubr.f32.mxu0 %v141
  %2275 = vmatmul.mubr.f32.gmra.mrb[0].mxu0 %v140
  %v2276 = vpop.f32.mrb[0].mxu0
  %v2277 = vadd.f32 %v2132, %v2276
  %v2278 = vpop.f32.mrb[0].mxu0
  %2279 = vmatprep.mubr.f32.mxu0 %v168
  %2280 = vmatmul.mubr.f32.gmra.mrb[0].mxu0 %v167
  %v2281 = vpop.f32.mrb[0].mxu0
  %v2282 = vadd.f32 %v2137, %v2281
  %v2283 = vpop.f32.mrb[0].mxu0
  %2284 = vmatprep.mubr.f32.mxu0 %v195
  %2285 = vmatmul.mubr.f32.gmra.mrb[0].mxu0 %v194
  %v2286 = vpop.f32.mrb[0].mxu0
  %v2287 = vadd.f32 %v2142, %v2286
  %v2288 = vpop.f32.mrb[0].mxu0
  %2289 = vmatprep.mubr.f32.mxu0 %v222
  %2290 = vmatmul.mubr.f32.gmra.mrb[0].mxu0 %v221
  %v2291 = vpop.f32.mrb[0].mxu0
  %v2292 = vadd.f32 %v2147, %v2291
  %v2293 = vpop.f32.mrb[0].mxu0
  %2294 = vmatprep.mubr.f32.mxu0 %v249
  %2295 = vmatmul.mubr.f32.gmra.mrb[0].mxu0 %v248
  %v2296 = vpop.f32.mrb[0].mxu0
  %v2297 = vadd.f32 %v2152, %v2296
  %v2298 = vpop.f32.mrb[0].mxu0
  %2299 = vmatprep.mubr.f32.mxu0 %v276
  %2300 = vmatmul.mubr.f32.gmra.mrb[0].mxu0 %v275
  %v2301 = vpop.f32.mrb[0].mxu0
  %v2302 = vadd.f32 %v2157, %v2301
  %v2303 = vpop.f32.mrb[0].mxu0
  %2304 = vmatprep.mubr.f32.mxu0 %v303
  %2305 = vmatmul.mubr.f32.gmra.mrb[0].mxu0 %v302
  %v2306 = vpop.f32.mrb[0].mxu0
  %v2307 = vadd.f32 %v2162, %v2306
  %v2308 = vpop.f32.mrb[0].mxu0
  %2309 = vmatprep.mubr.f32.mxu0 %v330
  %2310 = vmatmul.mubr.f32.gmra.mrb[0].mxu0 %v329
  %v2311 = vpop.f32.mrb[0].mxu0
  %v2312 = vadd.f32 %v2167, %v2311
  %v2313 = vpop.f32.mrb[0].mxu0
  %2314 = vmatprep.mubr.f32.mxu0 %v357
  %2315 = vmatmul.mubr.f32.gmra.mrb[0].mxu0 %v356
  %v2316 = vpop.f32.mrb[0].mxu0
  %v2317 = vadd.f32 %v2172, %v2316
  %v2318 = vpop.f32.mrb[0].mxu0
  %2319 = vmatprep.mubr.f32.mxu0 %v384
  %2320 = vmatmul.mubr.f32.gmra.mrb[0].mxu0 %v383
  %v2321 = vpop.f32.mrb[0].mxu0
  %v2322 = vadd.f32 %v2177, %v2321
  %v2323 = vpop.f32.mrb[0].mxu0
  %2324 = vmatprep.mubr.f32.mxu0 %v411
  %2325 = vmatmul.mubr.f32.gmra.mrb[0].mxu0 %v410
  %v2326 = vpop.f32.mrb[0].mxu0
  %v2327 = vadd.f32 %v2182, %v2326
  %v2328 = vpop.f32.mrb[0].mxu0
  %2329 = vmatprep.mubr.f32.mxu0 %v438
  %2330 = vmatmul.mubr.f32.gmra.mrb[0].mxu0 %v437
  %v2331 = vpop.f32.mrb[0].mxu0
  %v2332 = vadd.f32 %v2187, %v2331
  %v2333 = vpop.f32.mrb[0].mxu0
  %2334 = vdwg.mxu0
  %2335 = vmatprep.subr.mxu0 0.0
  %2336 = vmatpush1.msra.mxu0 %v766
  %2337 = vmatprep.subr.mxu0 0.0
  %2338 = vmatpush1.msra.mxu0 %v767
  %2339 = vmatprep.subr.mxu0 0.0
  %2340 = vmatpush1.msra.mxu0 %v768
  %2341 = vmatprep.subr.mxu0 0.0
  %2342 = vmatpush1.msra.mxu0 %v769
  %2343 = vmatprep.subr.mxu0 0.0
  %2344 = vmatpush1.msra.mxu0 %v770
  %2345 = vmatprep.subr.mxu0 0.0
  %2346 = vmatpush1.msra.mxu0 %v771
  %2347 = vmatprep.subr.mxu0 0.0
  %2348 = vmatpush1.msra.mxu0 %v772
  %2349 = vmatprep.subr.mxu0 0.0
  %2350 = vmatpush1.msra.mxu0 %v773
  %2351 = vmatprep.subr.mxu0 0.0
  %2352 = vmatpush1.msra.mxu0 %v774
  %2353 = vmatprep.subr.mxu0 0.0
  %2354 = vmatpush1.msra.mxu0 %v775
  %2355 = vmatprep.subr.mxu0 0.0
  %2356 = vmatpush1.msra.mxu0 %v776
  %2357 = vmatprep.subr.mxu0 0.0
  %2358 = vmatpush1.msra.mxu0 %v777
  %2359 = vmatprep.subr.mxu0 0.0
  %2360 = vmatpush1.msra.mxu0 %v778
  %2361 = vmatprep.subr.mxu0 0.0
  %2362 = vmatpush1.msra.mxu0 %v779
  %2363 = vmatprep.subr.mxu0 0.0
  %2364 = vmatpush1.msra.mxu0 %v780
  %2365 = vmatprep.subr.mxu0 0.0
  %2366 = vmatpush1.msra.mxu0 %v781
  %2367 = vmatprep.subr.mxu0 0.0
  %2368 = vmatpush1.msra.mxu0 %v782
  %2369 = vmatprep.subr.mxu0 0.0
  %2370 = vmatpush1.msra.mxu0 %v783
  %2371 = vmatprep.subr.mxu0 0.0
  %2372 = vmatpush1.msra.mxu0 %v784
  %2373 = vmatprep.subr.mxu0 0.0
  %2374 = vmatpush1.msra.mxu0 %v785
  %2375 = vmatprep.subr.mxu0 0.0
  %2376 = vmatpush1.msra.mxu0 %v786
  %2377 = vmatprep.subr.mxu0 0.0
  %2378 = vmatpush1.msra.mxu0 %v787
  %2379 = vmatprep.subr.mxu0 0.0
  %2380 = vmatpush1.msra.mxu0 %v788
  %2381 = vmatprep.subr.mxu0 0.0
  %2382 = vmatpush1.msra.mxu0 %v789
  %2383 = vmatprep.subr.mxu0 0.0
  %2384 = vmatpush1.msra.mxu0 %v790
  %2385 = vmatprep.subr.mxu0 0.0
  %2386 = vmatpush1.msra.mxu0 %v791
  %2387 = vmatprep.subr.mxu0 0.0
  %2388 = vmatpush1.msra.mxu0 %v792
  %2389 = vmatprep.subr.mxu0 0.0
  %2390 = vmatpush1.msra.mxu0 %v793
  %2391 = vmatprep.subr.mxu0 0.0
  %2392 = vmatpush1.msra.mxu0 %v794
  %2393 = vmatprep.subr.mxu0 0.0
  %2394 = vmatpush1.msra.mxu0 %v795
  %2395 = vmatprep.subr.mxu0 0.0
  %2396 = vmatpush1.msra.mxu0 %v796
  %2397 = vmatprep.subr.mxu0 0.0
  %2398 = vmatpush1.msra.mxu0 %v797
  %2399 = vmatprep.mubr.f32.mxu0 %v35
  %2400 = vmatmul.mubr.f32.gmra.mrb[0].mxu0 %v34
  %v2401 = vpop.f32.mrb[0].mxu0
  %v2402 = vadd.f32 %v2257, %v2401
  %v2403 = vpop.f32.mrb[0].mxu0
  %2404 = vmatprep.mubr.f32.mxu0 %v62
  %2405 = vmatmul.mubr.f32.gmra.mrb[0].mxu0 %v61
  %v2406 = vpop.f32.mrb[0].mxu0
  %v2407 = vadd.f32 %v2262, %v2406
  %v2408 = vpop.f32.mrb[0].mxu0
  %2409 = vmatprep.mubr.f32.mxu0 %v89
  %2410 = vmatmul.mubr.f32.gmra.mrb[0].mxu0 %v88
  %v2411 = vpop.f32.mrb[0].mxu0
  %v2412 = vadd.f32 %v2267, %v2411
  %v2413 = vpop.f32.mrb[0].mxu0
  %2414 = vmatprep.mubr.f32.mxu0 %v116
  %2415 = vmatmul.mubr.f32.gmra.mrb[0].mxu0 %v115
  %v2416 = vpop.f32.mrb[0].mxu0
  %v2417 = vadd.f32 %v2272, %v2416
  %v2418 = vpop.f32.mrb[0].mxu0
  %2419 = vmatprep.mubr.f32.mxu0 %v143
  %2420 = vmatmul.mubr.f32.gmra.mrb[0].mxu0 %v142
  %v2421 = vpop.f32.mrb[0].mxu0
  %v2422 = vadd.f32 %v2277, %v2421
  %v2423 = vpop.f32.mrb[0].mxu0
  %2424 = vmatprep.mubr.f32.mxu0 %v170
  %2425 = vmatmul.mubr.f32.gmra.mrb[0].mxu0 %v169
  %v2426 = vpop.f32.mrb[0].mxu0
  %v2427 = vadd.f32 %v2282, %v2426
  %v2428 = vpop.f32.mrb[0].mxu0
  %2429 = vmatprep.mubr.f32.mxu0 %v197
  %2430 = vmatmul.mubr.f32.gmra.mrb[0].mxu0 %v196
  %v2431 = vpop.f32.mrb[0].mxu0
  %v2432 = vadd.f32 %v2287, %v2431
  %v2433 = vpop.f32.mrb[0].mxu0
  %2434 = vmatprep.mubr.f32.mxu0 %v224
  %2435 = vmatmul.mubr.f32.gmra.mrb[0].mxu0 %v223
  %v2436 = vpop.f32.mrb[0].mxu0
  %v2437 = vadd.f32 %v2292, %v2436
  %v2438 = vpop.f32.mrb[0].mxu0
  %2439 = vmatprep.mubr.f32.mxu0 %v251
  %2440 = vmatmul.mubr.f32.gmra.mrb[0].mxu0 %v250
  %v2441 = vpop.f32.mrb[0].mxu0
  %v2442 = vadd.f32 %v2297, %v2441
  %v2443 = vpop.f32.mrb[0].mxu0
  %2444 = vmatprep.mubr.f32.mxu0 %v278
  %2445 = vmatmul.mubr.f32.gmra.mrb[0].mxu0 %v277
  %v2446 = vpop.f32.mrb[0].mxu0
  %v2447 = vadd.f32 %v2302, %v2446
  %v2448 = vpop.f32.mrb[0].mxu0
  %2449 = vmatprep.mubr.f32.mxu0 %v305
  %2450 = vmatmul.mubr.f32.gmra.mrb[0].mxu0 %v304
  %v2451 = vpop.f32.mrb[0].mxu0
  %v2452 = vadd.f32 %v2307, %v2451
  %v2453 = vpop.f32.mrb[0].mxu0
  %2454 = vmatprep.mubr.f32.mxu0 %v332
  %2455 = vmatmul.mubr.f32.gmra.mrb[0].mxu0 %v331
  %v2456 = vpop.f32.mrb[0].mxu0
  %v2457 = vadd.f32 %v2312, %v2456
  %v2458 = vpop.f32.mrb[0].mxu0
  %2459 = vmatprep.mubr.f32.mxu0 %v359
  %2460 = vmatmul.mubr.f32.gmra.mrb[0].mxu0 %v358
  %v2461 = vpop.f32.mrb[0].mxu0
  %v2462 = vadd.f32 %v2317, %v2461
  %v2463 = vpop.f32.mrb[0].mxu0
  %2464 = vmatprep.mubr.f32.mxu0 %v386
  %2465 = vmatmul.mubr.f32.gmra.mrb[0].mxu0 %v385
  %v2466 = vpop.f32.mrb[0].mxu0
  %v2467 = vadd.f32 %v2322, %v2466
  %v2468 = vpop.f32.mrb[0].mxu0
  %2469 = vmatprep.mubr.f32.mxu0 %v413
  %2470 = vmatmul.mubr.f32.gmra.mrb[0].mxu0 %v412
  %v2471 = vpop.f32.mrb[0].mxu0
  %v2472 = vadd.f32 %v2327, %v2471
  %v2473 = vpop.f32.mrb[0].mxu0
  %2474 = vmatprep.mubr.f32.mxu0 %v440
  %2475 = vmatmul.mubr.f32.gmra.mrb[0].mxu0 %v439
  %v2476 = vpop.f32.mrb[0].mxu0
  %v2477 = vadd.f32 %v2332, %v2476
  %v2478 = vpop.f32.mrb[0].mxu0
  %2479 = vdwg.mxu0
  %2480 = vmatprep.subr.mxu0 0.0
  %2481 = vmatpush1.msra.mxu0 %v798
  %2482 = vmatprep.subr.mxu0 0.0
  %2483 = vmatpush1.msra.mxu0 %v799
  %2484 = vmatprep.subr.mxu0 0.0
  %2485 = vmatpush1.msra.mxu0 %v800
  %2486 = vmatprep.subr.mxu0 0.0
  %2487 = vmatpush1.msra.mxu0 %v801
  %2488 = vmatprep.subr.mxu0 0.0
  %2489 = vmatpush1.msra.mxu0 %v802
  %2490 = vmatprep.subr.mxu0 0.0
  %2491 = vmatpush1.msra.mxu0 %v803
  %2492 = vmatprep.subr.mxu0 0.0
  %2493 = vmatpush1.msra.mxu0 %v804
  %2494 = vmatprep.subr.mxu0 0.0
  %2495 = vmatpush1.msra.mxu0 %v805
  %2496 = vmatprep.subr.mxu0 0.0
  %2497 = vmatpush1.msra.mxu0 %v806
  %2498 = vmatprep.subr.mxu0 0.0
  %2499 = vmatpush1.msra.mxu0 %v807
  %2500 = vmatprep.subr.mxu0 0.0
  %2501 = vmatpush1.msra.mxu0 %v808
  %2502 = vmatprep.subr.mxu0 0.0
  %2503 = vmatpush1.msra.mxu0 %v809
  %2504 = vmatprep.subr.mxu0 0.0
  %2505 = vmatpush1.msra.mxu0 %v810
  %2506 = vmatprep.subr.mxu0 0.0
  %2507 = vmatpush1.msra.mxu0 %v811
  %2508 = vmatprep.subr.mxu0 0.0
  %2509 = vmatpush1.msra.mxu0 %v812
  %2510 = vmatprep.subr.mxu0 0.0
  %2511 = vmatpush1.msra.mxu0 %v813
  %2512 = vmatprep.subr.mxu0 0.0
  %2513 = vmatpush1.msra.mxu0 %v814
  %2514 = vmatprep.subr.mxu0 0.0
  %2515 = vmatpush1.msra.mxu0 %v815
  %2516 = vmatprep.subr.mxu0 0.0
  %2517 = vmatpush1.msra.mxu0 %v816
  %2518 = vmatprep.subr.mxu0 0.0
  %2519 = vmatpush1.msra.mxu0 %v817
  %2520 = vmatprep.subr.mxu0 0.0
  %2521 = vmatpush1.msra.mxu0 %v818
  %2522 = vmatprep.subr.mxu0 0.0
  %2523 = vmatpush1.msra.mxu0 %v819
  %2524 = vmatprep.subr.mxu0 0.0
  %2525 = vmatpush1.msra.mxu0 %v820
  %2526 = vmatprep.subr.mxu0 0.0
  %2527 = vmatpush1.msra.mxu0 %v821
  %2528 = vmatprep.subr.mxu0 0.0
  %2529 = vmatpush1.msra.mxu0 %v822
  %2530 = vmatprep.subr.mxu0 0.0
  %2531 = vmatpush1.msra.mxu0 %v823
  %2532 = vmatprep.subr.mxu0 0.0
  %2533 = vmatpush1.msra.mxu0 %v824
  %2534 = vmatprep.subr.mxu0 0.0
  %2535 = vmatpush1.msra.mxu0 %v825
  %2536 = vmatprep.subr.mxu0 0.0
  %2537 = vmatpush1.msra.mxu0 %v826
  %2538 = vmatprep.subr.mxu0 0.0
  %2539 = vmatpush1.msra.mxu0 %v827
  %2540 = vmatprep.subr.mxu0 0.0
  %2541 = vmatpush1.msra.mxu0 %v828
  %2542 = vmatprep.subr.mxu0 0.0
  %2543 = vmatpush1.msra.mxu0 %v829
  %2544 = vmatprep.mubr.f32.mxu0 %v37
  %2545 = vmatmul.mubr.f32.gmra.mrb[0].mxu0 %v36
  %v2546 = vpop.f32.mrb[0].mxu0
  %v2547 = vadd.f32 %v2402, %v2546
  %v2548 = vpop.f32.mrb[0].mxu0
  %2549 = vmatprep.mubr.f32.mxu0 %v64
  %2550 = vmatmul.mubr.f32.gmra.mrb[0].mxu0 %v63
  %v2551 = vpop.f32.mrb[0].mxu0
  %v2552 = vadd.f32 %v2407, %v2551
  %v2553 = vpop.f32.mrb[0].mxu0
  %2554 = vmatprep.mubr.f32.mxu0 %v91
  %2555 = vmatmul.mubr.f32.gmra.mrb[0].mxu0 %v90
  %v2556 = vpop.f32.mrb[0].mxu0
  %v2557 = vadd.f32 %v2412, %v2556
  %v2558 = vpop.f32.mrb[0].mxu0
  %2559 = vmatprep.mubr.f32.mxu0 %v118
  %2560 = vmatmul.mubr.f32.gmra.mrb[0].mxu0 %v117
  %v2561 = vpop.f32.mrb[0].mxu0
  %v2562 = vadd.f32 %v2417, %v2561
  %v2563 = vpop.f32.mrb[0].mxu0
  %2564 = vmatprep.mubr.f32.mxu0 %v145
  %2565 = vmatmul.mubr.f32.gmra.mrb[0].mxu0 %v144
  %v2566 = vpop.f32.mrb[0].mxu0
  %v2567 = vadd.f32 %v2422, %v2566
  %v2568 = vpop.f32.mrb[0].mxu0
  %2569 = vmatprep.mubr.f32.mxu0 %v172
  %2570 = vmatmul.mubr.f32.gmra.mrb[0].mxu0 %v171
  %v2571 = vpop.f32.mrb[0].mxu0
  %v2572 = vadd.f32 %v2427, %v2571
  %v2573 = vpop.f32.mrb[0].mxu0
  %2574 = vmatprep.mubr.f32.mxu0 %v199
  %2575 = vmatmul.mubr.f32.gmra.mrb[0].mxu0 %v198
  %v2576 = vpop.f32.mrb[0].mxu0
  %v2577 = vadd.f32 %v2432, %v2576
  %v2578 = vpop.f32.mrb[0].mxu0
  %2579 = vmatprep.mubr.f32.mxu0 %v226
  %2580 = vmatmul.mubr.f32.gmra.mrb[0].mxu0 %v225
  %v2581 = vpop.f32.mrb[0].mxu0
  %v2582 = vadd.f32 %v2437, %v2581
  %v2583 = vpop.f32.mrb[0].mxu0
  %2584 = vmatprep.mubr.f32.mxu0 %v253
  %2585 = vmatmul.mubr.f32.gmra.mrb[0].mxu0 %v252
  %v2586 = vpop.f32.mrb[0].mxu0
  %v2587 = vadd.f32 %v2442, %v2586
  %v2588 = vpop.f32.mrb[0].mxu0
  %2589 = vmatprep.mubr.f32.mxu0 %v280
  %2590 = vmatmul.mubr.f32.gmra.mrb[0].mxu0 %v279
  %v2591 = vpop.f32.mrb[0].mxu0
  %v2592 = vadd.f32 %v2447, %v2591
  %v2593 = vpop.f32.mrb[0].mxu0
  %2594 = vmatprep.mubr.f32.mxu0 %v307
  %2595 = vmatmul.mubr.f32.gmra.mrb[0].mxu0 %v306
  %v2596 = vpop.f32.mrb[0].mxu0
  %v2597 = vadd.f32 %v2452, %v2596
  %v2598 = vpop.f32.mrb[0].mxu0
  %2599 = vmatprep.mubr.f32.mxu0 %v334
  %2600 = vmatmul.mubr.f32.gmra.mrb[0].mxu0 %v333
  %v2601 = vpop.f32.mrb[0].mxu0
  %v2602 = vadd.f32 %v2457, %v2601
  %v2603 = vpop.f32.mrb[0].mxu0
  %2604 = vmatprep.mubr.f32.mxu0 %v361
  %2605 = vmatmul.mubr.f32.gmra.mrb[0].mxu0 %v360
  %v2606 = vpop.f32.mrb[0].mxu0
  %v2607 = vadd.f32 %v2462, %v2606
  %v2608 = vpop.f32.mrb[0].mxu0
  %2609 = vmatprep.mubr.f32.mxu0 %v388
  %2610 = vmatmul.mubr.f32.gmra.mrb[0].mxu0 %v387
  %v2611 = vpop.f32.mrb[0].mxu0
  %v2612 = vadd.f32 %v2467, %v2611
  %v2613 = vpop.f32.mrb[0].mxu0
  %2614 = vmatprep.mubr.f32.mxu0 %v415
  %2615 = vmatmul.mubr.f32.gmra.mrb[0].mxu0 %v414
  %v2616 = vpop.f32.mrb[0].mxu0
  %v2617 = vadd.f32 %v2472, %v2616
  %v2618 = vpop.f32.mrb[0].mxu0
  %2619 = vmatprep.mubr.f32.mxu0 %v442
  %2620 = vmatmul.mubr.f32.gmra.mrb[0].mxu0 %v441
  %v2621 = vpop.f32.mrb[0].mxu0
  %v2622 = vadd.f32 %v2477, %v2621
  %v2623 = vpop.f32.mrb[0].mxu0
  %2624 = vdwg.mxu0
  %2625 = vmatprep.subr.mxu0 0.0
  %2626 = vmatpush1.msra.mxu0 %v830
  %2627 = vmatprep.subr.mxu0 0.0
  %2628 = vmatpush1.msra.mxu0 %v831
  %2629 = vmatprep.subr.mxu0 0.0
  %2630 = vmatpush1.msra.mxu0 %v832
  %2631 = vmatprep.subr.mxu0 0.0
  %2632 = vmatpush1.msra.mxu0 %v833
  %2633 = vmatprep.subr.mxu0 0.0
  %2634 = vmatpush1.msra.mxu0 %v834
  %2635 = vmatprep.subr.mxu0 0.0
  %2636 = vmatpush1.msra.mxu0 %v835
  %2637 = vmatprep.subr.mxu0 0.0
  %2638 = vmatpush1.msra.mxu0 %v836
  %2639 = vmatprep.subr.mxu0 0.0
  %2640 = vmatpush1.msra.mxu0 %v837
  %2641 = vmatprep.subr.mxu0 0.0
  %2642 = vmatpush1.msra.mxu0 %v838
  %2643 = vmatprep.subr.mxu0 0.0
  %2644 = vmatpush1.msra.mxu0 %v839
  %2645 = vmatprep.subr.mxu0 0.0
  %2646 = vmatpush1.msra.mxu0 %v840
  %2647 = vmatprep.subr.mxu0 0.0
  %2648 = vmatpush1.msra.mxu0 %v841
  %2649 = vmatprep.subr.mxu0 0.0
  %2650 = vmatpush1.msra.mxu0 %v842
  %2651 = vmatprep.subr.mxu0 0.0
  %2652 = vmatpush1.msra.mxu0 %v843
  %2653 = vmatprep.subr.mxu0 0.0
  %2654 = vmatpush1.msra.mxu0 %v844
  %2655 = vmatprep.subr.mxu0 0.0
  %2656 = vmatpush1.msra.mxu0 %v845
  %2657 = vmatprep.subr.mxu0 0.0
  %2658 = vmatpush1.msra.mxu0 %v846
  %2659 = vmatprep.subr.mxu0 0.0
  %2660 = vmatpush1.msra.mxu0 %v847
  %2661 = vmatprep.subr.mxu0 0.0
  %2662 = vmatpush1.msra.mxu0 %v848
  %2663 = vmatprep.subr.mxu0 0.0
  %2664 = vmatpush1.msra.mxu0 %v849
  %2665 = vmatprep.subr.mxu0 0.0
  %2666 = vmatpush1.msra.mxu0 %v850
  %2667 = vmatprep.subr.mxu0 0.0
  %2668 = vmatpush1.msra.mxu0 %v851
  %2669 = vmatprep.subr.mxu0 0.0
  %2670 = vmatpush1.msra.mxu0 %v852
  %2671 = vmatprep.subr.mxu0 0.0
  %2672 = vmatpush1.msra.mxu0 %v853
  %2673 = vmatprep.subr.mxu0 0.0
  %2674 = vmatpush1.msra.mxu0 %v854
  %2675 = vmatprep.subr.mxu0 0.0
  %2676 = vmatpush1.msra.mxu0 %v855
  %2677 = vmatprep.subr.mxu0 0.0
  %2678 = vmatpush1.msra.mxu0 %v856
  %2679 = vmatprep.subr.mxu0 0.0
  %2680 = vmatpush1.msra.mxu0 %v857
  %2681 = vmatprep.subr.mxu0 0.0
  %2682 = vmatpush1.msra.mxu0 %v858
  %2683 = vmatprep.subr.mxu0 0.0
  %2684 = vmatpush1.msra.mxu0 %v859
  %2685 = vmatprep.subr.mxu0 0.0
  %2686 = vmatpush1.msra.mxu0 %v860
  %2687 = vmatprep.subr.mxu0 0.0
  %2688 = vmatpush1.msra.mxu0 %v861
  %2689 = vmatprep.mubr.f32.mxu0 %v39
  %2690 = vmatmul.mubr.f32.gmra.mrb[0].mxu0 %v38
  %v2691 = vpop.f32.mrb[0].mxu0
  %v2692 = vadd.f32 %v2547, %v2691
  %v2693 = vpop.f32.mrb[0].mxu0
  %2694 = vmatprep.mubr.f32.mxu0 %v66
  %2695 = vmatmul.mubr.f32.gmra.mrb[0].mxu0 %v65
  %v2696 = vpop.f32.mrb[0].mxu0
  %v2697 = vadd.f32 %v2552, %v2696
  %v2698 = vpop.f32.mrb[0].mxu0
  %2699 = vmatprep.mubr.f32.mxu0 %v93
  %2700 = vmatmul.mubr.f32.gmra.mrb[0].mxu0 %v92
  %v2701 = vpop.f32.mrb[0].mxu0
  %v2702 = vadd.f32 %v2557, %v2701
  %v2703 = vpop.f32.mrb[0].mxu0
  %2704 = vmatprep.mubr.f32.mxu0 %v120
  %2705 = vmatmul.mubr.f32.gmra.mrb[0].mxu0 %v119
  %v2706 = vpop.f32.mrb[0].mxu0
  %v2707 = vadd.f32 %v2562, %v2706
  %v2708 = vpop.f32.mrb[0].mxu0
  %2709 = vmatprep.mubr.f32.mxu0 %v147
  %2710 = vmatmul.mubr.f32.gmra.mrb[0].mxu0 %v146
  %v2711 = vpop.f32.mrb[0].mxu0
  %v2712 = vadd.f32 %v2567, %v2711
  %v2713 = vpop.f32.mrb[0].mxu0
  %2714 = vmatprep.mubr.f32.mxu0 %v174
  %2715 = vmatmul.mubr.f32.gmra.mrb[0].mxu0 %v173
  %v2716 = vpop.f32.mrb[0].mxu0
  %v2717 = vadd.f32 %v2572, %v2716
  %v2718 = vpop.f32.mrb[0].mxu0
  %2719 = vmatprep.mubr.f32.mxu0 %v201
  %2720 = vmatmul.mubr.f32.gmra.mrb[0].mxu0 %v200
  %v2721 = vpop.f32.mrb[0].mxu0
  %v2722 = vadd.f32 %v2577, %v2721
  %v2723 = vpop.f32.mrb[0].mxu0
  %2724 = vmatprep.mubr.f32.mxu0 %v228
  %2725 = vmatmul.mubr.f32.gmra.mrb[0].mxu0 %v227
  %v2726 = vpop.f32.mrb[0].mxu0
  %v2727 = vadd.f32 %v2582, %v2726
  %v2728 = vpop.f32.mrb[0].mxu0
  %2729 = vmatprep.mubr.f32.mxu0 %v255
  %2730 = vmatmul.mubr.f32.gmra.mrb[0].mxu0 %v254
  %v2731 = vpop.f32.mrb[0].mxu0
  %v2732 = vadd.f32 %v2587, %v2731
  %v2733 = vpop.f32.mrb[0].mxu0
  %2734 = vmatprep.mubr.f32.mxu0 %v282
  %2735 = vmatmul.mubr.f32.gmra.mrb[0].mxu0 %v281
  %v2736 = vpop.f32.mrb[0].mxu0
  %v2737 = vadd.f32 %v2592, %v2736
  %v2738 = vpop.f32.mrb[0].mxu0
  %2739 = vmatprep.mubr.f32.mxu0 %v309
  %2740 = vmatmul.mubr.f32.gmra.mrb[0].mxu0 %v308
  %v2741 = vpop.f32.mrb[0].mxu0
  %v2742 = vadd.f32 %v2597, %v2741
  %v2743 = vpop.f32.mrb[0].mxu0
  %2744 = vmatprep.mubr.f32.mxu0 %v336
  %2745 = vmatmul.mubr.f32.gmra.mrb[0].mxu0 %v335
  %v2746 = vpop.f32.mrb[0].mxu0
  %v2747 = vadd.f32 %v2602, %v2746
  %v2748 = vpop.f32.mrb[0].mxu0
  %2749 = vmatprep.mubr.f32.mxu0 %v363
  %2750 = vmatmul.mubr.f32.gmra.mrb[0].mxu0 %v362
  %v2751 = vpop.f32.mrb[0].mxu0
  %v2752 = vadd.f32 %v2607, %v2751
  %v2753 = vpop.f32.mrb[0].mxu0
  %2754 = vmatprep.mubr.f32.mxu0 %v390
  %2755 = vmatmul.mubr.f32.gmra.mrb[0].mxu0 %v389
  %v2756 = vpop.f32.mrb[0].mxu0
  %v2757 = vadd.f32 %v2612, %v2756
  %v2758 = vpop.f32.mrb[0].mxu0
  %2759 = vmatprep.mubr.f32.mxu0 %v417
  %2760 = vmatmul.mubr.f32.gmra.mrb[0].mxu0 %v416
  %v2761 = vpop.f32.mrb[0].mxu0
  %v2762 = vadd.f32 %v2617, %v2761
  %v2763 = vpop.f32.mrb[0].mxu0
  %2764 = vmatprep.mubr.f32.mxu0 %v444
  %2765 = vmatmul.mubr.f32.gmra.mrb[0].mxu0 %v443
  %v2766 = vpop.f32.mrb[0].mxu0
  %v2767 = vadd.f32 %v2622, %v2766
  %v2768 = vpop.f32.mrb[0].mxu0
  %2769 = vdwg.mxu0
  %2770 = vmatprep.subr.mxu0 0.0
  %2771 = vmatpush1.msra.mxu0 %v862
  %2772 = vmatprep.subr.mxu0 0.0
  %2773 = vmatpush1.msra.mxu0 %v863
  %2774 = vmatprep.subr.mxu0 0.0
  %2775 = vmatpush1.msra.mxu0 %v864
  %2776 = vmatprep.subr.mxu0 0.0
  %2777 = vmatpush1.msra.mxu0 %v865
  %2778 = vmatprep.subr.mxu0 0.0
  %2779 = vmatpush1.msra.mxu0 %v866
  %2780 = vmatprep.subr.mxu0 0.0
  %2781 = vmatpush1.msra.mxu0 %v867
  %2782 = vmatprep.subr.mxu0 0.0
  %2783 = vmatpush1.msra.mxu0 %v868
  %2784 = vmatprep.subr.mxu0 0.0
  %2785 = vmatpush1.msra.mxu0 %v869
  %2786 = vmatprep.subr.mxu0 0.0
  %2787 = vmatpush1.msra.mxu0 %v870
  %2788 = vmatprep.subr.mxu0 0.0
  %2789 = vmatpush1.msra.mxu0 %v871
  %2790 = vmatprep.subr.mxu0 0.0
  %2791 = vmatpush1.msra.mxu0 %v872
  %2792 = vmatprep.subr.mxu0 0.0
  %2793 = vmatpush1.msra.mxu0 %v873
  %2794 = vmatprep.subr.mxu0 0.0
  %2795 = vmatpush1.msra.mxu0 %v874
  %2796 = vmatprep.subr.mxu0 0.0
  %2797 = vmatpush1.msra.mxu0 %v875
  %2798 = vmatprep.subr.mxu0 0.0
  %2799 = vmatpush1.msra.mxu0 %v876
  %2800 = vmatprep.subr.mxu0 0.0
  %2801 = vmatpush1.msra.mxu0 %v877
  %2802 = vmatprep.subr.mxu0 0.0
  %2803 = vmatpush1.msra.mxu0 0.0
  %2804 = vmatprep.subr.mxu0 0.0
  %2805 = vmatpush1.msra.mxu0 0.0
  %2806 = vmatprep.subr.mxu0 0.0
  %2807 = vmatpush1.msra.mxu0 0.0
  %2808 = vmatprep.subr.mxu0 0.0
  %2809 = vmatpush1.msra.mxu0 0.0
  %2810 = vmatprep.subr.mxu0 0.0
  %2811 = vmatpush1.msra.mxu0 0.0
  %2812 = vmatprep.subr.mxu0 0.0
  %2813 = vmatpush1.msra.mxu0 0.0
  %2814 = vmatprep.subr.mxu0 0.0
  %2815 = vmatpush1.msra.mxu0 0.0
  %2816 = vmatprep.subr.mxu0 0.0
  %2817 = vmatpush1.msra.mxu0 0.0
  %2818 = vmatprep.subr.mxu0 0.0
  %2819 = vmatpush1.msra.mxu0 0.0
  %2820 = vmatprep.subr.mxu0 0.0
  %2821 = vmatpush1.msra.mxu0 0.0
  %2822 = vmatprep.subr.mxu0 0.0
  %2823 = vmatpush1.msra.mxu0 0.0
  %2824 = vmatprep.subr.mxu0 0.0
  %2825 = vmatpush1.msra.mxu0 0.0
  %2826 = vmatprep.subr.mxu0 0.0
  %2827 = vmatpush1.msra.mxu0 0.0
  %2828 = vmatprep.subr.mxu0 0.0
  %2829 = vmatpush1.msra.mxu0 0.0
  %2830 = vmatprep.subr.mxu0 0.0
  %2831 = vmatpush1.msra.mxu0 0.0
  %2832 = vmatprep.subr.mxu0 0.0
  %2833 = vmatpush1.msra.mxu0 0.0
  %2834 = vmatprep.mubr.f32.mxu0 0.0
  %2835 = vmatmul.mubr.f32.gmra.mrb[0].mxu0 %v40
  %v2836 = vpop.f32.mrb[0].mxu0
  %v2837 = vadd.f32 %v2692, %v2836
  %v2838 = vpop.f32.mrb[0].mxu0
  %2839 = vmatprep.mubr.f32.mxu0 0.0
  %2840 = vmatmul.mubr.f32.gmra.mrb[0].mxu0 %v67
  %v2841 = vpop.f32.mrb[0].mxu0
  %v2842 = vadd.f32 %v2697, %v2841
  %v2843 = vpop.f32.mrb[0].mxu0
  %2844 = vmatprep.mubr.f32.mxu0 0.0
  %2845 = vmatmul.mubr.f32.gmra.mrb[0].mxu0 %v94
  %v2846 = vpop.f32.mrb[0].mxu0
  %v2847 = vadd.f32 %v2702, %v2846
  %v2848 = vpop.f32.mrb[0].mxu0
  %2849 = vmatprep.mubr.f32.mxu0 0.0
  %2850 = vmatmul.mubr.f32.gmra.mrb[0].mxu0 %v121
  %v2851 = vpop.f32.mrb[0].mxu0
  %v2852 = vadd.f32 %v2707, %v2851
  %v2853 = vpop.f32.mrb[0].mxu0
  %2854 = vmatprep.mubr.f32.mxu0 0.0
  %2855 = vmatmul.mubr.f32.gmra.mrb[0].mxu0 %v148
  %v2856 = vpop.f32.mrb[0].mxu0
  %v2857 = vadd.f32 %v2712, %v2856
  %v2858 = vpop.f32.mrb[0].mxu0
  %2859 = vmatprep.mubr.f32.mxu0 0.0
  %2860 = vmatmul.mubr.f32.gmra.mrb[0].mxu0 %v175
  %v2861 = vpop.f32.mrb[0].mxu0
  %v2862 = vadd.f32 %v2717, %v2861
  %v2863 = vpop.f32.mrb[0].mxu0
  %2864 = vmatprep.mubr.f32.mxu0 0.0
  %2865 = vmatmul.mubr.f32.gmra.mrb[0].mxu0 %v202
  %v2866 = vpop.f32.mrb[0].mxu0
  %v2867 = vadd.f32 %v2722, %v2866
  %v2868 = vpop.f32.mrb[0].mxu0
  %2869 = vmatprep.mubr.f32.mxu0 0.0
  %2870 = vmatmul.mubr.f32.gmra.mrb[0].mxu0 %v229
  %v2871 = vpop.f32.mrb[0].mxu0
  %v2872 = vadd.f32 %v2727, %v2871
  %v2873 = vpop.f32.mrb[0].mxu0
  %2874 = vmatprep.mubr.f32.mxu0 0.0
  %2875 = vmatmul.mubr.f32.gmra.mrb[0].mxu0 %v256
  %v2876 = vpop.f32.mrb[0].mxu0
  %v2877 = vadd.f32 %v2732, %v2876
  %v2878 = vpop.f32.mrb[0].mxu0
  %2879 = vmatprep.mubr.f32.mxu0 0.0
  %2880 = vmatmul.mubr.f32.gmra.mrb[0].mxu0 %v283
  %v2881 = vpop.f32.mrb[0].mxu0
  %v2882 = vadd.f32 %v2737, %v2881
  %v2883 = vpop.f32.mrb[0].mxu0
  %2884 = vmatprep.mubr.f32.mxu0 0.0
  %2885 = vmatmul.mubr.f32.gmra.mrb[0].mxu0 %v310
  %v2886 = vpop.f32.mrb[0].mxu0
  %v2887 = vadd.f32 %v2742, %v2886
  %v2888 = vpop.f32.mrb[0].mxu0
  %2889 = vmatprep.mubr.f32.mxu0 0.0
  %2890 = vmatmul.mubr.f32.gmra.mrb[0].mxu0 %v337
  %v2891 = vpop.f32.mrb[0].mxu0
  %v2892 = vadd.f32 %v2747, %v2891
  %v2893 = vpop.f32.mrb[0].mxu0
  %2894 = vmatprep.mubr.f32.mxu0 0.0
  %2895 = vmatmul.mubr.f32.gmra.mrb[0].mxu0 %v364
  %v2896 = vpop.f32.mrb[0].mxu0
  %v2897 = vadd.f32 %v2752, %v2896
  %v2898 = vpop.f32.mrb[0].mxu0
  %2899 = vmatprep.mubr.f32.mxu0 0.0
  %2900 = vmatmul.mubr.f32.gmra.mrb[0].mxu0 %v391
  %v2901 = vpop.f32.mrb[0].mxu0
  %v2902 = vadd.f32 %v2757, %v2901
  %v2903 = vpop.f32.mrb[0].mxu0
  %2904 = vmatprep.mubr.f32.mxu0 0.0
  %2905 = vmatmul.mubr.f32.gmra.mrb[0].mxu0 %v418
  %v2906 = vpop.f32.mrb[0].mxu0
  %v2907 = vadd.f32 %v2762, %v2906
  %v2908 = vpop.f32.mrb[0].mxu0
  %2909 = vmatprep.mubr.f32.mxu0 0.0
  %2910 = vmatmul.mubr.f32.gmra.mrb[0].mxu0 %v445
  %v2911 = vpop.f32.mrb[0].mxu0
  %v2912 = vadd.f32 %v2767, %v2911
  %v2913 = vpop.f32.mrb[0].mxu0
  %2914 = vdwg.mxu0
  %2915 = vst [vmem:[%s3] sm:$0xff] %v2837
  %2916 = vst [vmem:[%s3 + $0x8] sm:$0xff] %v2842
  %2917 = vst [vmem:[%s3 + $0x10] sm:$0xff] %v2847
  %2918 = vst [vmem:[%s3 + $0x18] sm:$0xff] %v2852
  %2919 = vst [vmem:[%s3 + $0x20] sm:$0xff] %v2857
  %2920 = vst [vmem:[%s3 + $0x28] sm:$0xff] %v2862
  %2921 = vst [vmem:[%s3 + $0x30] sm:$0xff] %v2867
  %2922 = vst [vmem:[%s3 + $0x38] sm:$0xff] %v2872
  %2923 = vst [vmem:[%s3 + $0x40] sm:$0xff] %v2877
  %2924 = vst [vmem:[%s3 + $0x48] sm:$0xff] %v2882
  %2925 = vst [vmem:[%s3 + $0x50] sm:$0xff] %v2887
  %2926 = vst [vmem:[%s3 + $0x58] sm:$0xff] %v2892
  %2927 = vst [vmem:[%s3 + $0x60] sm:$0xff] %v2897
  %2928 = vst [vmem:[%s3 + $0x68] sm:$0xff] %v2902
  %2929 = vst [vmem:[%s3 + $0x70] sm:$0xff] %v2907
  %2930 = vst [vmem:[%s3 + $0x78] sm:$0xff] %v2912
  // Predicated region
  $region14: #{baseline_tab_forward.8} parent=0 // pred_check
    _
  $region15: #{baseline_tab_forward.8} parent=0 // pred_check_branch
    %2932 = sbr.rel (0) target = $region17
  $region16: #{baseline_tab_forward.8} parent=0 // pred_region
    _
  $region17: #{baseline_tab_forward.8} parent=0 // pred_fallthru
    _
  // Predicated region
  $region18: #{baseline_tab_forward.8} parent=0 // pred_check
    _
  $region19: #{baseline_tab_forward.8} parent=0 // pred_check_branch
    %2934 = sbr.rel (0) target = $region21
  $region20: #{baseline_tab_forward.8} parent=0 // pred_region
    _
  $region21: #{baseline_tab_forward.8} parent=0 // pred_fallthru
    _

// kernel: baseline_tab_forward.10
$region0: #{baseline_tab_forward.10}
  #allocation0 [shape = 'u32[]', space=smem, size = 0x4, offset = 0x4, fixed_abs, tag = 'smem constant byte address 0x4 - core index']
  #allocation1 [shape = 'u32[144,128]{1,0:T(1,128)}', space=vmem, size = 0x12000, scoped, tag = 'internal scratch']
  #allocation2 [shape = 'f32[2,1024]{1,0:T(2,128)}', space=vmem, size = 0x2000, scoped, tag = 'scratch operand']
  %s0 = inlined_call_operand.vmem [shape: f32[2,1024], index: 0, kind: input, shape index: {}]
  %s1 = inlined_call_operand.vmem [shape: f32[4,1024,1024], index: 1, kind: input, shape index: {}]
  %s2 = inlined_call_operand.vmem [shape: f32[4,1,1024], index: 2, kind: input, shape index: {}]
  %s3 = inlined_call_operand.vmem [shape: f32[2,1024], index: 3, kind: output, shape index: {}]
  %s4 = sld [smem:[#allocation0]]
  $region49: #{baseline_tab_forward.10} parent=0
    _
  %s6 = ssub.s32 1, %s4
  %s7 = scalar_select 0, %s6, %s4
  loop: start=0, step=1, limit=6
  $region2: #{baseline_tab_forward.10} parent=0 // loop_pre_header
    _
  $region3: #{baseline_tab_forward.10} parent=0 // loop_header
    %s9 = sphi 0, %s13
    %p10 = scmp.ge.s32.totalorder %s9, 6
    %s17 = sphi 0, %s17
    %s19 = sphi 0, %s17
    %s20 = sphi 0, %s19
    %s34 = sphi 0, %s20
    %s40 = sphi 0, %s42
    %s43 = sphi 0, %s40
    %s44 = sphi 0, %s43
    %s60 = sphi 0, %s44
    %s66 = sphi 0, %s68
    %s69 = sphi 0, %s66
    %s70 = sphi 0, %s69
    %s86 = sphi 0, %s70
    %s90 = sphi 0, %s90
    %s92 = sphi 0, %s90
    %s93 = sphi 0, %s92
    %s107 = sphi 0, %s93
  $region4: #{baseline_tab_forward.10} parent=0 // loop_header_branch
    %12 = sbr.rel (%p10) target = $region8
  $region5: #{baseline_tab_forward.10} parent=0 // loop_body
    %s14 = ssub.s32 %s9, 1
    %s15 = ssub.s32 %s9, 2
    %s16 = sadd.s32 %s9, 1
    %s18 = sadd.s32 %s17, 1
    %p21 = scmp.eq.s32.totalorder %s9, 3
    %p22 = scmp.ne.s32.totalorder %s17, %s19
    %p23 = scmp.eq.s32.totalorder %s9, 0
    %p24 = por %p22, %p23
    %p25 = scmp.ne.s32.totalorder %s17, %s19
    %p26 = scmp.eq.s32.totalorder %s14, 3
    %p27 = por %p25, %p26
    %p28 = scmp.ne.s32.totalorder %s19, %s20
    %p29 = scmp.eq.s32.totalorder %s14, 0
    %p30 = por %p28, %p29
    %p31 = scmp.ne.s32.totalorder %s19, %s20
    %p32 = scmp.eq.s32.totalorder %s15, 3
    %p33 = por %p31, %p32
    %p35 = scmp.ne.s32.totalorder %s20, %s34
    %p36 = scmp.eq.s32.totalorder %s15, 0
    %p37 = por %p35, %p36
    %s38 = ssub.s32 %s9, %s16
    %p39 = scmp.eq.s32.totalorder %s38, 0
    %s41 = sadd.s32 %s40, 1
    %s42 = scalar_select %p39, %s40, %s41
    %p45 = pneg %p39
    %p46 = scmp.eq.s32.totalorder %s9, 3
    %p47 = por %p45, %p46
    %p48 = scmp.ne.s32.totalorder %s40, %s43
    %p49 = scmp.eq.s32.totalorder %s9, 0
    %p50 = por %p48, %p49
    %p51 = scmp.ne.s32.totalorder %s40, %s43
    %p52 = scmp.eq.s32.totalorder %s14, 3
    %p53 = por %p51, %p52
    %p54 = scmp.ne.s32.totalorder %s43, %s44
    %p55 = scmp.eq.s32.totalorder %s14, 0
    %p56 = por %p54, %p55
    %p57 = scmp.ne.s32.totalorder %s43, %s44
    %p58 = scmp.eq.s32.totalorder %s15, 3
    %p59 = por %p57, %p58
    %p61 = scmp.ne.s32.totalorder %s44, %s60
    %p62 = scmp.eq.s32.totalorder %s15, 0
    %p63 = por %p61, %p62
    %s64 = ssub.s32 %s9, %s16
    %p65 = scmp.eq.s32.totalorder %s64, 0
    %s67 = sadd.s32 %s66, 1
    %s68 = scalar_select %p65, %s66, %s67
    %p71 = pneg %p65
    %p72 = scmp.eq.s32.totalorder %s9, 3
    %p73 = por %p71, %p72
    %p74 = scmp.ne.s32.totalorder %s66, %s69
    %p75 = scmp.eq.s32.totalorder %s9, 0
    %p76 = por %p74, %p75
    %p77 = scmp.ne.s32.totalorder %s66, %s69
    %p78 = scmp.eq.s32.totalorder %s14, 3
    %p79 = por %p77, %p78
    %p80 = scmp.ne.s32.totalorder %s69, %s70
    %p81 = scmp.eq.s32.totalorder %s14, 0
    %p82 = por %p80, %p81
    %p83 = scmp.ne.s32.totalorder %s69, %s70
    %p84 = scmp.eq.s32.totalorder %s15, 3
    %p85 = por %p83, %p84
    %p87 = scmp.ne.s32.totalorder %s70, %s86
    %p88 = scmp.eq.s32.totalorder %s15, 0
    %p89 = por %p87, %p88
    %s91 = sadd.s32 %s90, 1
    %p94 = scmp.eq.s32.totalorder %s9, 3
    %p95 = scmp.ne.s32.totalorder %s90, %s92
    %p96 = scmp.eq.s32.totalorder %s9, 0
    %p97 = por %p95, %p96
    %p98 = scmp.ne.s32.totalorder %s90, %s92
    %p99 = scmp.eq.s32.totalorder %s14, 3
    %p100 = por %p98, %p99
    %p101 = scmp.ne.s32.totalorder %s92, %s93
    %p102 = scmp.eq.s32.totalorder %s14, 0
    %p103 = por %p101, %p102
    %p104 = scmp.ne.s32.totalorder %s92, %s93
    %p105 = scmp.eq.s32.totalorder %s15, 3
    %p106 = por %p104, %p105
    %p108 = scmp.ne.s32.totalorder %s93, %s107
    %p109 = scmp.eq.s32.totalorder %s15, 0
    %p110 = por %p108, %p109
    %p111 = scmp.le.s32.totalorder 1, %s9
    %p112 = scmp.lt.s32.totalorder %s9, 5
    %p113 = pnand %p111, %p112
    %p114 = pneg %p113
    // Predicated region
    $region9: #{baseline_tab_forward.10} parent=5 // pred_check
      _
    $region10: #{baseline_tab_forward.10} parent=5 // pred_check_branch
      %116 = sbr.rel (%p113) target = $region12
    $region11: #{baseline_tab_forward.10} parent=5 // pred_region
      %s117 = ssub.s32 %s9, 1
      // Predicated region
      $region13: #{baseline_tab_forward.10} parent=11 // pred_check
        %p118 = pneg %p30
      $region14: #{baseline_tab_forward.10} parent=11 // pred_check_branch
        %120 = sbr.rel (%p118) target = $region16
      $region15: #{baseline_tab_forward.10} parent=11 // pred_region
        _
      $region16: #{baseline_tab_forward.10} parent=11 // pred_fallthru
        _
    $region12: #{baseline_tab_forward.10} parent=5 // pred_fallthru
      _
    %p121 = scmp.lt.s32.totalorder %s9, 4
    // Predicated region
    $region17: #{baseline_tab_forward.10} parent=5 // pred_check
      %p122 = pneg %p121
    $region18: #{baseline_tab_forward.10} parent=5 // pred_check_branch
      %124 = sbr.rel (%p122) target = $region20
    $region19: #{baseline_tab_forward.10} parent=5 // pred_region
      // Predicated region
      $region21: #{baseline_tab_forward.10} parent=19 // pred_check
        %p125 = pneg %p50
      $region22: #{baseline_tab_forward.10} parent=19 // pred_check_branch
        %127 = sbr.rel (%p125) target = $region24
      $region23: #{baseline_tab_forward.10} parent=19 // pred_region
        %p128 = scmp.lt.s32.totalorder %s9, 3
        %s129 = scalar_select %p128, %s9, 3
        %s130 = smul.addr %s129, 1024
        %s131 = smul.addr %s130, 8
        %s132 = scalar_lea.vmem %s1, %s131
      $region24: #{baseline_tab_forward.10} parent=19 // pred_fallthru
        _
      // Predicated region
      $region25: #{baseline_tab_forward.10} parent=19 // pred_check
        %p133 = pneg %p76
      $region26: #{baseline_tab_forward.10} parent=19 // pred_check_branch
        %135 = sbr.rel (%p133) target = $region28
      $region27: #{baseline_tab_forward.10} parent=19 // pred_region
        %p136 = scmp.lt.s32.totalorder %s9, 3
        %s137 = scalar_select %p136, %s9, 3
        %s138 = smul.addr %s137, 8
        %s139 = scalar_lea.vmem %s2, %s138
      $region28: #{baseline_tab_forward.10} parent=19 // pred_fallthru
        _
    $region20: #{baseline_tab_forward.10} parent=5 // pred_fallthru
      _
    %p140 = scmp.le.s32.totalorder 1, %s9
    %p141 = scmp.lt.s32.totalorder %s9, 5
    %p142 = pnand %p140, %p141
    %p143 = pneg %p142
    // Predicated region
    $region29: #{baseline_tab_forward.10} parent=5 // pred_check
      _
    $region30: #{baseline_tab_forward.10} parent=5 // pred_check_branch
      %145 = sbr.rel (%p142) target = $region32
    $region31: #{baseline_tab_forward.10} parent=5 // pred_region
      %s146 = ssub.s32 %s9, 1
      %p147 = pneg %p30
      %p148 = pneg %p27
      %p149 = scmp.lt.s32.totalorder %s14, 3
      %s150 = scalar_select %p149, %s14, 3
      %s151 = smul.addr %s150, 1024
      %s152 = smul.addr %s151, 8
      %s153 = scalar_lea.vmem %s1, %s152
      %p154 = pneg %p56
      %p155 = pneg %p53
      %p156 = scmp.lt.s32.totalorder %s14, 3
      %s157 = scalar_select %p156, %s14, 3
      %s158 = smul.addr %s157, 8
      %s159 = scalar_lea.vmem %s2, %s158
      %p160 = pneg %p82
      %p161 = pneg %p79
      %p162 = pneg %p103
      %p163 = pneg %p100
      %p164 = scmp.lt.s32.totalorder %s14, 3
      %s165 = scalar_select %p164, %s14, 3
      %s166 = smul.addr %s165, 1024
      %s167 = smul.addr %s166, 8
      %s168 = scalar_lea.vmem %s1, %s167
      %p169 = scmp.lt.s32.totalorder %s14, 3
      %s170 = scalar_select %p169, %s14, 3
      %s171 = smul.addr %s170, 8
      %s172 = scalar_lea.vmem %s2, %s171
      %p173 = scmp.eq.s32.totalorder %s14, 0
      // Predicated region
      $region33: #{baseline_tab_forward.10} parent=31 // pred_check
        %p174 = pneg %p173
      $region34: #{baseline_tab_forward.10} parent=31 // pred_check_branch
        %176 = sbr.rel (%p174) target = $region36
      $region35: #{baseline_tab_forward.10} parent=31 // pred_region
        %v177 = vld [vmem:[%s0] sm:$0xff]
        %v178 = vld [vmem:[%s0 + $0x8] sm:$0xff]
        %179 = vst [vmem:[#allocation2] sm:$0xff] %v177
        %180 = vst [vmem:[#allocation2 + $0x8] sm:$0xff] %v178
      $region36: #{baseline_tab_forward.10} parent=31 // pred_fallthru
        _
      %v181 = vld [vmem:[#allocation2] sm:$0xff]
      %v182 = vld [vmem:[#allocation2 + $0x8] sm:$0xff]
      %v183 = vld [vmem:[%s168] sm:$0xff]
      %v184 = vld [vmem:[%s168 + $0x8] sm:$0xff]
      %v185 = vld [vmem:[%s168 + $0x10] sm:$0xff]
      %v186 = vld [vmem:[%s168 + $0x18] sm:$0xff]
      %v187 = vld [vmem:[%s168 + $0x20] sm:$0xff]
      %v188 = vld [vmem:[%s168 + $0x28] sm:$0xff]
      %v189 = vld [vmem:[%s168 + $0x30] sm:$0xff]
      %v190 = vld [vmem:[%s168 + $0x38] sm:$0xff]
      %v191 = vld [vmem:[%s168 + $0x40] sm:$0xff]
      %v192 = vld [vmem:[%s168 + $0x48] sm:$0xff]
      %v193 = vld [vmem:[%s168 + $0x50] sm:$0xff]
      %v194 = vld [vmem:[%s168 + $0x58] sm:$0xff]
      %v195 = vld [vmem:[%s168 + $0x60] sm:$0xff]
      %v196 = vld [vmem:[%s168 + $0x68] sm:$0xff]
      %v197 = vld [vmem:[%s168 + $0x70] sm:$0xff]
      %v198 = vld [vmem:[%s168 + $0x78] sm:$0xff]
      %v199 = vld [vmem:[%s168 + $0x80] sm:$0xff]
      %v200 = vld [vmem:[%s168 + $0x88] sm:$0xff]
      %v201 = vld [vmem:[%s168 + $0x90] sm:$0xff]
      %v202 = vld [vmem:[%s168 + $0x98] sm:$0xff]
      %v203 = vld [vmem:[%s168 + $0xa0] sm:$0xff]
      %v204 = vld [vmem:[%s168 + $0xa8] sm:$0xff]
      %v205 = vld [vmem:[%s168 + $0xb0] sm:$0xff]
      %v206 = vld [vmem:[%s168 + $0xb8] sm:$0xff]
      %v207 = vld [vmem:[%s168 + $0xc0] sm:$0xff]
      %v208 = vld [vmem:[%s168 + $0xc8] sm:$0xff]
      %v209 = vld [vmem:[%s168 + $0xd0] sm:$0xff]
      %v210 = vld [vmem:[%s168 + $0xd8] sm:$0xff]
      %v211 = vld [vmem:[%s168 + $0xe0] sm:$0xff]
      %v212 = vld [vmem:[%s168 + $0xe8] sm:$0xff]
      %v213 = vld [vmem:[%s168 + $0xf0] sm:$0xff]
      %v214 = vld [vmem:[%s168 + $0xf8] sm:$0xff]
      %v215 = vld [vmem:[%s168 + $0x100] sm:$0xff]
      %v216 = vld [vmem:[%s168 + $0x108] sm:$0xff]
      %v217 = vld [vmem:[%s168 + $0x110] sm:$0xff]
      %v218 = vld [vmem:[%s168 + $0x118] sm:$0xff]
      %v219 = vld [vmem:[%s168 + $0x120] sm:$0xff]
      %v220 = vld [vmem:[%s168 + $0x128] sm:$0xff]
      %v221 = vld [vmem:[%s168 + $0x130] sm:$0xff]
      %v222 = vld [vmem:[%s168 + $0x138] sm:$0xff]
      %v223 = vld [vmem:[%s168 + $0x140] sm:$0xff]
      %v224 = vld [vmem:[%s168 + $0x148] sm:$0xff]
      %v225 = vld [vmem:[%s168 + $0x150] sm:$0xff]
      %v226 = vld [vmem:[%s168 + $0x158] sm:$0xff]
      %v227 = vld [vmem:[%s168 + $0x160] sm:$0xff]
      %v228 = vld [vmem:[%s168 + $0x168] sm:$0xff]
      %v229 = vld [vmem:[%s168 + $0x170] sm:$0xff]
      %v230 = vld [vmem:[%s168 + $0x178] sm:$0xff]
      %v231 = vld [vmem:[%s168 + $0x180] sm:$0xff]
      %v232 = vld [vmem:[%s168 + $0x188] sm:$0xff]
      %v233 = vld [vmem:[%s168 + $0x190] sm:$0xff]
      %v234 = vld [vmem:[%s168 + $0x198] sm:$0xff]
      %v235 = vld [vmem:[%s168 + $0x1a0] sm:$0xff]
      %v236 = vld [vmem:[%s168 + $0x1a8] sm:$0xff]
      %v237 = vld [vmem:[%s168 + $0x1b0] sm:$0xff]
      %v238 = vld [vmem:[%s168 + $0x1b8] sm:$0xff]
      %v239 = vld [vmem:[%s168 + $0x1c0] sm:$0xff]
      %v240 = vld [vmem:[%s168 + $0x1c8] sm:$0xff]
      %v241 = vld [vmem:[%s168 + $0x1d0] sm:$0xff]
      %v242 = vld [vmem:[%s168 + $0x1d8] sm:$0xff]
      %v243 = vld [vmem:[%s168 + $0x1e0] sm:$0xff]
      %v244 = vld [vmem:[%s168 + $0x1e8] sm:$0xff]
      %v245 = vld [vmem:[%s168 + $0x1f0] sm:$0xff]
      %v246 = vld [vmem:[%s168 + $0x1f8] sm:$0xff]
      %v247 = vld [vmem:[%s168 + $0x200] sm:$0xff]
      %v248 = vld [vmem:[%s168 + $0x208] sm:$0xff]
      %v249 = vld [vmem:[%s168 + $0x210] sm:$0xff]
      %v250 = vld [vmem:[%s168 + $0x218] sm:$0xff]
      %v251 = vld [vmem:[%s168 + $0x220] sm:$0xff]
      %v252 = vld [vmem:[%s168 + $0x228] sm:$0xff]
      %v253 = vld [vmem:[%s168 + $0x230] sm:$0xff]
      %v254 = vld [vmem:[%s168 + $0x238] sm:$0xff]
      %v255 = vld [vmem:[%s168 + $0x240] sm:$0xff]
      %v256 = vld [vmem:[%s168 + $0x248] sm:$0xff]
      %v257 = vld [vmem:[%s168 + $0x250] sm:$0xff]
      %v258 = vld [vmem:[%s168 + $0x258] sm:$0xff]
      %v259 = vld [vmem:[%s168 + $0x260] sm:$0xff]
      %v260 = vld [vmem:[%s168 + $0x268] sm:$0xff]
      %v261 = vld [vmem:[%s168 + $0x270] sm:$0xff]
      %v262 = vld [vmem:[%s168 + $0x278] sm:$0xff]
      %v263 = vld [vmem:[%s168 + $0x280] sm:$0xff]
      %v264 = vld [vmem:[%s168 + $0x288] sm:$0xff]
      %v265 = vld [vmem:[%s168 + $0x290] sm:$0xff]
      %v266 = vld [vmem:[%s168 + $0x298] sm:$0xff]
      %v267 = vld [vmem:[%s168 + $0x2a0] sm:$0xff]
      %v268 = vld [vmem:[%s168 + $0x2a8] sm:$0xff]
      %v269 = vld [vmem:[%s168 + $0x2b0] sm:$0xff]
      %v270 = vld [vmem:[%s168 + $0x2b8] sm:$0xff]
      %v271 = vld [vmem:[%s168 + $0x2c0] sm:$0xff]
      %v272 = vld [vmem:[%s168 + $0x2c8] sm:$0xff]
      %v273 = vld [vmem:[%s168 + $0x2d0] sm:$0xff]
      %v274 = vld [vmem:[%s168 + $0x2d8] sm:$0xff]
      %v275 = vld [vmem:[%s168 + $0x2e0] sm:$0xff]
      %v276 = vld [vmem:[%s168 + $0x2e8] sm:$0xff]
      %v277 = vld [vmem:[%s168 + $0x2f0] sm:$0xff]
      %v278 = vld [vmem:[%s168 + $0x2f8] sm:$0xff]
      %v279 = vld [vmem:[%s168 + $0x300] sm:$0xff]
      %v280 = vld [vmem:[%s168 + $0x308] sm:$0xff]
      %v281 = vld [vmem:[%s168 + $0x310] sm:$0xff]
      %v282 = vld [vmem:[%s168 + $0x318] sm:$0xff]
      %v283 = vld [vmem:[%s168 + $0x320] sm:$0xff]
      %v284 = vld [vmem:[%s168 + $0x328] sm:$0xff]
      %v285 = vld [vmem:[%s168 + $0x330] sm:$0xff]
      %v286 = vld [vmem:[%s168 + $0x338] sm:$0xff]
      %v287 = vld [vmem:[%s168 + $0x340] sm:$0xff]
      %v288 = vld [vmem:[%s168 + $0x348] sm:$0xff]
      %v289 = vld [vmem:[%s168 + $0x350] sm:$0xff]
      %v290 = vld [vmem:[%s168 + $0x358] sm:$0xff]
      %v291 = vld [vmem:[%s168 + $0x360] sm:$0xff]
      %v292 = vld [vmem:[%s168 + $0x368] sm:$0xff]
      %v293 = vld [vmem:[%s168 + $0x370] sm:$0xff]
      %v294 = vld [vmem:[%s168 + $0x378] sm:$0xff]
      %v295 = vld [vmem:[%s168 + $0x380] sm:$0xff]
      %v296 = vld [vmem:[%s168 + $0x388] sm:$0xff]
      %v297 = vld [vmem:[%s168 + $0x390] sm:$0xff]
      %v298 = vld [vmem:[%s168 + $0x398] sm:$0xff]
      %v299 = vld [vmem:[%s168 + $0x3a0] sm:$0xff]
      %v300 = vld [vmem:[%s168 + $0x3a8] sm:$0xff]
      %v301 = vld [vmem:[%s168 + $0x3b0] sm:$0xff]
      %v302 = vld [vmem:[%s168 + $0x3b8] sm:$0xff]
      %v303 = vld [vmem:[%s168 + $0x3c0] sm:$0xff]
      %v304 = vld [vmem:[%s168 + $0x3c8] sm:$0xff]
      %v305 = vld [vmem:[%s168 + $0x3d0] sm:$0xff]
      %v306 = vld [vmem:[%s168 + $0x3d8] sm:$0xff]
      %v307 = vld [vmem:[%s168 + $0x3e0] sm:$0xff]
      %v308 = vld [vmem:[%s168 + $0x3e8] sm:$0xff]
      %v309 = vld [vmem:[%s168 + $0x3f0] sm:$0xff]
      %v310 = vld [vmem:[%s168 + $0x3f8] sm:$0xff]
      %v311 = vld [vmem:[%s168 + $0x400] sm:$0xff]
      %v312 = vld [vmem:[%s168 + $0x408] sm:$0xff]
      %v313 = vld [vmem:[%s168 + $0x410] sm:$0xff]
      %v314 = vld [vmem:[%s168 + $0x418] sm:$0xff]
      %v315 = vld [vmem:[%s168 + $0x420] sm:$0xff]
      %v316 = vld [vmem:[%s168 + $0x428] sm:$0xff]
      %v317 = vld [vmem:[%s168 + $0x430] sm:$0xff]
      %v318 = vld [vmem:[%s168 + $0x438] sm:$0xff]
      %v319 = vld [vmem:[%s168 + $0x440] sm:$0xff]
      %v320 = vld [vmem:[%s168 + $0x448] sm:$0xff]
      %v321 = vld [vmem:[%s168 + $0x450] sm:$0xff]
      %v322 = vld [vmem:[%s168 + $0x458] sm:$0xff]
      %v323 = vld [vmem:[%s168 + $0x460] sm:$0xff]
      %v324 = vld [vmem:[%s168 + $0x468] sm:$0xff]
      %v325 = vld [vmem:[%s168 + $0x470] sm:$0xff]
      %v326 = vld [vmem:[%s168 + $0x478] sm:$0xff]
      %v327 = vld [vmem:[%s168 + $0x480] sm:$0xff]
      %v328 = vld [vmem:[%s168 + $0x488] sm:$0xff]
      %v329 = vld [vmem:[%s168 + $0x490] sm:$0xff]
      %v330 = vld [vmem:[%s168 + $0x498] sm:$0xff]
      %v331 = vld [vmem:[%s168 + $0x4a0] sm:$0xff]
      %v332 = vld [vmem:[%s168 + $0x4a8] sm:$0xff]
      %v333 = vld [vmem:[%s168 + $0x4b0] sm:$0xff]
      %v334 = vld [vmem:[%s168 + $0x4b8] sm:$0xff]
      %v335 = vld [vmem:[%s168 + $0x4c0] sm:$0xff]
      %v336 = vld [vmem:[%s168 + $0x4c8] sm:$0xff]
      %v337 = vld [vmem:[%s168 + $0x4d0] sm:$0xff]
      %v338 = vld [vmem:[%s168 + $0x4d8] sm:$0xff]
      %v339 = vld [vmem:[%s168 + $0x4e0] sm:$0xff]
      %v340 = vld [vmem:[%s168 + $0x4e8] sm:$0xff]
      %v341 = vld [vmem:[%s168 + $0x4f0] sm:$0xff]
      %v342 = vld [vmem:[%s168 + $0x4f8] sm:$0xff]
      %v343 = vld [vmem:[%s168 + $0x500] sm:$0xff]
      %v344 = vld [vmem:[%s168 + $0x508] sm:$0xff]
      %v345 = vld [vmem:[%s168 + $0x510] sm:$0xff]
      %v346 = vld [vmem:[%s168 + $0x518] sm:$0xff]
      %v347 = vld [vmem:[%s168 + $0x520] sm:$0xff]
      %v348 = vld [vmem:[%s168 + $0x528] sm:$0xff]
      %v349 = vld [vmem:[%s168 + $0x530] sm:$0xff]
      %v350 = vld [vmem:[%s168 + $0x538] sm:$0xff]
      %v351 = vld [vmem:[%s168 + $0x540] sm:$0xff]
      %v352 = vld [vmem:[%s168 + $0x548] sm:$0xff]
      %v353 = vld [vmem:[%s168 + $0x550] sm:$0xff]
      %v354 = vld [vmem:[%s168 + $0x558] sm:$0xff]
      %v355 = vld [vmem:[%s168 + $0x560] sm:$0xff]
      %v356 = vld [vmem:[%s168 + $0x568] sm:$0xff]
      %v357 = vld [vmem:[%s168 + $0x570] sm:$0xff]
      %v358 = vld [vmem:[%s168 + $0x578] sm:$0xff]
      %v359 = vld [vmem:[%s168 + $0x580] sm:$0xff]
      %v360 = vld [vmem:[%s168 + $0x588] sm:$0xff]
      %v361 = vld [vmem:[%s168 + $0x590] sm:$0xff]
      %v362 = vld [vmem:[%s168 + $0x598] sm:$0xff]
      %v363 = vld [vmem:[%s168 + $0x5a0] sm:$0xff]
      %v364 = vld [vmem:[%s168 + $0x5a8] sm:$0xff]
      %v365 = vld [vmem:[%s168 + $0x5b0] sm:$0xff]
      %v366 = vld [vmem:[%s168 + $0x5b8] sm:$0xff]
      %v367 = vld [vmem:[%s168 + $0x5c0] sm:$0xff]
      %v368 = vld [vmem:[%s168 + $0x5c8] sm:$0xff]
      %v369 = vld [vmem:[%s168 + $0x5d0] sm:$0xff]
      %v370 = vld [vmem:[%s168 + $0x5d8] sm:$0xff]
      %v371 = vld [vmem:[%s168 + $0x5e0] sm:$0xff]
      %v372 = vld [vmem:[%s168 + $0x5e8] sm:$0xff]
      %v373 = vld [vmem:[%s168 + $0x5f0] sm:$0xff]
      %v374 = vld [vmem:[%s168 + $0x5f8] sm:$0xff]
      %v375 = vld [vmem:[%s168 + $0x600] sm:$0xff]
      %v376 = vld [vmem:[%s168 + $0x608] sm:$0xff]
      %v377 = vld [vmem:[%s168 + $0x610] sm:$0xff]
      %v378 = vld [vmem:[%s168 + $0x618] sm:$0xff]
      %v379 = vld [vmem:[%s168 + $0x620] sm:$0xff]
      %v380 = vld [vmem:[%s168 + $0x628] sm:$0xff]
      %v381 = vld [vmem:[%s168 + $0x630] sm:$0xff]
      %v382 = vld [vmem:[%s168 + $0x638] sm:$0xff]
      %v383 = vld [vmem:[%s168 + $0x640] sm:$0xff]
      %v384 = vld [vmem:[%s168 + $0x648] sm:$0xff]
      %v385 = vld [vmem:[%s168 + $0x650] sm:$0xff]
      %v386 = vld [vmem:[%s168 + $0x658] sm:$0xff]
      %v387 = vld [vmem:[%s168 + $0x660] sm:$0xff]
      %v388 = vld [vmem:[%s168 + $0x668] sm:$0xff]
      %v389 = vld [vmem:[%s168 + $0x670] sm:$0xff]
      %v390 = vld [vmem:[%s168 + $0x678] sm:$0xff]
      %v391 = vld [vmem:[%s168 + $0x680] sm:$0xff]
      %v392 = vld [vmem:[%s168 + $0x688] sm:$0xff]
      %v393 = vld [vmem:[%s168 + $0x690] sm:$0xff]
      %v394 = vld [vmem:[%s168 + $0x698] sm:$0xff]
      %v395 = vld [vmem:[%s168 + $0x6a0] sm:$0xff]
      %v396 = vld [vmem:[%s168 + $0x6a8] sm:$0xff]
      %v397 = vld [vmem:[%s168 + $0x6b0] sm:$0xff]
      %v398 = vld [vmem:[%s168 + $0x6b8] sm:$0xff]
      %v399 = vld [vmem:[%s168 + $0x6c0] sm:$0xff]
      %v400 = vld [vmem:[%s168 + $0x6c8] sm:$0xff]
      %v401 = vld [vmem:[%s168 + $0x6d0] sm:$0xff]
      %v402 = vld [vmem:[%s168 + $0x6d8] sm:$0xff]
      %v403 = vld [vmem:[%s168 + $0x6e0] sm:$0xff]
      %v404 = vld [vmem:[%s168 + $0x6e8] sm:$0xff]
      %v405 = vld [vmem:[%s168 + $0x6f0] sm:$0xff]
      %v406 = vld [vmem:[%s168 + $0x6f8] sm:$0xff]
      %v407 = vld [vmem:[%s168 + $0x700] sm:$0xff]
      %v408 = vld [vmem:[%s168 + $0x708] sm:$0xff]
      %v409 = vld [vmem:[%s168 + $0x710] sm:$0xff]
      %v410 = vld [vmem:[%s168 + $0x718] sm:$0xff]
      %v411 = vld [vmem:[%s168 + $0x720] sm:$0xff]
      %v412 = vld [vmem:[%s168 + $0x728] sm:$0xff]
      %v413 = vld [vmem:[%s168 + $0x730] sm:$0xff]
      %v414 = vld [vmem:[%s168 + $0x738] sm:$0xff]
      %v415 = vld [vmem:[%s168 + $0x740] sm:$0xff]
      %v416 = vld [vmem:[%s168 + $0x748] sm:$0xff]
      %v417 = vld [vmem:[%s168 + $0x750] sm:$0xff]
      %v418 = vld [vmem:[%s168 + $0x758] sm:$0xff]
      %v419 = vld [vmem:[%s168 + $0x760] sm:$0xff]
      %v420 = vld [vmem:[%s168 + $0x768] sm:$0xff]
      %v421 = vld [vmem:[%s168 + $0x770] sm:$0xff]
      %v422 = vld [vmem:[%s168 + $0x778] sm:$0xff]
      %v423 = vld [vmem:[%s168 + $0x780] sm:$0xff]
      %v424 = vld [vmem:[%s168 + $0x788] sm:$0xff]
      %v425 = vld [vmem:[%s168 + $0x790] sm:$0xff]
      %v426 = vld [vmem:[%s168 + $0x798] sm:$0xff]
      %v427 = vld [vmem:[%s168 + $0x7a0] sm:$0xff]
      %v428 = vld [vmem:[%s168 + $0x7a8] sm:$0xff]
      %v429 = vld [vmem:[%s168 + $0x7b0] sm:$0xff]
      %v430 = vld [vmem:[%s168 + $0x7b8] sm:$0xff]
      %v431 = vld [vmem:[%s168 + $0x7c0] sm:$0xff]
      %v432 = vld [vmem:[%s168 + $0x7c8] sm:$0xff]
      %v433 = vld [vmem:[%s168 + $0x7d0] sm:$0xff]
      %v434 = vld [vmem:[%s168 + $0x7d8] sm:$0xff]
      %v435 = vld [vmem:[%s168 + $0x7e0] sm:$0xff]
      %v436 = vld [vmem:[%s168 + $0x7e8] sm:$0xff]
      %v437 = vld [vmem:[%s168 + $0x7f0] sm:$0xff]
      %v438 = vld [vmem:[%s168 + $0x7f8] sm:$0xff]
      %v439 = vld [vmem:[%s168 + $0x800] sm:$0xff]
      %v440 = vld [vmem:[%s168 + $0x808] sm:$0xff]
      %v441 = vld [vmem:[%s168 + $0x810] sm:$0xff]
      %v442 = vld [vmem:[%s168 + $0x818] sm:$0xff]
      %v443 = vld [vmem:[%s168 + $0x820] sm:$0xff]
      %v444 = vld [vmem:[%s168 + $0x828] sm:$0xff]
      %v445 = vld [vmem:[%s168 + $0x830] sm:$0xff]
      %v446 = vld [vmem:[%s168 + $0x838] sm:$0xff]
      %v447 = vld [vmem:[%s168 + $0x840] sm:$0xff]
      %v448 = vld [vmem:[%s168 + $0x848] sm:$0xff]
      %v449 = vld [vmem:[%s168 + $0x850] sm:$0xff]
      %v450 = vld [vmem:[%s168 + $0x858] sm:$0xff]
      %v451 = vld [vmem:[%s168 + $0x860] sm:$0xff]
      %v452 = vld [vmem:[%s168 + $0x868] sm:$0xff]
      %v453 = vld [vmem:[%s168 + $0x870] sm:$0xff]
      %v454 = vld [vmem:[%s168 + $0x878] sm:$0xff]
      %v455 = vld [vmem:[%s168 + $0x880] sm:$0xff]
      %v456 = vld [vmem:[%s168 + $0x888] sm:$0xff]
      %v457 = vld [vmem:[%s168 + $0x890] sm:$0xff]
      %v458 = vld [vmem:[%s168 + $0x898] sm:$0xff]
      %v459 = vld [vmem:[%s168 + $0x8a0] sm:$0xff]
      %v460 = vld [vmem:[%s168 + $0x8a8] sm:$0xff]
      %v461 = vld [vmem:[%s168 + $0x8b0] sm:$0xff]
      %v462 = vld [vmem:[%s168 + $0x8b8] sm:$0xff]
      %v463 = vld [vmem:[%s168 + $0x8c0] sm:$0xff]
      %v464 = vld [vmem:[%s168 + $0x8c8] sm:$0xff]
      %v465 = vld [vmem:[%s168 + $0x8d0] sm:$0xff]
      %v466 = vld [vmem:[%s168 + $0x8d8] sm:$0xff]
      %v467 = vld [vmem:[%s168 + $0x8e0] sm:$0xff]
      %v468 = vld [vmem:[%s168 + $0x8e8] sm:$0xff]
      %v469 = vld [vmem:[%s168 + $0x8f0] sm:$0xff]
      %v470 = vld [vmem:[%s168 + $0x8f8] sm:$0xff]
      %v471 = vld [vmem:[%s168 + $0x900] sm:$0xff]
      %v472 = vld [vmem:[%s168 + $0x908] sm:$0xff]
      %v473 = vld [vmem:[%s168 + $0x910] sm:$0xff]
      %v474 = vld [vmem:[%s168 + $0x918] sm:$0xff]
      %v475 = vld [vmem:[%s168 + $0x920] sm:$0xff]
      %v476 = vld [vmem:[%s168 + $0x928] sm:$0xff]
      %v477 = vld [vmem:[%s168 + $0x930] sm:$0xff]
      %v478 = vld [vmem:[%s168 + $0x938] sm:$0xff]
      %v479 = vld [vmem:[%s168 + $0x940] sm:$0xff]
      %v480 = vld [vmem:[%s168 + $0x948] sm:$0xff]
      %v481 = vld [vmem:[%s168 + $0x950] sm:$0xff]
      %v482 = vld [vmem:[%s168 + $0x958] sm:$0xff]
      %v483 = vld [vmem:[%s168 + $0x960] sm:$0xff]
      %v484 = vld [vmem:[%s168 + $0x968] sm:$0xff]
      %v485 = vld [vmem:[%s168 + $0x970] sm:$0xff]
      %v486 = vld [vmem:[%s168 + $0x978] sm:$0xff]
      %v487 = vld [vmem:[%s168 + $0x980] sm:$0xff]
      %v488 = vld [vmem:[%s168 + $0x988] sm:$0xff]
      %v489 = vld [vmem:[%s168 + $0x990] sm:$0xff]
      %v490 = vld [vmem:[%s168 + $0x998] sm:$0xff]
      %v491 = vld [vmem:[%s168 + $0x9a0] sm:$0xff]
      %v492 = vld [vmem:[%s168 + $0x9a8] sm:$0xff]
      %v493 = vld [vmem:[%s168 + $0x9b0] sm:$0xff]
      %v494 = vld [vmem:[%s168 + $0x9b8] sm:$0xff]
      %v495 = vld [vmem:[%s168 + $0x9c0] sm:$0xff]
      %v496 = vld [vmem:[%s168 + $0x9c8] sm:$0xff]
      %v497 = vld [vmem:[%s168 + $0x9d0] sm:$0xff]
      %v498 = vld [vmem:[%s168 + $0x9d8] sm:$0xff]
      %v499 = vld [vmem:[%s168 + $0x9e0] sm:$0xff]
      %v500 = vld [vmem:[%s168 + $0x9e8] sm:$0xff]
      %v501 = vld [vmem:[%s168 + $0x9f0] sm:$0xff]
      %v502 = vld [vmem:[%s168 + $0x9f8] sm:$0xff]
      %v503 = vld [vmem:[%s168 + $0xa00] sm:$0xff]
      %v504 = vld [vmem:[%s168 + $0xa08] sm:$0xff]
      %v505 = vld [vmem:[%s168 + $0xa10] sm:$0xff]
      %v506 = vld [vmem:[%s168 + $0xa18] sm:$0xff]
      %v507 = vld [vmem:[%s168 + $0xa20] sm:$0xff]
      %v508 = vld [vmem:[%s168 + $0xa28] sm:$0xff]
      %v509 = vld [vmem:[%s168 + $0xa30] sm:$0xff]
      %v510 = vld [vmem:[%s168 + $0xa38] sm:$0xff]
      %v511 = vld [vmem:[%s168 + $0xa40] sm:$0xff]
      %v512 = vld [vmem:[%s168 + $0xa48] sm:$0xff]
      %v513 = vld [vmem:[%s168 + $0xa50] sm:$0xff]
      %v514 = vld [vmem:[%s168 + $0xa58] sm:$0xff]
      %v515 = vld [vmem:[%s168 + $0xa60] sm:$0xff]
      %v516 = vld [vmem:[%s168 + $0xa68] sm:$0xff]
      %v517 = vld [vmem:[%s168 + $0xa70] sm:$0xff]
      %v518 = vld [vmem:[%s168 + $0xa78] sm:$0xff]
      %v519 = vld [vmem:[%s168 + $0xa80] sm:$0xff]
      %v520 = vld [vmem:[%s168 + $0xa88] sm:$0xff]
      %v521 = vld [vmem:[%s168 + $0xa90] sm:$0xff]
      %v522 = vld [vmem:[%s168 + $0xa98] sm:$0xff]
      %v523 = vld [vmem:[%s168 + $0xaa0] sm:$0xff]
      %v524 = vld [vmem:[%s168 + $0xaa8] sm:$0xff]
      %v525 = vld [vmem:[%s168 + $0xab0] sm:$0xff]
      %v526 = vld [vmem:[%s168 + $0xab8] sm:$0xff]
      %v527 = vld [vmem:[%s168 + $0xac0] sm:$0xff]
      %v528 = vld [vmem:[%s168 + $0xac8] sm:$0xff]
      %v529 = vld [vmem:[%s168 + $0xad0] sm:$0xff]
      %v530 = vld [vmem:[%s168 + $0xad8] sm:$0xff]
      %v531 = vld [vmem:[%s168 + $0xae0] sm:$0xff]
      %v532 = vld [vmem:[%s168 + $0xae8] sm:$0xff]
      %v533 = vld [vmem:[%s168 + $0xaf0] sm:$0xff]
      %v534 = vld [vmem:[%s168 + $0xaf8] sm:$0xff]
      %v535 = vld [vmem:[%s168 + $0xb00] sm:$0xff]
      %v536 = vld [vmem:[%s168 + $0xb08] sm:$0xff]
      %v537 = vld [vmem:[%s168 + $0xb10] sm:$0xff]
      %v538 = vld [vmem:[%s168 + $0xb18] sm:$0xff]
      %v539 = vld [vmem:[%s168 + $0xb20] sm:$0xff]
      %v540 = vld [vmem:[%s168 + $0xb28] sm:$0xff]
      %v541 = vld [vmem:[%s168 + $0xb30] sm:$0xff]
      %v542 = vld [vmem:[%s168 + $0xb38] sm:$0xff]
      %v543 = vld [vmem:[%s168 + $0xb40] sm:$0xff]
      %v544 = vld [vmem:[%s168 + $0xb48] sm:$0xff]
      %v545 = vld [vmem:[%s168 + $0xb50] sm:$0xff]
      %v546 = vld [vmem:[%s168 + $0xb58] sm:$0xff]
      %v547 = vld [vmem:[%s168 + $0xb60] sm:$0xff]
      %v548 = vld [vmem:[%s168 + $0xb68] sm:$0xff]
      %v549 = vld [vmem:[%s168 + $0xb70] sm:$0xff]
      %v550 = vld [vmem:[%s168 + $0xb78] sm:$0xff]
      %v551 = vld [vmem:[%s168 + $0xb80] sm:$0xff]
      %v552 = vld [vmem:[%s168 + $0xb88] sm:$0xff]
      %v553 = vld [vmem:[%s168 + $0xb90] sm:$0xff]
      %v554 = vld [vmem:[%s168 + $0xb98] sm:$0xff]
      %v555 = vld [vmem:[%s168 + $0xba0] sm:$0xff]
      %v556 = vld [vmem:[%s168 + $0xba8] sm:$0xff]
      %v557 = vld [vmem:[%s168 + $0xbb0] sm:$0xff]
      %v558 = vld [vmem:[%s168 + $0xbb8] sm:$0xff]
      %v559 = vld [vmem:[%s168 + $0xbc0] sm:$0xff]
      %v560 = vld [vmem:[%s168 + $0xbc8] sm:$0xff]
      %v561 = vld [vmem:[%s168 + $0xbd0] sm:$0xff]
      %v562 = vld [vmem:[%s168 + $0xbd8] sm:$0xff]
      %v563 = vld [vmem:[%s168 + $0xbe0] sm:$0xff]
      %v564 = vld [vmem:[%s168 + $0xbe8] sm:$0xff]
      %v565 = vld [vmem:[%s168 + $0xbf0] sm:$0xff]
      %v566 = vld [vmem:[%s168 + $0xbf8] sm:$0xff]
      %v567 = vld [vmem:[%s168 + $0xc00] sm:$0xff]
      %v568 = vld [vmem:[%s168 + $0xc08] sm:$0xff]
      %v569 = vld [vmem:[%s168 + $0xc10] sm:$0xff]
      %v570 = vld [vmem:[%s168 + $0xc18] sm:$0xff]
      %v571 = vld [vmem:[%s168 + $0xc20] sm:$0xff]
      %v572 = vld [vmem:[%s168 + $0xc28] sm:$0xff]
      %v573 = vld [vmem:[%s168 + $0xc30] sm:$0xff]
      %v574 = vld [vmem:[%s168 + $0xc38] sm:$0xff]
      %v575 = vld [vmem:[%s168 + $0xc40] sm:$0xff]
      %v576 = vld [vmem:[%s168 + $0xc48] sm:$0xff]
      %v577 = vld [vmem:[%s168 + $0xc50] sm:$0xff]
      %v578 = vld [vmem:[%s168 + $0xc58] sm:$0xff]
      %v579 = vld [vmem:[%s168 + $0xc60] sm:$0xff]
      %v580 = vld [vmem:[%s168 + $0xc68] sm:$0xff]
      %v581 = vld [vmem:[%s168 + $0xc70] sm:$0xff]
      %v582 = vld [vmem:[%s168 + $0xc78] sm:$0xff]
      %v583 = vld [vmem:[%s168 + $0xc80] sm:$0xff]
      %v584 = vld [vmem:[%s168 + $0xc88] sm:$0xff]
      %v585 = vld [vmem:[%s168 + $0xc90] sm:$0xff]
      %v586 = vld [vmem:[%s168 + $0xc98] sm:$0xff]
      %v587 = vld [vmem:[%s168 + $0xca0] sm:$0xff]
      %v588 = vld [vmem:[%s168 + $0xca8] sm:$0xff]
      %v589 = vld [vmem:[%s168 + $0xcb0] sm:$0xff]
      %v590 = vld [vmem:[%s168 + $0xcb8] sm:$0xff]
      %v591 = vld [vmem:[%s168 + $0xcc0] sm:$0xff]
      %v592 = vld [vmem:[%s168 + $0xcc8] sm:$0xff]
      %v593 = vld [vmem:[%s168 + $0xcd0] sm:$0xff]
      %v594 = vld [vmem:[%s168 + $0xcd8] sm:$0xff]
      %v595 = vld [vmem:[%s168 + $0xce0] sm:$0xff]
      %v596 = vld [vmem:[%s168 + $0xce8] sm:$0xff]
      %v597 = vld [vmem:[%s168 + $0xcf0] sm:$0xff]
      %v598 = vld [vmem:[%s168 + $0xcf8] sm:$0xff]
      %v599 = vld [vmem:[%s168 + $0xd00] sm:$0xff]
      %v600 = vld [vmem:[%s168 + $0xd08] sm:$0xff]
      %v601 = vld [vmem:[%s168 + $0xd10] sm:$0xff]
      %v602 = vld [vmem:[%s168 + $0xd18] sm:$0xff]
      %v603 = vld [vmem:[%s168 + $0xd20] sm:$0xff]
      %v604 = vld [vmem:[%s168 + $0xd28] sm:$0xff]
      %v605 = vld [vmem:[%s168 + $0xd30] sm:$0xff]
      %v606 = vld [vmem:[%s168 + $0xd38] sm:$0xff]
      %v607 = vld [vmem:[%s168 + $0xd40] sm:$0xff]
      %v608 = vld [vmem:[%s168 + $0xd48] sm:$0xff]
      %v609 = vld [vmem:[%s168 + $0xd50] sm:$0xff]
      %v610 = vld [vmem:[%s168 + $0xd58] sm:$0xff]
      %v611 = vld [vmem:[%s168 + $0xd60] sm:$0xff]
      %v612 = vld [vmem:[%s168 + $0xd68] sm:$0xff]
      %v613 = vld [vmem:[%s168 + $0xd70] sm:$0xff]
      %v614 = vld [vmem:[%s168 + $0xd78] sm:$0xff]
      %v615 = vld [vmem:[%s168 + $0xd80] sm:$0xff]
      %v616 = vld [vmem:[%s168 + $0xd88] sm:$0xff]
      %v617 = vld [vmem:[%s168 + $0xd90] sm:$0xff]
      %v618 = vld [vmem:[%s168 + $0xd98] sm:$0xff]
      %v619 = vld [vmem:[%s168 + $0xda0] sm:$0xff]
      %v620 = vld [vmem:[%s168 + $0xda8] sm:$0xff]
      %v621 = vld [vmem:[%s168 + $0xdb0] sm:$0xff]
      %v622 = vld [vmem:[%s168 + $0xdb8] sm:$0xff]
      %v623 = vld [vmem:[%s168 + $0xdc0] sm:$0xff]
      %v624 = vld [vmem:[%s168 + $0xdc8] sm:$0xff]
      %v625 = vld [vmem:[%s168 + $0xdd0] sm:$0xff]
      %v626 = vld [vmem:[%s168 + $0xdd8] sm:$0xff]
      %v627 = vld [vmem:[%s168 + $0xde0] sm:$0xff]
      %v628 = vld [vmem:[%s168 + $0xde8] sm:$0xff]
      %v629 = vld [vmem:[%s168 + $0xdf0] sm:$0xff]
      %v630 = vld [vmem:[%s168 + $0xdf8] sm:$0xff]
      %v631 = vld [vmem:[%s168 + $0xe00] sm:$0xff]
      %v632 = vld [vmem:[%s168 + $0xe08] sm:$0xff]
      %v633 = vld [vmem:[%s168 + $0xe10] sm:$0xff]
      %v634 = vld [vmem:[%s168 + $0xe18] sm:$0xff]
      %v635 = vld [vmem:[%s168 + $0xe20] sm:$0xff]
      %v636 = vld [vmem:[%s168 + $0xe28] sm:$0xff]
      %v637 = vld [vmem:[%s168 + $0xe30] sm:$0xff]
      %v638 = vld [vmem:[%s168 + $0xe38] sm:$0xff]
      %v639 = vld [vmem:[%s168 + $0xe40] sm:$0xff]
      %v640 = vld [vmem:[%s168 + $0xe48] sm:$0xff]
      %v641 = vld [vmem:[%s168 + $0xe50] sm:$0xff]
      %v642 = vld [vmem:[%s168 + $0xe58] sm:$0xff]
      %v643 = vld [vmem:[%s168 + $0xe60] sm:$0xff]
      %v644 = vld [vmem:[%s168 + $0xe68] sm:$0xff]
      %v645 = vld [vmem:[%s168 + $0xe70] sm:$0xff]
      %v646 = vld [vmem:[%s168 + $0xe78] sm:$0xff]
      %v647 = vld [vmem:[%s168 + $0xe80] sm:$0xff]
      %v648 = vld [vmem:[%s168 + $0xe88] sm:$0xff]
      %v649 = vld [vmem:[%s168 + $0xe90] sm:$0xff]
      %v650 = vld [vmem:[%s168 + $0xe98] sm:$0xff]
      %v651 = vld [vmem:[%s168 + $0xea0] sm:$0xff]
      %v652 = vld [vmem:[%s168 + $0xea8] sm:$0xff]
      %v653 = vld [vmem:[%s168 + $0xeb0] sm:$0xff]
      %v654 = vld [vmem:[%s168 + $0xeb8] sm:$0xff]
      %v655 = vld [vmem:[%s168 + $0xec0] sm:$0xff]
      %v656 = vld [vmem:[%s168 + $0xec8] sm:$0xff]
      %v657 = vld [vmem:[%s168 + $0xed0] sm:$0xff]
      %v658 = vld [vmem:[%s168 + $0xed8] sm:$0xff]
      %v659 = vld [vmem:[%s168 + $0xee0] sm:$0xff]
      %v660 = vld [vmem:[%s168 + $0xee8] sm:$0xff]
      %v661 = vld [vmem:[%s168 + $0xef0] sm:$0xff]
      %v662 = vld [vmem:[%s168 + $0xef8] sm:$0xff]
      %v663 = vld [vmem:[%s168 + $0xf00] sm:$0xff]
      %v664 = vld [vmem:[%s168 + $0xf08] sm:$0xff]
      %v665 = vld [vmem:[%s168 + $0xf10] sm:$0xff]
      %v666 = vld [vmem:[%s168 + $0xf18] sm:$0xff]
      %v667 = vld [vmem:[%s168 + $0xf20] sm:$0xff]
      %v668 = vld [vmem:[%s168 + $0xf28] sm:$0xff]
      %v669 = vld [vmem:[%s168 + $0xf30] sm:$0xff]
      %v670 = vld [vmem:[%s168 + $0xf38] sm:$0xff]
      %v671 = vld [vmem:[%s168 + $0xf40] sm:$0xff]
      %v672 = vld [vmem:[%s168 + $0xf48] sm:$0xff]
      %v673 = vld [vmem:[%s168 + $0xf50] sm:$0xff]
      %v674 = vld [vmem:[%s168 + $0xf58] sm:$0xff]
      %v675 = vld [vmem:[%s168 + $0xf60] sm:$0xff]
      %v676 = vld [vmem:[%s168 + $0xf68] sm:$0xff]
      %v677 = vld [vmem:[%s168 + $0xf70] sm:$0xff]
      %v678 = vld [vmem:[%s168 + $0xf78] sm:$0xff]
      %v679 = vld [vmem:[%s168 + $0xf80] sm:$0xff]
      %v680 = vld [vmem:[%s168 + $0xf88] sm:$0xff]
      %v681 = vld [vmem:[%s168 + $0xf90] sm:$0xff]
      %v682 = vld [vmem:[%s168 + $0xf98] sm:$0xff]
      %v683 = vld [vmem:[%s168 + $0xfa0] sm:$0xff]
      %v684 = vld [vmem:[%s168 + $0xfa8] sm:$0xff]
      %v685 = vld [vmem:[%s168 + $0xfb0] sm:$0xff]
      %v686 = vld [vmem:[%s168 + $0xfb8] sm:$0xff]
      %v687 = vld [vmem:[%s168 + $0xfc0] sm:$0xff]
      %v688 = vld [vmem:[%s168 + $0xfc8] sm:$0xff]
      %v689 = vld [vmem:[%s168 + $0xfd0] sm:$0xff]
      %v690 = vld [vmem:[%s168 + $0xfd8] sm:$0xff]
      %v691 = vld [vmem:[%s168 + $0xfe0] sm:$0xff]
      %v692 = vld [vmem:[%s168 + $0xfe8] sm:$0xff]
      %v693 = vld [vmem:[%s168 + $0xff0] sm:$0xff]
      %v694 = vld [vmem:[%s168 + $0xff8] sm:$0xff]
      %v695 = vld [vmem:[%s168 + $0x1000] sm:$0xff]
      %v696 = vld [vmem:[%s168 + $0x1008] sm:$0xff]
      %v697 = vld [vmem:[%s168 + $0x1010] sm:$0xff]
      %v698 = vld [vmem:[%s168 + $0x1018] sm:$0xff]
      %v699 = vld [vmem:[%s168 + $0x1020] sm:$0xff]
      %v700 = vld [vmem:[%s168 + $0x1028] sm:$0xff]
      %v701 = vld [vmem:[%s168 + $0x1030] sm:$0xff]
      %v702 = vld [vmem:[%s168 + $0x1038] sm:$0xff]
      %v703 = vld [vmem:[%s168 + $0x1040] sm:$0xff]
      %v704 = vld [vmem:[%s168 + $0x1048] sm:$0xff]
      %v705 = vld [vmem:[%s168 + $0x1050] sm:$0xff]
      %v706 = vld [vmem:[%s168 + $0x1058] sm:$0xff]
      %v707 = vld [vmem:[%s168 + $0x1060] sm:$0xff]
      %v708 = vld [vmem:[%s168 + $0x1068] sm:$0xff]
      %v709 = vld [vmem:[%s168 + $0x1070] sm:$0xff]
      %v710 = vld [vmem:[%s168 + $0x1078] sm:$0xff]
      %v711 = vld [vmem:[%s168 + $0x1080] sm:$0xff]
      %v712 = vld [vmem:[%s168 + $0x1088] sm:$0xff]
      %v713 = vld [vmem:[%s168 + $0x1090] sm:$0xff]
      %v714 = vld [vmem:[%s168 + $0x1098] sm:$0xff]
      %v715 = vld [vmem:[%s168 + $0x10a0] sm:$0xff]
      %v716 = vld [vmem:[%s168 + $0x10a8] sm:$0xff]
      %v717 = vld [vmem:[%s168 + $0x10b0] sm:$0xff]
      %v718 = vld [vmem:[%s168 + $0x10b8] sm:$0xff]
      %v719 = vld [vmem:[%s168 + $0x10c0] sm:$0xff]
      %v720 = vld [vmem:[%s168 + $0x10c8] sm:$0xff]
      %v721 = vld [vmem:[%s168 + $0x10d0] sm:$0xff]
      %v722 = vld [vmem:[%s168 + $0x10d8] sm:$0xff]
      %v723 = vld [vmem:[%s168 + $0x10e0] sm:$0xff]
      %v724 = vld [vmem:[%s168 + $0x10e8] sm:$0xff]
      %v725 = vld [vmem:[%s168 + $0x10f0] sm:$0xff]
      %v726 = vld [vmem:[%s168 + $0x10f8] sm:$0xff]
      %v727 = vld [vmem:[%s168 + $0x1100] sm:$0xff]
      %v728 = vld [vmem:[%s168 + $0x1108] sm:$0xff]
      %v729 = vld [vmem:[%s168 + $0x1110] sm:$0xff]
      %v730 = vld [vmem:[%s168 + $0x1118] sm:$0xff]
      %v731 = vld [vmem:[%s168 + $0x1120] sm:$0xff]
      %v732 = vld [vmem:[%s168 + $0x1128] sm:$0xff]
      %v733 = vld [vmem:[%s168 + $0x1130] sm:$0xff]
      %v734 = vld [vmem:[%s168 + $0x1138] sm:$0xff]
      %v735 = vld [vmem:[%s168 + $0x1140] sm:$0xff]
      %v736 = vld [vmem:[%s168 + $0x1148] sm:$0xff]
      %v737 = vld [vmem:[%s168 + $0x1150] sm:$0xff]
      %v738 = vld [vmem:[%s168 + $0x1158] sm:$0xff]
      %v739 = vld [vmem:[%s168 + $0x1160] sm:$0xff]
      %v740 = vld [vmem:[%s168 + $0x1168] sm:$0xff]
      %v741 = vld [vmem:[%s168 + $0x1170] sm:$0xff]
      %v742 = vld [vmem:[%s168 + $0x1178] sm:$0xff]
      %v743 = vld [vmem:[%s168 + $0x1180] sm:$0xff]
      %v744 = vld [vmem:[%s168 + $0x1188] sm:$0xff]
      %v745 = vld [vmem:[%s168 + $0x1190] sm:$0xff]
      %v746 = vld [vmem:[%s168 + $0x1198] sm:$0xff]
      %v747 = vld [vmem:[%s168 + $0x11a0] sm:$0xff]
      %v748 = vld [vmem:[%s168 + $0x11a8] sm:$0xff]
      %v749 = vld [vmem:[%s168 + $0x11b0] sm:$0xff]
      %v750 = vld [vmem:[%s168 + $0x11b8] sm:$0xff]
      %v751 = vld [vmem:[%s168 + $0x11c0] sm:$0xff]
      %v752 = vld [vmem:[%s168 + $0x11c8] sm:$0xff]
      %v753 = vld [vmem:[%s168 + $0x11d0] sm:$0xff]
      %v754 = vld [vmem:[%s168 + $0x11d8] sm:$0xff]
      %v755 = vld [vmem:[%s168 + $0x11e0] sm:$0xff]
      %v756 = vld [vmem:[%s168 + $0x11e8] sm:$0xff]
      %v757 = vld [vmem:[%s168 + $0x11f0] sm:$0xff]
      %v758 = vld [vmem:[%s168 + $0x11f8] sm:$0xff]
      %v759 = vld [vmem:[%s168 + $0x1200] sm:$0xff]
      %v760 = vld [vmem:[%s168 + $0x1208] sm:$0xff]
      %v761 = vld [vmem:[%s168 + $0x1210] sm:$0xff]
      %v762 = vld [vmem:[%s168 + $0x1218] sm:$0xff]
      %v763 = vld [vmem:[%s168 + $0x1220] sm:$0xff]
      %v764 = vld [vmem:[%s168 + $0x1228] sm:$0xff]
      %v765 = vld [vmem:[%s168 + $0x1230] sm:$0xff]
      %v766 = vld [vmem:[%s168 + $0x1238] sm:$0xff]
      %v767 = vld [vmem:[%s168 + $0x1240] sm:$0xff]
      %v768 = vld [vmem:[%s168 + $0x1248] sm:$0xff]
      %v769 = vld [vmem:[%s168 + $0x1250] sm:$0xff]
      %v770 = vld [vmem:[%s168 + $0x1258] sm:$0xff]
      %v771 = vld [vmem:[%s168 + $0x1260] sm:$0xff]
      %v772 = vld [vmem:[%s168 + $0x1268] sm:$0xff]
      %v773 = vld [vmem:[%s168 + $0x1270] sm:$0xff]
      %v774 = vld [vmem:[%s168 + $0x1278] sm:$0xff]
      %v775 = vld [vmem:[%s168 + $0x1280] sm:$0xff]
      %v776 = vld [vmem:[%s168 + $0x1288] sm:$0xff]
      %v777 = vld [vmem:[%s168 + $0x1290] sm:$0xff]
      %v778 = vld [vmem:[%s168 + $0x1298] sm:$0xff]
      %v779 = vld [vmem:[%s168 + $0x12a0] sm:$0xff]
      %v780 = vld [vmem:[%s168 + $0x12a8] sm:$0xff]
      %v781 = vld [vmem:[%s168 + $0x12b0] sm:$0xff]
      %v782 = vld [vmem:[%s168 + $0x12b8] sm:$0xff]
      %v783 = vld [vmem:[%s168 + $0x12c0] sm:$0xff]
      %v784 = vld [vmem:[%s168 + $0x12c8] sm:$0xff]
      %v785 = vld [vmem:[%s168 + $0x12d0] sm:$0xff]
      %v786 = vld [vmem:[%s168 + $0x12d8] sm:$0xff]
      %v787 = vld [vmem:[%s168 + $0x12e0] sm:$0xff]
      %v788 = vld [vmem:[%s168 + $0x12e8] sm:$0xff]
      %v789 = vld [vmem:[%s168 + $0x12f0] sm:$0xff]
      %v790 = vld [vmem:[%s168 + $0x12f8] sm:$0xff]
      %v791 = vld [vmem:[%s168 + $0x1300] sm:$0xff]
      %v792 = vld [vmem:[%s168 + $0x1308] sm:$0xff]
      %v793 = vld [vmem:[%s168 + $0x1310] sm:$0xff]
      %v794 = vld [vmem:[%s168 + $0x1318] sm:$0xff]
      %v795 = vld [vmem:[%s168 + $0x1320] sm:$0xff]
      %v796 = vld [vmem:[%s168 + $0x1328] sm:$0xff]
      %v797 = vld [vmem:[%s168 + $0x1330] sm:$0xff]
      %v798 = vld [vmem:[%s168 + $0x1338] sm:$0xff]
      %v799 = vld [vmem:[%s168 + $0x1340] sm:$0xff]
      %v800 = vld [vmem:[%s168 + $0x1348] sm:$0xff]
      %v801 = vld [vmem:[%s168 + $0x1350] sm:$0xff]
      %v802 = vld [vmem:[%s168 + $0x1358] sm:$0xff]
      %v803 = vld [vmem:[%s168 + $0x1360] sm:$0xff]
      %v804 = vld [vmem:[%s168 + $0x1368] sm:$0xff]
      %v805 = vld [vmem:[%s168 + $0x1370] sm:$0xff]
      %v806 = vld [vmem:[%s168 + $0x1378] sm:$0xff]
      %v807 = vld [vmem:[%s168 + $0x1380] sm:$0xff]
      %v808 = vld [vmem:[%s168 + $0x1388] sm:$0xff]
      %v809 = vld [vmem:[%s168 + $0x1390] sm:$0xff]
      %v810 = vld [vmem:[%s168 + $0x1398] sm:$0xff]
      %v811 = vld [vmem:[%s168 + $0x13a0] sm:$0xff]
      %v812 = vld [vmem:[%s168 + $0x13a8] sm:$0xff]
      %v813 = vld [vmem:[%s168 + $0x13b0] sm:$0xff]
      %v814 = vld [vmem:[%s168 + $0x13b8] sm:$0xff]
      %v815 = vld [vmem:[%s168 + $0x13c0] sm:$0xff]
      %v816 = vld [vmem:[%s168 + $0x13c8] sm:$0xff]
      %v817 = vld [vmem:[%s168 + $0x13d0] sm:$0xff]
      %v818 = vld [vmem:[%s168 + $0x13d8] sm:$0xff]
      %v819 = vld [vmem:[%s168 + $0x13e0] sm:$0xff]
      %v820 = vld [vmem:[%s168 + $0x13e8] sm:$0xff]
      %v821 = vld [vmem:[%s168 + $0x13f0] sm:$0xff]
      %v822 = vld [vmem:[%s168 + $0x13f8] sm:$0xff]
      %v823 = vld [vmem:[%s168 + $0x1400] sm:$0xff]
      %v824 = vld [vmem:[%s168 + $0x1408] sm:$0xff]
      %v825 = vld [vmem:[%s168 + $0x1410] sm:$0xff]
      %v826 = vld [vmem:[%s168 + $0x1418] sm:$0xff]
      %v827 = vld [vmem:[%s168 + $0x1420] sm:$0xff]
      %v828 = vld [vmem:[%s168 + $0x1428] sm:$0xff]
      %v829 = vld [vmem:[%s168 + $0x1430] sm:$0xff]
      %v830 = vld [vmem:[%s168 + $0x1438] sm:$0xff]
      %v831 = vld [vmem:[%s168 + $0x1440] sm:$0xff]
      %v832 = vld [vmem:[%s168 + $0x1448] sm:$0xff]
      %v833 = vld [vmem:[%s168 + $0x1450] sm:$0xff]
      %v834 = vld [vmem:[%s168 + $0x1458] sm:$0xff]
      %v835 = vld [vmem:[%s168 + $0x1460] sm:$0xff]
      %v836 = vld [vmem:[%s168 + $0x1468] sm:$0xff]
      %v837 = vld [vmem:[%s168 + $0x1470] sm:$0xff]
      %v838 = vld [vmem:[%s168 + $0x1478] sm:$0xff]
      %v839 = vld [vmem:[%s168 + $0x1480] sm:$0xff]
      %v840 = vld [vmem:[%s168 + $0x1488] sm:$0xff]
      %v841 = vld [vmem:[%s168 + $0x1490] sm:$0xff]
      %v842 = vld [vmem:[%s168 + $0x1498] sm:$0xff]
      %v843 = vld [vmem:[%s168 + $0x14a0] sm:$0xff]
      %v844 = vld [vmem:[%s168 + $0x14a8] sm:$0xff]
      %v845 = vld [vmem:[%s168 + $0x14b0] sm:$0xff]
      %v846 = vld [vmem:[%s168 + $0x14b8] sm:$0xff]
      %v847 = vld [vmem:[%s168 + $0x14c0] sm:$0xff]
      %v848 = vld [vmem:[%s168 + $0x14c8] sm:$0xff]
      %v849 = vld [vmem:[%s168 + $0x14d0] sm:$0xff]
      %v850 = vld [vmem:[%s168 + $0x14d8] sm:$0xff]
      %v851 = vld [vmem:[%s168 + $0x14e0] sm:$0xff]
      %v852 = vld [vmem:[%s168 + $0x14e8] sm:$0xff]
      %v853 = vld [vmem:[%s168 + $0x14f0] sm:$0xff]
      %v854 = vld [vmem:[%s168 + $0x14f8] sm:$0xff]
      %v855 = vld [vmem:[%s168 + $0x1500] sm:$0xff]
      %v856 = vld [vmem:[%s168 + $0x1508] sm:$0xff]
      %v857 = vld [vmem:[%s168 + $0x1510] sm:$0xff]
      %v858 = vld [vmem:[%s168 + $0x1518] sm:$0xff]
      %v859 = vld [vmem:[%s168 + $0x1520] sm:$0xff]
      %v860 = vld [vmem:[%s168 + $0x1528] sm:$0xff]
      %v861 = vld [vmem:[%s168 + $0x1530] sm:$0xff]
      %v862 = vld [vmem:[%s168 + $0x1538] sm:$0xff]
      %v863 = vld [vmem:[%s168 + $0x1540] sm:$0xff]
      %v864 = vld [vmem:[%s168 + $0x1548] sm:$0xff]
      %v865 = vld [vmem:[%s168 + $0x1550] sm:$0xff]
      %v866 = vld [vmem:[%s168 + $0x1558] sm:$0xff]
      %v867 = vld [vmem:[%s168 + $0x1560] sm:$0xff]
      %v868 = vld [vmem:[%s168 + $0x1568] sm:$0xff]
      %v869 = vld [vmem:[%s168 + $0x1570] sm:$0xff]
      %v870 = vld [vmem:[%s168 + $0x1578] sm:$0xff]
      %v871 = vld [vmem:[%s168 + $0x1580] sm:$0xff]
      %v872 = vld [vmem:[%s168 + $0x1588] sm:$0xff]
      %v873 = vld [vmem:[%s168 + $0x1590] sm:$0xff]
      %v874 = vld [vmem:[%s168 + $0x1598] sm:$0xff]
      %v875 = vld [vmem:[%s168 + $0x15a0] sm:$0xff]
      %v876 = vld [vmem:[%s168 + $0x15a8] sm:$0xff]
      %v877 = vld [vmem:[%s168 + $0x15b0] sm:$0xff]
      %v878 = vld [vmem:[%s168 + $0x15b8] sm:$0xff]
      %v879 = vld [vmem:[%s168 + $0x15c0] sm:$0xff]
      %v880 = vld [vmem:[%s168 + $0x15c8] sm:$0xff]
      %v881 = vld [vmem:[%s168 + $0x15d0] sm:$0xff]
      %v882 = vld [vmem:[%s168 + $0x15d8] sm:$0xff]
      %v883 = vld [vmem:[%s168 + $0x15e0] sm:$0xff]
      %v884 = vld [vmem:[%s168 + $0x15e8] sm:$0xff]
      %v885 = vld [vmem:[%s168 + $0x15f0] sm:$0xff]
      %v886 = vld [vmem:[%s168 + $0x15f8] sm:$0xff]
      %v887 = vld [vmem:[%s168 + $0x1600] sm:$0xff]
      %v888 = vld [vmem:[%s168 + $0x1608] sm:$0xff]
      %v889 = vld [vmem:[%s168 + $0x1610] sm:$0xff]
      %v890 = vld [vmem:[%s168 + $0x1618] sm:$0xff]
      %v891 = vld [vmem:[%s168 + $0x1620] sm:$0xff]
      %v892 = vld [vmem:[%s168 + $0x1628] sm:$0xff]
      %v893 = vld [vmem:[%s168 + $0x1630] sm:$0xff]
      %v894 = vld [vmem:[%s168 + $0x1638] sm:$0xff]
      %v895 = vld [vmem:[%s168 + $0x1640] sm:$0xff]
      %v896 = vld [vmem:[%s168 + $0x1648] sm:$0xff]
      %v897 = vld [vmem:[%s168 + $0x1650] sm:$0xff]
      %v898 = vld [vmem:[%s168 + $0x1658] sm:$0xff]
      %v899 = vld [vmem:[%s168 + $0x1660] sm:$0xff]
      %v900 = vld [vmem:[%s168 + $0x1668] sm:$0xff]
      %v901 = vld [vmem:[%s168 + $0x1670] sm:$0xff]
      %v902 = vld [vmem:[%s168 + $0x1678] sm:$0xff]
      %v903 = vld [vmem:[%s168 + $0x1680] sm:$0xff]
      %v904 = vld [vmem:[%s168 + $0x1688] sm:$0xff]
      %v905 = vld [vmem:[%s168 + $0x1690] sm:$0xff]
      %v906 = vld [vmem:[%s168 + $0x1698] sm:$0xff]
      %v907 = vld [vmem:[%s168 + $0x16a0] sm:$0xff]
      %v908 = vld [vmem:[%s168 + $0x16a8] sm:$0xff]
      %v909 = vld [vmem:[%s168 + $0x16b0] sm:$0xff]
      %v910 = vld [vmem:[%s168 + $0x16b8] sm:$0xff]
      %v911 = vld [vmem:[%s168 + $0x16c0] sm:$0xff]
      %v912 = vld [vmem:[%s168 + $0x16c8] sm:$0xff]
      %v913 = vld [vmem:[%s168 + $0x16d0] sm:$0xff]
      %v914 = vld [vmem:[%s168 + $0x16d8] sm:$0xff]
      %v915 = vld [vmem:[%s168 + $0x16e0] sm:$0xff]
      %v916 = vld [vmem:[%s168 + $0x16e8] sm:$0xff]
      %v917 = vld [vmem:[%s168 + $0x16f0] sm:$0xff]
      %v918 = vld [vmem:[%s168 + $0x16f8] sm:$0xff]
      %v919 = vld [vmem:[%s168 + $0x1700] sm:$0xff]
      %v920 = vld [vmem:[%s168 + $0x1708] sm:$0xff]
      %v921 = vld [vmem:[%s168 + $0x1710] sm:$0xff]
      %v922 = vld [vmem:[%s168 + $0x1718] sm:$0xff]
      %v923 = vld [vmem:[%s168 + $0x1720] sm:$0xff]
      %v924 = vld [vmem:[%s168 + $0x1728] sm:$0xff]
      %v925 = vld [vmem:[%s168 + $0x1730] sm:$0xff]
      %v926 = vld [vmem:[%s168 + $0x1738] sm:$0xff]
      %v927 = vld [vmem:[%s168 + $0x1740] sm:$0xff]
      %v928 = vld [vmem:[%s168 + $0x1748] sm:$0xff]
      %v929 = vld [vmem:[%s168 + $0x1750] sm:$0xff]
      %v930 = vld [vmem:[%s168 + $0x1758] sm:$0xff]
      %v931 = vld [vmem:[%s168 + $0x1760] sm:$0xff]
      %v932 = vld [vmem:[%s168 + $0x1768] sm:$0xff]
      %v933 = vld [vmem:[%s168 + $0x1770] sm:$0xff]
      %v934 = vld [vmem:[%s168 + $0x1778] sm:$0xff]
      %v935 = vld [vmem:[%s168 + $0x1780] sm:$0xff]
      %v936 = vld [vmem:[%s168 + $0x1788] sm:$0xff]
      %v937 = vld [vmem:[%s168 + $0x1790] sm:$0xff]
      %v938 = vld [vmem:[%s168 + $0x1798] sm:$0xff]
      %v939 = vld [vmem:[%s168 + $0x17a0] sm:$0xff]
      %v940 = vld [vmem:[%s168 + $0x17a8] sm:$0xff]
      %v941 = vld [vmem:[%s168 + $0x17b0] sm:$0xff]
      %v942 = vld [vmem:[%s168 + $0x17b8] sm:$0xff]
      %v943 = vld [vmem:[%s168 + $0x17c0] sm:$0xff]
      %v944 = vld [vmem:[%s168 + $0x17c8] sm:$0xff]
      %v945 = vld [vmem:[%s168 + $0x17d0] sm:$0xff]
      %v946 = vld [vmem:[%s168 + $0x17d8] sm:$0xff]
      %v947 = vld [vmem:[%s168 + $0x17e0] sm:$0xff]
      %v948 = vld [vmem:[%s168 + $0x17e8] sm:$0xff]
      %v949 = vld [vmem:[%s168 + $0x17f0] sm:$0xff]
      %v950 = vld [vmem:[%s168 + $0x17f8] sm:$0xff]
      %v951 = vld [vmem:[%s168 + $0x1800] sm:$0xff]
      %v952 = vld [vmem:[%s168 + $0x1808] sm:$0xff]
      %v953 = vld [vmem:[%s168 + $0x1810] sm:$0xff]
      %v954 = vld [vmem:[%s168 + $0x1818] sm:$0xff]
      %v955 = vld [vmem:[%s168 + $0x1820] sm:$0xff]
      %v956 = vld [vmem:[%s168 + $0x1828] sm:$0xff]
      %v957 = vld [vmem:[%s168 + $0x1830] sm:$0xff]
      %v958 = vld [vmem:[%s168 + $0x1838] sm:$0xff]
      %v959 = vld [vmem:[%s168 + $0x1840] sm:$0xff]
      %v960 = vld [vmem:[%s168 + $0x1848] sm:$0xff]
      %v961 = vld [vmem:[%s168 + $0x1850] sm:$0xff]
      %v962 = vld [vmem:[%s168 + $0x1858] sm:$0xff]
      %v963 = vld [vmem:[%s168 + $0x1860] sm:$0xff]
      %v964 = vld [vmem:[%s168 + $0x1868] sm:$0xff]
      %v965 = vld [vmem:[%s168 + $0x1870] sm:$0xff]
      %v966 = vld [vmem:[%s168 + $0x1878] sm:$0xff]
      %v967 = vld [vmem:[%s168 + $0x1880] sm:$0xff]
      %v968 = vld [vmem:[%s168 + $0x1888] sm:$0xff]
      %v969 = vld [vmem:[%s168 + $0x1890] sm:$0xff]
      %v970 = vld [vmem:[%s168 + $0x1898] sm:$0xff]
      %v971 = vld [vmem:[%s168 + $0x18a0] sm:$0xff]
      %v972 = vld [vmem:[%s168 + $0x18a8] sm:$0xff]
      %v973 = vld [vmem:[%s168 + $0x18b0] sm:$0xff]
      %v974 = vld [vmem:[%s168 + $0x18b8] sm:$0xff]
      %v975 = vld [vmem:[%s168 + $0x18c0] sm:$0xff]
      %v976 = vld [vmem:[%s168 + $0x18c8] sm:$0xff]
      %v977 = vld [vmem:[%s168 + $0x18d0] sm:$0xff]
      %v978 = vld [vmem:[%s168 + $0x18d8] sm:$0xff]
      %v979 = vld [vmem:[%s168 + $0x18e0] sm:$0xff]
      %v980 = vld [vmem:[%s168 + $0x18e8] sm:$0xff]
      %v981 = vld [vmem:[%s168 + $0x18f0] sm:$0xff]
      %v982 = vld [vmem:[%s168 + $0x18f8] sm:$0xff]
      %v983 = vld [vmem:[%s168 + $0x1900] sm:$0xff]
      %v984 = vld [vmem:[%s168 + $0x1908] sm:$0xff]
      %v985 = vld [vmem:[%s168 + $0x1910] sm:$0xff]
      %v986 = vld [vmem:[%s168 + $0x1918] sm:$0xff]
      %v987 = vld [vmem:[%s168 + $0x1920] sm:$0xff]
      %v988 = vld [vmem:[%s168 + $0x1928] sm:$0xff]
      %v989 = vld [vmem:[%s168 + $0x1930] sm:$0xff]
      %v990 = vld [vmem:[%s168 + $0x1938] sm:$0xff]
      %v991 = vld [vmem:[%s168 + $0x1940] sm:$0xff]
      %v992 = vld [vmem:[%s168 + $0x1948] sm:$0xff]
      %v993 = vld [vmem:[%s168 + $0x1950] sm:$0xff]
      %v994 = vld [vmem:[%s168 + $0x1958] sm:$0xff]
      %v995 = vld [vmem:[%s168 + $0x1960] sm:$0xff]
      %v996 = vld [vmem:[%s168 + $0x1968] sm:$0xff]
      %v997 = vld [vmem:[%s168 + $0x1970] sm:$0xff]
      %v998 = vld [vmem:[%s168 + $0x1978] sm:$0xff]
      %v999 = vld [vmem:[%s168 + $0x1980] sm:$0xff]
      %v1000 = vld [vmem:[%s168 + $0x1988] sm:$0xff]
      %v1001 = vld [vmem:[%s168 + $0x1990] sm:$0xff]
      %v1002 = vld [vmem:[%s168 + $0x1998] sm:$0xff]
      %v1003 = vld [vmem:[%s168 + $0x19a0] sm:$0xff]
      %v1004 = vld [vmem:[%s168 + $0x19a8] sm:$0xff]
      %v1005 = vld [vmem:[%s168 + $0x19b0] sm:$0xff]
      %v1006 = vld [vmem:[%s168 + $0x19b8] sm:$0xff]
      %v1007 = vld [vmem:[%s168 + $0x19c0] sm:$0xff]
      %v1008 = vld [vmem:[%s168 + $0x19c8] sm:$0xff]
      %v1009 = vld [vmem:[%s168 + $0x19d0] sm:$0xff]
      %v1010 = vld [vmem:[%s168 + $0x19d8] sm:$0xff]
      %v1011 = vld [vmem:[%s168 + $0x19e0] sm:$0xff]
      %v1012 = vld [vmem:[%s168 + $0x19e8] sm:$0xff]
      %v1013 = vld [vmem:[%s168 + $0x19f0] sm:$0xff]
      %v1014 = vld [vmem:[%s168 + $0x19f8] sm:$0xff]
      %v1015 = vld [vmem:[%s168 + $0x1a00] sm:$0xff]
      %v1016 = vld [vmem:[%s168 + $0x1a08] sm:$0xff]
      %v1017 = vld [vmem:[%s168 + $0x1a10] sm:$0xff]
      %v1018 = vld [vmem:[%s168 + $0x1a18] sm:$0xff]
      %v1019 = vld [vmem:[%s168 + $0x1a20] sm:$0xff]
      %v1020 = vld [vmem:[%s168 + $0x1a28] sm:$0xff]
      %v1021 = vld [vmem:[%s168 + $0x1a30] sm:$0xff]
      %v1022 = vld [vmem:[%s168 + $0x1a38] sm:$0xff]
      %v1023 = vld [vmem:[%s168 + $0x1a40] sm:$0xff]
      %v1024 = vld [vmem:[%s168 + $0x1a48] sm:$0xff]
      %v1025 = vld [vmem:[%s168 + $0x1a50] sm:$0xff]
      %v1026 = vld [vmem:[%s168 + $0x1a58] sm:$0xff]
      %v1027 = vld [vmem:[%s168 + $0x1a60] sm:$0xff]
      %v1028 = vld [vmem:[%s168 + $0x1a68] sm:$0xff]
      %v1029 = vld [vmem:[%s168 + $0x1a70] sm:$0xff]
      %v1030 = vld [vmem:[%s168 + $0x1a78] sm:$0xff]
      %v1031 = vld [vmem:[%s168 + $0x1a80] sm:$0xff]
      %v1032 = vld [vmem:[%s168 + $0x1a88] sm:$0xff]
      %v1033 = vld [vmem:[%s168 + $0x1a90] sm:$0xff]
      %v1034 = vld [vmem:[%s168 + $0x1a98] sm:$0xff]
      %v1035 = vld [vmem:[%s168 + $0x1aa0] sm:$0xff]
      %v1036 = vld [vmem:[%s168 + $0x1aa8] sm:$0xff]
      %v1037 = vld [vmem:[%s168 + $0x1ab0] sm:$0xff]
      %v1038 = vld [vmem:[%s168 + $0x1ab8] sm:$0xff]
      %v1039 = vld [vmem:[%s168 + $0x1ac0] sm:$0xff]
      %v1040 = vld [vmem:[%s168 + $0x1ac8] sm:$0xff]
      %v1041 = vld [vmem:[%s168 + $0x1ad0] sm:$0xff]
      %v1042 = vld [vmem:[%s168 + $0x1ad8] sm:$0xff]
      %v1043 = vld [vmem:[%s168 + $0x1ae0] sm:$0xff]
      %v1044 = vld [vmem:[%s168 + $0x1ae8] sm:$0xff]
      %v1045 = vld [vmem:[%s168 + $0x1af0] sm:$0xff]
      %v1046 = vld [vmem:[%s168 + $0x1af8] sm:$0xff]
      %v1047 = vld [vmem:[%s168 + $0x1b00] sm:$0xff]
      %v1048 = vld [vmem:[%s168 + $0x1b08] sm:$0xff]
      %v1049 = vld [vmem:[%s168 + $0x1b10] sm:$0xff]
      %v1050 = vld [vmem:[%s168 + $0x1b18] sm:$0xff]
      %v1051 = vld [vmem:[%s168 + $0x1b20] sm:$0xff]
      %v1052 = vld [vmem:[%s168 + $0x1b28] sm:$0xff]
      %v1053 = vld [vmem:[%s168 + $0x1b30] sm:$0xff]
      %v1054 = vld [vmem:[%s168 + $0x1b38] sm:$0xff]
      %v1055 = vld [vmem:[%s168 + $0x1b40] sm:$0xff]
      %v1056 = vld [vmem:[%s168 + $0x1b48] sm:$0xff]
      %v1057 = vld [vmem:[%s168 + $0x1b50] sm:$0xff]
      %v1058 = vld [vmem:[%s168 + $0x1b58] sm:$0xff]
      %v1059 = vld [vmem:[%s168 + $0x1b60] sm:$0xff]
      %v1060 = vld [vmem:[%s168 + $0x1b68] sm:$0xff]
      %v1061 = vld [vmem:[%s168 + $0x1b70] sm:$0xff]
      %v1062 = vld [vmem:[%s168 + $0x1b78] sm:$0xff]
      %v1063 = vld [vmem:[%s168 + $0x1b80] sm:$0xff]
      %v1064 = vld [vmem:[%s168 + $0x1b88] sm:$0xff]
      %v1065 = vld [vmem:[%s168 + $0x1b90] sm:$0xff]
      %v1066 = vld [vmem:[%s168 + $0x1b98] sm:$0xff]
      %v1067 = vld [vmem:[%s168 + $0x1ba0] sm:$0xff]
      %v1068 = vld [vmem:[%s168 + $0x1ba8] sm:$0xff]
      %v1069 = vld [vmem:[%s168 + $0x1bb0] sm:$0xff]
      %v1070 = vld [vmem:[%s168 + $0x1bb8] sm:$0xff]
      %v1071 = vld [vmem:[%s168 + $0x1bc0] sm:$0xff]
      %v1072 = vld [vmem:[%s168 + $0x1bc8] sm:$0xff]
      %v1073 = vld [vmem:[%s168 + $0x1bd0] sm:$0xff]
      %v1074 = vld [vmem:[%s168 + $0x1bd8] sm:$0xff]
      %v1075 = vld [vmem:[%s168 + $0x1be0] sm:$0xff]
      %v1076 = vld [vmem:[%s168 + $0x1be8] sm:$0xff]
      %v1077 = vld [vmem:[%s168 + $0x1bf0] sm:$0xff]
      %v1078 = vld [vmem:[%s168 + $0x1bf8] sm:$0xff]
      %v1079 = vld [vmem:[%s168 + $0x1c00] sm:$0xff]
      %v1080 = vld [vmem:[%s168 + $0x1c08] sm:$0xff]
      %v1081 = vld [vmem:[%s168 + $0x1c10] sm:$0xff]
      %v1082 = vld [vmem:[%s168 + $0x1c18] sm:$0xff]
      %v1083 = vld [vmem:[%s168 + $0x1c20] sm:$0xff]
      %v1084 = vld [vmem:[%s168 + $0x1c28] sm:$0xff]
      %v1085 = vld [vmem:[%s168 + $0x1c30] sm:$0xff]
      %v1086 = vld [vmem:[%s168 + $0x1c38] sm:$0xff]
      %v1087 = vld [vmem:[%s168 + $0x1c40] sm:$0xff]
      %v1088 = vld [vmem:[%s168 + $0x1c48] sm:$0xff]
      %v1089 = vld [vmem:[%s168 + $0x1c50] sm:$0xff]
      %v1090 = vld [vmem:[%s168 + $0x1c58] sm:$0xff]
      %v1091 = vld [vmem:[%s168 + $0x1c60] sm:$0xff]
      %v1092 = vld [vmem:[%s168 + $0x1c68] sm:$0xff]
      %v1093 = vld [vmem:[%s168 + $0x1c70] sm:$0xff]
      %v1094 = vld [vmem:[%s168 + $0x1c78] sm:$0xff]
      %v1095 = vld [vmem:[%s168 + $0x1c80] sm:$0xff]
      %v1096 = vld [vmem:[%s168 + $0x1c88] sm:$0xff]
      %v1097 = vld [vmem:[%s168 + $0x1c90] sm:$0xff]
      %v1098 = vld [vmem:[%s168 + $0x1c98] sm:$0xff]
      %v1099 = vld [vmem:[%s168 + $0x1ca0] sm:$0xff]
      %v1100 = vld [vmem:[%s168 + $0x1ca8] sm:$0xff]
      %v1101 = vld [vmem:[%s168 + $0x1cb0] sm:$0xff]
      %v1102 = vld [vmem:[%s168 + $0x1cb8] sm:$0xff]
      %v1103 = vld [vmem:[%s168 + $0x1cc0] sm:$0xff]
      %v1104 = vld [vmem:[%s168 + $0x1cc8] sm:$0xff]
      %v1105 = vld [vmem:[%s168 + $0x1cd0] sm:$0xff]
      %v1106 = vld [vmem:[%s168 + $0x1cd8] sm:$0xff]
      %v1107 = vld [vmem:[%s168 + $0x1ce0] sm:$0xff]
      %v1108 = vld [vmem:[%s168 + $0x1ce8] sm:$0xff]
      %v1109 = vld [vmem:[%s168 + $0x1cf0] sm:$0xff]
      %v1110 = vld [vmem:[%s168 + $0x1cf8] sm:$0xff]
      %v1111 = vld [vmem:[%s168 + $0x1d00] sm:$0xff]
      %v1112 = vld [vmem:[%s168 + $0x1d08] sm:$0xff]
      %v1113 = vld [vmem:[%s168 + $0x1d10] sm:$0xff]
      %v1114 = vld [vmem:[%s168 + $0x1d18] sm:$0xff]
      %v1115 = vld [vmem:[%s168 + $0x1d20] sm:$0xff]
      %v1116 = vld [vmem:[%s168 + $0x1d28] sm:$0xff]
      %v1117 = vld [vmem:[%s168 + $0x1d30] sm:$0xff]
      %v1118 = vld [vmem:[%s168 + $0x1d38] sm:$0xff]
      %v1119 = vld [vmem:[%s168 + $0x1d40] sm:$0xff]
      %v1120 = vld [vmem:[%s168 + $0x1d48] sm:$0xff]
      %v1121 = vld [vmem:[%s168 + $0x1d50] sm:$0xff]
      %v1122 = vld [vmem:[%s168 + $0x1d58] sm:$0xff]
      %v1123 = vld [vmem:[%s168 + $0x1d60] sm:$0xff]
      %v1124 = vld [vmem:[%s168 + $0x1d68] sm:$0xff]
      %v1125 = vld [vmem:[%s168 + $0x1d70] sm:$0xff]
      %v1126 = vld [vmem:[%s168 + $0x1d78] sm:$0xff]
      %v1127 = vld [vmem:[%s168 + $0x1d80] sm:$0xff]
      %v1128 = vld [vmem:[%s168 + $0x1d88] sm:$0xff]
      %v1129 = vld [vmem:[%s168 + $0x1d90] sm:$0xff]
      %v1130 = vld [vmem:[%s168 + $0x1d98] sm:$0xff]
      %v1131 = vld [vmem:[%s168 + $0x1da0] sm:$0xff]
      %v1132 = vld [vmem:[%s168 + $0x1da8] sm:$0xff]
      %v1133 = vld [vmem:[%s168 + $0x1db0] sm:$0xff]
      %v1134 = vld [vmem:[%s168 + $0x1db8] sm:$0xff]
      %v1135 = vld [vmem:[%s168 + $0x1dc0] sm:$0xff]
      %v1136 = vld [vmem:[%s168 + $0x1dc8] sm:$0xff]
      %v1137 = vld [vmem:[%s168 + $0x1dd0] sm:$0xff]
      %v1138 = vld [vmem:[%s168 + $0x1dd8] sm:$0xff]
      %v1139 = vld [vmem:[%s168 + $0x1de0] sm:$0xff]
      %v1140 = vld [vmem:[%s168 + $0x1de8] sm:$0xff]
      %v1141 = vld [vmem:[%s168 + $0x1df0] sm:$0xff]
      %v1142 = vld [vmem:[%s168 + $0x1df8] sm:$0xff]
      %v1143 = vld [vmem:[%s168 + $0x1e00] sm:$0xff]
      %v1144 = vld [vmem:[%s168 + $0x1e08] sm:$0xff]
      %v1145 = vld [vmem:[%s168 + $0x1e10] sm:$0xff]
      %v1146 = vld [vmem:[%s168 + $0x1e18] sm:$0xff]
      %v1147 = vld [vmem:[%s168 + $0x1e20] sm:$0xff]
      %v1148 = vld [vmem:[%s168 + $0x1e28] sm:$0xff]
      %v1149 = vld [vmem:[%s168 + $0x1e30] sm:$0xff]
      %v1150 = vld [vmem:[%s168 + $0x1e38] sm:$0xff]
      %v1151 = vld [vmem:[%s168 + $0x1e40] sm:$0xff]
      %v1152 = vld [vmem:[%s168 + $0x1e48] sm:$0xff]
      %v1153 = vld [vmem:[%s168 + $0x1e50] sm:$0xff]
      %v1154 = vld [vmem:[%s168 + $0x1e58] sm:$0xff]
      %v1155 = vld [vmem:[%s168 + $0x1e60] sm:$0xff]
      %v1156 = vld [vmem:[%s168 + $0x1e68] sm:$0xff]
      %v1157 = vld [vmem:[%s168 + $0x1e70] sm:$0xff]
      %v1158 = vld [vmem:[%s168 + $0x1e78] sm:$0xff]
      %v1159 = vld [vmem:[%s168 + $0x1e80] sm:$0xff]
      %v1160 = vld [vmem:[%s168 + $0x1e88] sm:$0xff]
      %v1161 = vld [vmem:[%s168 + $0x1e90] sm:$0xff]
      %v1162 = vld [vmem:[%s168 + $0x1e98] sm:$0xff]
      %v1163 = vld [vmem:[%s168 + $0x1ea0] sm:$0xff]
      %v1164 = vld [vmem:[%s168 + $0x1ea8] sm:$0xff]
      %v1165 = vld [vmem:[%s168 + $0x1eb0] sm:$0xff]
      %v1166 = vld [vmem:[%s168 + $0x1eb8] sm:$0xff]
      %v1167 = vld [vmem:[%s168 + $0x1ec0] sm:$0xff]
      %v1168 = vld [vmem:[%s168 + $0x1ec8] sm:$0xff]
      %v1169 = vld [vmem:[%s168 + $0x1ed0] sm:$0xff]
      %v1170 = vld [vmem:[%s168 + $0x1ed8] sm:$0xff]
      %v1171 = vld [vmem:[%s168 + $0x1ee0] sm:$0xff]
      %v1172 = vld [vmem:[%s168 + $0x1ee8] sm:$0xff]
      %v1173 = vld [vmem:[%s168 + $0x1ef0] sm:$0xff]
      %v1174 = vld [vmem:[%s168 + $0x1ef8] sm:$0xff]
      %v1175 = vld [vmem:[%s168 + $0x1f00] sm:$0xff]
      %v1176 = vld [vmem:[%s168 + $0x1f08] sm:$0xff]
      %v1177 = vld [vmem:[%s168 + $0x1f10] sm:$0xff]
      %v1178 = vld [vmem:[%s168 + $0x1f18] sm:$0xff]
      %v1179 = vld [vmem:[%s168 + $0x1f20] sm:$0xff]
      %v1180 = vld [vmem:[%s168 + $0x1f28] sm:$0xff]
      %v1181 = vld [vmem:[%s168 + $0x1f30] sm:$0xff]
      %v1182 = vld [vmem:[%s168 + $0x1f38] sm:$0xff]
      %v1183 = vld [vmem:[%s168 + $0x1f40] sm:$0xff]
      %v1184 = vld [vmem:[%s168 + $0x1f48] sm:$0xff]
      %v1185 = vld [vmem:[%s168 + $0x1f50] sm:$0xff]
      %v1186 = vld [vmem:[%s168 + $0x1f58] sm:$0xff]
      %v1187 = vld [vmem:[%s168 + $0x1f60] sm:$0xff]
      %v1188 = vld [vmem:[%s168 + $0x1f68] sm:$0xff]
      %v1189 = vld [vmem:[%s168 + $0x1f70] sm:$0xff]
      %v1190 = vld [vmem:[%s168 + $0x1f78] sm:$0xff]
      %v1191 = vld [vmem:[%s168 + $0x1f80] sm:$0xff]
      %v1192 = vld [vmem:[%s168 + $0x1f88] sm:$0xff]
      %v1193 = vld [vmem:[%s168 + $0x1f90] sm:$0xff]
      %v1194 = vld [vmem:[%s168 + $0x1f98] sm:$0xff]
      %v1195 = vld [vmem:[%s168 + $0x1fa0] sm:$0xff]
      %v1196 = vld [vmem:[%s168 + $0x1fa8] sm:$0xff]
      %v1197 = vld [vmem:[%s168 + $0x1fb0] sm:$0xff]
      %v1198 = vld [vmem:[%s168 + $0x1fb8] sm:$0xff]
      %v1199 = vld [vmem:[%s168 + $0x1fc0] sm:$0xff]
      %v1200 = vld [vmem:[%s168 + $0x1fc8] sm:$0xff]
      %v1201 = vld [vmem:[%s168 + $0x1fd0] sm:$0xff]
      %v1202 = vld [vmem:[%s168 + $0x1fd8] sm:$0xff]
      %v1203 = vld [vmem:[%s168 + $0x1fe0] sm:$0xff]
      %v1204 = vld [vmem:[%s168 + $0x1fe8] sm:$0xff]
      %v1205 = vld [vmem:[%s168 + $0x1ff0] sm:$0xff]
      %v1206 = vld [vmem:[%s168 + $0x1ff8] sm:$0xff]
      %v1207 = vld [vmem:[%s172] sm:$0xff]
      %v1209 = vlaneseq
      %v1210 = vshrl.u32 %v1209, 7
      %v1211 = vsub.s32 0, %v1210
      %v1212 = vrot.slane %v1207, %v1211
      %v1213 = vlaneseq
      %v1214 = vshrl.u32 %v1213, 7
      %v1215 = vsub.s32 1, %v1214
      %v1216 = vrot.slane %v1207, %v1215
      %v1217 = vlaneseq
      %v1218 = vshrl.u32 %v1217, 7
      %v1219 = vsub.s32 2, %v1218
      %v1220 = vrot.slane %v1207, %v1219
      %v1221 = vlaneseq
      %v1222 = vshrl.u32 %v1221, 7
      %v1223 = vsub.s32 3, %v1222
      %v1224 = vrot.slane %v1207, %v1223
      %v1225 = vlaneseq
      %v1226 = vshrl.u32 %v1225, 7
      %v1227 = vsub.s32 4, %v1226
      %v1228 = vrot.slane %v1207, %v1227
      %v1229 = vlaneseq
      %v1230 = vshrl.u32 %v1229, 7
      %v1231 = vsub.s32 5, %v1230
      %v1232 = vrot.slane %v1207, %v1231
      %v1233 = vlaneseq
      %v1234 = vshrl.u32 %v1233, 7
      %v1235 = vsub.s32 6, %v1234
      %v1236 = vrot.slane %v1207, %v1235
      %v1237 = vlaneseq
      %v1238 = vshrl.u32 %v1237, 7
      %v1239 = vsub.s32 7, %v1238
      %v1240 = vrot.slane %v1207, %v1239
      %v1251 = vcombine.high %v181, %v181
      %v1253 = vunpack.c.l.s4 1983009808
      %v1254 = vunpack.c.0.s8 %v1253
      %v1255 = vlaneseq
      %v1256 = vshrl.u32 %v1255, 7
      %v1257 = vsub.s32 %v1254, %v1256
      %v1258 = vrot.slane %v181, %v1257
      %v1260 = vunpack.c.l.s4 1983009808
      %v1261 = vunpack.c.0.s8 %v1260
      %v1262 = vlaneseq
      %v1263 = vshrl.u32 %v1262, 7
      %v1264 = vsub.s32 %v1261, %v1263
      %v1265 = vrot.slane %v1251, %v1264
      %v1266 = vcombine.high %v1258, %v1258
      %v1267 = vcombine.high %v1265, %v1265
      %v1268 = vcombine.high %v182, %v182
      %v1270 = vunpack.c.l.s4 1983009808
      %v1271 = vunpack.c.0.s8 %v1270
      %v1272 = vlaneseq
      %v1273 = vshrl.u32 %v1272, 7
      %v1274 = vsub.s32 %v1271, %v1273
      %v1275 = vrot.slane %v182, %v1274
      %v1277 = vunpack.c.l.s4 1983009808
      %v1278 = vunpack.c.0.s8 %v1277
      %v1279 = vlaneseq
      %v1280 = vshrl.u32 %v1279, 7
      %v1281 = vsub.s32 %v1278, %v1280
      %v1282 = vrot.slane %v1268, %v1281
      %v1283 = vcombine.high %v1275, %v1275
      %v1284 = vcombine.high %v1282, %v1282
      %1293 = vmatprep.subr.mxu0 %v184
      %1294 = vmatpush1.msra.mxu0 %v183
      %1295 = vmatprep.subr.mxu0 %v192
      %1296 = vmatpush1.msra.mxu0 %v191
      %1297 = vmatprep.subr.mxu0 %v200
      %1298 = vmatpush1.msra.mxu0 %v199
      %1299 = vmatprep.subr.mxu0 %v208
      %1300 = vmatpush1.msra.mxu0 %v207
      %1301 = vmatprep.subr.mxu0 %v216
      %1302 = vmatpush1.msra.mxu0 %v215
      %1303 = vmatprep.subr.mxu0 %v224
      %1304 = vmatpush1.msra.mxu0 %v223
      %1305 = vmatprep.subr.mxu0 %v232
      %1306 = vmatpush1.msra.mxu0 %v231
      %1307 = vmatprep.subr.mxu0 %v240
      %1308 = vmatpush1.msra.mxu0 %v239
      %1309 = vmatprep.subr.mxu0 %v248
      %1310 = vmatpush1.msra.mxu0 %v247
      %1311 = vmatprep.subr.mxu0 %v256
      %1312 = vmatpush1.msra.mxu0 %v255
      %1313 = vmatprep.subr.mxu0 %v264
      %1314 = vmatpush1.msra.mxu0 %v263
      %1315 = vmatprep.subr.mxu0 %v272
      %1316 = vmatpush1.msra.mxu0 %v271
      %1317 = vmatprep.subr.mxu0 %v280
      %1318 = vmatpush1.msra.mxu0 %v279
      %1319 = vmatprep.subr.mxu0 %v288
      %1320 = vmatpush1.msra.mxu0 %v287
      %1321 = vmatprep.subr.mxu0 %v296
      %1322 = vmatpush1.msra.mxu0 %v295
      %1323 = vmatprep.subr.mxu0 %v304
      %1324 = vmatpush1.msra.mxu0 %v303
      %1325 = vmatprep.subr.mxu0 %v312
      %1326 = vmatpush1.msra.mxu0 %v311
      %1327 = vmatprep.subr.mxu0 %v320
      %1328 = vmatpush1.msra.mxu0 %v319
      %1329 = vmatprep.subr.mxu0 %v328
      %1330 = vmatpush1.msra.mxu0 %v327
      %1331 = vmatprep.subr.mxu0 %v336
      %1332 = vmatpush1.msra.mxu0 %v335
      %1333 = vmatprep.subr.mxu0 %v344
      %1334 = vmatpush1.msra.mxu0 %v343
      %1335 = vmatprep.subr.mxu0 %v352
      %1336 = vmatpush1.msra.mxu0 %v351
      %1337 = vmatprep.subr.mxu0 %v360
      %1338 = vmatpush1.msra.mxu0 %v359
      %1339 = vmatprep.subr.mxu0 %v368
      %1340 = vmatpush1.msra.mxu0 %v367
      %1341 = vmatprep.subr.mxu0 %v376
      %1342 = vmatpush1.msra.mxu0 %v375
      %1343 = vmatprep.subr.mxu0 %v384
      %1344 = vmatpush1.msra.mxu0 %v383
      %1345 = vmatprep.subr.mxu0 %v392
      %1346 = vmatpush1.msra.mxu0 %v391
      %1347 = vmatprep.subr.mxu0 %v400
      %1348 = vmatpush1.msra.mxu0 %v399
      %1349 = vmatprep.subr.mxu0 %v408
      %1350 = vmatpush1.msra.mxu0 %v407
      %1351 = vmatprep.subr.mxu0 %v416
      %1352 = vmatpush1.msra.mxu0 %v415
      %1353 = vmatprep.subr.mxu0 %v424
      %1354 = vmatpush1.msra.mxu0 %v423
      %1355 = vmatprep.subr.mxu0 %v432
      %1356 = vmatpush1.msra.mxu0 %v431
      %1357 = vmatprep.mubr.f32.mxu0 %v1266
      %1358 = vmatmul.mubr.f32.gmra.mrb[0].mxu0 %v1258
      %v1359 = vpop.f32.mrb[0].mxu0
      %v1360 = vadd.f32 %v1212, %v1359
      %v1361 = vpop.f32.mrb[0].mxu0
      %v1362 = vadd.f32 %v1216, %v1361
      %1363 = vdwg.mxu0
      %1364 = vmatprep.subr.mxu0 %v440
      %1365 = vmatpush1.msra.mxu0 %v439
      %1366 = vmatprep.subr.mxu0 %v448
      %1367 = vmatpush1.msra.mxu0 %v447
      %1368 = vmatprep.subr.mxu0 %v456
      %1369 = vmatpush1.msra.mxu0 %v455
      %1370 = vmatprep.subr.mxu0 %v464
      %1371 = vmatpush1.msra.mxu0 %v463
      %1372 = vmatprep.subr.mxu0 %v472
      %1373 = vmatpush1.msra.mxu0 %v471
      %1374 = vmatprep.subr.mxu0 %v480
      %1375 = vmatpush1.msra.mxu0 %v479
      %1376 = vmatprep.subr.mxu0 %v488
      %1377 = vmatpush1.msra.mxu0 %v487
      %1378 = vmatprep.subr.mxu0 %v496
      %1379 = vmatpush1.msra.mxu0 %v495
      %1380 = vmatprep.subr.mxu0 %v504
      %1381 = vmatpush1.msra.mxu0 %v503
      %1382 = vmatprep.subr.mxu0 %v512
      %1383 = vmatpush1.msra.mxu0 %v511
      %1384 = vmatprep.subr.mxu0 %v520
      %1385 = vmatpush1.msra.mxu0 %v519
      %1386 = vmatprep.subr.mxu0 %v528
      %1387 = vmatpush1.msra.mxu0 %v527
      %1388 = vmatprep.subr.mxu0 %v536
      %1389 = vmatpush1.msra.mxu0 %v535
      %1390 = vmatprep.subr.mxu0 %v544
      %1391 = vmatpush1.msra.mxu0 %v543
      %1392 = vmatprep.subr.mxu0 %v552
      %1393 = vmatpush1.msra.mxu0 %v551
      %1394 = vmatprep.subr.mxu0 %v560
      %1395 = vmatpush1.msra.mxu0 %v559
      %1396 = vmatprep.subr.mxu0 %v568
      %1397 = vmatpush1.msra.mxu0 %v567
      %1398 = vmatprep.subr.mxu0 %v576
      %1399 = vmatpush1.msra.mxu0 %v575
      %1400 = vmatprep.subr.mxu0 %v584
      %1401 = vmatpush1.msra.mxu0 %v583
      %1402 = vmatprep.subr.mxu0 %v592
      %1403 = vmatpush1.msra.mxu0 %v591
      %1404 = vmatprep.subr.mxu0 %v600
      %1405 = vmatpush1.msra.mxu0 %v599
      %1406 = vmatprep.subr.mxu0 %v608
      %1407 = vmatpush1.msra.mxu0 %v607
      %1408 = vmatprep.subr.mxu0 %v616
      %1409 = vmatpush1.msra.mxu0 %v615
      %1410 = vmatprep.subr.mxu0 %v624
      %1411 = vmatpush1.msra.mxu0 %v623
      %1412 = vmatprep.subr.mxu0 %v632
      %1413 = vmatpush1.msra.mxu0 %v631
      %1414 = vmatprep.subr.mxu0 %v640
      %1415 = vmatpush1.msra.mxu0 %v639
      %1416 = vmatprep.subr.mxu0 %v648
      %1417 = vmatpush1.msra.mxu0 %v647
      %1418 = vmatprep.subr.mxu0 %v656
      %1419 = vmatpush1.msra.mxu0 %v655
      %1420 = vmatprep.subr.mxu0 %v664
      %1421 = vmatpush1.msra.mxu0 %v663
      %1422 = vmatprep.subr.mxu0 %v672
      %1423 = vmatpush1.msra.mxu0 %v671
      %1424 = vmatprep.subr.mxu0 %v680
      %1425 = vmatpush1.msra.mxu0 %v679
      %1426 = vmatprep.subr.mxu0 %v688
      %1427 = vmatpush1.msra.mxu0 %v687
      %1428 = vmatprep.mubr.f32.mxu0 %v1267
      %1429 = vmatmul.mubr.f32.gmra.mrb[0].mxu0 %v1265
      %v1430 = vpop.f32.mrb[0].mxu0
      %v1431 = vadd.f32 %v1360, %v1430
      %v1432 = vpop.f32.mrb[0].mxu0
      %v1433 = vadd.f32 %v1362, %v1432
      %1434 = vdwg.mxu0
      %1435 = vmatprep.subr.mxu0 %v696
      %1436 = vmatpush1.msra.mxu0 %v695
      %1437 = vmatprep.subr.mxu0 %v704
      %1438 = vmatpush1.msra.mxu0 %v703
      %1439 = vmatprep.subr.mxu0 %v712
      %1440 = vmatpush1.msra.mxu0 %v711
      %1441 = vmatprep.subr.mxu0 %v720
      %1442 = vmatpush1.msra.mxu0 %v719
      %1443 = vmatprep.subr.mxu0 %v728
      %1444 = vmatpush1.msra.mxu0 %v727
      %1445 = vmatprep.subr.mxu0 %v736
      %1446 = vmatpush1.msra.mxu0 %v735
      %1447 = vmatprep.subr.mxu0 %v744
      %1448 = vmatpush1.msra.mxu0 %v743
      %1449 = vmatprep.subr.mxu0 %v752
      %1450 = vmatpush1.msra.mxu0 %v751
      %1451 = vmatprep.subr.mxu0 %v760
      %1452 = vmatpush1.msra.mxu0 %v759
      %1453 = vmatprep.subr.mxu0 %v768
      %1454 = vmatpush1.msra.mxu0 %v767
      %1455 = vmatprep.subr.mxu0 %v776
      %1456 = vmatpush1.msra.mxu0 %v775
      %1457 = vmatprep.subr.mxu0 %v784
      %1458 = vmatpush1.msra.mxu0 %v783
      %1459 = vmatprep.subr.mxu0 %v792
      %1460 = vmatpush1.msra.mxu0 %v791
      %1461 = vmatprep.subr.mxu0 %v800
      %1462 = vmatpush1.msra.mxu0 %v799
      %1463 = vmatprep.subr.mxu0 %v808
      %1464 = vmatpush1.msra.mxu0 %v807
      %1465 = vmatprep.subr.mxu0 %v816
      %1466 = vmatpush1.msra.mxu0 %v815
      %1467 = vmatprep.subr.mxu0 %v824
      %1468 = vmatpush1.msra.mxu0 %v823
      %1469 = vmatprep.subr.mxu0 %v832
      %1470 = vmatpush1.msra.mxu0 %v831
      %1471 = vmatprep.subr.mxu0 %v840
      %1472 = vmatpush1.msra.mxu0 %v839
      %1473 = vmatprep.subr.mxu0 %v848
      %1474 = vmatpush1.msra.mxu0 %v847
      %1475 = vmatprep.subr.mxu0 %v856
      %1476 = vmatpush1.msra.mxu0 %v855
      %1477 = vmatprep.subr.mxu0 %v864
      %1478 = vmatpush1.msra.mxu0 %v863
      %1479 = vmatprep.subr.mxu0 %v872
      %1480 = vmatpush1.msra.mxu0 %v871
      %1481 = vmatprep.subr.mxu0 %v880
      %1482 = vmatpush1.msra.mxu0 %v879
      %1483 = vmatprep.subr.mxu0 %v888
      %1484 = vmatpush1.msra.mxu0 %v887
      %1485 = vmatprep.subr.mxu0 %v896
      %1486 = vmatpush1.msra.mxu0 %v895
      %1487 = vmatprep.subr.mxu0 %v904
      %1488 = vmatpush1.msra.mxu0 %v903
      %1489 = vmatprep.subr.mxu0 %v912
      %1490 = vmatpush1.msra.mxu0 %v911
      %1491 = vmatprep.subr.mxu0 %v920
      %1492 = vmatpush1.msra.mxu0 %v919
      %1493 = vmatprep.subr.mxu0 %v928
      %1494 = vmatpush1.msra.mxu0 %v927
      %1495 = vmatprep.subr.mxu0 %v936
      %1496 = vmatpush1.msra.mxu0 %v935
      %1497 = vmatprep.subr.mxu0 %v944
      %1498 = vmatpush1.msra.mxu0 %v943
      %1499 = vmatprep.mubr.f32.mxu0 %v1283
      %1500 = vmatmul.mubr.f32.gmra.mrb[0].mxu0 %v1275
      %v1501 = vpop.f32.mrb[0].mxu0
      %v1502 = vadd.f32 %v1431, %v1501
      %v1503 = vpop.f32.mrb[0].mxu0
      %v1504 = vadd.f32 %v1433, %v1503
      %1505 = vdwg.mxu0
      %1506 = vmatprep.subr.mxu0 %v952
      %1507 = vmatpush1.msra.mxu0 %v951
      %1508 = vmatprep.subr.mxu0 %v960
      %1509 = vmatpush1.msra.mxu0 %v959
      %1510 = vmatprep.subr.mxu0 %v968
      %1511 = vmatpush1.msra.mxu0 %v967
      %1512 = vmatprep.subr.mxu0 %v976
      %1513 = vmatpush1.msra.mxu0 %v975
      %1514 = vmatprep.subr.mxu0 %v984
      %1515 = vmatpush1.msra.mxu0 %v983
      %1516 = vmatprep.subr.mxu0 %v992
      %1517 = vmatpush1.msra.mxu0 %v991
      %1518 = vmatprep.subr.mxu0 %v1000
      %1519 = vmatpush1.msra.mxu0 %v999
      %1520 = vmatprep.subr.mxu0 %v1008
      %1521 = vmatpush1.msra.mxu0 %v1007
      %1522 = vmatprep.subr.mxu0 %v1016
      %1523 = vmatpush1.msra.mxu0 %v1015
      %1524 = vmatprep.subr.mxu0 %v1024
      %1525 = vmatpush1.msra.mxu0 %v1023
      %1526 = vmatprep.subr.mxu0 %v1032
      %1527 = vmatpush1.msra.mxu0 %v1031
      %1528 = vmatprep.subr.mxu0 %v1040
      %1529 = vmatpush1.msra.mxu0 %v1039
      %1530 = vmatprep.subr.mxu0 %v1048
      %1531 = vmatpush1.msra.mxu0 %v1047
      %1532 = vmatprep.subr.mxu0 %v1056
      %1533 = vmatpush1.msra.mxu0 %v1055
      %1534 = vmatprep.subr.mxu0 %v1064
      %1535 = vmatpush1.msra.mxu0 %v1063
      %1536 = vmatprep.subr.mxu0 %v1072
      %1537 = vmatpush1.msra.mxu0 %v1071
      %1538 = vmatprep.subr.mxu0 %v1080
      %1539 = vmatpush1.msra.mxu0 %v1079
      %1540 = vmatprep.subr.mxu0 %v1088
      %1541 = vmatpush1.msra.mxu0 %v1087
      %1542 = vmatprep.subr.mxu0 %v1096
      %1543 = vmatpush1.msra.mxu0 %v1095
      %1544 = vmatprep.subr.mxu0 %v1104
      %1545 = vmatpush1.msra.mxu0 %v1103
      %1546 = vmatprep.subr.mxu0 %v1112
      %1547 = vmatpush1.msra.mxu0 %v1111
      %1548 = vmatprep.subr.mxu0 %v1120
      %1549 = vmatpush1.msra.mxu0 %v1119
      %1550 = vmatprep.subr.mxu0 %v1128
      %1551 = vmatpush1.msra.mxu0 %v1127
      %1552 = vmatprep.subr.mxu0 %v1136
      %1553 = vmatpush1.msra.mxu0 %v1135
      %1554 = vmatprep.subr.mxu0 %v1144
      %1555 = vmatpush1.msra.mxu0 %v1143
      %1556 = vmatprep.subr.mxu0 %v1152
      %1557 = vmatpush1.msra.mxu0 %v1151
      %1558 = vmatprep.subr.mxu0 %v1160
      %1559 = vmatpush1.msra.mxu0 %v1159
      %1560 = vmatprep.subr.mxu0 %v1168
      %1561 = vmatpush1.msra.mxu0 %v1167
      %1562 = vmatprep.subr.mxu0 %v1176
      %1563 = vmatpush1.msra.mxu0 %v1175
      %1564 = vmatprep.subr.mxu0 %v1184
      %1565 = vmatpush1.msra.mxu0 %v1183
      %1566 = vmatprep.subr.mxu0 %v1192
      %1567 = vmatpush1.msra.mxu0 %v1191
      %1568 = vmatprep.subr.mxu0 %v1200
      %1569 = vmatpush1.msra.mxu0 %v1199
      %1570 = vmatprep.mubr.f32.mxu0 %v1284
      %1571 = vmatmul.mubr.f32.gmra.mrb[0].mxu0 %v1282
      %v1572 = vpop.f32.mrb[0].mxu0
      %v1573 = vadd.f32 %v1502, %v1572
      %v1574 = vpop.f32.mrb[0].mxu0
      %v1575 = vadd.f32 %v1504, %v1574
      %1576 = vdwg.mxu0
      %1577 = vmatprep.subr.mxu0 %v186
      %1578 = vmatpush1.msra.mxu0 %v185
      %1579 = vmatprep.subr.mxu0 %v194
      %1580 = vmatpush1.msra.mxu0 %v193
      %1581 = vmatprep.subr.mxu0 %v202
      %1582 = vmatpush1.msra.mxu0 %v201
      %1583 = vmatprep.subr.mxu0 %v210
      %1584 = vmatpush1.msra.mxu0 %v209
      %1585 = vmatprep.subr.mxu0 %v218
      %1586 = vmatpush1.msra.mxu0 %v217
      %1587 = vmatprep.subr.mxu0 %v226
      %1588 = vmatpush1.msra.mxu0 %v225
      %1589 = vmatprep.subr.mxu0 %v234
      %1590 = vmatpush1.msra.mxu0 %v233
      %1591 = vmatprep.subr.mxu0 %v242
      %1592 = vmatpush1.msra.mxu0 %v241
      %1593 = vmatprep.subr.mxu0 %v250
      %1594 = vmatpush1.msra.mxu0 %v249
      %1595 = vmatprep.subr.mxu0 %v258
      %1596 = vmatpush1.msra.mxu0 %v257
      %1597 = vmatprep.subr.mxu0 %v266
      %1598 = vmatpush1.msra.mxu0 %v265
      %1599 = vmatprep.subr.mxu0 %v274
      %1600 = vmatpush1.msra.mxu0 %v273
      %1601 = vmatprep.subr.mxu0 %v282
      %1602 = vmatpush1.msra.mxu0 %v281
      %1603 = vmatprep.subr.mxu0 %v290
      %1604 = vmatpush1.msra.mxu0 %v289
      %1605 = vmatprep.subr.mxu0 %v298
      %1606 = vmatpush1.msra.mxu0 %v297
      %1607 = vmatprep.subr.mxu0 %v306
      %1608 = vmatpush1.msra.mxu0 %v305
      %1609 = vmatprep.subr.mxu0 %v314
      %1610 = vmatpush1.msra.mxu0 %v313
      %1611 = vmatprep.subr.mxu0 %v322
      %1612 = vmatpush1.msra.mxu0 %v321
      %1613 = vmatprep.subr.mxu0 %v330
      %1614 = vmatpush1.msra.mxu0 %v329
      %1615 = vmatprep.subr.mxu0 %v338
      %1616 = vmatpush1.msra.mxu0 %v337
      %1617 = vmatprep.subr.mxu0 %v346
      %1618 = vmatpush1.msra.mxu0 %v345
      %1619 = vmatprep.subr.mxu0 %v354
      %1620 = vmatpush1.msra.mxu0 %v353
      %1621 = vmatprep.subr.mxu0 %v362
      %1622 = vmatpush1.msra.mxu0 %v361
      %1623 = vmatprep.subr.mxu0 %v370
      %1624 = vmatpush1.msra.mxu0 %v369
      %1625 = vmatprep.subr.mxu0 %v378
      %1626 = vmatpush1.msra.mxu0 %v377
      %1627 = vmatprep.subr.mxu0 %v386
      %1628 = vmatpush1.msra.mxu0 %v385
      %1629 = vmatprep.subr.mxu0 %v394
      %1630 = vmatpush1.msra.mxu0 %v393
      %1631 = vmatprep.subr.mxu0 %v402
      %1632 = vmatpush1.msra.mxu0 %v401
      %1633 = vmatprep.subr.mxu0 %v410
      %1634 = vmatpush1.msra.mxu0 %v409
      %1635 = vmatprep.subr.mxu0 %v418
      %1636 = vmatpush1.msra.mxu0 %v417
      %1637 = vmatprep.subr.mxu0 %v426
      %1638 = vmatpush1.msra.mxu0 %v425
      %1639 = vmatprep.subr.mxu0 %v434
      %1640 = vmatpush1.msra.mxu0 %v433
      %1641 = vmatprep.mubr.f32.mxu0 %v1266
      %1642 = vmatmul.mubr.f32.gmra.mrb[0].mxu0 %v1258
      %v1643 = vpop.f32.mrb[0].mxu0
      %v1644 = vadd.f32 %v1220, %v1643
      %v1645 = vpop.f32.mrb[0].mxu0
      %v1646 = vadd.f32 %v1224, %v1645
      %1647 = vdwg.mxu0
      %1648 = vmatprep.subr.mxu0 %v442
      %1649 = vmatpush1.msra.mxu0 %v441
      %1650 = vmatprep.subr.mxu0 %v450
      %1651 = vmatpush1.msra.mxu0 %v449
      %1652 = vmatprep.subr.mxu0 %v458
      %1653 = vmatpush1.msra.mxu0 %v457
      %1654 = vmatprep.subr.mxu0 %v466
      %1655 = vmatpush1.msra.mxu0 %v465
      %1656 = vmatprep.subr.mxu0 %v474
      %1657 = vmatpush1.msra.mxu0 %v473
      %1658 = vmatprep.subr.mxu0 %v482
      %1659 = vmatpush1.msra.mxu0 %v481
      %1660 = vmatprep.subr.mxu0 %v490
      %1661 = vmatpush1.msra.mxu0 %v489
      %1662 = vmatprep.subr.mxu0 %v498
      %1663 = vmatpush1.msra.mxu0 %v497
      %1664 = vmatprep.subr.mxu0 %v506
      %1665 = vmatpush1.msra.mxu0 %v505
      %1666 = vmatprep.subr.mxu0 %v514
      %1667 = vmatpush1.msra.mxu0 %v513
      %1668 = vmatprep.subr.mxu0 %v522
      %1669 = vmatpush1.msra.mxu0 %v521
      %1670 = vmatprep.subr.mxu0 %v530
      %1671 = vmatpush1.msra.mxu0 %v529
      %1672 = vmatprep.subr.mxu0 %v538
      %1673 = vmatpush1.msra.mxu0 %v537
      %1674 = vmatprep.subr.mxu0 %v546
      %1675 = vmatpush1.msra.mxu0 %v545
      %1676 = vmatprep.subr.mxu0 %v554
      %1677 = vmatpush1.msra.mxu0 %v553
      %1678 = vmatprep.subr.mxu0 %v562
      %1679 = vmatpush1.msra.mxu0 %v561
      %1680 = vmatprep.subr.mxu0 %v570
      %1681 = vmatpush1.msra.mxu0 %v569
      %1682 = vmatprep.subr.mxu0 %v578
      %1683 = vmatpush1.msra.mxu0 %v577
      %1684 = vmatprep.subr.mxu0 %v586
      %1685 = vmatpush1.msra.mxu0 %v585
      %1686 = vmatprep.subr.mxu0 %v594
      %1687 = vmatpush1.msra.mxu0 %v593
      %1688 = vmatprep.subr.mxu0 %v602
      %1689 = vmatpush1.msra.mxu0 %v601
      %1690 = vmatprep.subr.mxu0 %v610
      %1691 = vmatpush1.msra.mxu0 %v609
      %1692 = vmatprep.subr.mxu0 %v618
      %1693 = vmatpush1.msra.mxu0 %v617
      %1694 = vmatprep.subr.mxu0 %v626
      %1695 = vmatpush1.msra.mxu0 %v625
      %1696 = vmatprep.subr.mxu0 %v634
      %1697 = vmatpush1.msra.mxu0 %v633
      %1698 = vmatprep.subr.mxu0 %v642
      %1699 = vmatpush1.msra.mxu0 %v641
      %1700 = vmatprep.subr.mxu0 %v650
      %1701 = vmatpush1.msra.mxu0 %v649
      %1702 = vmatprep.subr.mxu0 %v658
      %1703 = vmatpush1.msra.mxu0 %v657
      %1704 = vmatprep.subr.mxu0 %v666
      %1705 = vmatpush1.msra.mxu0 %v665
      %1706 = vmatprep.subr.mxu0 %v674
      %1707 = vmatpush1.msra.mxu0 %v673
      %1708 = vmatprep.subr.mxu0 %v682
      %1709 = vmatpush1.msra.mxu0 %v681
      %1710 = vmatprep.subr.mxu0 %v690
      %1711 = vmatpush1.msra.mxu0 %v689
      %1712 = vmatprep.mubr.f32.mxu0 %v1267
      %1713 = vmatmul.mubr.f32.gmra.mrb[0].mxu0 %v1265
      %v1714 = vpop.f32.mrb[0].mxu0
      %v1715 = vadd.f32 %v1644, %v1714
      %v1716 = vpop.f32.mrb[0].mxu0
      %v1717 = vadd.f32 %v1646, %v1716
      %1718 = vdwg.mxu0
      %1719 = vmatprep.subr.mxu0 %v698
      %1720 = vmatpush1.msra.mxu0 %v697
      %1721 = vmatprep.subr.mxu0 %v706
      %1722 = vmatpush1.msra.mxu0 %v705
      %1723 = vmatprep.subr.mxu0 %v714
      %1724 = vmatpush1.msra.mxu0 %v713
      %1725 = vmatprep.subr.mxu0 %v722
      %1726 = vmatpush1.msra.mxu0 %v721
      %1727 = vmatprep.subr.mxu0 %v730
      %1728 = vmatpush1.msra.mxu0 %v729
      %1729 = vmatprep.subr.mxu0 %v738
      %1730 = vmatpush1.msra.mxu0 %v737
      %1731 = vmatprep.subr.mxu0 %v746
      %1732 = vmatpush1.msra.mxu0 %v745
      %1733 = vmatprep.subr.mxu0 %v754
      %1734 = vmatpush1.msra.mxu0 %v753
      %1735 = vmatprep.subr.mxu0 %v762
      %1736 = vmatpush1.msra.mxu0 %v761
      %1737 = vmatprep.subr.mxu0 %v770
      %1738 = vmatpush1.msra.mxu0 %v769
      %1739 = vmatprep.subr.mxu0 %v778
      %1740 = vmatpush1.msra.mxu0 %v777
      %1741 = vmatprep.subr.mxu0 %v786
      %1742 = vmatpush1.msra.mxu0 %v785
      %1743 = vmatprep.subr.mxu0 %v794
      %1744 = vmatpush1.msra.mxu0 %v793
      %1745 = vmatprep.subr.mxu0 %v802
      %1746 = vmatpush1.msra.mxu0 %v801
      %1747 = vmatprep.subr.mxu0 %v810
      %1748 = vmatpush1.msra.mxu0 %v809
      %1749 = vmatprep.subr.mxu0 %v818
      %1750 = vmatpush1.msra.mxu0 %v817
      %1751 = vmatprep.subr.mxu0 %v826
      %1752 = vmatpush1.msra.mxu0 %v825
      %1753 = vmatprep.subr.mxu0 %v834
      %1754 = vmatpush1.msra.mxu0 %v833
      %1755 = vmatprep.subr.mxu0 %v842
      %1756 = vmatpush1.msra.mxu0 %v841
      %1757 = vmatprep.subr.mxu0 %v850
      %1758 = vmatpush1.msra.mxu0 %v849
      %1759 = vmatprep.subr.mxu0 %v858
      %1760 = vmatpush1.msra.mxu0 %v857
      %1761 = vmatprep.subr.mxu0 %v866
      %1762 = vmatpush1.msra.mxu0 %v865
      %1763 = vmatprep.subr.mxu0 %v874
      %1764 = vmatpush1.msra.mxu0 %v873
      %1765 = vmatprep.subr.mxu0 %v882
      %1766 = vmatpush1.msra.mxu0 %v881
      %1767 = vmatprep.subr.mxu0 %v890
      %1768 = vmatpush1.msra.mxu0 %v889
      %1769 = vmatprep.subr.mxu0 %v898
      %1770 = vmatpush1.msra.mxu0 %v897
      %1771 = vmatprep.subr.mxu0 %v906
      %1772 = vmatpush1.msra.mxu0 %v905
      %1773 = vmatprep.subr.mxu0 %v914
      %1774 = vmatpush1.msra.mxu0 %v913
      %1775 = vmatprep.subr.mxu0 %v922
      %1776 = vmatpush1.msra.mxu0 %v921
      %1777 = vmatprep.subr.mxu0 %v930
      %1778 = vmatpush1.msra.mxu0 %v929
      %1779 = vmatprep.subr.mxu0 %v938
      %1780 = vmatpush1.msra.mxu0 %v937
      %1781 = vmatprep.subr.mxu0 %v946
      %1782 = vmatpush1.msra.mxu0 %v945
      %1783 = vmatprep.mubr.f32.mxu0 %v1283
      %1784 = vmatmul.mubr.f32.gmra.mrb[0].mxu0 %v1275
      %v1785 = vpop.f32.mrb[0].mxu0
      %v1786 = vadd.f32 %v1715, %v1785
      %v1787 = vpop.f32.mrb[0].mxu0
      %v1788 = vadd.f32 %v1717, %v1787
      %1789 = vdwg.mxu0
      %1790 = vmatprep.subr.mxu0 %v954
      %1791 = vmatpush1.msra.mxu0 %v953
      %1792 = vmatprep.subr.mxu0 %v962
      %1793 = vmatpush1.msra.mxu0 %v961
      %1794 = vmatprep.subr.mxu0 %v970
      %1795 = vmatpush1.msra.mxu0 %v969
      %1796 = vmatprep.subr.mxu0 %v978
      %1797 = vmatpush1.msra.mxu0 %v977
      %1798 = vmatprep.subr.mxu0 %v986
      %1799 = vmatpush1.msra.mxu0 %v985
      %1800 = vmatprep.subr.mxu0 %v994
      %1801 = vmatpush1.msra.mxu0 %v993
      %1802 = vmatprep.subr.mxu0 %v1002
      %1803 = vmatpush1.msra.mxu0 %v1001
      %1804 = vmatprep.subr.mxu0 %v1010
      %1805 = vmatpush1.msra.mxu0 %v1009
      %1806 = vmatprep.subr.mxu0 %v1018
      %1807 = vmatpush1.msra.mxu0 %v1017
      %1808 = vmatprep.subr.mxu0 %v1026
      %1809 = vmatpush1.msra.mxu0 %v1025
      %1810 = vmatprep.subr.mxu0 %v1034
      %1811 = vmatpush1.msra.mxu0 %v1033
      %1812 = vmatprep.subr.mxu0 %v1042
      %1813 = vmatpush1.msra.mxu0 %v1041
      %1814 = vmatprep.subr.mxu0 %v1050
      %1815 = vmatpush1.msra.mxu0 %v1049
      %1816 = vmatprep.subr.mxu0 %v1058
      %1817 = vmatpush1.msra.mxu0 %v1057
      %1818 = vmatprep.subr.mxu0 %v1066
      %1819 = vmatpush1.msra.mxu0 %v1065
      %1820 = vmatprep.subr.mxu0 %v1074
      %1821 = vmatpush1.msra.mxu0 %v1073
      %1822 = vmatprep.subr.mxu0 %v1082
      %1823 = vmatpush1.msra.mxu0 %v1081
      %1824 = vmatprep.subr.mxu0 %v1090
      %1825 = vmatpush1.msra.mxu0 %v1089
      %1826 = vmatprep.subr.mxu0 %v1098
      %1827 = vmatpush1.msra.mxu0 %v1097
      %1828 = vmatprep.subr.mxu0 %v1106
      %1829 = vmatpush1.msra.mxu0 %v1105
      %1830 = vmatprep.subr.mxu0 %v1114
      %1831 = vmatpush1.msra.mxu0 %v1113
      %1832 = vmatprep.subr.mxu0 %v1122
      %1833 = vmatpush1.msra.mxu0 %v1121
      %1834 = vmatprep.subr.mxu0 %v1130
      %1835 = vmatpush1.msra.mxu0 %v1129
      %1836 = vmatprep.subr.mxu0 %v1138
      %1837 = vmatpush1.msra.mxu0 %v1137
      %1838 = vmatprep.subr.mxu0 %v1146
      %1839 = vmatpush1.msra.mxu0 %v1145
      %1840 = vmatprep.subr.mxu0 %v1154
      %1841 = vmatpush1.msra.mxu0 %v1153
      %1842 = vmatprep.subr.mxu0 %v1162
      %1843 = vmatpush1.msra.mxu0 %v1161
      %1844 = vmatprep.subr.mxu0 %v1170
      %1845 = vmatpush1.msra.mxu0 %v1169
      %1846 = vmatprep.subr.mxu0 %v1178
      %1847 = vmatpush1.msra.mxu0 %v1177
      %1848 = vmatprep.subr.mxu0 %v1186
      %1849 = vmatpush1.msra.mxu0 %v1185
      %1850 = vmatprep.subr.mxu0 %v1194
      %1851 = vmatpush1.msra.mxu0 %v1193
      %1852 = vmatprep.subr.mxu0 %v1202
      %1853 = vmatpush1.msra.mxu0 %v1201
      %1854 = vmatprep.mubr.f32.mxu0 %v1284
      %1855 = vmatmul.mubr.f32.gmra.mrb[0].mxu0 %v1282
      %v1856 = vpop.f32.mrb[0].mxu0
      %v1857 = vadd.f32 %v1786, %v1856
      %v1858 = vpop.f32.mrb[0].mxu0
      %v1859 = vadd.f32 %v1788, %v1858
      %1860 = vdwg.mxu0
      %1861 = vmatprep.subr.mxu0 %v188
      %1862 = vmatpush1.msra.mxu0 %v187
      %1863 = vmatprep.subr.mxu0 %v196
      %1864 = vmatpush1.msra.mxu0 %v195
      %1865 = vmatprep.subr.mxu0 %v204
      %1866 = vmatpush1.msra.mxu0 %v203
      %1867 = vmatprep.subr.mxu0 %v212
      %1868 = vmatpush1.msra.mxu0 %v211
      %1869 = vmatprep.subr.mxu0 %v220
      %1870 = vmatpush1.msra.mxu0 %v219
      %1871 = vmatprep.subr.mxu0 %v228
      %1872 = vmatpush1.msra.mxu0 %v227
      %1873 = vmatprep.subr.mxu0 %v236
      %1874 = vmatpush1.msra.mxu0 %v235
      %1875 = vmatprep.subr.mxu0 %v244
      %1876 = vmatpush1.msra.mxu0 %v243
      %1877 = vmatprep.subr.mxu0 %v252
      %1878 = vmatpush1.msra.mxu0 %v251
      %1879 = vmatprep.subr.mxu0 %v260
      %1880 = vmatpush1.msra.mxu0 %v259
      %1881 = vmatprep.subr.mxu0 %v268
      %1882 = vmatpush1.msra.mxu0 %v267
      %1883 = vmatprep.subr.mxu0 %v276
      %1884 = vmatpush1.msra.mxu0 %v275
      %1885 = vmatprep.subr.mxu0 %v284
      %1886 = vmatpush1.msra.mxu0 %v283
      %1887 = vmatprep.subr.mxu0 %v292
      %1888 = vmatpush1.msra.mxu0 %v291
      %1889 = vmatprep.subr.mxu0 %v300
      %1890 = vmatpush1.msra.mxu0 %v299
      %1891 = vmatprep.subr.mxu0 %v308
      %1892 = vmatpush1.msra.mxu0 %v307
      %1893 = vmatprep.subr.mxu0 %v316
      %1894 = vmatpush1.msra.mxu0 %v315
      %1895 = vmatprep.subr.mxu0 %v324
      %1896 = vmatpush1.msra.mxu0 %v323
      %1897 = vmatprep.subr.mxu0 %v332
      %1898 = vmatpush1.msra.mxu0 %v331
      %1899 = vmatprep.subr.mxu0 %v340
      %1900 = vmatpush1.msra.mxu0 %v339
      %1901 = vmatprep.subr.mxu0 %v348
      %1902 = vmatpush1.msra.mxu0 %v347
      %1903 = vmatprep.subr.mxu0 %v356
      %1904 = vmatpush1.msra.mxu0 %v355
      %1905 = vmatprep.subr.mxu0 %v364
      %1906 = vmatpush1.msra.mxu0 %v363
      %1907 = vmatprep.subr.mxu0 %v372
      %1908 = vmatpush1.msra.mxu0 %v371
      %1909 = vmatprep.subr.mxu0 %v380
      %1910 = vmatpush1.msra.mxu0 %v379
      %1911 = vmatprep.subr.mxu0 %v388
      %1912 = vmatpush1.msra.mxu0 %v387
      %1913 = vmatprep.subr.mxu0 %v396
      %1914 = vmatpush1.msra.mxu0 %v395
      %1915 = vmatprep.subr.mxu0 %v404
      %1916 = vmatpush1.msra.mxu0 %v403
      %1917 = vmatprep.subr.mxu0 %v412
      %1918 = vmatpush1.msra.mxu0 %v411
      %1919 = vmatprep.subr.mxu0 %v420
      %1920 = vmatpush1.msra.mxu0 %v419
      %1921 = vmatprep.subr.mxu0 %v428
      %1922 = vmatpush1.msra.mxu0 %v427
      %1923 = vmatprep.subr.mxu0 %v436
      %1924 = vmatpush1.msra.mxu0 %v435
      %1925 = vmatprep.mubr.f32.mxu0 %v1266
      %1926 = vmatmul.mubr.f32.gmra.mrb[0].mxu0 %v1258
      %v1927 = vpop.f32.mrb[0].mxu0
      %v1928 = vadd.f32 %v1228, %v1927
      %v1929 = vpop.f32.mrb[0].mxu0
      %v1930 = vadd.f32 %v1232, %v1929
      %1931 = vdwg.mxu0
      %1932 = vmatprep.subr.mxu0 %v444
      %1933 = vmatpush1.msra.mxu0 %v443
      %1934 = vmatprep.subr.mxu0 %v452
      %1935 = vmatpush1.msra.mxu0 %v451
      %1936 = vmatprep.subr.mxu0 %v460
      %1937 = vmatpush1.msra.mxu0 %v459
      %1938 = vmatprep.subr.mxu0 %v468
      %1939 = vmatpush1.msra.mxu0 %v467
      %1940 = vmatprep.subr.mxu0 %v476
      %1941 = vmatpush1.msra.mxu0 %v475
      %1942 = vmatprep.subr.mxu0 %v484
      %1943 = vmatpush1.msra.mxu0 %v483
      %1944 = vmatprep.subr.mxu0 %v492
      %1945 = vmatpush1.msra.mxu0 %v491
      %1946 = vmatprep.subr.mxu0 %v500
      %1947 = vmatpush1.msra.mxu0 %v499
      %1948 = vmatprep.subr.mxu0 %v508
      %1949 = vmatpush1.msra.mxu0 %v507
      %1950 = vmatprep.subr.mxu0 %v516
      %1951 = vmatpush1.msra.mxu0 %v515
      %1952 = vmatprep.subr.mxu0 %v524
      %1953 = vmatpush1.msra.mxu0 %v523
      %1954 = vmatprep.subr.mxu0 %v532
      %1955 = vmatpush1.msra.mxu0 %v531
      %1956 = vmatprep.subr.mxu0 %v540
      %1957 = vmatpush1.msra.mxu0 %v539
      %1958 = vmatprep.subr.mxu0 %v548
      %1959 = vmatpush1.msra.mxu0 %v547
      %1960 = vmatprep.subr.mxu0 %v556
      %1961 = vmatpush1.msra.mxu0 %v555
      %1962 = vmatprep.subr.mxu0 %v564
      %1963 = vmatpush1.msra.mxu0 %v563
      %1964 = vmatprep.subr.mxu0 %v572
      %1965 = vmatpush1.msra.mxu0 %v571
      %1966 = vmatprep.subr.mxu0 %v580
      %1967 = vmatpush1.msra.mxu0 %v579
      %1968 = vmatprep.subr.mxu0 %v588
      %1969 = vmatpush1.msra.mxu0 %v587
      %1970 = vmatprep.subr.mxu0 %v596
      %1971 = vmatpush1.msra.mxu0 %v595
      %1972 = vmatprep.subr.mxu0 %v604
      %1973 = vmatpush1.msra.mxu0 %v603
      %1974 = vmatprep.subr.mxu0 %v612
      %1975 = vmatpush1.msra.mxu0 %v611
      %1976 = vmatprep.subr.mxu0 %v620
      %1977 = vmatpush1.msra.mxu0 %v619
      %1978 = vmatprep.subr.mxu0 %v628
      %1979 = vmatpush1.msra.mxu0 %v627
      %1980 = vmatprep.subr.mxu0 %v636
      %1981 = vmatpush1.msra.mxu0 %v635
      %1982 = vmatprep.subr.mxu0 %v644
      %1983 = vmatpush1.msra.mxu0 %v643
      %1984 = vmatprep.subr.mxu0 %v652
      %1985 = vmatpush1.msra.mxu0 %v651
      %1986 = vmatprep.subr.mxu0 %v660
      %1987 = vmatpush1.msra.mxu0 %v659
      %1988 = vmatprep.subr.mxu0 %v668
      %1989 = vmatpush1.msra.mxu0 %v667
      %1990 = vmatprep.subr.mxu0 %v676
      %1991 = vmatpush1.msra.mxu0 %v675
      %1992 = vmatprep.subr.mxu0 %v684
      %1993 = vmatpush1.msra.mxu0 %v683
      %1994 = vmatprep.subr.mxu0 %v692
      %1995 = vmatpush1.msra.mxu0 %v691
      %1996 = vmatprep.mubr.f32.mxu0 %v1267
      %1997 = vmatmul.mubr.f32.gmra.mrb[0].mxu0 %v1265
      %v1998 = vpop.f32.mrb[0].mxu0
      %v1999 = vadd.f32 %v1928, %v1998
      %v2000 = vpop.f32.mrb[0].mxu0
      %v2001 = vadd.f32 %v1930, %v2000
      %2002 = vdwg.mxu0
      %2003 = vmatprep.subr.mxu0 %v700
      %2004 = vmatpush1.msra.mxu0 %v699
      %2005 = vmatprep.subr.mxu0 %v708
      %2006 = vmatpush1.msra.mxu0 %v707
      %2007 = vmatprep.subr.mxu0 %v716
      %2008 = vmatpush1.msra.mxu0 %v715
      %2009 = vmatprep.subr.mxu0 %v724
      %2010 = vmatpush1.msra.mxu0 %v723
      %2011 = vmatprep.subr.mxu0 %v732
      %2012 = vmatpush1.msra.mxu0 %v731
      %2013 = vmatprep.subr.mxu0 %v740
      %2014 = vmatpush1.msra.mxu0 %v739
      %2015 = vmatprep.subr.mxu0 %v748
      %2016 = vmatpush1.msra.mxu0 %v747
      %2017 = vmatprep.subr.mxu0 %v756
      %2018 = vmatpush1.msra.mxu0 %v755
      %2019 = vmatprep.subr.mxu0 %v764
      %2020 = vmatpush1.msra.mxu0 %v763
      %2021 = vmatprep.subr.mxu0 %v772
      %2022 = vmatpush1.msra.mxu0 %v771
      %2023 = vmatprep.subr.mxu0 %v780
      %2024 = vmatpush1.msra.mxu0 %v779
      %2025 = vmatprep.subr.mxu0 %v788
      %2026 = vmatpush1.msra.mxu0 %v787
      %2027 = vmatprep.subr.mxu0 %v796
      %2028 = vmatpush1.msra.mxu0 %v795
      %2029 = vmatprep.subr.mxu0 %v804
      %2030 = vmatpush1.msra.mxu0 %v803
      %2031 = vmatprep.subr.mxu0 %v812
      %2032 = vmatpush1.msra.mxu0 %v811
      %2033 = vmatprep.subr.mxu0 %v820
      %2034 = vmatpush1.msra.mxu0 %v819
      %2035 = vmatprep.subr.mxu0 %v828
      %2036 = vmatpush1.msra.mxu0 %v827
      %2037 = vmatprep.subr.mxu0 %v836
      %2038 = vmatpush1.msra.mxu0 %v835
      %2039 = vmatprep.subr.mxu0 %v844
      %2040 = vmatpush1.msra.mxu0 %v843
      %2041 = vmatprep.subr.mxu0 %v852
      %2042 = vmatpush1.msra.mxu0 %v851
      %2043 = vmatprep.subr.mxu0 %v860
      %2044 = vmatpush1.msra.mxu0 %v859
      %2045 = vmatprep.subr.mxu0 %v868
      %2046 = vmatpush1.msra.mxu0 %v867
      %2047 = vmatprep.subr.mxu0 %v876
      %2048 = vmatpush1.msra.mxu0 %v875
      %2049 = vmatprep.subr.mxu0 %v884
      %2050 = vmatpush1.msra.mxu0 %v883
      %2051 = vmatprep.subr.mxu0 %v892
      %2052 = vmatpush1.msra.mxu0 %v891
      %2053 = vmatprep.subr.mxu0 %v900
      %2054 = vmatpush1.msra.mxu0 %v899
      %2055 = vmatprep.subr.mxu0 %v908
      %2056 = vmatpush1.msra.mxu0 %v907
      %2057 = vmatprep.subr.mxu0 %v916
      %2058 = vmatpush1.msra.mxu0 %v915
      %2059 = vmatprep.subr.mxu0 %v924
      %2060 = vmatpush1.msra.mxu0 %v923
      %2061 = vmatprep.subr.mxu0 %v932
      %2062 = vmatpush1.msra.mxu0 %v931
      %2063 = vmatprep.subr.mxu0 %v940
      %2064 = vmatpush1.msra.mxu0 %v939
      %2065 = vmatprep.subr.mxu0 %v948
      %2066 = vmatpush1.msra.mxu0 %v947
      %2067 = vmatprep.mubr.f32.mxu0 %v1283
      %2068 = vmatmul.mubr.f32.gmra.mrb[0].mxu0 %v1275
      %v2069 = vpop.f32.mrb[0].mxu0
      %v2070 = vadd.f32 %v1999, %v2069
      %v2071 = vpop.f32.mrb[0].mxu0
      %v2072 = vadd.f32 %v2001, %v2071
      %2073 = vdwg.mxu0
      %2074 = vmatprep.subr.mxu0 %v956
      %2075 = vmatpush1.msra.mxu0 %v955
      %2076 = vmatprep.subr.mxu0 %v964
      %2077 = vmatpush1.msra.mxu0 %v963
      %2078 = vmatprep.subr.mxu0 %v972
      %2079 = vmatpush1.msra.mxu0 %v971
      %2080 = vmatprep.subr.mxu0 %v980
      %2081 = vmatpush1.msra.mxu0 %v979
      %2082 = vmatprep.subr.mxu0 %v988
      %2083 = vmatpush1.msra.mxu0 %v987
      %2084 = vmatprep.subr.mxu0 %v996
      %2085 = vmatpush1.msra.mxu0 %v995
      %2086 = vmatprep.subr.mxu0 %v1004
      %2087 = vmatpush1.msra.mxu0 %v1003
      %2088 = vmatprep.subr.mxu0 %v1012
      %2089 = vmatpush1.msra.mxu0 %v1011
      %2090 = vmatprep.subr.mxu0 %v1020
      %2091 = vmatpush1.msra.mxu0 %v1019
      %2092 = vmatprep.subr.mxu0 %v1028
      %2093 = vmatpush1.msra.mxu0 %v1027
      %2094 = vmatprep.subr.mxu0 %v1036
      %2095 = vmatpush1.msra.mxu0 %v1035
      %2096 = vmatprep.subr.mxu0 %v1044
      %2097 = vmatpush1.msra.mxu0 %v1043
      %2098 = vmatprep.subr.mxu0 %v1052
      %2099 = vmatpush1.msra.mxu0 %v1051
      %2100 = vmatprep.subr.mxu0 %v1060
      %2101 = vmatpush1.msra.mxu0 %v1059
      %2102 = vmatprep.subr.mxu0 %v1068
      %2103 = vmatpush1.msra.mxu0 %v1067
      %2104 = vmatprep.subr.mxu0 %v1076
      %2105 = vmatpush1.msra.mxu0 %v1075
      %2106 = vmatprep.subr.mxu0 %v1084
      %2107 = vmatpush1.msra.mxu0 %v1083
      %2108 = vmatprep.subr.mxu0 %v1092
      %2109 = vmatpush1.msra.mxu0 %v1091
      %2110 = vmatprep.subr.mxu0 %v1100
      %2111 = vmatpush1.msra.mxu0 %v1099
      %2112 = vmatprep.subr.mxu0 %v1108
      %2113 = vmatpush1.msra.mxu0 %v1107
      %2114 = vmatprep.subr.mxu0 %v1116
      %2115 = vmatpush1.msra.mxu0 %v1115
      %2116 = vmatprep.subr.mxu0 %v1124
      %2117 = vmatpush1.msra.mxu0 %v1123
      %2118 = vmatprep.subr.mxu0 %v1132
      %2119 = vmatpush1.msra.mxu0 %v1131
      %2120 = vmatprep.subr.mxu0 %v1140
      %2121 = vmatpush1.msra.mxu0 %v1139
      %2122 = vmatprep.subr.mxu0 %v1148
      %2123 = vmatpush1.msra.mxu0 %v1147
      %2124 = vmatprep.subr.mxu0 %v1156
      %2125 = vmatpush1.msra.mxu0 %v1155
      %2126 = vmatprep.subr.mxu0 %v1164
      %2127 = vmatpush1.msra.mxu0 %v1163
      %2128 = vmatprep.subr.mxu0 %v1172
      %2129 = vmatpush1.msra.mxu0 %v1171
      %2130 = vmatprep.subr.mxu0 %v1180
      %2131 = vmatpush1.msra.mxu0 %v1179
      %2132 = vmatprep.subr.mxu0 %v1188
      %2133 = vmatpush1.msra.mxu0 %v1187
      %2134 = vmatprep.subr.mxu0 %v1196
      %2135 = vmatpush1.msra.mxu0 %v1195
      %2136 = vmatprep.subr.mxu0 %v1204
      %2137 = vmatpush1.msra.mxu0 %v1203
      %2138 = vmatprep.mubr.f32.mxu0 %v1284
      %2139 = vmatmul.mubr.f32.gmra.mrb[0].mxu0 %v1282
      %v2140 = vpop.f32.mrb[0].mxu0
      %v2141 = vadd.f32 %v2070, %v2140
      %v2142 = vpop.f32.mrb[0].mxu0
      %v2143 = vadd.f32 %v2072, %v2142
      %2144 = vdwg.mxu0
      %2145 = vmatprep.subr.mxu0 %v190
      %2146 = vmatpush1.msra.mxu0 %v189
      %2147 = vmatprep.subr.mxu0 %v198
      %2148 = vmatpush1.msra.mxu0 %v197
      %2149 = vmatprep.subr.mxu0 %v206
      %2150 = vmatpush1.msra.mxu0 %v205
      %2151 = vmatprep.subr.mxu0 %v214
      %2152 = vmatpush1.msra.mxu0 %v213
      %2153 = vmatprep.subr.mxu0 %v222
      %2154 = vmatpush1.msra.mxu0 %v221
      %2155 = vmatprep.subr.mxu0 %v230
      %2156 = vmatpush1.msra.mxu0 %v229
      %2157 = vmatprep.subr.mxu0 %v238
      %2158 = vmatpush1.msra.mxu0 %v237
      %2159 = vmatprep.subr.mxu0 %v246
      %2160 = vmatpush1.msra.mxu0 %v245
      %2161 = vmatprep.subr.mxu0 %v254
      %2162 = vmatpush1.msra.mxu0 %v253
      %2163 = vmatprep.subr.mxu0 %v262
      %2164 = vmatpush1.msra.mxu0 %v261
      %2165 = vmatprep.subr.mxu0 %v270
      %2166 = vmatpush1.msra.mxu0 %v269
      %2167 = vmatprep.subr.mxu0 %v278
      %2168 = vmatpush1.msra.mxu0 %v277
      %2169 = vmatprep.subr.mxu0 %v286
      %2170 = vmatpush1.msra.mxu0 %v285
      %2171 = vmatprep.subr.mxu0 %v294
      %2172 = vmatpush1.msra.mxu0 %v293
      %2173 = vmatprep.subr.mxu0 %v302
      %2174 = vmatpush1.msra.mxu0 %v301
      %2175 = vmatprep.subr.mxu0 %v310
      %2176 = vmatpush1.msra.mxu0 %v309
      %2177 = vmatprep.subr.mxu0 %v318
      %2178 = vmatpush1.msra.mxu0 %v317
      %2179 = vmatprep.subr.mxu0 %v326
      %2180 = vmatpush1.msra.mxu0 %v325
      %2181 = vmatprep.subr.mxu0 %v334
      %2182 = vmatpush1.msra.mxu0 %v333
      %2183 = vmatprep.subr.mxu0 %v342
      %2184 = vmatpush1.msra.mxu0 %v341
      %2185 = vmatprep.subr.mxu0 %v350
      %2186 = vmatpush1.msra.mxu0 %v349
      %2187 = vmatprep.subr.mxu0 %v358
      %2188 = vmatpush1.msra.mxu0 %v357
      %2189 = vmatprep.subr.mxu0 %v366
      %2190 = vmatpush1.msra.mxu0 %v365
      %2191 = vmatprep.subr.mxu0 %v374
      %2192 = vmatpush1.msra.mxu0 %v373
      %2193 = vmatprep.subr.mxu0 %v382
      %2194 = vmatpush1.msra.mxu0 %v381
      %2195 = vmatprep.subr.mxu0 %v390
      %2196 = vmatpush1.msra.mxu0 %v389
      %2197 = vmatprep.subr.mxu0 %v398
      %2198 = vmatpush1.msra.mxu0 %v397
      %2199 = vmatprep.subr.mxu0 %v406
      %2200 = vmatpush1.msra.mxu0 %v405
      %2201 = vmatprep.subr.mxu0 %v414
      %2202 = vmatpush1.msra.mxu0 %v413
      %2203 = vmatprep.subr.mxu0 %v422
      %2204 = vmatpush1.msra.mxu0 %v421
      %2205 = vmatprep.subr.mxu0 %v430
      %2206 = vmatpush1.msra.mxu0 %v429
      %2207 = vmatprep.subr.mxu0 %v438
      %2208 = vmatpush1.msra.mxu0 %v437
      %2209 = vmatprep.mubr.f32.mxu0 %v1266
      %2210 = vmatmul.mubr.f32.gmra.mrb[0].mxu0 %v1258
      %v2211 = vpop.f32.mrb[0].mxu0
      %v2212 = vadd.f32 %v1236, %v2211
      %v2213 = vpop.f32.mrb[0].mxu0
      %v2214 = vadd.f32 %v1240, %v2213
      %2215 = vdwg.mxu0
      %2216 = vmatprep.subr.mxu0 %v446
      %2217 = vmatpush1.msra.mxu0 %v445
      %2218 = vmatprep.subr.mxu0 %v454
      %2219 = vmatpush1.msra.mxu0 %v453
      %2220 = vmatprep.subr.mxu0 %v462
      %2221 = vmatpush1.msra.mxu0 %v461
      %2222 = vmatprep.subr.mxu0 %v470
      %2223 = vmatpush1.msra.mxu0 %v469
      %2224 = vmatprep.subr.mxu0 %v478
      %2225 = vmatpush1.msra.mxu0 %v477
      %2226 = vmatprep.subr.mxu0 %v486
      %2227 = vmatpush1.msra.mxu0 %v485
      %2228 = vmatprep.subr.mxu0 %v494
      %2229 = vmatpush1.msra.mxu0 %v493
      %2230 = vmatprep.subr.mxu0 %v502
      %2231 = vmatpush1.msra.mxu0 %v501
      %2232 = vmatprep.subr.mxu0 %v510
      %2233 = vmatpush1.msra.mxu0 %v509
      %2234 = vmatprep.subr.mxu0 %v518
      %2235 = vmatpush1.msra.mxu0 %v517
      %2236 = vmatprep.subr.mxu0 %v526
      %2237 = vmatpush1.msra.mxu0 %v525
      %2238 = vmatprep.subr.mxu0 %v534
      %2239 = vmatpush1.msra.mxu0 %v533
      %2240 = vmatprep.subr.mxu0 %v542
      %2241 = vmatpush1.msra.mxu0 %v541
      %2242 = vmatprep.subr.mxu0 %v550
      %2243 = vmatpush1.msra.mxu0 %v549
      %2244 = vmatprep.subr.mxu0 %v558
      %2245 = vmatpush1.msra.mxu0 %v557
      %2246 = vmatprep.subr.mxu0 %v566
      %2247 = vmatpush1.msra.mxu0 %v565
      %2248 = vmatprep.subr.mxu0 %v574
      %2249 = vmatpush1.msra.mxu0 %v573
      %2250 = vmatprep.subr.mxu0 %v582
      %2251 = vmatpush1.msra.mxu0 %v581
      %2252 = vmatprep.subr.mxu0 %v590
      %2253 = vmatpush1.msra.mxu0 %v589
      %2254 = vmatprep.subr.mxu0 %v598
      %2255 = vmatpush1.msra.mxu0 %v597
      %2256 = vmatprep.subr.mxu0 %v606
      %2257 = vmatpush1.msra.mxu0 %v605
      %2258 = vmatprep.subr.mxu0 %v614
      %2259 = vmatpush1.msra.mxu0 %v613
      %2260 = vmatprep.subr.mxu0 %v622
      %2261 = vmatpush1.msra.mxu0 %v621
      %2262 = vmatprep.subr.mxu0 %v630
      %2263 = vmatpush1.msra.mxu0 %v629
      %2264 = vmatprep.subr.mxu0 %v638
      %2265 = vmatpush1.msra.mxu0 %v637
      %2266 = vmatprep.subr.mxu0 %v646
      %2267 = vmatpush1.msra.mxu0 %v645
      %2268 = vmatprep.subr.mxu0 %v654
      %2269 = vmatpush1.msra.mxu0 %v653
      %2270 = vmatprep.subr.mxu0 %v662
      %2271 = vmatpush1.msra.mxu0 %v661
      %2272 = vmatprep.subr.mxu0 %v670
      %2273 = vmatpush1.msra.mxu0 %v669
      %2274 = vmatprep.subr.mxu0 %v678
      %2275 = vmatpush1.msra.mxu0 %v677
      %2276 = vmatprep.subr.mxu0 %v686
      %2277 = vmatpush1.msra.mxu0 %v685
      %2278 = vmatprep.subr.mxu0 %v694
      %2279 = vmatpush1.msra.mxu0 %v693
      %2280 = vmatprep.mubr.f32.mxu0 %v1267
      %2281 = vmatmul.mubr.f32.gmra.mrb[0].mxu0 %v1265
      %v2282 = vpop.f32.mrb[0].mxu0
      %v2283 = vadd.f32 %v2212, %v2282
      %v2284 = vpop.f32.mrb[0].mxu0
      %v2285 = vadd.f32 %v2214, %v2284
      %2286 = vdwg.mxu0
      %2287 = vmatprep.subr.mxu0 %v702
      %2288 = vmatpush1.msra.mxu0 %v701
      %2289 = vmatprep.subr.mxu0 %v710
      %2290 = vmatpush1.msra.mxu0 %v709
      %2291 = vmatprep.subr.mxu0 %v718
      %2292 = vmatpush1.msra.mxu0 %v717
      %2293 = vmatprep.subr.mxu0 %v726
      %2294 = vmatpush1.msra.mxu0 %v725
      %2295 = vmatprep.subr.mxu0 %v734
      %2296 = vmatpush1.msra.mxu0 %v733
      %2297 = vmatprep.subr.mxu0 %v742
      %2298 = vmatpush1.msra.mxu0 %v741
      %2299 = vmatprep.subr.mxu0 %v750
      %2300 = vmatpush1.msra.mxu0 %v749
      %2301 = vmatprep.subr.mxu0 %v758
      %2302 = vmatpush1.msra.mxu0 %v757
      %2303 = vmatprep.subr.mxu0 %v766
      %2304 = vmatpush1.msra.mxu0 %v765
      %2305 = vmatprep.subr.mxu0 %v774
      %2306 = vmatpush1.msra.mxu0 %v773
      %2307 = vmatprep.subr.mxu0 %v782
      %2308 = vmatpush1.msra.mxu0 %v781
      %2309 = vmatprep.subr.mxu0 %v790
      %2310 = vmatpush1.msra.mxu0 %v789
      %2311 = vmatprep.subr.mxu0 %v798
      %2312 = vmatpush1.msra.mxu0 %v797
      %2313 = vmatprep.subr.mxu0 %v806
      %2314 = vmatpush1.msra.mxu0 %v805
      %2315 = vmatprep.subr.mxu0 %v814
      %2316 = vmatpush1.msra.mxu0 %v813
      %2317 = vmatprep.subr.mxu0 %v822
      %2318 = vmatpush1.msra.mxu0 %v821
      %2319 = vmatprep.subr.mxu0 %v830
      %2320 = vmatpush1.msra.mxu0 %v829
      %2321 = vmatprep.subr.mxu0 %v838
      %2322 = vmatpush1.msra.mxu0 %v837
      %2323 = vmatprep.subr.mxu0 %v846
      %2324 = vmatpush1.msra.mxu0 %v845
      %2325 = vmatprep.subr.mxu0 %v854
      %2326 = vmatpush1.msra.mxu0 %v853
      %2327 = vmatprep.subr.mxu0 %v862
      %2328 = vmatpush1.msra.mxu0 %v861
      %2329 = vmatprep.subr.mxu0 %v870
      %2330 = vmatpush1.msra.mxu0 %v869
      %2331 = vmatprep.subr.mxu0 %v878
      %2332 = vmatpush1.msra.mxu0 %v877
      %2333 = vmatprep.subr.mxu0 %v886
      %2334 = vmatpush1.msra.mxu0 %v885
      %2335 = vmatprep.subr.mxu0 %v894
      %2336 = vmatpush1.msra.mxu0 %v893
      %2337 = vmatprep.subr.mxu0 %v902
      %2338 = vmatpush1.msra.mxu0 %v901
      %2339 = vmatprep.subr.mxu0 %v910
      %2340 = vmatpush1.msra.mxu0 %v909
      %2341 = vmatprep.subr.mxu0 %v918
      %2342 = vmatpush1.msra.mxu0 %v917
      %2343 = vmatprep.subr.mxu0 %v926
      %2344 = vmatpush1.msra.mxu0 %v925
      %2345 = vmatprep.subr.mxu0 %v934
      %2346 = vmatpush1.msra.mxu0 %v933
      %2347 = vmatprep.subr.mxu0 %v942
      %2348 = vmatpush1.msra.mxu0 %v941
      %2349 = vmatprep.subr.mxu0 %v950
      %2350 = vmatpush1.msra.mxu0 %v949
      %2351 = vmatprep.mubr.f32.mxu0 %v1283
      %2352 = vmatmul.mubr.f32.gmra.mrb[0].mxu0 %v1275
      %v2353 = vpop.f32.mrb[0].mxu0
      %v2354 = vadd.f32 %v2283, %v2353
      %v2355 = vpop.f32.mrb[0].mxu0
      %v2356 = vadd.f32 %v2285, %v2355
      %2357 = vdwg.mxu0
      %2358 = vmatprep.subr.mxu0 %v958
      %2359 = vmatpush1.msra.mxu0 %v957
      %2360 = vmatprep.subr.mxu0 %v966
      %2361 = vmatpush1.msra.mxu0 %v965
      %2362 = vmatprep.subr.mxu0 %v974
      %2363 = vmatpush1.msra.mxu0 %v973
      %2364 = vmatprep.subr.mxu0 %v982
      %2365 = vmatpush1.msra.mxu0 %v981
      %2366 = vmatprep.subr.mxu0 %v990
      %2367 = vmatpush1.msra.mxu0 %v989
      %2368 = vmatprep.subr.mxu0 %v998
      %2369 = vmatpush1.msra.mxu0 %v997
      %2370 = vmatprep.subr.mxu0 %v1006
      %2371 = vmatpush1.msra.mxu0 %v1005
      %2372 = vmatprep.subr.mxu0 %v1014
      %2373 = vmatpush1.msra.mxu0 %v1013
      %2374 = vmatprep.subr.mxu0 %v1022
      %2375 = vmatpush1.msra.mxu0 %v1021
      %2376 = vmatprep.subr.mxu0 %v1030
      %2377 = vmatpush1.msra.mxu0 %v1029
      %2378 = vmatprep.subr.mxu0 %v1038
      %2379 = vmatpush1.msra.mxu0 %v1037
      %2380 = vmatprep.subr.mxu0 %v1046
      %2381 = vmatpush1.msra.mxu0 %v1045
      %2382 = vmatprep.subr.mxu0 %v1054
      %2383 = vmatpush1.msra.mxu0 %v1053
      %2384 = vmatprep.subr.mxu0 %v1062
      %2385 = vmatpush1.msra.mxu0 %v1061
      %2386 = vmatprep.subr.mxu0 %v1070
      %2387 = vmatpush1.msra.mxu0 %v1069
      %2388 = vmatprep.subr.mxu0 %v1078
      %2389 = vmatpush1.msra.mxu0 %v1077
      %2390 = vmatprep.subr.mxu0 %v1086
      %2391 = vmatpush1.msra.mxu0 %v1085
      %2392 = vmatprep.subr.mxu0 %v1094
      %2393 = vmatpush1.msra.mxu0 %v1093
      %2394 = vmatprep.subr.mxu0 %v1102
      %2395 = vmatpush1.msra.mxu0 %v1101
      %2396 = vmatprep.subr.mxu0 %v1110
      %2397 = vmatpush1.msra.mxu0 %v1109
      %2398 = vmatprep.subr.mxu0 %v1118
      %2399 = vmatpush1.msra.mxu0 %v1117
      %2400 = vmatprep.subr.mxu0 %v1126
      %2401 = vmatpush1.msra.mxu0 %v1125
      %2402 = vmatprep.subr.mxu0 %v1134
      %2403 = vmatpush1.msra.mxu0 %v1133
      %2404 = vmatprep.subr.mxu0 %v1142
      %2405 = vmatpush1.msra.mxu0 %v1141
      %2406 = vmatprep.subr.mxu0 %v1150
      %2407 = vmatpush1.msra.mxu0 %v1149
      %2408 = vmatprep.subr.mxu0 %v1158
      %2409 = vmatpush1.msra.mxu0 %v1157
      %2410 = vmatprep.subr.mxu0 %v1166
      %2411 = vmatpush1.msra.mxu0 %v1165
      %2412 = vmatprep.subr.mxu0 %v1174
      %2413 = vmatpush1.msra.mxu0 %v1173
      %2414 = vmatprep.subr.mxu0 %v1182
      %2415 = vmatpush1.msra.mxu0 %v1181
      %2416 = vmatprep.subr.mxu0 %v1190
      %2417 = vmatpush1.msra.mxu0 %v1189
      %2418 = vmatprep.subr.mxu0 %v1198
      %2419 = vmatpush1.msra.mxu0 %v1197
      %2420 = vmatprep.subr.mxu0 %v1206
      %2421 = vmatpush1.msra.mxu0 %v1205
      %2422 = vmatprep.mubr.f32.mxu0 %v1284
      %2423 = vmatmul.mubr.f32.gmra.mrb[0].mxu0 %v1282
      %v2424 = vpop.f32.mrb[0].mxu0
      %v2425 = vadd.f32 %v2354, %v2424
      %v2426 = vpop.f32.mrb[0].mxu0
      %v2427 = vadd.f32 %v2356, %v2426
      %2428 = vdwg.mxu0
      %v2429 = vmax.f32 %v1573, 0.0
      %v2430 = vmax.f32 %v1575, 0.0
      %v2431 = vmax.f32 %v1857, 0.0
      %v2432 = vmax.f32 %v1859, 0.0
      %v2433 = vmax.f32 %v2141, 0.0
      %v2434 = vmax.f32 %v2143, 0.0
      %v2435 = vmax.f32 %v2425, 0.0
      %v2436 = vmax.f32 %v2427, 0.0
      %v2445 = vcombine.low %v2429, %v2430
      %v2446 = vcombine.low %v2431, %v2432
      %v2448 = vunpack.c.l.s4 1983009808
      %v2449 = vunpack.c.0.s8 %v2448
      %v2450 = vlaneseq
      %v2451 = vshrl.u32 %v2450, 7
      %v2452 = vsub.s32 %v2449, %v2451
      %v2453 = vrot.slane %v2445, %v2452
      %v2455 = vunpack.c.l.s4 1983009808
      %v2456 = vunpack.c.0.s8 %v2455
      %v2457 = vlaneseq
      %v2458 = vshrl.u32 %v2457, 7
      %v2459 = vsub.s32 %v2456, %v2458
      %v2460 = vrot.slane %v2446, %v2459
      %v2461 = vcombine.low %v2453, %v2460
      %v2462 = vcombine.low %v2433, %v2434
      %v2463 = vcombine.low %v2435, %v2436
      %v2465 = vunpack.c.l.s4 1983009808
      %v2466 = vunpack.c.0.s8 %v2465
      %v2467 = vlaneseq
      %v2468 = vshrl.u32 %v2467, 7
      %v2469 = vsub.s32 %v2466, %v2468
      %v2470 = vrot.slane %v2462, %v2469
      %v2472 = vunpack.c.l.s4 1983009808
      %v2473 = vunpack.c.0.s8 %v2472
      %v2474 = vlaneseq
      %v2475 = vshrl.u32 %v2474, 7
      %v2476 = vsub.s32 %v2473, %v2475
      %v2477 = vrot.slane %v2463, %v2476
      %v2478 = vcombine.low %v2470, %v2477
      %2481 = vst [vmem:[#allocation2] sm:$0xff] %v2461
      %2482 = vst [vmem:[#allocation2 + $0x8] sm:$0xff] %v2478
      %2483 = vst [vmem:[%s3] sm:$0xff] %v2461
      %2484 = vst [vmem:[%s3 + $0x8] sm:$0xff] %v2478
      // Predicated region
      $region37: #{baseline_tab_forward.10} parent=31 // pred_check
        %p2485 = pneg %p100
      $region38: #{baseline_tab_forward.10} parent=31 // pred_check_branch
        %2487 = sbr.rel (%p2485) target = $region40
      $region39: #{baseline_tab_forward.10} parent=31 // pred_region
        _
      $region40: #{baseline_tab_forward.10} parent=31 // pred_fallthru
        _
      // Predicated region
      $region41: #{baseline_tab_forward.10} parent=31 // pred_check
        %p2488 = pneg %p100
      $region42: #{baseline_tab_forward.10} parent=31 // pred_check_branch
        %2490 = sbr.rel (%p2488) target = $region44
      $region43: #{baseline_tab_forward.10} parent=31 // pred_region
        _
      $region44: #{baseline_tab_forward.10} parent=31 // pred_fallthru
        _
    $region32: #{baseline_tab_forward.10} parent=5 // pred_fallthru
      _
    %p2491 = scmp.le.s32.totalorder 2, %s9
    // Predicated region
    $region45: #{baseline_tab_forward.10} parent=5 // pred_check
      %p2492 = pneg %p2491
    $region46: #{baseline_tab_forward.10} parent=5 // pred_check_branch
      %2494 = sbr.rel (%p2492) target = $region48
    $region47: #{baseline_tab_forward.10} parent=5 // pred_region
      %s2495 = ssub.s32 %s9, 2
    $region48: #{baseline_tab_forward.10} parent=5 // pred_fallthru
      _
  $region6: #{baseline_tab_forward.10} parent=0 // loop_footer
    %s13 = sadd.s32 1, %s9
  $region7: #{baseline_tab_forward.10} parent=0 // loop_footer_branch
    %8 = sbr.rel target = $region3
  $region8: #{baseline_tab_forward.10} parent=0 // loop_exit
    _

// kernel: baseline_tab_forward.11
$region0: #{baseline_tab_forward.11}
  #allocation0 [shape = 'u32[]', space=smem, size = 0x4, offset = 0x4, fixed_abs, tag = 'smem constant byte address 0x4 - core index']
  #allocation1 [shape = 'u32[144,128]{1,0:T(1,128)}', space=vmem, size = 0x12000, scoped, tag = 'internal scratch']
  %s0 = inlined_call_operand.vmem [shape: f32[2,8,128], index: 0, kind: input, shape index: {}]
  %s1 = inlined_call_operand.vmem [shape: f32[128,128], index: 1, kind: input, shape index: {}]
  %s2 = inlined_call_operand.vmem [shape: f32[1,128], index: 2, kind: input, shape index: {}]
  %s3 = inlined_call_operand.vmem [shape: f32[2,1024], index: 3, kind: input, shape index: {}]
  %s4 = inlined_call_operand.vmem [shape: f32[128,128], index: 4, kind: input, shape index: {}]
  %s5 = inlined_call_operand.vmem [shape: f32[1024,128], index: 5, kind: input, shape index: {}]
  %s6 = inlined_call_operand.vmem [shape: f32[1,128], index: 6, kind: input, shape index: {}]
  %s7 = inlined_call_operand.hbm [shape: f32[2,128], index: 7, kind: output, shape index: {}]
  %s8 = sld [smem:[#allocation0]]
  $region38: #{baseline_tab_forward.11} parent=0
    _
  %s10 = ssub.s32 1, %s8
  %s11 = scalar_select 0, %s10, %s8
  $region1: #{baseline_tab_forward.11} parent=0
    #allocation2 [shape = 'u8[1024]{0}', space=vmem, size = 0x400, scoped, tag = 'output window, operand 0, single buffered']
    #allocation3 [shape = 's32[1]{0}', space=sflag, size = 0x4, scoped, tag = 'scoped memory for baseline_tab_forward.11']
    %12 = vsyncpa [#allocation3], 0
    // Predicated region
    $region2: #{baseline_tab_forward.11} parent=1 // pred_check
      _
    $region3: #{baseline_tab_forward.11} parent=1 // pred_check_branch
      %14 = sbr.rel (0) target = $region5
    $region4: #{baseline_tab_forward.11} parent=1 // pred_region
      _
    $region5: #{baseline_tab_forward.11} parent=1 // pred_fallthru
      _
    // Predicated region
    $region6: #{baseline_tab_forward.11} parent=1 // pred_check
      _
    $region7: #{baseline_tab_forward.11} parent=1 // pred_check_branch
      %16 = sbr.rel (0) target = $region9
    $region8: #{baseline_tab_forward.11} parent=1 // pred_region
      _
    $region9: #{baseline_tab_forward.11} parent=1 // pred_fallthru
      _
    // Predicated region
    $region10: #{baseline_tab_forward.11} parent=1 // pred_check
      _
    $region11: #{baseline_tab_forward.11} parent=1 // pred_check_branch
      %18 = sbr.rel (0) target = $region13
    $region12: #{baseline_tab_forward.11} parent=1 // pred_region
      _
    $region13: #{baseline_tab_forward.11} parent=1 // pred_fallthru
      _
    // Predicated region
    $region14: #{baseline_tab_forward.11} parent=1 // pred_check
      _
    $region15: #{baseline_tab_forward.11} parent=1 // pred_check_branch
      %20 = sbr.rel (0) target = $region17
    $region16: #{baseline_tab_forward.11} parent=1 // pred_region
      _
    $region17: #{baseline_tab_forward.11} parent=1 // pred_fallthru
      _
    // Predicated region
    $region18: #{baseline_tab_forward.11} parent=1 // pred_check
      _
    $region19: #{baseline_tab_forward.11} parent=1 // pred_check_branch
      %22 = sbr.rel (0) target = $region21
    $region20: #{baseline_tab_forward.11} parent=1 // pred_region
      _
    $region21: #{baseline_tab_forward.11} parent=1 // pred_fallthru
      _
    // Predicated region
    $region22: #{baseline_tab_forward.11} parent=1 // pred_check
      _
    $region23: #{baseline_tab_forward.11} parent=1 // pred_check_branch
      %24 = sbr.rel (0) target = $region25
    $region24: #{baseline_tab_forward.11} parent=1 // pred_region
      _
    $region25: #{baseline_tab_forward.11} parent=1 // pred_fallthru
      _
    // Predicated region
    $region26: #{baseline_tab_forward.11} parent=1 // pred_check
      _
    $region27: #{baseline_tab_forward.11} parent=1 // pred_check_branch
      %26 = sbr.rel (0) target = $region29
    $region28: #{baseline_tab_forward.11} parent=1 // pred_region
      _
    $region29: #{baseline_tab_forward.11} parent=1 // pred_fallthru
      _
    %v27 = vld [vmem:[%s0] sm:$0xff]
    %v28 = vld [vmem:[%s0 + $0x8] sm:$0xff]
    %v29 = vrot.slane %v27, 4
    %v30 = vadd.f32 %v27, %v29
    %v31 = vrot.slane %v30, 2
    %v32 = vadd.f32 %v30, %v31
    %v33 = vrot.slane %v32, 1
    %v34 = vadd.f32 %v32, %v33
    %v35 = vrot.slane %v28, 4
    %v36 = vadd.f32 %v28, %v35
    %v37 = vrot.slane %v36, 2
    %v38 = vadd.f32 %v36, %v37
    %v39 = vrot.slane %v38, 1
    %v40 = vadd.f32 %v38, %v39
    %v41 = vmul.f32 %v34, 0.125
    %v42 = vmul.f32 %v40, 0.125
    %v43 = vld [vmem:[%s1] sm:$0xff]
    %v44 = vld [vmem:[%s1 + $0x8] sm:$0xff]
    %v45 = vld [vmem:[%s1 + $0x10] sm:$0xff]
    %v46 = vld [vmem:[%s1 + $0x18] sm:$0xff]
    %v47 = vld [vmem:[%s1 + $0x20] sm:$0xff]
    %v48 = vld [vmem:[%s1 + $0x28] sm:$0xff]
    %v49 = vld [vmem:[%s1 + $0x30] sm:$0xff]
    %v50 = vld [vmem:[%s1 + $0x38] sm:$0xff]
    %v51 = vld [vmem:[%s1 + $0x40] sm:$0xff]
    %v52 = vld [vmem:[%s1 + $0x48] sm:$0xff]
    %v53 = vld [vmem:[%s1 + $0x50] sm:$0xff]
    %v54 = vld [vmem:[%s1 + $0x58] sm:$0xff]
    %v55 = vld [vmem:[%s1 + $0x60] sm:$0xff]
    %v56 = vld [vmem:[%s1 + $0x68] sm:$0xff]
    %v57 = vld [vmem:[%s1 + $0x70] sm:$0xff]
    %v58 = vld [vmem:[%s1 + $0x78] sm:$0xff]
    %v59 = vld [vmem:[%s2] sm:$0x1]
    %v61 = vlaneseq
    %v62 = vshrl.u32 %v61, 7
    %v63 = vsub.s32 0, %v62
    %v64 = vrot.slane %v59, %v63
    %vm68 = vcmask 1041409
    %v69 = vsel %vm68, %v42, %v41
    %71 = vmatprep.subr.mxu0 0.0
    %72 = vmatpush1.msra.mxu0 %v43
    %73 = vmatprep.subr.mxu0 0.0
    %74 = vmatpush1.msra.mxu0 %v44
    %75 = vmatprep.subr.mxu0 0.0
    %76 = vmatpush1.msra.mxu0 %v45
    %77 = vmatprep.subr.mxu0 0.0
    %78 = vmatpush1.msra.mxu0 %v46
    %79 = vmatprep.subr.mxu0 0.0
    %80 = vmatpush1.msra.mxu0 %v47
    %81 = vmatprep.subr.mxu0 0.0
    %82 = vmatpush1.msra.mxu0 %v48
    %83 = vmatprep.subr.mxu0 0.0
    %84 = vmatpush1.msra.mxu0 %v49
    %85 = vmatprep.subr.mxu0 0.0
    %86 = vmatpush1.msra.mxu0 %v50
    %87 = vmatprep.subr.mxu0 0.0
    %88 = vmatpush1.msra.mxu0 %v51
    %89 = vmatprep.subr.mxu0 0.0
    %90 = vmatpush1.msra.mxu0 %v52
    %91 = vmatprep.subr.mxu0 0.0
    %92 = vmatpush1.msra.mxu0 %v53
    %93 = vmatprep.subr.mxu0 0.0
    %94 = vmatpush1.msra.mxu0 %v54
    %95 = vmatprep.subr.mxu0 0.0
    %96 = vmatpush1.msra.mxu0 %v55
    %97 = vmatprep.subr.mxu0 0.0
    %98 = vmatpush1.msra.mxu0 %v56
    %99 = vmatprep.subr.mxu0 0.0
    %100 = vmatpush1.msra.mxu0 %v57
    %101 = vmatprep.subr.mxu0 0.0
    %102 = vmatpush1.msra.mxu0 %v58
    %103 = vmatprep.subr.mxu0 0.0
    %104 = vmatpush1.msra.mxu0 0.0
    %105 = vmatprep.subr.mxu0 0.0
    %106 = vmatpush1.msra.mxu0 0.0
    %107 = vmatprep.subr.mxu0 0.0
    %108 = vmatpush1.msra.mxu0 0.0
    %109 = vmatprep.subr.mxu0 0.0
    %110 = vmatpush1.msra.mxu0 0.0
    %111 = vmatprep.subr.mxu0 0.0
    %112 = vmatpush1.msra.mxu0 0.0
    %113 = vmatprep.subr.mxu0 0.0
    %114 = vmatpush1.msra.mxu0 0.0
    %115 = vmatprep.subr.mxu0 0.0
    %116 = vmatpush1.msra.mxu0 0.0
    %117 = vmatprep.subr.mxu0 0.0
    %118 = vmatpush1.msra.mxu0 0.0
    %119 = vmatprep.subr.mxu0 0.0
    %120 = vmatpush1.msra.mxu0 0.0
    %121 = vmatprep.subr.mxu0 0.0
    %122 = vmatpush1.msra.mxu0 0.0
    %123 = vmatprep.subr.mxu0 0.0
    %124 = vmatpush1.msra.mxu0 0.0
    %125 = vmatprep.subr.mxu0 0.0
    %126 = vmatpush1.msra.mxu0 0.0
    %127 = vmatprep.subr.mxu0 0.0
    %128 = vmatpush1.msra.mxu0 0.0
    %129 = vmatprep.subr.mxu0 0.0
    %130 = vmatpush1.msra.mxu0 0.0
    %131 = vmatprep.subr.mxu0 0.0
    %132 = vmatpush1.msra.mxu0 0.0
    %133 = vmatprep.subr.mxu0 0.0
    %134 = vmatpush1.msra.mxu0 0.0
    %135 = vmatprep.mubr.f32.mxu0 0.0
    %136 = vmatmul.mubr.f32.gmra.mrb[0].mxu0 %v69
    %v137 = vpop.f32.mrb[0].mxu0
    %v138 = vadd.f32 %v64, %v137
    %v139 = vpop.f32.mrb[0].mxu0
    %140 = vdwg.mxu0
    %v141 = vld [vmem:[%s4] sm:$0xff]
    %v142 = vld [vmem:[%s4 + $0x8] sm:$0xff]
    %v143 = vld [vmem:[%s4 + $0x10] sm:$0xff]
    %v144 = vld [vmem:[%s4 + $0x18] sm:$0xff]
    %v145 = vld [vmem:[%s4 + $0x20] sm:$0xff]
    %v146 = vld [vmem:[%s4 + $0x28] sm:$0xff]
    %v147 = vld [vmem:[%s4 + $0x30] sm:$0xff]
    %v148 = vld [vmem:[%s4 + $0x38] sm:$0xff]
    %v149 = vld [vmem:[%s4 + $0x40] sm:$0xff]
    %v150 = vld [vmem:[%s4 + $0x48] sm:$0xff]
    %v151 = vld [vmem:[%s4 + $0x50] sm:$0xff]
    %v152 = vld [vmem:[%s4 + $0x58] sm:$0xff]
    %v153 = vld [vmem:[%s4 + $0x60] sm:$0xff]
    %v154 = vld [vmem:[%s4 + $0x68] sm:$0xff]
    %v155 = vld [vmem:[%s4 + $0x70] sm:$0xff]
    %v156 = vld [vmem:[%s4 + $0x78] sm:$0xff]
    %v157 = vld [vmem:[%s3] sm:$0xff]
    %v158 = vld [vmem:[%s3 + $0x8] sm:$0xff]
    %v159 = vld [vmem:[%s5] sm:$0xff]
    %v160 = vld [vmem:[%s5 + $0x8] sm:$0xff]
    %v161 = vld [vmem:[%s5 + $0x10] sm:$0xff]
    %v162 = vld [vmem:[%s5 + $0x18] sm:$0xff]
    %v163 = vld [vmem:[%s5 + $0x20] sm:$0xff]
    %v164 = vld [vmem:[%s5 + $0x28] sm:$0xff]
    %v165 = vld [vmem:[%s5 + $0x30] sm:$0xff]
    %v166 = vld [vmem:[%s5 + $0x38] sm:$0xff]
    %v167 = vld [vmem:[%s5 + $0x40] sm:$0xff]
    %v168 = vld [vmem:[%s5 + $0x48] sm:$0xff]
    %v169 = vld [vmem:[%s5 + $0x50] sm:$0xff]
    %v170 = vld [vmem:[%s5 + $0x58] sm:$0xff]
    %v171 = vld [vmem:[%s5 + $0x60] sm:$0xff]
    %v172 = vld [vmem:[%s5 + $0x68] sm:$0xff]
    %v173 = vld [vmem:[%s5 + $0x70] sm:$0xff]
    %v174 = vld [vmem:[%s5 + $0x78] sm:$0xff]
    %v175 = vld [vmem:[%s5 + $0x80] sm:$0xff]
    %v176 = vld [vmem:[%s5 + $0x88] sm:$0xff]
    %v177 = vld [vmem:[%s5 + $0x90] sm:$0xff]
    %v178 = vld [vmem:[%s5 + $0x98] sm:$0xff]
    %v179 = vld [vmem:[%s5 + $0xa0] sm:$0xff]
    %v180 = vld [vmem:[%s5 + $0xa8] sm:$0xff]
    %v181 = vld [vmem:[%s5 + $0xb0] sm:$0xff]
    %v182 = vld [vmem:[%s5 + $0xb8] sm:$0xff]
    %v183 = vld [vmem:[%s5 + $0xc0] sm:$0xff]
    %v184 = vld [vmem:[%s5 + $0xc8] sm:$0xff]
    %v185 = vld [vmem:[%s5 + $0xd0] sm:$0xff]
    %v186 = vld [vmem:[%s5 + $0xd8] sm:$0xff]
    %v187 = vld [vmem:[%s5 + $0xe0] sm:$0xff]
    %v188 = vld [vmem:[%s5 + $0xe8] sm:$0xff]
    %v189 = vld [vmem:[%s5 + $0xf0] sm:$0xff]
    %v190 = vld [vmem:[%s5 + $0xf8] sm:$0xff]
    %v191 = vld [vmem:[%s5 + $0x100] sm:$0xff]
    %v192 = vld [vmem:[%s5 + $0x108] sm:$0xff]
    %v193 = vld [vmem:[%s5 + $0x110] sm:$0xff]
    %v194 = vld [vmem:[%s5 + $0x118] sm:$0xff]
    %v195 = vld [vmem:[%s5 + $0x120] sm:$0xff]
    %v196 = vld [vmem:[%s5 + $0x128] sm:$0xff]
    %v197 = vld [vmem:[%s5 + $0x130] sm:$0xff]
    %v198 = vld [vmem:[%s5 + $0x138] sm:$0xff]
    %v199 = vld [vmem:[%s5 + $0x140] sm:$0xff]
    %v200 = vld [vmem:[%s5 + $0x148] sm:$0xff]
    %v201 = vld [vmem:[%s5 + $0x150] sm:$0xff]
    %v202 = vld [vmem:[%s5 + $0x158] sm:$0xff]
    %v203 = vld [vmem:[%s5 + $0x160] sm:$0xff]
    %v204 = vld [vmem:[%s5 + $0x168] sm:$0xff]
    %v205 = vld [vmem:[%s5 + $0x170] sm:$0xff]
    %v206 = vld [vmem:[%s5 + $0x178] sm:$0xff]
    %v207 = vld [vmem:[%s5 + $0x180] sm:$0xff]
    %v208 = vld [vmem:[%s5 + $0x188] sm:$0xff]
    %v209 = vld [vmem:[%s5 + $0x190] sm:$0xff]
    %v210 = vld [vmem:[%s5 + $0x198] sm:$0xff]
    %v211 = vld [vmem:[%s5 + $0x1a0] sm:$0xff]
    %v212 = vld [vmem:[%s5 + $0x1a8] sm:$0xff]
    %v213 = vld [vmem:[%s5 + $0x1b0] sm:$0xff]
    %v214 = vld [vmem:[%s5 + $0x1b8] sm:$0xff]
    %v215 = vld [vmem:[%s5 + $0x1c0] sm:$0xff]
    %v216 = vld [vmem:[%s5 + $0x1c8] sm:$0xff]
    %v217 = vld [vmem:[%s5 + $0x1d0] sm:$0xff]
    %v218 = vld [vmem:[%s5 + $0x1d8] sm:$0xff]
    %v219 = vld [vmem:[%s5 + $0x1e0] sm:$0xff]
    %v220 = vld [vmem:[%s5 + $0x1e8] sm:$0xff]
    %v221 = vld [vmem:[%s5 + $0x1f0] sm:$0xff]
    %v222 = vld [vmem:[%s5 + $0x1f8] sm:$0xff]
    %v223 = vld [vmem:[%s5 + $0x200] sm:$0xff]
    %v224 = vld [vmem:[%s5 + $0x208] sm:$0xff]
    %v225 = vld [vmem:[%s5 + $0x210] sm:$0xff]
    %v226 = vld [vmem:[%s5 + $0x218] sm:$0xff]
    %v227 = vld [vmem:[%s5 + $0x220] sm:$0xff]
    %v228 = vld [vmem:[%s5 + $0x228] sm:$0xff]
    %v229 = vld [vmem:[%s5 + $0x230] sm:$0xff]
    %v230 = vld [vmem:[%s5 + $0x238] sm:$0xff]
    %v231 = vld [vmem:[%s5 + $0x240] sm:$0xff]
    %v232 = vld [vmem:[%s5 + $0x248] sm:$0xff]
    %v233 = vld [vmem:[%s5 + $0x250] sm:$0xff]
    %v234 = vld [vmem:[%s5 + $0x258] sm:$0xff]
    %v235 = vld [vmem:[%s5 + $0x260] sm:$0xff]
    %v236 = vld [vmem:[%s5 + $0x268] sm:$0xff]
    %v237 = vld [vmem:[%s5 + $0x270] sm:$0xff]
    %v238 = vld [vmem:[%s5 + $0x278] sm:$0xff]
    %v239 = vld [vmem:[%s5 + $0x280] sm:$0xff]
    %v240 = vld [vmem:[%s5 + $0x288] sm:$0xff]
    %v241 = vld [vmem:[%s5 + $0x290] sm:$0xff]
    %v242 = vld [vmem:[%s5 + $0x298] sm:$0xff]
    %v243 = vld [vmem:[%s5 + $0x2a0] sm:$0xff]
    %v244 = vld [vmem:[%s5 + $0x2a8] sm:$0xff]
    %v245 = vld [vmem:[%s5 + $0x2b0] sm:$0xff]
    %v246 = vld [vmem:[%s5 + $0x2b8] sm:$0xff]
    %v247 = vld [vmem:[%s5 + $0x2c0] sm:$0xff]
    %v248 = vld [vmem:[%s5 + $0x2c8] sm:$0xff]
    %v249 = vld [vmem:[%s5 + $0x2d0] sm:$0xff]
    %v250 = vld [vmem:[%s5 + $0x2d8] sm:$0xff]
    %v251 = vld [vmem:[%s5 + $0x2e0] sm:$0xff]
    %v252 = vld [vmem:[%s5 + $0x2e8] sm:$0xff]
    %v253 = vld [vmem:[%s5 + $0x2f0] sm:$0xff]
    %v254 = vld [vmem:[%s5 + $0x2f8] sm:$0xff]
    %v255 = vld [vmem:[%s5 + $0x300] sm:$0xff]
    %v256 = vld [vmem:[%s5 + $0x308] sm:$0xff]
    %v257 = vld [vmem:[%s5 + $0x310] sm:$0xff]
    %v258 = vld [vmem:[%s5 + $0x318] sm:$0xff]
    %v259 = vld [vmem:[%s5 + $0x320] sm:$0xff]
    %v260 = vld [vmem:[%s5 + $0x328] sm:$0xff]
    %v261 = vld [vmem:[%s5 + $0x330] sm:$0xff]
    %v262 = vld [vmem:[%s5 + $0x338] sm:$0xff]
    %v263 = vld [vmem:[%s5 + $0x340] sm:$0xff]
    %v264 = vld [vmem:[%s5 + $0x348] sm:$0xff]
    %v265 = vld [vmem:[%s5 + $0x350] sm:$0xff]
    %v266 = vld [vmem:[%s5 + $0x358] sm:$0xff]
    %v267 = vld [vmem:[%s5 + $0x360] sm:$0xff]
    %v268 = vld [vmem:[%s5 + $0x368] sm:$0xff]
    %v269 = vld [vmem:[%s5 + $0x370] sm:$0xff]
    %v270 = vld [vmem:[%s5 + $0x378] sm:$0xff]
    %v271 = vld [vmem:[%s5 + $0x380] sm:$0xff]
    %v272 = vld [vmem:[%s5 + $0x388] sm:$0xff]
    %v273 = vld [vmem:[%s5 + $0x390] sm:$0xff]
    %v274 = vld [vmem:[%s5 + $0x398] sm:$0xff]
    %v275 = vld [vmem:[%s5 + $0x3a0] sm:$0xff]
    %v276 = vld [vmem:[%s5 + $0x3a8] sm:$0xff]
    %v277 = vld [vmem:[%s5 + $0x3b0] sm:$0xff]
    %v278 = vld [vmem:[%s5 + $0x3b8] sm:$0xff]
    %v279 = vld [vmem:[%s5 + $0x3c0] sm:$0xff]
    %v280 = vld [vmem:[%s5 + $0x3c8] sm:$0xff]
    %v281 = vld [vmem:[%s5 + $0x3d0] sm:$0xff]
    %v282 = vld [vmem:[%s5 + $0x3d8] sm:$0xff]
    %v283 = vld [vmem:[%s5 + $0x3e0] sm:$0xff]
    %v284 = vld [vmem:[%s5 + $0x3e8] sm:$0xff]
    %v285 = vld [vmem:[%s5 + $0x3f0] sm:$0xff]
    %v286 = vld [vmem:[%s5 + $0x3f8] sm:$0xff]
    %v289 = vcombine.high %v157, %v157
    %v291 = vunpack.c.l.s4 1983009808
    %v292 = vunpack.c.0.s8 %v291
    %v293 = vlaneseq
    %v294 = vshrl.u32 %v293, 7
    %v295 = vsub.s32 %v292, %v294
    %v296 = vrot.slane %v157, %v295
    %v298 = vunpack.c.l.s4 1983009808
    %v299 = vunpack.c.0.s8 %v298
    %v300 = vlaneseq
    %v301 = vshrl.u32 %v300, 7
    %v302 = vsub.s32 %v299, %v301
    %v303 = vrot.slane %v289, %v302
    %v304 = vcombine.high %v296, %v296
    %v305 = vcombine.high %v303, %v303
    %v306 = vcombine.high %v158, %v158
    %v308 = vunpack.c.l.s4 1983009808
    %v309 = vunpack.c.0.s8 %v308
    %v310 = vlaneseq
    %v311 = vshrl.u32 %v310, 7
    %v312 = vsub.s32 %v309, %v311
    %v313 = vrot.slane %v158, %v312
    %v315 = vunpack.c.l.s4 1983009808
    %v316 = vunpack.c.0.s8 %v315
    %v317 = vlaneseq
    %v318 = vshrl.u32 %v317, 7
    %v319 = vsub.s32 %v316, %v318
    %v320 = vrot.slane %v306, %v319
    %v321 = vcombine.high %v313, %v313
    %v322 = vcombine.high %v320, %v320
    %331 = vmatprep.subr.mxu0 0.0
    %332 = vmatpush1.msra.mxu0 %v159
    %333 = vmatprep.subr.mxu0 0.0
    %334 = vmatpush1.msra.mxu0 %v160
    %335 = vmatprep.subr.mxu0 0.0
    %336 = vmatpush1.msra.mxu0 %v161
    %337 = vmatprep.subr.mxu0 0.0
    %338 = vmatpush1.msra.mxu0 %v162
    %339 = vmatprep.subr.mxu0 0.0
    %340 = vmatpush1.msra.mxu0 %v163
    %341 = vmatprep.subr.mxu0 0.0
    %342 = vmatpush1.msra.mxu0 %v164
    %343 = vmatprep.subr.mxu0 0.0
    %344 = vmatpush1.msra.mxu0 %v165
    %345 = vmatprep.subr.mxu0 0.0
    %346 = vmatpush1.msra.mxu0 %v166
    %347 = vmatprep.subr.mxu0 0.0
    %348 = vmatpush1.msra.mxu0 %v167
    %349 = vmatprep.subr.mxu0 0.0
    %350 = vmatpush1.msra.mxu0 %v168
    %351 = vmatprep.subr.mxu0 0.0
    %352 = vmatpush1.msra.mxu0 %v169
    %353 = vmatprep.subr.mxu0 0.0
    %354 = vmatpush1.msra.mxu0 %v170
    %355 = vmatprep.subr.mxu0 0.0
    %356 = vmatpush1.msra.mxu0 %v171
    %357 = vmatprep.subr.mxu0 0.0
    %358 = vmatpush1.msra.mxu0 %v172
    %359 = vmatprep.subr.mxu0 0.0
    %360 = vmatpush1.msra.mxu0 %v173
    %361 = vmatprep.subr.mxu0 0.0
    %362 = vmatpush1.msra.mxu0 %v174
    %363 = vmatprep.subr.mxu0 0.0
    %364 = vmatpush1.msra.mxu0 %v175
    %365 = vmatprep.subr.mxu0 0.0
    %366 = vmatpush1.msra.mxu0 %v176
    %367 = vmatprep.subr.mxu0 0.0
    %368 = vmatpush1.msra.mxu0 %v177
    %369 = vmatprep.subr.mxu0 0.0
    %370 = vmatpush1.msra.mxu0 %v178
    %371 = vmatprep.subr.mxu0 0.0
    %372 = vmatpush1.msra.mxu0 %v179
    %373 = vmatprep.subr.mxu0 0.0
    %374 = vmatpush1.msra.mxu0 %v180
    %375 = vmatprep.subr.mxu0 0.0
    %376 = vmatpush1.msra.mxu0 %v181
    %377 = vmatprep.subr.mxu0 0.0
    %378 = vmatpush1.msra.mxu0 %v182
    %379 = vmatprep.subr.mxu0 0.0
    %380 = vmatpush1.msra.mxu0 %v183
    %381 = vmatprep.subr.mxu0 0.0
    %382 = vmatpush1.msra.mxu0 %v184
    %383 = vmatprep.subr.mxu0 0.0
    %384 = vmatpush1.msra.mxu0 %v185
    %385 = vmatprep.subr.mxu0 0.0
    %386 = vmatpush1.msra.mxu0 %v186
    %387 = vmatprep.subr.mxu0 0.0
    %388 = vmatpush1.msra.mxu0 %v187
    %389 = vmatprep.subr.mxu0 0.0
    %390 = vmatpush1.msra.mxu0 %v188
    %391 = vmatprep.subr.mxu0 0.0
    %392 = vmatpush1.msra.mxu0 %v189
    %393 = vmatprep.subr.mxu0 0.0
    %394 = vmatpush1.msra.mxu0 %v190
    %395 = vmatprep.mubr.f32.mxu0 %v304
    %396 = vmatmul.mubr.f32.gmra.mrb[0].mxu0 %v296
    %v397 = vpop.f32.mrb[0].mxu0
    %v398 = vadd.f32 0.0, %v397
    %v399 = vpop.f32.mrb[0].mxu0
    %400 = vdwg.mxu0
    %401 = vmatprep.subr.mxu0 0.0
    %402 = vmatpush1.msra.mxu0 %v191
    %403 = vmatprep.subr.mxu0 0.0
    %404 = vmatpush1.msra.mxu0 %v192
    %405 = vmatprep.subr.mxu0 0.0
    %406 = vmatpush1.msra.mxu0 %v193
    %407 = vmatprep.subr.mxu0 0.0
    %408 = vmatpush1.msra.mxu0 %v194
    %409 = vmatprep.subr.mxu0 0.0
    %410 = vmatpush1.msra.mxu0 %v195
    %411 = vmatprep.subr.mxu0 0.0
    %412 = vmatpush1.msra.mxu0 %v196
    %413 = vmatprep.subr.mxu0 0.0
    %414 = vmatpush1.msra.mxu0 %v197
    %415 = vmatprep.subr.mxu0 0.0
    %416 = vmatpush1.msra.mxu0 %v198
    %417 = vmatprep.subr.mxu0 0.0
    %418 = vmatpush1.msra.mxu0 %v199
    %419 = vmatprep.subr.mxu0 0.0
    %420 = vmatpush1.msra.mxu0 %v200
    %421 = vmatprep.subr.mxu0 0.0
    %422 = vmatpush1.msra.mxu0 %v201
    %423 = vmatprep.subr.mxu0 0.0
    %424 = vmatpush1.msra.mxu0 %v202
    %425 = vmatprep.subr.mxu0 0.0
    %426 = vmatpush1.msra.mxu0 %v203
    %427 = vmatprep.subr.mxu0 0.0
    %428 = vmatpush1.msra.mxu0 %v204
    %429 = vmatprep.subr.mxu0 0.0
    %430 = vmatpush1.msra.mxu0 %v205
    %431 = vmatprep.subr.mxu0 0.0
    %432 = vmatpush1.msra.mxu0 %v206
    %433 = vmatprep.subr.mxu0 0.0
    %434 = vmatpush1.msra.mxu0 %v207
    %435 = vmatprep.subr.mxu0 0.0
    %436 = vmatpush1.msra.mxu0 %v208
    %437 = vmatprep.subr.mxu0 0.0
    %438 = vmatpush1.msra.mxu0 %v209
    %439 = vmatprep.subr.mxu0 0.0
    %440 = vmatpush1.msra.mxu0 %v210
    %441 = vmatprep.subr.mxu0 0.0
    %442 = vmatpush1.msra.mxu0 %v211
    %443 = vmatprep.subr.mxu0 0.0
    %444 = vmatpush1.msra.mxu0 %v212
    %445 = vmatprep.subr.mxu0 0.0
    %446 = vmatpush1.msra.mxu0 %v213
    %447 = vmatprep.subr.mxu0 0.0
    %448 = vmatpush1.msra.mxu0 %v214
    %449 = vmatprep.subr.mxu0 0.0
    %450 = vmatpush1.msra.mxu0 %v215
    %451 = vmatprep.subr.mxu0 0.0
    %452 = vmatpush1.msra.mxu0 %v216
    %453 = vmatprep.subr.mxu0 0.0
    %454 = vmatpush1.msra.mxu0 %v217
    %455 = vmatprep.subr.mxu0 0.0
    %456 = vmatpush1.msra.mxu0 %v218
    %457 = vmatprep.subr.mxu0 0.0
    %458 = vmatpush1.msra.mxu0 %v219
    %459 = vmatprep.subr.mxu0 0.0
    %460 = vmatpush1.msra.mxu0 %v220
    %461 = vmatprep.subr.mxu0 0.0
    %462 = vmatpush1.msra.mxu0 %v221
    %463 = vmatprep.subr.mxu0 0.0
    %464 = vmatpush1.msra.mxu0 %v222
    %465 = vmatprep.mubr.f32.mxu0 %v305
    %466 = vmatmul.mubr.f32.gmra.mrb[0].mxu0 %v303
    %v467 = vpop.f32.mrb[0].mxu0
    %v468 = vadd.f32 %v398, %v467
    %v469 = vpop.f32.mrb[0].mxu0
    %470 = vdwg.mxu0
    %471 = vmatprep.subr.mxu0 0.0
    %472 = vmatpush1.msra.mxu0 %v223
    %473 = vmatprep.subr.mxu0 0.0
    %474 = vmatpush1.msra.mxu0 %v224
    %475 = vmatprep.subr.mxu0 0.0
    %476 = vmatpush1.msra.mxu0 %v225
    %477 = vmatprep.subr.mxu0 0.0
    %478 = vmatpush1.msra.mxu0 %v226
    %479 = vmatprep.subr.mxu0 0.0
    %480 = vmatpush1.msra.mxu0 %v227
    %481 = vmatprep.subr.mxu0 0.0
    %482 = vmatpush1.msra.mxu0 %v228
    %483 = vmatprep.subr.mxu0 0.0
    %484 = vmatpush1.msra.mxu0 %v229
    %485 = vmatprep.subr.mxu0 0.0
    %486 = vmatpush1.msra.mxu0 %v230
    %487 = vmatprep.subr.mxu0 0.0
    %488 = vmatpush1.msra.mxu0 %v231
    %489 = vmatprep.subr.mxu0 0.0
    %490 = vmatpush1.msra.mxu0 %v232
    %491 = vmatprep.subr.mxu0 0.0
    %492 = vmatpush1.msra.mxu0 %v233
    %493 = vmatprep.subr.mxu0 0.0
    %494 = vmatpush1.msra.mxu0 %v234
    %495 = vmatprep.subr.mxu0 0.0
    %496 = vmatpush1.msra.mxu0 %v235
    %497 = vmatprep.subr.mxu0 0.0
    %498 = vmatpush1.msra.mxu0 %v236
    %499 = vmatprep.subr.mxu0 0.0
    %500 = vmatpush1.msra.mxu0 %v237
    %501 = vmatprep.subr.mxu0 0.0
    %502 = vmatpush1.msra.mxu0 %v238
    %503 = vmatprep.subr.mxu0 0.0
    %504 = vmatpush1.msra.mxu0 %v239
    %505 = vmatprep.subr.mxu0 0.0
    %506 = vmatpush1.msra.mxu0 %v240
    %507 = vmatprep.subr.mxu0 0.0
    %508 = vmatpush1.msra.mxu0 %v241
    %509 = vmatprep.subr.mxu0 0.0
    %510 = vmatpush1.msra.mxu0 %v242
    %511 = vmatprep.subr.mxu0 0.0
    %512 = vmatpush1.msra.mxu0 %v243
    %513 = vmatprep.subr.mxu0 0.0
    %514 = vmatpush1.msra.mxu0 %v244
    %515 = vmatprep.subr.mxu0 0.0
    %516 = vmatpush1.msra.mxu0 %v245
    %517 = vmatprep.subr.mxu0 0.0
    %518 = vmatpush1.msra.mxu0 %v246
    %519 = vmatprep.subr.mxu0 0.0
    %520 = vmatpush1.msra.mxu0 %v247
    %521 = vmatprep.subr.mxu0 0.0
    %522 = vmatpush1.msra.mxu0 %v248
    %523 = vmatprep.subr.mxu0 0.0
    %524 = vmatpush1.msra.mxu0 %v249
    %525 = vmatprep.subr.mxu0 0.0
    %526 = vmatpush1.msra.mxu0 %v250
    %527 = vmatprep.subr.mxu0 0.0
    %528 = vmatpush1.msra.mxu0 %v251
    %529 = vmatprep.subr.mxu0 0.0
    %530 = vmatpush1.msra.mxu0 %v252
    %531 = vmatprep.subr.mxu0 0.0
    %532 = vmatpush1.msra.mxu0 %v253
    %533 = vmatprep.subr.mxu0 0.0
    %534 = vmatpush1.msra.mxu0 %v254
    %535 = vmatprep.mubr.f32.mxu0 %v321
    %536 = vmatmul.mubr.f32.gmra.mrb[0].mxu0 %v313
    %v537 = vpop.f32.mrb[0].mxu0
    %v538 = vadd.f32 %v468, %v537
    %v539 = vpop.f32.mrb[0].mxu0
    %540 = vdwg.mxu0
    %541 = vmatprep.subr.mxu0 0.0
    %542 = vmatpush1.msra.mxu0 %v255
    %543 = vmatprep.subr.mxu0 0.0
    %544 = vmatpush1.msra.mxu0 %v256
    %545 = vmatprep.subr.mxu0 0.0
    %546 = vmatpush1.msra.mxu0 %v257
    %547 = vmatprep.subr.mxu0 0.0
    %548 = vmatpush1.msra.mxu0 %v258
    %549 = vmatprep.subr.mxu0 0.0
    %550 = vmatpush1.msra.mxu0 %v259
    %551 = vmatprep.subr.mxu0 0.0
    %552 = vmatpush1.msra.mxu0 %v260
    %553 = vmatprep.subr.mxu0 0.0
    %554 = vmatpush1.msra.mxu0 %v261
    %555 = vmatprep.subr.mxu0 0.0
    %556 = vmatpush1.msra.mxu0 %v262
    %557 = vmatprep.subr.mxu0 0.0
    %558 = vmatpush1.msra.mxu0 %v263
    %559 = vmatprep.subr.mxu0 0.0
    %560 = vmatpush1.msra.mxu0 %v264
    %561 = vmatprep.subr.mxu0 0.0
    %562 = vmatpush1.msra.mxu0 %v265
    %563 = vmatprep.subr.mxu0 0.0
    %564 = vmatpush1.msra.mxu0 %v266
    %565 = vmatprep.subr.mxu0 0.0
    %566 = vmatpush1.msra.mxu0 %v267
    %567 = vmatprep.subr.mxu0 0.0
    %568 = vmatpush1.msra.mxu0 %v268
    %569 = vmatprep.subr.mxu0 0.0
    %570 = vmatpush1.msra.mxu0 %v269
    %571 = vmatprep.subr.mxu0 0.0
    %572 = vmatpush1.msra.mxu0 %v270
    %573 = vmatprep.subr.mxu0 0.0
    %574 = vmatpush1.msra.mxu0 %v271
    %575 = vmatprep.subr.mxu0 0.0
    %576 = vmatpush1.msra.mxu0 %v272
    %577 = vmatprep.subr.mxu0 0.0
    %578 = vmatpush1.msra.mxu0 %v273
    %579 = vmatprep.subr.mxu0 0.0
    %580 = vmatpush1.msra.mxu0 %v274
    %581 = vmatprep.subr.mxu0 0.0
    %582 = vmatpush1.msra.mxu0 %v275
    %583 = vmatprep.subr.mxu0 0.0
    %584 = vmatpush1.msra.mxu0 %v276
    %585 = vmatprep.subr.mxu0 0.0
    %586 = vmatpush1.msra.mxu0 %v277
    %587 = vmatprep.subr.mxu0 0.0
    %588 = vmatpush1.msra.mxu0 %v278
    %589 = vmatprep.subr.mxu0 0.0
    %590 = vmatpush1.msra.mxu0 %v279
    %591 = vmatprep.subr.mxu0 0.0
    %592 = vmatpush1.msra.mxu0 %v280
    %593 = vmatprep.subr.mxu0 0.0
    %594 = vmatpush1.msra.mxu0 %v281
    %595 = vmatprep.subr.mxu0 0.0
    %596 = vmatpush1.msra.mxu0 %v282
    %597 = vmatprep.subr.mxu0 0.0
    %598 = vmatpush1.msra.mxu0 %v283
    %599 = vmatprep.subr.mxu0 0.0
    %600 = vmatpush1.msra.mxu0 %v284
    %601 = vmatprep.subr.mxu0 0.0
    %602 = vmatpush1.msra.mxu0 %v285
    %603 = vmatprep.subr.mxu0 0.0
    %604 = vmatpush1.msra.mxu0 %v286
    %605 = vmatprep.mubr.f32.mxu0 %v322
    %606 = vmatmul.mubr.f32.gmra.mrb[0].mxu0 %v320
    %v607 = vpop.f32.mrb[0].mxu0
    %v608 = vadd.f32 %v538, %v607
    %v609 = vpop.f32.mrb[0].mxu0
    %610 = vdwg.mxu0
    %611 = vmatprep.subr.mxu0 0.0
    %612 = vmatpush1.msra.mxu0 %v141
    %613 = vmatprep.subr.mxu0 0.0
    %614 = vmatpush1.msra.mxu0 %v142
    %615 = vmatprep.subr.mxu0 0.0
    %616 = vmatpush1.msra.mxu0 %v143
    %617 = vmatprep.subr.mxu0 0.0
    %618 = vmatpush1.msra.mxu0 %v144
    %619 = vmatprep.subr.mxu0 0.0
    %620 = vmatpush1.msra.mxu0 %v145
    %621 = vmatprep.subr.mxu0 0.0
    %622 = vmatpush1.msra.mxu0 %v146
    %623 = vmatprep.subr.mxu0 0.0
    %624 = vmatpush1.msra.mxu0 %v147
    %625 = vmatprep.subr.mxu0 0.0
    %626 = vmatpush1.msra.mxu0 %v148
    %627 = vmatprep.subr.mxu0 0.0
    %628 = vmatpush1.msra.mxu0 %v149
    %629 = vmatprep.subr.mxu0 0.0
    %630 = vmatpush1.msra.mxu0 %v150
    %631 = vmatprep.subr.mxu0 0.0
    %632 = vmatpush1.msra.mxu0 %v151
    %633 = vmatprep.subr.mxu0 0.0
    %634 = vmatpush1.msra.mxu0 %v152
    %635 = vmatprep.subr.mxu0 0.0
    %636 = vmatpush1.msra.mxu0 %v153
    %637 = vmatprep.subr.mxu0 0.0
    %638 = vmatpush1.msra.mxu0 %v154
    %639 = vmatprep.subr.mxu0 0.0
    %640 = vmatpush1.msra.mxu0 %v155
    %641 = vmatprep.subr.mxu0 0.0
    %642 = vmatpush1.msra.mxu0 %v156
    %643 = vmatprep.subr.mxu0 0.0
    %644 = vmatpush1.msra.mxu0 0.0
    %645 = vmatprep.subr.mxu0 0.0
    %646 = vmatpush1.msra.mxu0 0.0
    %647 = vmatprep.subr.mxu0 0.0
    %648 = vmatpush1.msra.mxu0 0.0
    %649 = vmatprep.subr.mxu0 0.0
    %650 = vmatpush1.msra.mxu0 0.0
    %651 = vmatprep.subr.mxu0 0.0
    %652 = vmatpush1.msra.mxu0 0.0
    %653 = vmatprep.subr.mxu0 0.0
    %654 = vmatpush1.msra.mxu0 0.0
    %655 = vmatprep.subr.mxu0 0.0
    %656 = vmatpush1.msra.mxu0 0.0
    %657 = vmatprep.subr.mxu0 0.0
    %658 = vmatpush1.msra.mxu0 0.0
    %659 = vmatprep.subr.mxu0 0.0
    %660 = vmatpush1.msra.mxu0 0.0
    %661 = vmatprep.subr.mxu0 0.0
    %662 = vmatpush1.msra.mxu0 0.0
    %663 = vmatprep.subr.mxu0 0.0
    %664 = vmatpush1.msra.mxu0 0.0
    %665 = vmatprep.subr.mxu0 0.0
    %666 = vmatpush1.msra.mxu0 0.0
    %667 = vmatprep.subr.mxu0 0.0
    %668 = vmatpush1.msra.mxu0 0.0
    %669 = vmatprep.subr.mxu0 0.0
    %670 = vmatpush1.msra.mxu0 0.0
    %671 = vmatprep.subr.mxu0 0.0
    %672 = vmatpush1.msra.mxu0 0.0
    %673 = vmatprep.subr.mxu0 0.0
    %674 = vmatpush1.msra.mxu0 0.0
    %675 = vmatprep.mubr.f32.mxu0 0.0
    %676 = vmatmul.mubr.f32.gmra.mrb[0].mxu0 %v138
    %v677 = vpop.f32.mrb[0].mxu0
    %v678 = vadd.f32 %v608, %v677
    %v679 = vpop.f32.mrb[0].mxu0
    %680 = vdwg.mxu0
    %v681 = vld [vmem:[%s6] sm:$0x1]
    %v683 = vlaneseq
    %v684 = vshrl.u32 %v683, 7
    %v685 = vsub.s32 0, %v684
    %v686 = vrot.slane %v681, %v685
    %v688 = vadd.f32 %v678, %v686
    %689 = vst [vmem:[#allocation2] sm:$0x3] %v688
    // Predicated region
    $region30: #{baseline_tab_forward.11} parent=1 // pred_check
      _
    $region31: #{baseline_tab_forward.11} parent=1 // pred_check_branch
      %691 = sbr.rel (0) target = $region33
    $region32: #{baseline_tab_forward.11} parent=1 // pred_region
      %s693 = ssub.s32 32, 32
      %694 = vsyncadd [#allocation3], %s693
      %s696 = sshll.u32 [#allocation2], 4
      %s697 = int_to_ptr.vmem [resolvable:$true] %s696
      %699 = dma.vmem_to_hbm [thread:$0]  %s697, 32, %s7, [#allocation3]
    $region33: #{baseline_tab_forward.11} parent=1 // pred_fallthru
      _
    // Predicated region
    $region34: #{baseline_tab_forward.11} parent=1 // pred_check
      _
    $region35: #{baseline_tab_forward.11} parent=1 // pred_check_branch
      %701 = sbr.rel (0) target = $region37
    $region36: #{baseline_tab_forward.11} parent=1 // pred_region
      %702 = dma.done [#allocation3], 32
    $region37: #{baseline_tab_forward.11} parent=1 // pred_fallthru
      _
    %703 = vsyncpa [#allocation3], 1

</llo_original>
